<compile_context>
chip_gen: v6e
topology: v6e:2x2x1
jax: 0.10.0
libtpu: 0.0.40
codegen_flags: <defaults>
</compile_context>

<pallas_src>
import jax
import jax.numpy as jnp
import numpy as np
from jax import lax
from jax.experimental import pallas as pl
from jax.experimental.pallas import tpu as pltpu

block_length = 64


# ---------------------------------------------------------------------------
# In-kernel helpers
# ---------------------------------------------------------------------------
def _relu(x):
    return jnp.maximum(x, 0.0)


def _shift_rows(x, s, row_idx):
    """y[l, :] = x[l + s, :], zero outside [0, L).  s is a static Python int."""
    if s == 0:
        return x
    L = x.shape[0]
    rolled = pltpu.roll(x, shift=(-s) % L, axis=0)     # XLU sublane rotate
    if s > 0:
        valid = row_idx < (L - s)
    else:
        valid = row_idx >= (-s)
    return jnp.where(valid, rolled, 0.0)


def _conv1d_same(x, w_ref, b_ref):
    """'same' Conv1d on an (L, Cin) f32 activation.

    w_ref: (K, Cin, Cout) bf16 VMEM ref, b_ref: (1, Cout) f32 VMEM ref.
    bf16 MXU matmuls with f32 accumulation; returns (L, Cout) f32.
    """
    K = w_ref.shape[0]
    p = (K - 1) // 2
    L = x.shape[0]
    row_idx = lax.broadcasted_iota(jnp.int32, (L, 1), 0)
    acc = b_ref[...] + jnp.dot(
        _shift_rows(x, -p, row_idx).astype(jnp.bfloat16), w_ref[0],
        preferred_element_type=jnp.float32)
    for k in range(1, K):                               # static unroll over taps
        xs = _shift_rows(x, k - p, row_idx).astype(jnp.bfloat16)
        acc = acc + jnp.dot(xs, w_ref[k], preferred_element_type=jnp.float32)
    return acc


def _conv1d_last(x, w_ref, b_ref):
    """'same' Conv1d with Cout=1: VPU multiply + lane reduction (no MXU).

    x: (L, Cin) f32, w_ref: (K, 1, Cin) f32, b_ref: (1, 1) f32 -> (L, 1) f32.
    """
    K = w_ref.shape[0]
    p = (K - 1) // 2
    L = x.shape[0]
    row_idx = lax.broadcasted_iota(jnp.int32, (L, 1), 0)
    acc = b_ref[...] + jnp.sum(_shift_rows(x, -p, row_idx) * w_ref[0],
                               axis=-1, keepdims=True)
    for k in range(1, K):
        xs = _shift_rows(x, k - p, row_idx)
        acc = acc + jnp.sum(xs * w_ref[k], axis=-1, keepdims=True)
    return acc


# ---------------------------------------------------------------------------
# Pallas kernel: full Decoding forward for one batch element per grid step.
# ---------------------------------------------------------------------------
def decoding_kernel(x_ref,
                    w1, b1, w2, b2, w3, b3, w4, b4,
                    w5, b5, w6, b6, w7, b7, w8, b8,
                    logit_ref, prob_ref):
    x = x_ref[0]                                                   # (L, K1*8) bf16

    # conv1: already im2col'd in the wrapper -> single matmul, contraction 40.
    c1 = _relu(b1[...] + jnp.dot(x, w1[...],
                                 preferred_element_type=jnp.float32))  # (L, 256)

    c2_ori = _conv1d_same(c1, w2, b2)                              # (L, 128)
    c2 = _relu(c2_ori)
    c2 = _conv1d_same(_relu(_conv1d_same(c2, w3, b3)), w3, b3)     # conv3 reused, as in torch
    c2 = _relu(c2 + c2_ori)

    c3_ori = _conv1d_same(c2, w4, b4)                              # (L, 64)
    c3 = _relu(c3_ori)
    c3 = _conv1d_same(_relu(_conv1d_same(c3, w5, b5)), w6, b6)
    c3 = c3 + c3_ori
    c3 = c3 + _relu(c3)

    c4 = _relu(_conv1d_same(c3, w7, b7))                           # (L, 32)
    c4 = _relu(c4)

    logit = _conv1d_last(c4, w8, b8)                               # (L, 1)
    logit_ref[0] = logit
    prob_ref[0] = pl.reciprocal(1.0 + jnp.exp(-logit), approx=True)


# ---------------------------------------------------------------------------
# Wrapper
# ---------------------------------------------------------------------------
def _im2col_1d(x, K):
    """x: (B, L, C) -> (B, L, K*C) with 'same' zero padding, tap-major columns."""
    B, L, C = x.shape
    p = (K - 1) // 2
    xpad = jnp.pad(x, ((0, 0), (p, p), (0, 0)))
    cols = [xpad[:, k:k + L, :] for k in range(K)]
    return jnp.concatenate(cols, axis=-1)


def _const_spec(shape):
    shape = tuple(shape)
    return pl.BlockSpec(shape, lambda b: (0,) * len(shape))


def decoding_forward(x, channel_info, params):
    """x, channel_info: (B, L, 4) -> (logit, prob), each (B, block_length, 1)."""
    B, L, _ = x.shape
    (w1, b1), (w2, b2), (w3, b3), (w4, b4), \
        (w5, b5), (w6, b6), (w7, b7), (w8, b8) = params

    x_comb = jnp.concatenate([x, channel_info], axis=-1).astype(jnp.float32)
    K1 = w1.shape[0]
    x_col = _im2col_1d(x_comb, K1).astype(jnp.bfloat16)            # (B, L, K1*8)

    # Weights to bf16 for the MXU layers; conv8 stays f32 and is pre-transposed
    # to (K, 1, Cin) so the kernel can use a VPU multiply + lane reduction.
    w1f = w1.reshape(K1 * w1.shape[1], w1.shape[2]).astype(jnp.bfloat16)
    w2b, w3b, w4b, w5b, w6b, w7b = (w.astype(jnp.bfloat16)
                                    for w in (w2, w3, w4, w5, w6, w7))
    w8r = jnp.transpose(w8, (0, 2, 1)).astype(jnp.float32)         # (3, 1, 32)

    flat_params = [w1f, b1, w2b, b2, w3b, b3, w4b, b4,
                   w5b, b5, w6b, b6, w7b, b7, w8r, b8]

    in_specs = [pl.BlockSpec((1, L, x_col.shape[-1]), lambda b: (b, 0, 0))]
    in_specs += [_const_spec(p.shape) for p in flat_params]

    out_shape = (jax.ShapeDtypeStruct((B, L, 1), jnp.float32),
                 jax.ShapeDtypeStruct((B, L, 1), jnp.float32))
    out_specs = (pl.BlockSpec((1, L, 1), lambda b: (b, 0, 0)),
                 pl.BlockSpec((1, L, 1), lambda b: (b, 0, 0)))

    logit, prob = pl.pallas_call(
        decoding_kernel,
        grid=(B,),
        in_specs=in_specs,
        out_specs=out_specs,
        out_shape=out_shape,
        compiler_params=pltpu.CompilerParams(
            dimension_semantics=("parallel",),
            vmem_limit_bytes=32 * 1024 * 1024),
    )(x_col, *flat_params)

    # Same as D_logit[:, 0:block_length], D_prob[:, 0:block_length]
    return logit[:, :block_length], prob[:, :block_length]


# ---------------------------------------------------------------------------
# Pure-JAX reference (same bf16-matmul / f32-accumulate numerics class)
# ---------------------------------------------------------------------------
def _ref_conv(x, w, b, compute_dtype=jnp.bfloat16):
    y = lax.conv_general_dilated(
        x.astype(compute_dtype), w.astype(compute_dtype),
        window_strides=(1,), padding="SAME",
        dimension_numbers=("NWC", "WIO", "NWC"),
        preferred_element_type=jnp.float32)
    return y + b[None]


def decoding_reference(x, channel_info, params):
    (w1, b1), (w2, b2), (w3, b3), (w4, b4), \
        (w5, b5), (w6, b6), (w7, b7), (w8, b8) = params
    xc = jnp.concatenate([x, channel_info], axis=-1).astype(jnp.float32)
    r = jax.nn.relu
    c1 = r(_ref_conv(xc, w1, b1))
    c2o = _ref_conv(c1, w2, b2)
    c2 = r(c2o)
    c2 = _ref_conv(r(_ref_conv(c2, w3, b3)), w3, b3)
    c2 = r(c2 + c2o)
    c3o = _ref_conv(c2, w4, b4)
    c3 = r(c3o)
    c3 = _ref_conv(r(_ref_conv(c3, w5, b5)), w6, b6)
    c3 = c3 + c3o
    c3 = c3 + r(c3)
    c4 = r(r(_ref_conv(c3, w7, b7)))
    logit = _ref_conv(c4, w8, b8, compute_dtype=jnp.float32)   # last layer f32 (VPU in kernel)
    prob = jax.nn.sigmoid(logit)
    return logit[:, :block_length], prob[:, :block_length]


# ---------------------------------------------------------------------------
def init_params(key):
    # (Cin, Cout, K) for conv1..conv8 (matches the PyTorch module's __init__).
    configs = [(8, 256, 5), (256, 128, 5), (128, 128, 5), (128, 64, 5),
               (64, 64, 5), (64, 64, 3), (64, 32, 3), (32, 1, 3)]
    params = []
    for cin, cout, k in configs:
        key, kw, kb = jax.random.split(key, 3)
        bound = 1.0 / np.sqrt(cin * k)   # PyTorch-style uniform fan-in bound
        w = jax.random.uniform(kw, (k, cin, cout), jnp.float32, -bound, bound)
        b = jax.random.uniform(kb, (1, cout), jnp.float32, -bound, bound)
        params.append((w, b))
    return params


if __name__ == "__main__":
    key = jax.random.PRNGKey(0)
    kx, kc, kp = jax.random.split(key, 3)

    B, L = 2, 80                       # L >= block_length so the slice matters
    x = jax.random.normal(kx, (B, L, 4), jnp.float32)
    channel_info = jax.random.normal(kc, (B, L, 4), jnp.float32)
    params = init_params(kp)

    logit, prob = decoding_forward(x, channel_info, params)
    jax.block_until_ready((logit, prob))

    ref_logit, ref_prob = decoding_reference(x, channel_info, params)
    np.testing.assert_allclose(np.asarray(logit), np.asarray(ref_logit),
                               rtol=1e-2, atol=2e-3)
    np.testing.assert_allclose(np.asarray(prob), np.asarray(ref_prob),
                               rtol=1e-2, atol=1e-3)

    assert logit.shape == (B, block_length, 1)
    assert prob.shape == (B, block_length, 1)
    print("KERNEL_OK")
</pallas_src>

<mosaic_0001>
module attributes {stable_mosaic.version = 11 : i64} {
  func.func @decoding_kernel(%arg0: i32, %arg1: memref<1x80x40xbf16, #tpu.memory_space<vmem>>, %arg2: memref<40x256xbf16, #tpu.memory_space<vmem>>, %arg3: memref<1x256xf32, #tpu.memory_space<vmem>>, %arg4: memref<5x256x128xbf16, #tpu.memory_space<vmem>>, %arg5: memref<1x128xf32, #tpu.memory_space<vmem>>, %arg6: memref<5x128x128xbf16, #tpu.memory_space<vmem>>, %arg7: memref<1x128xf32, #tpu.memory_space<vmem>>, %arg8: memref<5x128x64xbf16, #tpu.memory_space<vmem>>, %arg9: memref<1x64xf32, #tpu.memory_space<vmem>>, %arg10: memref<5x64x64xbf16, #tpu.memory_space<vmem>>, %arg11: memref<1x64xf32, #tpu.memory_space<vmem>>, %arg12: memref<3x64x64xbf16, #tpu.memory_space<vmem>>, %arg13: memref<1x64xf32, #tpu.memory_space<vmem>>, %arg14: memref<3x64x32xbf16, #tpu.memory_space<vmem>>, %arg15: memref<1x32xf32, #tpu.memory_space<vmem>>, %arg16: memref<3x1x32xf32, #tpu.memory_space<vmem>>, %arg17: memref<1x1xf32, #tpu.memory_space<vmem>>, %arg18: memref<1x80x1xf32, #tpu.memory_space<vmem>>, %arg19: memref<1x80x1xf32, #tpu.memory_space<vmem>>) attributes {dimension_semantics = [#tpu.dimension_semantics<parallel>], iteration_bounds = array<i64: 2>, scalar_prefetch = 0 : i64, scratch_operands = 0 : i64, tpu.core_type = #tpu.core_type<tc>, window_params = [{transform_indices = @transform_0, window_bounds = array<i64: 1, 80, 40>}, {pipeline_mode = #tpu.pipeline_mode<synchronous>, transform_indices = @transform_1, window_bounds = array<i64: 40, 256>}, {pipeline_mode = #tpu.pipeline_mode<synchronous>, transform_indices = @transform_2, window_bounds = array<i64: 1, 256>}, {pipeline_mode = #tpu.pipeline_mode<synchronous>, transform_indices = @transform_3, window_bounds = array<i64: 5, 256, 128>}, {pipeline_mode = #tpu.pipeline_mode<synchronous>, transform_indices = @transform_4, window_bounds = array<i64: 1, 128>}, {pipeline_mode = #tpu.pipeline_mode<synchronous>, transform_indices = @transform_5, window_bounds = array<i64: 5, 128, 128>}, {pipeline_mode = #tpu.pipeline_mode<synchronous>, transform_indices = @transform_6, window_bounds = array<i64: 1, 128>}, {pipeline_mode = #tpu.pipeline_mode<synchronous>, transform_indices = @transform_7, window_bounds = array<i64: 5, 128, 64>}, {pipeline_mode = #tpu.pipeline_mode<synchronous>, transform_indices = @transform_8, window_bounds = array<i64: 1, 64>}, {pipeline_mode = #tpu.pipeline_mode<synchronous>, transform_indices = @transform_9, window_bounds = array<i64: 5, 64, 64>}, {pipeline_mode = #tpu.pipeline_mode<synchronous>, transform_indices = @transform_10, window_bounds = array<i64: 1, 64>}, {pipeline_mode = #tpu.pipeline_mode<synchronous>, transform_indices = @transform_11, window_bounds = array<i64: 3, 64, 64>}, {pipeline_mode = #tpu.pipeline_mode<synchronous>, transform_indices = @transform_12, window_bounds = array<i64: 1, 64>}, {pipeline_mode = #tpu.pipeline_mode<synchronous>, transform_indices = @transform_13, window_bounds = array<i64: 3, 64, 32>}, {pipeline_mode = #tpu.pipeline_mode<synchronous>, transform_indices = @transform_14, window_bounds = array<i64: 1, 32>}, {pipeline_mode = #tpu.pipeline_mode<synchronous>, transform_indices = @transform_15, window_bounds = array<i64: 3, 1, 32>}, {pipeline_mode = #tpu.pipeline_mode<synchronous>, transform_indices = @transform_16, window_bounds = array<i64: 1, 1>}, {transform_indices = @transform_17, window_bounds = array<i64: 1, 80, 1>}, {transform_indices = @transform_18, window_bounds = array<i64: 1, 80, 1>}]} {
    %c0 = arith.constant 0 : index
    %c0_0 = arith.constant 0 : index
    %c0_1 = arith.constant 0 : index
    %0 = vector.load %arg1[%c0, %c0_0, %c0_1] : memref<1x80x40xbf16, #tpu.memory_space<vmem>>, vector<1x80x40xbf16>
    %1 = vector.shape_cast %0 : vector<1x80x40xbf16> to vector<80x40xbf16>
    %c0_2 = arith.constant 0 : index
    %c0_3 = arith.constant 0 : index
    %2 = vector.load %arg3[%c0_2, %c0_3] : memref<1x256xf32, #tpu.memory_space<vmem>>, vector<1x256xf32>
    %c0_4 = arith.constant 0 : index
    %c0_5 = arith.constant 0 : index
    %3 = vector.load %arg2[%c0_4, %c0_5] : memref<40x256xbf16, #tpu.memory_space<vmem>>, vector<40x256xbf16>
    %cst = arith.constant dense<0.000000e+00> : vector<80x256xf32>
    %4 = tpu.matmul %1, %3, %cst {dimension_numbers = #tpu.dot_dimension_numbers<[1], [0], [0], [1], [0, 0, 1, 1], [], []>} : vector<80x40xbf16>, vector<40x256xbf16>, vector<80x256xf32> -> vector<80x256xf32>
    %5 = vector.broadcast %2 : vector<1x256xf32> to vector<80x256xf32>
    %6 = arith.addf %5, %4 : vector<80x256xf32>
    %cst_6 = arith.constant 0.000000e+00 : f32
    %7 = vector.broadcast %cst_6 : f32 to vector<80x256xf32>
    %8 = arith.maximumf %6, %7 : vector<80x256xf32>
    %9 = tpu.iota {dimensions = array<i32: 0>} : vector<80x1xi32>
    %c0_7 = arith.constant 0 : index
    %c0_8 = arith.constant 0 : index
    %10 = vector.load %arg5[%c0_7, %c0_8] : memref<1x128xf32, #tpu.memory_space<vmem>>, vector<1x128xf32>
    %c2_i32 = arith.constant 2 : i32
    %11 = tpu.dynamic_rotate %8 by %c2_i32 dim 0 : vector<80x256xf32>, i32 -> vector<80x256xf32>
    %c2_i32_9 = arith.constant 2 : i32
    %12 = vector.broadcast %c2_i32_9 : i32 to vector<80x1xi32>
    %13 = arith.cmpi sge, %9, %12 : vector<80x1xi32>
    %cst_10 = arith.constant 0.000000e+00 : f32
    %14 = vector.shape_cast %13 : vector<80x1xi1> to vector<80x1xi1>
    %15 = vector.broadcast %14 : vector<80x1xi1> to vector<80x256xi1>
    %16 = vector.broadcast %cst_10 : f32 to vector<80x256xf32>
    %17 = arith.select %15, %11, %16 : vector<80x256xi1>, vector<80x256xf32>
    %18 = arith.truncf %17 : vector<80x256xf32> to vector<80x256xbf16>
    %c0_11 = arith.constant 0 : index
    %c0_12 = arith.constant 0 : index
    %c0_13 = arith.constant 0 : index
    %19 = vector.load %arg4[%c0_11, %c0_12, %c0_13] : memref<5x256x128xbf16, #tpu.memory_space<vmem>>, vector<1x256x128xbf16>
    %20 = vector.shape_cast %19 : vector<1x256x128xbf16> to vector<256x128xbf16>
    %cst_14 = arith.constant dense<0.000000e+00> : vector<80x128xf32>
    %21 = tpu.matmul %18, %20, %cst_14 {dimension_numbers = #tpu.dot_dimension_numbers<[1], [0], [0], [1], [0, 0, 1, 1], [], []>} : vector<80x256xbf16>, vector<256x128xbf16>, vector<80x128xf32> -> vector<80x128xf32>
    %22 = vector.broadcast %10 : vector<1x128xf32> to vector<80x128xf32>
    %23 = arith.addf %22, %21 : vector<80x128xf32>
    %c1_i32 = arith.constant 1 : i32
    %24 = tpu.dynamic_rotate %8 by %c1_i32 dim 0 : vector<80x256xf32>, i32 -> vector<80x256xf32>
    %c1_i32_15 = arith.constant 1 : i32
    %25 = vector.broadcast %c1_i32_15 : i32 to vector<80x1xi32>
    %26 = arith.cmpi sge, %9, %25 : vector<80x1xi32>
    %cst_16 = arith.constant 0.000000e+00 : f32
    %27 = vector.shape_cast %26 : vector<80x1xi1> to vector<80x1xi1>
    %28 = vector.broadcast %27 : vector<80x1xi1> to vector<80x256xi1>
    %29 = vector.broadcast %cst_16 : f32 to vector<80x256xf32>
    %30 = arith.select %28, %24, %29 : vector<80x256xi1>, vector<80x256xf32>
    %31 = arith.truncf %30 : vector<80x256xf32> to vector<80x256xbf16>
    %c1 = arith.constant 1 : index
    %c0_17 = arith.constant 0 : index
    %c0_18 = arith.constant 0 : index
    %32 = vector.load %arg4[%c1, %c0_17, %c0_18] : memref<5x256x128xbf16, #tpu.memory_space<vmem>>, vector<1x256x128xbf16>
    %33 = vector.shape_cast %32 : vector<1x256x128xbf16> to vector<256x128xbf16>
    %cst_19 = arith.constant dense<0.000000e+00> : vector<80x128xf32>
    %34 = tpu.matmul %31, %33, %cst_19 {dimension_numbers = #tpu.dot_dimension_numbers<[1], [0], [0], [1], [0, 0, 1, 1], [], []>} : vector<80x256xbf16>, vector<256x128xbf16>, vector<80x128xf32> -> vector<80x128xf32>
    %35 = arith.addf %23, %34 : vector<80x128xf32>
    %36 = arith.truncf %8 : vector<80x256xf32> to vector<80x256xbf16>
    %c2 = arith.constant 2 : index
    %c0_20 = arith.constant 0 : index
    %c0_21 = arith.constant 0 : index
    %37 = vector.load %arg4[%c2, %c0_20, %c0_21] : memref<5x256x128xbf16, #tpu.memory_space<vmem>>, vector<1x256x128xbf16>
    %38 = vector.shape_cast %37 : vector<1x256x128xbf16> to vector<256x128xbf16>
    %cst_22 = arith.constant dense<0.000000e+00> : vector<80x128xf32>
    %39 = tpu.matmul %36, %38, %cst_22 {dimension_numbers = #tpu.dot_dimension_numbers<[1], [0], [0], [1], [0, 0, 1, 1], [], []>} : vector<80x256xbf16>, vector<256x128xbf16>, vector<80x128xf32> -> vector<80x128xf32>
    %40 = arith.addf %35, %39 : vector<80x128xf32>
    %c79_i32 = arith.constant 79 : i32
    %41 = tpu.dynamic_rotate %8 by %c79_i32 dim 0 : vector<80x256xf32>, i32 -> vector<80x256xf32>
    %c79_i32_23 = arith.constant 79 : i32
    %42 = vector.broadcast %c79_i32_23 : i32 to vector<80x1xi32>
    %43 = arith.cmpi slt, %9, %42 : vector<80x1xi32>
    %cst_24 = arith.constant 0.000000e+00 : f32
    %44 = vector.shape_cast %43 : vector<80x1xi1> to vector<80x1xi1>
    %45 = vector.broadcast %44 : vector<80x1xi1> to vector<80x256xi1>
    %46 = vector.broadcast %cst_24 : f32 to vector<80x256xf32>
    %47 = arith.select %45, %41, %46 : vector<80x256xi1>, vector<80x256xf32>
    %48 = arith.truncf %47 : vector<80x256xf32> to vector<80x256xbf16>
    %c3 = arith.constant 3 : index
    %c0_25 = arith.constant 0 : index
    %c0_26 = arith.constant 0 : index
    %49 = vector.load %arg4[%c3, %c0_25, %c0_26] : memref<5x256x128xbf16, #tpu.memory_space<vmem>>, vector<1x256x128xbf16>
    %50 = vector.shape_cast %49 : vector<1x256x128xbf16> to vector<256x128xbf16>
    %cst_27 = arith.constant dense<0.000000e+00> : vector<80x128xf32>
    %51 = tpu.matmul %48, %50, %cst_27 {dimension_numbers = #tpu.dot_dimension_numbers<[1], [0], [0], [1], [0, 0, 1, 1], [], []>} : vector<80x256xbf16>, vector<256x128xbf16>, vector<80x128xf32> -> vector<80x128xf32>
    %52 = arith.addf %40, %51 : vector<80x128xf32>
    %c78_i32 = arith.constant 78 : i32
    %53 = tpu.dynamic_rotate %8 by %c78_i32 dim 0 : vector<80x256xf32>, i32 -> vector<80x256xf32>
    %c78_i32_28 = arith.constant 78 : i32
    %54 = vector.broadcast %c78_i32_28 : i32 to vector<80x1xi32>
    %55 = arith.cmpi slt, %9, %54 : vector<80x1xi32>
    %cst_29 = arith.constant 0.000000e+00 : f32
    %56 = vector.shape_cast %55 : vector<80x1xi1> to vector<80x1xi1>
    %57 = vector.broadcast %56 : vector<80x1xi1> to vector<80x256xi1>
    %58 = vector.broadcast %cst_29 : f32 to vector<80x256xf32>
    %59 = arith.select %57, %53, %58 : vector<80x256xi1>, vector<80x256xf32>
    %60 = arith.truncf %59 : vector<80x256xf32> to vector<80x256xbf16>
    %c4 = arith.constant 4 : index
    %c0_30 = arith.constant 0 : index
    %c0_31 = arith.constant 0 : index
    %61 = vector.load %arg4[%c4, %c0_30, %c0_31] : memref<5x256x128xbf16, #tpu.memory_space<vmem>>, vector<1x256x128xbf16>
    %62 = vector.shape_cast %61 : vector<1x256x128xbf16> to vector<256x128xbf16>
    %cst_32 = arith.constant dense<0.000000e+00> : vector<80x128xf32>
    %63 = tpu.matmul %60, %62, %cst_32 {dimension_numbers = #tpu.dot_dimension_numbers<[1], [0], [0], [1], [0, 0, 1, 1], [], []>} : vector<80x256xbf16>, vector<256x128xbf16>, vector<80x128xf32> -> vector<80x128xf32>
    %64 = arith.addf %52, %63 : vector<80x128xf32>
    %cst_33 = arith.constant 0.000000e+00 : f32
    %65 = vector.broadcast %cst_33 : f32 to vector<80x128xf32>
    %66 = arith.maximumf %64, %65 : vector<80x128xf32>
    %67 = tpu.iota {dimensions = array<i32: 0>} : vector<80x1xi32>
    %c0_34 = arith.constant 0 : index
    %c0_35 = arith.constant 0 : index
    %68 = vector.load %arg7[%c0_34, %c0_35] : memref<1x128xf32, #tpu.memory_space<vmem>>, vector<1x128xf32>
    %c2_i32_36 = arith.constant 2 : i32
    %69 = tpu.dynamic_rotate %66 by %c2_i32_36 dim 0 : vector<80x128xf32>, i32 -> vector<80x128xf32>
    %c2_i32_37 = arith.constant 2 : i32
    %70 = vector.broadcast %c2_i32_37 : i32 to vector<80x1xi32>
    %71 = arith.cmpi sge, %67, %70 : vector<80x1xi32>
    %cst_38 = arith.constant 0.000000e+00 : f32
    %72 = vector.shape_cast %71 : vector<80x1xi1> to vector<80x1xi1>
    %73 = vector.broadcast %72 : vector<80x1xi1> to vector<80x128xi1>
    %74 = vector.broadcast %cst_38 : f32 to vector<80x128xf32>
    %75 = arith.select %73, %69, %74 : vector<80x128xi1>, vector<80x128xf32>
    %76 = arith.truncf %75 : vector<80x128xf32> to vector<80x128xbf16>
    %c0_39 = arith.constant 0 : index
    %c0_40 = arith.constant 0 : index
    %c0_41 = arith.constant 0 : index
    %77 = vector.load %arg6[%c0_39, %c0_40, %c0_41] : memref<5x128x128xbf16, #tpu.memory_space<vmem>>, vector<1x128x128xbf16>
    %78 = vector.shape_cast %77 : vector<1x128x128xbf16> to vector<128x128xbf16>
    %cst_42 = arith.constant dense<0.000000e+00> : vector<80x128xf32>
    %79 = tpu.matmul %76, %78, %cst_42 {dimension_numbers = #tpu.dot_dimension_numbers<[1], [0], [0], [1], [0, 0, 1, 1], [], []>} : vector<80x128xbf16>, vector<128x128xbf16>, vector<80x128xf32> -> vector<80x128xf32>
    %80 = vector.broadcast %68 : vector<1x128xf32> to vector<80x128xf32>
    %81 = arith.addf %80, %79 : vector<80x128xf32>
    %c1_i32_43 = arith.constant 1 : i32
    %82 = tpu.dynamic_rotate %66 by %c1_i32_43 dim 0 : vector<80x128xf32>, i32 -> vector<80x128xf32>
    %c1_i32_44 = arith.constant 1 : i32
    %83 = vector.broadcast %c1_i32_44 : i32 to vector<80x1xi32>
    %84 = arith.cmpi sge, %67, %83 : vector<80x1xi32>
    %cst_45 = arith.constant 0.000000e+00 : f32
    %85 = vector.shape_cast %84 : vector<80x1xi1> to vector<80x1xi1>
    %86 = vector.broadcast %85 : vector<80x1xi1> to vector<80x128xi1>
    %87 = vector.broadcast %cst_45 : f32 to vector<80x128xf32>
    %88 = arith.select %86, %82, %87 : vector<80x128xi1>, vector<80x128xf32>
    %89 = arith.truncf %88 : vector<80x128xf32> to vector<80x128xbf16>
    %c1_46 = arith.constant 1 : index
    %c0_47 = arith.constant 0 : index
    %c0_48 = arith.constant 0 : index
    %90 = vector.load %arg6[%c1_46, %c0_47, %c0_48] : memref<5x128x128xbf16, #tpu.memory_space<vmem>>, vector<1x128x128xbf16>
    %91 = vector.shape_cast %90 : vector<1x128x128xbf16> to vector<128x128xbf16>
    %cst_49 = arith.constant dense<0.000000e+00> : vector<80x128xf32>
    %92 = tpu.matmul %89, %91, %cst_49 {dimension_numbers = #tpu.dot_dimension_numbers<[1], [0], [0], [1], [0, 0, 1, 1], [], []>} : vector<80x128xbf16>, vector<128x128xbf16>, vector<80x128xf32> -> vector<80x128xf32>
    %93 = arith.addf %81, %92 : vector<80x128xf32>
    %94 = arith.truncf %66 : vector<80x128xf32> to vector<80x128xbf16>
    %c2_50 = arith.constant 2 : index
    %c0_51 = arith.constant 0 : index
    %c0_52 = arith.constant 0 : index
    %95 = vector.load %arg6[%c2_50, %c0_51, %c0_52] : memref<5x128x128xbf16, #tpu.memory_space<vmem>>, vector<1x128x128xbf16>
    %96 = vector.shape_cast %95 : vector<1x128x128xbf16> to vector<128x128xbf16>
    %cst_53 = arith.constant dense<0.000000e+00> : vector<80x128xf32>
    %97 = tpu.matmul %94, %96, %cst_53 {dimension_numbers = #tpu.dot_dimension_numbers<[1], [0], [0], [1], [0, 0, 1, 1], [], []>} : vector<80x128xbf16>, vector<128x128xbf16>, vector<80x128xf32> -> vector<80x128xf32>
    %98 = arith.addf %93, %97 : vector<80x128xf32>
    %c79_i32_54 = arith.constant 79 : i32
    %99 = tpu.dynamic_rotate %66 by %c79_i32_54 dim 0 : vector<80x128xf32>, i32 -> vector<80x128xf32>
    %c79_i32_55 = arith.constant 79 : i32
    %100 = vector.broadcast %c79_i32_55 : i32 to vector<80x1xi32>
    %101 = arith.cmpi slt, %67, %100 : vector<80x1xi32>
    %cst_56 = arith.constant 0.000000e+00 : f32
    %102 = vector.shape_cast %101 : vector<80x1xi1> to vector<80x1xi1>
    %103 = vector.broadcast %102 : vector<80x1xi1> to vector<80x128xi1>
    %104 = vector.broadcast %cst_56 : f32 to vector<80x128xf32>
    %105 = arith.select %103, %99, %104 : vector<80x128xi1>, vector<80x128xf32>
    %106 = arith.truncf %105 : vector<80x128xf32> to vector<80x128xbf16>
    %c3_57 = arith.constant 3 : index
    %c0_58 = arith.constant 0 : index
    %c0_59 = arith.constant 0 : index
    %107 = vector.load %arg6[%c3_57, %c0_58, %c0_59] : memref<5x128x128xbf16, #tpu.memory_space<vmem>>, vector<1x128x128xbf16>
    %108 = vector.shape_cast %107 : vector<1x128x128xbf16> to vector<128x128xbf16>
    %cst_60 = arith.constant dense<0.000000e+00> : vector<80x128xf32>
    %109 = tpu.matmul %106, %108, %cst_60 {dimension_numbers = #tpu.dot_dimension_numbers<[1], [0], [0], [1], [0, 0, 1, 1], [], []>} : vector<80x128xbf16>, vector<128x128xbf16>, vector<80x128xf32> -> vector<80x128xf32>
    %110 = arith.addf %98, %109 : vector<80x128xf32>
    %c78_i32_61 = arith.constant 78 : i32
    %111 = tpu.dynamic_rotate %66 by %c78_i32_61 dim 0 : vector<80x128xf32>, i32 -> vector<80x128xf32>
    %c78_i32_62 = arith.constant 78 : i32
    %112 = vector.broadcast %c78_i32_62 : i32 to vector<80x1xi32>
    %113 = arith.cmpi slt, %67, %112 : vector<80x1xi32>
    %cst_63 = arith.constant 0.000000e+00 : f32
    %114 = vector.shape_cast %113 : vector<80x1xi1> to vector<80x1xi1>
    %115 = vector.broadcast %114 : vector<80x1xi1> to vector<80x128xi1>
    %116 = vector.broadcast %cst_63 : f32 to vector<80x128xf32>
    %117 = arith.select %115, %111, %116 : vector<80x128xi1>, vector<80x128xf32>
    %118 = arith.truncf %117 : vector<80x128xf32> to vector<80x128xbf16>
    %c4_64 = arith.constant 4 : index
    %c0_65 = arith.constant 0 : index
    %c0_66 = arith.constant 0 : index
    %119 = vector.load %arg6[%c4_64, %c0_65, %c0_66] : memref<5x128x128xbf16, #tpu.memory_space<vmem>>, vector<1x128x128xbf16>
    %120 = vector.shape_cast %119 : vector<1x128x128xbf16> to vector<128x128xbf16>
    %cst_67 = arith.constant dense<0.000000e+00> : vector<80x128xf32>
    %121 = tpu.matmul %118, %120, %cst_67 {dimension_numbers = #tpu.dot_dimension_numbers<[1], [0], [0], [1], [0, 0, 1, 1], [], []>} : vector<80x128xbf16>, vector<128x128xbf16>, vector<80x128xf32> -> vector<80x128xf32>
    %122 = arith.addf %110, %121 : vector<80x128xf32>
    %cst_68 = arith.constant 0.000000e+00 : f32
    %123 = vector.broadcast %cst_68 : f32 to vector<80x128xf32>
    %124 = arith.maximumf %122, %123 : vector<80x128xf32>
    %125 = tpu.iota {dimensions = array<i32: 0>} : vector<80x1xi32>
    %c0_69 = arith.constant 0 : index
    %c0_70 = arith.constant 0 : index
    %126 = vector.load %arg7[%c0_69, %c0_70] : memref<1x128xf32, #tpu.memory_space<vmem>>, vector<1x128xf32>
    %c2_i32_71 = arith.constant 2 : i32
    %127 = tpu.dynamic_rotate %124 by %c2_i32_71 dim 0 : vector<80x128xf32>, i32 -> vector<80x128xf32>
    %c2_i32_72 = arith.constant 2 : i32
    %128 = vector.broadcast %c2_i32_72 : i32 to vector<80x1xi32>
    %129 = arith.cmpi sge, %125, %128 : vector<80x1xi32>
    %cst_73 = arith.constant 0.000000e+00 : f32
    %130 = vector.shape_cast %129 : vector<80x1xi1> to vector<80x1xi1>
    %131 = vector.broadcast %130 : vector<80x1xi1> to vector<80x128xi1>
    %132 = vector.broadcast %cst_73 : f32 to vector<80x128xf32>
    %133 = arith.select %131, %127, %132 : vector<80x128xi1>, vector<80x128xf32>
    %134 = arith.truncf %133 : vector<80x128xf32> to vector<80x128xbf16>
    %c0_74 = arith.constant 0 : index
    %c0_75 = arith.constant 0 : index
    %c0_76 = arith.constant 0 : index
    %135 = vector.load %arg6[%c0_74, %c0_75, %c0_76] : memref<5x128x128xbf16, #tpu.memory_space<vmem>>, vector<1x128x128xbf16>
    %136 = vector.shape_cast %135 : vector<1x128x128xbf16> to vector<128x128xbf16>
    %cst_77 = arith.constant dense<0.000000e+00> : vector<80x128xf32>
    %137 = tpu.matmul %134, %136, %cst_77 {dimension_numbers = #tpu.dot_dimension_numbers<[1], [0], [0], [1], [0, 0, 1, 1], [], []>} : vector<80x128xbf16>, vector<128x128xbf16>, vector<80x128xf32> -> vector<80x128xf32>
    %138 = vector.broadcast %126 : vector<1x128xf32> to vector<80x128xf32>
    %139 = arith.addf %138, %137 : vector<80x128xf32>
    %c1_i32_78 = arith.constant 1 : i32
    %140 = tpu.dynamic_rotate %124 by %c1_i32_78 dim 0 : vector<80x128xf32>, i32 -> vector<80x128xf32>
    %c1_i32_79 = arith.constant 1 : i32
    %141 = vector.broadcast %c1_i32_79 : i32 to vector<80x1xi32>
    %142 = arith.cmpi sge, %125, %141 : vector<80x1xi32>
    %cst_80 = arith.constant 0.000000e+00 : f32
    %143 = vector.shape_cast %142 : vector<80x1xi1> to vector<80x1xi1>
    %144 = vector.broadcast %143 : vector<80x1xi1> to vector<80x128xi1>
    %145 = vector.broadcast %cst_80 : f32 to vector<80x128xf32>
    %146 = arith.select %144, %140, %145 : vector<80x128xi1>, vector<80x128xf32>
    %147 = arith.truncf %146 : vector<80x128xf32> to vector<80x128xbf16>
    %c1_81 = arith.constant 1 : index
    %c0_82 = arith.constant 0 : index
    %c0_83 = arith.constant 0 : index
    %148 = vector.load %arg6[%c1_81, %c0_82, %c0_83] : memref<5x128x128xbf16, #tpu.memory_space<vmem>>, vector<1x128x128xbf16>
    %149 = vector.shape_cast %148 : vector<1x128x128xbf16> to vector<128x128xbf16>
    %cst_84 = arith.constant dense<0.000000e+00> : vector<80x128xf32>
    %150 = tpu.matmul %147, %149, %cst_84 {dimension_numbers = #tpu.dot_dimension_numbers<[1], [0], [0], [1], [0, 0, 1, 1], [], []>} : vector<80x128xbf16>, vector<128x128xbf16>, vector<80x128xf32> -> vector<80x128xf32>
    %151 = arith.addf %139, %150 : vector<80x128xf32>
    %152 = arith.truncf %124 : vector<80x128xf32> to vector<80x128xbf16>
    %c2_85 = arith.constant 2 : index
    %c0_86 = arith.constant 0 : index
    %c0_87 = arith.constant 0 : index
    %153 = vector.load %arg6[%c2_85, %c0_86, %c0_87] : memref<5x128x128xbf16, #tpu.memory_space<vmem>>, vector<1x128x128xbf16>
    %154 = vector.shape_cast %153 : vector<1x128x128xbf16> to vector<128x128xbf16>
    %cst_88 = arith.constant dense<0.000000e+00> : vector<80x128xf32>
    %155 = tpu.matmul %152, %154, %cst_88 {dimension_numbers = #tpu.dot_dimension_numbers<[1], [0], [0], [1], [0, 0, 1, 1], [], []>} : vector<80x128xbf16>, vector<128x128xbf16>, vector<80x128xf32> -> vector<80x128xf32>
    %156 = arith.addf %151, %155 : vector<80x128xf32>
    %c79_i32_89 = arith.constant 79 : i32
    %157 = tpu.dynamic_rotate %124 by %c79_i32_89 dim 0 : vector<80x128xf32>, i32 -> vector<80x128xf32>
    %c79_i32_90 = arith.constant 79 : i32
    %158 = vector.broadcast %c79_i32_90 : i32 to vector<80x1xi32>
    %159 = arith.cmpi slt, %125, %158 : vector<80x1xi32>
    %cst_91 = arith.constant 0.000000e+00 : f32
    %160 = vector.shape_cast %159 : vector<80x1xi1> to vector<80x1xi1>
    %161 = vector.broadcast %160 : vector<80x1xi1> to vector<80x128xi1>
    %162 = vector.broadcast %cst_91 : f32 to vector<80x128xf32>
    %163 = arith.select %161, %157, %162 : vector<80x128xi1>, vector<80x128xf32>
    %164 = arith.truncf %163 : vector<80x128xf32> to vector<80x128xbf16>
    %c3_92 = arith.constant 3 : index
    %c0_93 = arith.constant 0 : index
    %c0_94 = arith.constant 0 : index
    %165 = vector.load %arg6[%c3_92, %c0_93, %c0_94] : memref<5x128x128xbf16, #tpu.memory_space<vmem>>, vector<1x128x128xbf16>
    %166 = vector.shape_cast %165 : vector<1x128x128xbf16> to vector<128x128xbf16>
    %cst_95 = arith.constant dense<0.000000e+00> : vector<80x128xf32>
    %167 = tpu.matmul %164, %166, %cst_95 {dimension_numbers = #tpu.dot_dimension_numbers<[1], [0], [0], [1], [0, 0, 1, 1], [], []>} : vector<80x128xbf16>, vector<128x128xbf16>, vector<80x128xf32> -> vector<80x128xf32>
    %168 = arith.addf %156, %167 : vector<80x128xf32>
    %c78_i32_96 = arith.constant 78 : i32
    %169 = tpu.dynamic_rotate %124 by %c78_i32_96 dim 0 : vector<80x128xf32>, i32 -> vector<80x128xf32>
    %c78_i32_97 = arith.constant 78 : i32
    %170 = vector.broadcast %c78_i32_97 : i32 to vector<80x1xi32>
    %171 = arith.cmpi slt, %125, %170 : vector<80x1xi32>
    %cst_98 = arith.constant 0.000000e+00 : f32
    %172 = vector.shape_cast %171 : vector<80x1xi1> to vector<80x1xi1>
    %173 = vector.broadcast %172 : vector<80x1xi1> to vector<80x128xi1>
    %174 = vector.broadcast %cst_98 : f32 to vector<80x128xf32>
    %175 = arith.select %173, %169, %174 : vector<80x128xi1>, vector<80x128xf32>
    %176 = arith.truncf %175 : vector<80x128xf32> to vector<80x128xbf16>
    %c4_99 = arith.constant 4 : index
    %c0_100 = arith.constant 0 : index
    %c0_101 = arith.constant 0 : index
    %177 = vector.load %arg6[%c4_99, %c0_100, %c0_101] : memref<5x128x128xbf16, #tpu.memory_space<vmem>>, vector<1x128x128xbf16>
    %178 = vector.shape_cast %177 : vector<1x128x128xbf16> to vector<128x128xbf16>
    %cst_102 = arith.constant dense<0.000000e+00> : vector<80x128xf32>
    %179 = tpu.matmul %176, %178, %cst_102 {dimension_numbers = #tpu.dot_dimension_numbers<[1], [0], [0], [1], [0, 0, 1, 1], [], []>} : vector<80x128xbf16>, vector<128x128xbf16>, vector<80x128xf32> -> vector<80x128xf32>
    %180 = arith.addf %168, %179 : vector<80x128xf32>
    %181 = arith.addf %180, %64 : vector<80x128xf32>
    %cst_103 = arith.constant 0.000000e+00 : f32
    %182 = vector.broadcast %cst_103 : f32 to vector<80x128xf32>
    %183 = arith.maximumf %181, %182 : vector<80x128xf32>
    %184 = tpu.iota {dimensions = array<i32: 0>} : vector<80x1xi32>
    %c0_104 = arith.constant 0 : index
    %c0_105 = arith.constant 0 : index
    %185 = vector.load %arg9[%c0_104, %c0_105] : memref<1x64xf32, #tpu.memory_space<vmem>>, vector<1x64xf32>
    %c2_i32_106 = arith.constant 2 : i32
    %186 = tpu.dynamic_rotate %183 by %c2_i32_106 dim 0 : vector<80x128xf32>, i32 -> vector<80x128xf32>
    %c2_i32_107 = arith.constant 2 : i32
    %187 = vector.broadcast %c2_i32_107 : i32 to vector<80x1xi32>
    %188 = arith.cmpi sge, %184, %187 : vector<80x1xi32>
    %cst_108 = arith.constant 0.000000e+00 : f32
    %189 = vector.shape_cast %188 : vector<80x1xi1> to vector<80x1xi1>
    %190 = vector.broadcast %189 : vector<80x1xi1> to vector<80x128xi1>
    %191 = vector.broadcast %cst_108 : f32 to vector<80x128xf32>
    %192 = arith.select %190, %186, %191 : vector<80x128xi1>, vector<80x128xf32>
    %193 = arith.truncf %192 : vector<80x128xf32> to vector<80x128xbf16>
    %c0_109 = arith.constant 0 : index
    %c0_110 = arith.constant 0 : index
    %c0_111 = arith.constant 0 : index
    %194 = vector.load %arg8[%c0_109, %c0_110, %c0_111] : memref<5x128x64xbf16, #tpu.memory_space<vmem>>, vector<1x128x64xbf16>
    %195 = vector.shape_cast %194 : vector<1x128x64xbf16> to vector<128x64xbf16>
    %cst_112 = arith.constant dense<0.000000e+00> : vector<80x64xf32>
    %196 = tpu.matmul %193, %195, %cst_112 {dimension_numbers = #tpu.dot_dimension_numbers<[1], [0], [0], [1], [0, 0, 1, 1], [], []>} : vector<80x128xbf16>, vector<128x64xbf16>, vector<80x64xf32> -> vector<80x64xf32>
    %197 = vector.broadcast %185 : vector<1x64xf32> to vector<80x64xf32>
    %198 = arith.addf %197, %196 : vector<80x64xf32>
    %c1_i32_113 = arith.constant 1 : i32
    %199 = tpu.dynamic_rotate %183 by %c1_i32_113 dim 0 : vector<80x128xf32>, i32 -> vector<80x128xf32>
    %c1_i32_114 = arith.constant 1 : i32
    %200 = vector.broadcast %c1_i32_114 : i32 to vector<80x1xi32>
    %201 = arith.cmpi sge, %184, %200 : vector<80x1xi32>
    %cst_115 = arith.constant 0.000000e+00 : f32
    %202 = vector.shape_cast %201 : vector<80x1xi1> to vector<80x1xi1>
    %203 = vector.broadcast %202 : vector<80x1xi1> to vector<80x128xi1>
    %204 = vector.broadcast %cst_115 : f32 to vector<80x128xf32>
    %205 = arith.select %203, %199, %204 : vector<80x128xi1>, vector<80x128xf32>
    %206 = arith.truncf %205 : vector<80x128xf32> to vector<80x128xbf16>
    %c1_116 = arith.constant 1 : index
    %c0_117 = arith.constant 0 : index
    %c0_118 = arith.constant 0 : index
    %207 = vector.load %arg8[%c1_116, %c0_117, %c0_118] : memref<5x128x64xbf16, #tpu.memory_space<vmem>>, vector<1x128x64xbf16>
    %208 = vector.shape_cast %207 : vector<1x128x64xbf16> to vector<128x64xbf16>
    %cst_119 = arith.constant dense<0.000000e+00> : vector<80x64xf32>
    %209 = tpu.matmul %206, %208, %cst_119 {dimension_numbers = #tpu.dot_dimension_numbers<[1], [0], [0], [1], [0, 0, 1, 1], [], []>} : vector<80x128xbf16>, vector<128x64xbf16>, vector<80x64xf32> -> vector<80x64xf32>
    %210 = arith.addf %198, %209 : vector<80x64xf32>
    %211 = arith.truncf %183 : vector<80x128xf32> to vector<80x128xbf16>
    %c2_120 = arith.constant 2 : index
    %c0_121 = arith.constant 0 : index
    %c0_122 = arith.constant 0 : index
    %212 = vector.load %arg8[%c2_120, %c0_121, %c0_122] : memref<5x128x64xbf16, #tpu.memory_space<vmem>>, vector<1x128x64xbf16>
    %213 = vector.shape_cast %212 : vector<1x128x64xbf16> to vector<128x64xbf16>
    %cst_123 = arith.constant dense<0.000000e+00> : vector<80x64xf32>
    %214 = tpu.matmul %211, %213, %cst_123 {dimension_numbers = #tpu.dot_dimension_numbers<[1], [0], [0], [1], [0, 0, 1, 1], [], []>} : vector<80x128xbf16>, vector<128x64xbf16>, vector<80x64xf32> -> vector<80x64xf32>
    %215 = arith.addf %210, %214 : vector<80x64xf32>
    %c79_i32_124 = arith.constant 79 : i32
    %216 = tpu.dynamic_rotate %183 by %c79_i32_124 dim 0 : vector<80x128xf32>, i32 -> vector<80x128xf32>
    %c79_i32_125 = arith.constant 79 : i32
    %217 = vector.broadcast %c79_i32_125 : i32 to vector<80x1xi32>
    %218 = arith.cmpi slt, %184, %217 : vector<80x1xi32>
    %cst_126 = arith.constant 0.000000e+00 : f32
    %219 = vector.shape_cast %218 : vector<80x1xi1> to vector<80x1xi1>
    %220 = vector.broadcast %219 : vector<80x1xi1> to vector<80x128xi1>
    %221 = vector.broadcast %cst_126 : f32 to vector<80x128xf32>
    %222 = arith.select %220, %216, %221 : vector<80x128xi1>, vector<80x128xf32>
    %223 = arith.truncf %222 : vector<80x128xf32> to vector<80x128xbf16>
    %c3_127 = arith.constant 3 : index
    %c0_128 = arith.constant 0 : index
    %c0_129 = arith.constant 0 : index
    %224 = vector.load %arg8[%c3_127, %c0_128, %c0_129] : memref<5x128x64xbf16, #tpu.memory_space<vmem>>, vector<1x128x64xbf16>
    %225 = vector.shape_cast %224 : vector<1x128x64xbf16> to vector<128x64xbf16>
    %cst_130 = arith.constant dense<0.000000e+00> : vector<80x64xf32>
    %226 = tpu.matmul %223, %225, %cst_130 {dimension_numbers = #tpu.dot_dimension_numbers<[1], [0], [0], [1], [0, 0, 1, 1], [], []>} : vector<80x128xbf16>, vector<128x64xbf16>, vector<80x64xf32> -> vector<80x64xf32>
    %227 = arith.addf %215, %226 : vector<80x64xf32>
    %c78_i32_131 = arith.constant 78 : i32
    %228 = tpu.dynamic_rotate %183 by %c78_i32_131 dim 0 : vector<80x128xf32>, i32 -> vector<80x128xf32>
    %c78_i32_132 = arith.constant 78 : i32
    %229 = vector.broadcast %c78_i32_132 : i32 to vector<80x1xi32>
    %230 = arith.cmpi slt, %184, %229 : vector<80x1xi32>
    %cst_133 = arith.constant 0.000000e+00 : f32
    %231 = vector.shape_cast %230 : vector<80x1xi1> to vector<80x1xi1>
    %232 = vector.broadcast %231 : vector<80x1xi1> to vector<80x128xi1>
    %233 = vector.broadcast %cst_133 : f32 to vector<80x128xf32>
    %234 = arith.select %232, %228, %233 : vector<80x128xi1>, vector<80x128xf32>
    %235 = arith.truncf %234 : vector<80x128xf32> to vector<80x128xbf16>
    %c4_134 = arith.constant 4 : index
    %c0_135 = arith.constant 0 : index
    %c0_136 = arith.constant 0 : index
    %236 = vector.load %arg8[%c4_134, %c0_135, %c0_136] : memref<5x128x64xbf16, #tpu.memory_space<vmem>>, vector<1x128x64xbf16>
    %237 = vector.shape_cast %236 : vector<1x128x64xbf16> to vector<128x64xbf16>
    %cst_137 = arith.constant dense<0.000000e+00> : vector<80x64xf32>
    %238 = tpu.matmul %235, %237, %cst_137 {dimension_numbers = #tpu.dot_dimension_numbers<[1], [0], [0], [1], [0, 0, 1, 1], [], []>} : vector<80x128xbf16>, vector<128x64xbf16>, vector<80x64xf32> -> vector<80x64xf32>
    %239 = arith.addf %227, %238 : vector<80x64xf32>
    %cst_138 = arith.constant 0.000000e+00 : f32
    %240 = vector.broadcast %cst_138 : f32 to vector<80x64xf32>
    %241 = arith.maximumf %239, %240 : vector<80x64xf32>
    %242 = tpu.iota {dimensions = array<i32: 0>} : vector<80x1xi32>
    %c0_139 = arith.constant 0 : index
    %c0_140 = arith.constant 0 : index
    %243 = vector.load %arg11[%c0_139, %c0_140] : memref<1x64xf32, #tpu.memory_space<vmem>>, vector<1x64xf32>
    %c2_i32_141 = arith.constant 2 : i32
    %244 = tpu.dynamic_rotate %241 by %c2_i32_141 dim 0 : vector<80x64xf32>, i32 -> vector<80x64xf32>
    %c2_i32_142 = arith.constant 2 : i32
    %245 = vector.broadcast %c2_i32_142 : i32 to vector<80x1xi32>
    %246 = arith.cmpi sge, %242, %245 : vector<80x1xi32>
    %cst_143 = arith.constant 0.000000e+00 : f32
    %247 = vector.shape_cast %246 : vector<80x1xi1> to vector<80x1xi1>
    %248 = vector.broadcast %247 : vector<80x1xi1> to vector<80x64xi1>
    %249 = vector.broadcast %cst_143 : f32 to vector<80x64xf32>
    %250 = arith.select %248, %244, %249 : vector<80x64xi1>, vector<80x64xf32>
    %251 = arith.truncf %250 : vector<80x64xf32> to vector<80x64xbf16>
    %c0_144 = arith.constant 0 : index
    %c0_145 = arith.constant 0 : index
    %c0_146 = arith.constant 0 : index
    %252 = vector.load %arg10[%c0_144, %c0_145, %c0_146] : memref<5x64x64xbf16, #tpu.memory_space<vmem>>, vector<1x64x64xbf16>
    %253 = vector.shape_cast %252 : vector<1x64x64xbf16> to vector<64x64xbf16>
    %cst_147 = arith.constant dense<0.000000e+00> : vector<80x64xf32>
    %254 = tpu.matmul %251, %253, %cst_147 {dimension_numbers = #tpu.dot_dimension_numbers<[1], [0], [0], [1], [0, 0, 1, 1], [], []>} : vector<80x64xbf16>, vector<64x64xbf16>, vector<80x64xf32> -> vector<80x64xf32>
    %255 = vector.broadcast %243 : vector<1x64xf32> to vector<80x64xf32>
    %256 = arith.addf %255, %254 : vector<80x64xf32>
    %c1_i32_148 = arith.constant 1 : i32
    %257 = tpu.dynamic_rotate %241 by %c1_i32_148 dim 0 : vector<80x64xf32>, i32 -> vector<80x64xf32>
    %c1_i32_149 = arith.constant 1 : i32
    %258 = vector.broadcast %c1_i32_149 : i32 to vector<80x1xi32>
    %259 = arith.cmpi sge, %242, %258 : vector<80x1xi32>
    %cst_150 = arith.constant 0.000000e+00 : f32
    %260 = vector.shape_cast %259 : vector<80x1xi1> to vector<80x1xi1>
    %261 = vector.broadcast %260 : vector<80x1xi1> to vector<80x64xi1>
    %262 = vector.broadcast %cst_150 : f32 to vector<80x64xf32>
    %263 = arith.select %261, %257, %262 : vector<80x64xi1>, vector<80x64xf32>
    %264 = arith.truncf %263 : vector<80x64xf32> to vector<80x64xbf16>
    %c1_151 = arith.constant 1 : index
    %c0_152 = arith.constant 0 : index
    %c0_153 = arith.constant 0 : index
    %265 = vector.load %arg10[%c1_151, %c0_152, %c0_153] : memref<5x64x64xbf16, #tpu.memory_space<vmem>>, vector<1x64x64xbf16>
    %266 = vector.shape_cast %265 : vector<1x64x64xbf16> to vector<64x64xbf16>
    %cst_154 = arith.constant dense<0.000000e+00> : vector<80x64xf32>
    %267 = tpu.matmul %264, %266, %cst_154 {dimension_numbers = #tpu.dot_dimension_numbers<[1], [0], [0], [1], [0, 0, 1, 1], [], []>} : vector<80x64xbf16>, vector<64x64xbf16>, vector<80x64xf32> -> vector<80x64xf32>
    %268 = arith.addf %256, %267 : vector<80x64xf32>
    %269 = arith.truncf %241 : vector<80x64xf32> to vector<80x64xbf16>
    %c2_155 = arith.constant 2 : index
    %c0_156 = arith.constant 0 : index
    %c0_157 = arith.constant 0 : index
    %270 = vector.load %arg10[%c2_155, %c0_156, %c0_157] : memref<5x64x64xbf16, #tpu.memory_space<vmem>>, vector<1x64x64xbf16>
    %271 = vector.shape_cast %270 : vector<1x64x64xbf16> to vector<64x64xbf16>
    %cst_158 = arith.constant dense<0.000000e+00> : vector<80x64xf32>
    %272 = tpu.matmul %269, %271, %cst_158 {dimension_numbers = #tpu.dot_dimension_numbers<[1], [0], [0], [1], [0, 0, 1, 1], [], []>} : vector<80x64xbf16>, vector<64x64xbf16>, vector<80x64xf32> -> vector<80x64xf32>
    %273 = arith.addf %268, %272 : vector<80x64xf32>
    %c79_i32_159 = arith.constant 79 : i32
    %274 = tpu.dynamic_rotate %241 by %c79_i32_159 dim 0 : vector<80x64xf32>, i32 -> vector<80x64xf32>
    %c79_i32_160 = arith.constant 79 : i32
    %275 = vector.broadcast %c79_i32_160 : i32 to vector<80x1xi32>
    %276 = arith.cmpi slt, %242, %275 : vector<80x1xi32>
    %cst_161 = arith.constant 0.000000e+00 : f32
    %277 = vector.shape_cast %276 : vector<80x1xi1> to vector<80x1xi1>
    %278 = vector.broadcast %277 : vector<80x1xi1> to vector<80x64xi1>
    %279 = vector.broadcast %cst_161 : f32 to vector<80x64xf32>
    %280 = arith.select %278, %274, %279 : vector<80x64xi1>, vector<80x64xf32>
    %281 = arith.truncf %280 : vector<80x64xf32> to vector<80x64xbf16>
    %c3_162 = arith.constant 3 : index
    %c0_163 = arith.constant 0 : index
    %c0_164 = arith.constant 0 : index
    %282 = vector.load %arg10[%c3_162, %c0_163, %c0_164] : memref<5x64x64xbf16, #tpu.memory_space<vmem>>, vector<1x64x64xbf16>
    %283 = vector.shape_cast %282 : vector<1x64x64xbf16> to vector<64x64xbf16>
    %cst_165 = arith.constant dense<0.000000e+00> : vector<80x64xf32>
    %284 = tpu.matmul %281, %283, %cst_165 {dimension_numbers = #tpu.dot_dimension_numbers<[1], [0], [0], [1], [0, 0, 1, 1], [], []>} : vector<80x64xbf16>, vector<64x64xbf16>, vector<80x64xf32> -> vector<80x64xf32>
    %285 = arith.addf %273, %284 : vector<80x64xf32>
    %c78_i32_166 = arith.constant 78 : i32
    %286 = tpu.dynamic_rotate %241 by %c78_i32_166 dim 0 : vector<80x64xf32>, i32 -> vector<80x64xf32>
    %c78_i32_167 = arith.constant 78 : i32
    %287 = vector.broadcast %c78_i32_167 : i32 to vector<80x1xi32>
    %288 = arith.cmpi slt, %242, %287 : vector<80x1xi32>
    %cst_168 = arith.constant 0.000000e+00 : f32
    %289 = vector.shape_cast %288 : vector<80x1xi1> to vector<80x1xi1>
    %290 = vector.broadcast %289 : vector<80x1xi1> to vector<80x64xi1>
    %291 = vector.broadcast %cst_168 : f32 to vector<80x64xf32>
    %292 = arith.select %290, %286, %291 : vector<80x64xi1>, vector<80x64xf32>
    %293 = arith.truncf %292 : vector<80x64xf32> to vector<80x64xbf16>
    %c4_169 = arith.constant 4 : index
    %c0_170 = arith.constant 0 : index
    %c0_171 = arith.constant 0 : index
    %294 = vector.load %arg10[%c4_169, %c0_170, %c0_171] : memref<5x64x64xbf16, #tpu.memory_space<vmem>>, vector<1x64x64xbf16>
    %295 = vector.shape_cast %294 : vector<1x64x64xbf16> to vector<64x64xbf16>
    %cst_172 = arith.constant dense<0.000000e+00> : vector<80x64xf32>
    %296 = tpu.matmul %293, %295, %cst_172 {dimension_numbers = #tpu.dot_dimension_numbers<[1], [0], [0], [1], [0, 0, 1, 1], [], []>} : vector<80x64xbf16>, vector<64x64xbf16>, vector<80x64xf32> -> vector<80x64xf32>
    %297 = arith.addf %285, %296 : vector<80x64xf32>
    %cst_173 = arith.constant 0.000000e+00 : f32
    %298 = vector.broadcast %cst_173 : f32 to vector<80x64xf32>
    %299 = arith.maximumf %297, %298 : vector<80x64xf32>
    %300 = tpu.iota {dimensions = array<i32: 0>} : vector<80x1xi32>
    %c0_174 = arith.constant 0 : index
    %c0_175 = arith.constant 0 : index
    %301 = vector.load %arg13[%c0_174, %c0_175] : memref<1x64xf32, #tpu.memory_space<vmem>>, vector<1x64xf32>
    %c1_i32_176 = arith.constant 1 : i32
    %302 = tpu.dynamic_rotate %299 by %c1_i32_176 dim 0 : vector<80x64xf32>, i32 -> vector<80x64xf32>
    %c1_i32_177 = arith.constant 1 : i32
    %303 = vector.broadcast %c1_i32_177 : i32 to vector<80x1xi32>
    %304 = arith.cmpi sge, %300, %303 : vector<80x1xi32>
    %cst_178 = arith.constant 0.000000e+00 : f32
    %305 = vector.shape_cast %304 : vector<80x1xi1> to vector<80x1xi1>
    %306 = vector.broadcast %305 : vector<80x1xi1> to vector<80x64xi1>
    %307 = vector.broadcast %cst_178 : f32 to vector<80x64xf32>
    %308 = arith.select %306, %302, %307 : vector<80x64xi1>, vector<80x64xf32>
    %309 = arith.truncf %308 : vector<80x64xf32> to vector<80x64xbf16>
    %c0_179 = arith.constant 0 : index
    %c0_180 = arith.constant 0 : index
    %c0_181 = arith.constant 0 : index
    %310 = vector.load %arg12[%c0_179, %c0_180, %c0_181] : memref<3x64x64xbf16, #tpu.memory_space<vmem>>, vector<1x64x64xbf16>
    %311 = vector.shape_cast %310 : vector<1x64x64xbf16> to vector<64x64xbf16>
    %cst_182 = arith.constant dense<0.000000e+00> : vector<80x64xf32>
    %312 = tpu.matmul %309, %311, %cst_182 {dimension_numbers = #tpu.dot_dimension_numbers<[1], [0], [0], [1], [0, 0, 1, 1], [], []>} : vector<80x64xbf16>, vector<64x64xbf16>, vector<80x64xf32> -> vector<80x64xf32>
    %313 = vector.broadcast %301 : vector<1x64xf32> to vector<80x64xf32>
    %314 = arith.addf %313, %312 : vector<80x64xf32>
    %315 = arith.truncf %299 : vector<80x64xf32> to vector<80x64xbf16>
    %c1_183 = arith.constant 1 : index
    %c0_184 = arith.constant 0 : index
    %c0_185 = arith.constant 0 : index
    %316 = vector.load %arg12[%c1_183, %c0_184, %c0_185] : memref<3x64x64xbf16, #tpu.memory_space<vmem>>, vector<1x64x64xbf16>
    %317 = vector.shape_cast %316 : vector<1x64x64xbf16> to vector<64x64xbf16>
    %cst_186 = arith.constant dense<0.000000e+00> : vector<80x64xf32>
    %318 = tpu.matmul %315, %317, %cst_186 {dimension_numbers = #tpu.dot_dimension_numbers<[1], [0], [0], [1], [0, 0, 1, 1], [], []>} : vector<80x64xbf16>, vector<64x64xbf16>, vector<80x64xf32> -> vector<80x64xf32>
    %319 = arith.addf %314, %318 : vector<80x64xf32>
    %c79_i32_187 = arith.constant 79 : i32
    %320 = tpu.dynamic_rotate %299 by %c79_i32_187 dim 0 : vector<80x64xf32>, i32 -> vector<80x64xf32>
    %c79_i32_188 = arith.constant 79 : i32
    %321 = vector.broadcast %c79_i32_188 : i32 to vector<80x1xi32>
    %322 = arith.cmpi slt, %300, %321 : vector<80x1xi32>
    %cst_189 = arith.constant 0.000000e+00 : f32
    %323 = vector.shape_cast %322 : vector<80x1xi1> to vector<80x1xi1>
    %324 = vector.broadcast %323 : vector<80x1xi1> to vector<80x64xi1>
    %325 = vector.broadcast %cst_189 : f32 to vector<80x64xf32>
    %326 = arith.select %324, %320, %325 : vector<80x64xi1>, vector<80x64xf32>
    %327 = arith.truncf %326 : vector<80x64xf32> to vector<80x64xbf16>
    %c2_190 = arith.constant 2 : index
    %c0_191 = arith.constant 0 : index
    %c0_192 = arith.constant 0 : index
    %328 = vector.load %arg12[%c2_190, %c0_191, %c0_192] : memref<3x64x64xbf16, #tpu.memory_space<vmem>>, vector<1x64x64xbf16>
    %329 = vector.shape_cast %328 : vector<1x64x64xbf16> to vector<64x64xbf16>
    %cst_193 = arith.constant dense<0.000000e+00> : vector<80x64xf32>
    %330 = tpu.matmul %327, %329, %cst_193 {dimension_numbers = #tpu.dot_dimension_numbers<[1], [0], [0], [1], [0, 0, 1, 1], [], []>} : vector<80x64xbf16>, vector<64x64xbf16>, vector<80x64xf32> -> vector<80x64xf32>
    %331 = arith.addf %319, %330 : vector<80x64xf32>
    %332 = arith.addf %331, %239 : vector<80x64xf32>
    %cst_194 = arith.constant 0.000000e+00 : f32
    %333 = vector.broadcast %cst_194 : f32 to vector<80x64xf32>
    %334 = arith.maximumf %332, %333 : vector<80x64xf32>
    %335 = arith.addf %332, %334 : vector<80x64xf32>
    %336 = tpu.iota {dimensions = array<i32: 0>} : vector<80x1xi32>
    %c0_195 = arith.constant 0 : index
    %c0_196 = arith.constant 0 : index
    %337 = vector.load %arg15[%c0_195, %c0_196] : memref<1x32xf32, #tpu.memory_space<vmem>>, vector<1x32xf32>
    %c1_i32_197 = arith.constant 1 : i32
    %338 = tpu.dynamic_rotate %335 by %c1_i32_197 dim 0 : vector<80x64xf32>, i32 -> vector<80x64xf32>
    %c1_i32_198 = arith.constant 1 : i32
    %339 = vector.broadcast %c1_i32_198 : i32 to vector<80x1xi32>
    %340 = arith.cmpi sge, %336, %339 : vector<80x1xi32>
    %cst_199 = arith.constant 0.000000e+00 : f32
    %341 = vector.shape_cast %340 : vector<80x1xi1> to vector<80x1xi1>
    %342 = vector.broadcast %341 : vector<80x1xi1> to vector<80x64xi1>
    %343 = vector.broadcast %cst_199 : f32 to vector<80x64xf32>
    %344 = arith.select %342, %338, %343 : vector<80x64xi1>, vector<80x64xf32>
    %345 = arith.truncf %344 : vector<80x64xf32> to vector<80x64xbf16>
    %c0_200 = arith.constant 0 : index
    %c0_201 = arith.constant 0 : index
    %c0_202 = arith.constant 0 : index
    %346 = vector.load %arg14[%c0_200, %c0_201, %c0_202] : memref<3x64x32xbf16, #tpu.memory_space<vmem>>, vector<1x64x32xbf16>
    %347 = vector.shape_cast %346 : vector<1x64x32xbf16> to vector<64x32xbf16>
    %cst_203 = arith.constant dense<0.000000e+00> : vector<80x32xf32>
    %348 = tpu.matmul %345, %347, %cst_203 {dimension_numbers = #tpu.dot_dimension_numbers<[1], [0], [0], [1], [0, 0, 1, 1], [], []>} : vector<80x64xbf16>, vector<64x32xbf16>, vector<80x32xf32> -> vector<80x32xf32>
    %349 = vector.broadcast %337 : vector<1x32xf32> to vector<80x32xf32>
    %350 = arith.addf %349, %348 : vector<80x32xf32>
    %351 = arith.truncf %335 : vector<80x64xf32> to vector<80x64xbf16>
    %c1_204 = arith.constant 1 : index
    %c0_205 = arith.constant 0 : index
    %c0_206 = arith.constant 0 : index
    %352 = vector.load %arg14[%c1_204, %c0_205, %c0_206] : memref<3x64x32xbf16, #tpu.memory_space<vmem>>, vector<1x64x32xbf16>
    %353 = vector.shape_cast %352 : vector<1x64x32xbf16> to vector<64x32xbf16>
    %cst_207 = arith.constant dense<0.000000e+00> : vector<80x32xf32>
    %354 = tpu.matmul %351, %353, %cst_207 {dimension_numbers = #tpu.dot_dimension_numbers<[1], [0], [0], [1], [0, 0, 1, 1], [], []>} : vector<80x64xbf16>, vector<64x32xbf16>, vector<80x32xf32> -> vector<80x32xf32>
    %355 = arith.addf %350, %354 : vector<80x32xf32>
    %c79_i32_208 = arith.constant 79 : i32
    %356 = tpu.dynamic_rotate %335 by %c79_i32_208 dim 0 : vector<80x64xf32>, i32 -> vector<80x64xf32>
    %c79_i32_209 = arith.constant 79 : i32
    %357 = vector.broadcast %c79_i32_209 : i32 to vector<80x1xi32>
    %358 = arith.cmpi slt, %336, %357 : vector<80x1xi32>
    %cst_210 = arith.constant 0.000000e+00 : f32
    %359 = vector.shape_cast %358 : vector<80x1xi1> to vector<80x1xi1>
    %360 = vector.broadcast %359 : vector<80x1xi1> to vector<80x64xi1>
    %361 = vector.broadcast %cst_210 : f32 to vector<80x64xf32>
    %362 = arith.select %360, %356, %361 : vector<80x64xi1>, vector<80x64xf32>
    %363 = arith.truncf %362 : vector<80x64xf32> to vector<80x64xbf16>
    %c2_211 = arith.constant 2 : index
    %c0_212 = arith.constant 0 : index
    %c0_213 = arith.constant 0 : index
    %364 = vector.load %arg14[%c2_211, %c0_212, %c0_213] : memref<3x64x32xbf16, #tpu.memory_space<vmem>>, vector<1x64x32xbf16>
    %365 = vector.shape_cast %364 : vector<1x64x32xbf16> to vector<64x32xbf16>
    %cst_214 = arith.constant dense<0.000000e+00> : vector<80x32xf32>
    %366 = tpu.matmul %363, %365, %cst_214 {dimension_numbers = #tpu.dot_dimension_numbers<[1], [0], [0], [1], [0, 0, 1, 1], [], []>} : vector<80x64xbf16>, vector<64x32xbf16>, vector<80x32xf32> -> vector<80x32xf32>
    %367 = arith.addf %355, %366 : vector<80x32xf32>
    %cst_215 = arith.constant 0.000000e+00 : f32
    %368 = vector.broadcast %cst_215 : f32 to vector<80x32xf32>
    %369 = arith.maximumf %367, %368 : vector<80x32xf32>
    %cst_216 = arith.constant 0.000000e+00 : f32
    %370 = vector.broadcast %cst_216 : f32 to vector<80x32xf32>
    %371 = arith.maximumf %369, %370 : vector<80x32xf32>
    %372 = tpu.iota {dimensions = array<i32: 0>} : vector<80x1xi32>
    %c0_217 = arith.constant 0 : index
    %c0_218 = arith.constant 0 : index
    %373 = vector.load %arg17[%c0_217, %c0_218] : memref<1x1xf32, #tpu.memory_space<vmem>>, vector<1x1xf32>
    %c1_i32_219 = arith.constant 1 : i32
    %374 = tpu.dynamic_rotate %371 by %c1_i32_219 dim 0 : vector<80x32xf32>, i32 -> vector<80x32xf32>
    %c1_i32_220 = arith.constant 1 : i32
    %375 = vector.broadcast %c1_i32_220 : i32 to vector<80x1xi32>
    %376 = arith.cmpi sge, %372, %375 : vector<80x1xi32>
    %cst_221 = arith.constant 0.000000e+00 : f32
    %377 = vector.shape_cast %376 : vector<80x1xi1> to vector<80x1xi1>
    %378 = vector.broadcast %377 : vector<80x1xi1> to vector<80x32xi1>
    %379 = vector.broadcast %cst_221 : f32 to vector<80x32xf32>
    %380 = arith.select %378, %374, %379 : vector<80x32xi1>, vector<80x32xf32>
    %c0_222 = arith.constant 0 : index
    %c0_223 = arith.constant 0 : index
    %c0_224 = arith.constant 0 : index
    %381 = vector.load %arg16[%c0_222, %c0_223, %c0_224] : memref<3x1x32xf32, #tpu.memory_space<vmem>>, vector<1x1x32xf32>
    %382 = vector.shape_cast %381 : vector<1x1x32xf32> to vector<1x32xf32>
    %383 = vector.broadcast %382 : vector<1x32xf32> to vector<80x32xf32>
    %384 = arith.mulf %380, %383 : vector<80x32xf32>
    %cst_225 = arith.constant dense<0.000000e+00> : vector<80xf32>
    %385 = vector.multi_reduction <add>, %384, %cst_225 [1] : vector<80x32xf32> to vector<80xf32>
    %386 = vector.shape_cast %385 : vector<80xf32> to vector<80x1xf32>
    %387 = vector.broadcast %373 : vector<1x1xf32> to vector<80x1xf32>
    %388 = arith.addf %387, %386 : vector<80x1xf32>
    %c1_226 = arith.constant 1 : index
    %c0_227 = arith.constant 0 : index
    %c0_228 = arith.constant 0 : index
    %389 = vector.load %arg16[%c1_226, %c0_227, %c0_228] : memref<3x1x32xf32, #tpu.memory_space<vmem>>, vector<1x1x32xf32>
    %390 = vector.shape_cast %389 : vector<1x1x32xf32> to vector<1x32xf32>
    %391 = vector.broadcast %390 : vector<1x32xf32> to vector<80x32xf32>
    %392 = arith.mulf %371, %391 : vector<80x32xf32>
    %cst_229 = arith.constant dense<0.000000e+00> : vector<80xf32>
    %393 = vector.multi_reduction <add>, %392, %cst_229 [1] : vector<80x32xf32> to vector<80xf32>
    %394 = vector.shape_cast %393 : vector<80xf32> to vector<80x1xf32>
    %395 = arith.addf %388, %394 : vector<80x1xf32>
    %c79_i32_230 = arith.constant 79 : i32
    %396 = tpu.dynamic_rotate %371 by %c79_i32_230 dim 0 : vector<80x32xf32>, i32 -> vector<80x32xf32>
    %c79_i32_231 = arith.constant 79 : i32
    %397 = vector.broadcast %c79_i32_231 : i32 to vector<80x1xi32>
    %398 = arith.cmpi slt, %372, %397 : vector<80x1xi32>
    %cst_232 = arith.constant 0.000000e+00 : f32
    %399 = vector.shape_cast %398 : vector<80x1xi1> to vector<80x1xi1>
    %400 = vector.broadcast %399 : vector<80x1xi1> to vector<80x32xi1>
    %401 = vector.broadcast %cst_232 : f32 to vector<80x32xf32>
    %402 = arith.select %400, %396, %401 : vector<80x32xi1>, vector<80x32xf32>
    %c2_233 = arith.constant 2 : index
    %c0_234 = arith.constant 0 : index
    %c0_235 = arith.constant 0 : index
    %403 = vector.load %arg16[%c2_233, %c0_234, %c0_235] : memref<3x1x32xf32, #tpu.memory_space<vmem>>, vector<1x1x32xf32>
    %404 = vector.shape_cast %403 : vector<1x1x32xf32> to vector<1x32xf32>
    %405 = vector.broadcast %404 : vector<1x32xf32> to vector<80x32xf32>
    %406 = arith.mulf %402, %405 : vector<80x32xf32>
    %cst_236 = arith.constant dense<0.000000e+00> : vector<80xf32>
    %407 = vector.multi_reduction <add>, %406, %cst_236 [1] : vector<80x32xf32> to vector<80xf32>
    %408 = vector.shape_cast %407 : vector<80xf32> to vector<80x1xf32>
    %409 = arith.addf %395, %408 : vector<80x1xf32>
    %c0_237 = arith.constant 0 : index
    %c0_238 = arith.constant 0 : index
    %c0_239 = arith.constant 0 : index
    %410 = vector.load %arg18[%c0_237, %c0_238, %c0_239] : memref<1x80x1xf32, #tpu.memory_space<vmem>>, vector<1x80x1xf32>
    %411 = vector.shape_cast %410 : vector<1x80x1xf32> to vector<80x1xf32>
    %412 = vector.shape_cast %409 : vector<80x1xf32> to vector<1x80x1xf32>
    tpu.vector_store %arg18[%c0_237, %c0_238, %c0_239], %412 {strides = array<i32>} : memref<1x80x1xf32, #tpu.memory_space<vmem>>, vector<1x80x1xf32>,
    %cst_240 = arith.constant 0.000000e+00 : f32
    %413 = vector.broadcast %cst_240 : f32 to vector<80x1xf32>
    %414 = arith.subf %413, %409 : vector<80x1xf32>
    %415 = math.exp %414 : vector<80x1xf32>
    %cst_241 = arith.constant 1.000000e+00 : f32
    %416 = vector.broadcast %cst_241 : f32 to vector<80x1xf32>
    %417 = arith.addf %416, %415 : vector<80x1xf32>
    %418 = tpu.reciprocal %417 {approx = true} : vector<80x1xf32> -> vector<80x1xf32>
    %c0_242 = arith.constant 0 : index
    %c0_243 = arith.constant 0 : index
    %c0_244 = arith.constant 0 : index
    %419 = vector.load %arg19[%c0_242, %c0_243, %c0_244] : memref<1x80x1xf32, #tpu.memory_space<vmem>>, vector<1x80x1xf32>
    %420 = vector.shape_cast %419 : vector<1x80x1xf32> to vector<80x1xf32>
    %421 = vector.shape_cast %418 : vector<80x1xf32> to vector<1x80x1xf32>
    tpu.vector_store %arg19[%c0_242, %c0_243, %c0_244], %421 {strides = array<i32>} : memref<1x80x1xf32, #tpu.memory_space<vmem>>, vector<1x80x1xf32>,
    return
  }
  func.func @transform_0(%arg0: i32) -> (i32, i32, i32) {
    %c0_i32 = arith.constant 0 : i32
    %c0_i32_0 = arith.constant 0 : i32
    %c0_i32_1 = arith.constant 0 : i32
    return %arg0, %c0_i32, %c0_i32_0 : i32, i32, i32
  }
  func.func @transform_1(%arg0: i32) -> (i32, i32) {
    %c0_i32 = arith.constant 0 : i32
    %c0_i32_0 = arith.constant 0 : i32
    %c0_i32_1 = arith.constant 0 : i32
    return %c0_i32, %c0_i32_0 : i32, i32
  }
  func.func @transform_2(%arg0: i32) -> (i32, i32) {
    %c0_i32 = arith.constant 0 : i32
    %c0_i32_0 = arith.constant 0 : i32
    %c0_i32_1 = arith.constant 0 : i32
    return %c0_i32, %c0_i32_0 : i32, i32
  }
  func.func @transform_3(%arg0: i32) -> (i32, i32, i32) {
    %c0_i32 = arith.constant 0 : i32
    %c0_i32_0 = arith.constant 0 : i32
    %c0_i32_1 = arith.constant 0 : i32
    %c0_i32_2 = arith.constant 0 : i32
    return %c0_i32, %c0_i32_0, %c0_i32_1 : i32, i32, i32
  }
  func.func @transform_4(%arg0: i32) -> (i32, i32) {
    %c0_i32 = arith.constant 0 : i32
    %c0_i32_0 = arith.constant 0 : i32
    %c0_i32_1 = arith.constant 0 : i32
    return %c0_i32, %c0_i32_0 : i32, i32
  }
  func.func @transform_5(%arg0: i32) -> (i32, i32, i32) {
    %c0_i32 = arith.constant 0 : i32
    %c0_i32_0 = arith.constant 0 : i32
    %c0_i32_1 = arith.constant 0 : i32
    %c0_i32_2 = arith.constant 0 : i32
    return %c0_i32, %c0_i32_0, %c0_i32_1 : i32, i32, i32
  }
  func.func @transform_6(%arg0: i32) -> (i32, i32) {
    %c0_i32 = arith.constant 0 : i32
    %c0_i32_0 = arith.constant 0 : i32
    %c0_i32_1 = arith.constant 0 : i32
    return %c0_i32, %c0_i32_0 : i32, i32
  }
  func.func @transform_7(%arg0: i32) -> (i32, i32, i32) {
    %c0_i32 = arith.constant 0 : i32
    %c0_i32_0 = arith.constant 0 : i32
    %c0_i32_1 = arith.constant 0 : i32
    %c0_i32_2 = arith.constant 0 : i32
    return %c0_i32, %c0_i32_0, %c0_i32_1 : i32, i32, i32
  }
  func.func @transform_8(%arg0: i32) -> (i32, i32) {
    %c0_i32 = arith.constant 0 : i32
    %c0_i32_0 = arith.constant 0 : i32
    %c0_i32_1 = arith.constant 0 : i32
    return %c0_i32, %c0_i32_0 : i32, i32
  }
  func.func @transform_9(%arg0: i32) -> (i32, i32, i32) {
    %c0_i32 = arith.constant 0 : i32
    %c0_i32_0 = arith.constant 0 : i32
    %c0_i32_1 = arith.constant 0 : i32
    %c0_i32_2 = arith.constant 0 : i32
    return %c0_i32, %c0_i32_0, %c0_i32_1 : i32, i32, i32
  }
  func.func @transform_10(%arg0: i32) -> (i32, i32) {
    %c0_i32 = arith.constant 0 : i32
    %c0_i32_0 = arith.constant 0 : i32
    %c0_i32_1 = arith.constant 0 : i32
    return %c0_i32, %c0_i32_0 : i32, i32
  }
  func.func @transform_11(%arg0: i32) -> (i32, i32, i32) {
    %c0_i32 = arith.constant 0 : i32
    %c0_i32_0 = arith.constant 0 : i32
    %c0_i32_1 = arith.constant 0 : i32
    %c0_i32_2 = arith.constant 0 : i32
    return %c0_i32, %c0_i32_0, %c0_i32_1 : i32, i32, i32
  }
  func.func @transform_12(%arg0: i32) -> (i32, i32) {
    %c0_i32 = arith.constant 0 : i32
    %c0_i32_0 = arith.constant 0 : i32
    %c0_i32_1 = arith.constant 0 : i32
    return %c0_i32, %c0_i32_0 : i32, i32
  }
  func.func @transform_13(%arg0: i32) -> (i32, i32, i32) {
    %c0_i32 = arith.constant 0 : i32
    %c0_i32_0 = arith.constant 0 : i32
    %c0_i32_1 = arith.constant 0 : i32
    %c0_i32_2 = arith.constant 0 : i32
    return %c0_i32, %c0_i32_0, %c0_i32_1 : i32, i32, i32
  }
  func.func @transform_14(%arg0: i32) -> (i32, i32) {
    %c0_i32 = arith.constant 0 : i32
    %c0_i32_0 = arith.constant 0 : i32
    %c0_i32_1 = arith.constant 0 : i32
    return %c0_i32, %c0_i32_0 : i32, i32
  }
  func.func @transform_15(%arg0: i32) -> (i32, i32, i32) {
    %c0_i32 = arith.constant 0 : i32
    %c0_i32_0 = arith.constant 0 : i32
    %c0_i32_1 = arith.constant 0 : i32
    %c0_i32_2 = arith.constant 0 : i32
    return %c0_i32, %c0_i32_0, %c0_i32_1 : i32, i32, i32
  }
  func.func @transform_16(%arg0: i32) -> (i32, i32) {
    %c0_i32 = arith.constant 0 : i32
    %c0_i32_0 = arith.constant 0 : i32
    %c0_i32_1 = arith.constant 0 : i32
    return %c0_i32, %c0_i32_0 : i32, i32
  }
  func.func @transform_17(%arg0: i32) -> (i32, i32, i32) {
    %c0_i32 = arith.constant 0 : i32
    %c0_i32_0 = arith.constant 0 : i32
    %c0_i32_1 = arith.constant 0 : i32
    return %arg0, %c0_i32, %c0_i32_0 : i32, i32, i32
  }
  func.func @transform_18(%arg0: i32) -> (i32, i32, i32) {
    %c0_i32 = arith.constant 0 : i32
    %c0_i32_0 = arith.constant 0 : i32
    %c0_i32_1 = arith.constant 0 : i32
    return %arg0, %c0_i32, %c0_i32_0 : i32, i32, i32
  }
}

</mosaic_0001>

<llo_original>
// kernel: tpu_custom_call.1
$region0: #{tpu_custom_call.1}
  #allocation0 [shape = 'u32[]', space=smem, size = 0x4, offset = 0x4, fixed_abs, tag = 'smem constant byte address 0x4 - core index']
  #allocation1 [shape = 'u32[144,128]{1,0:T(1,128)}', space=vmem, size = 0x12000, scoped, tag = 'internal scratch']
  #allocation2 [shape = 'f32[1,1]{1,0:T(1,128)S(1)}', space=vmem, size = 0x200, scoped, tag = 'scoped memory for tpu_custom_call.1']
  %s0 = inlined_call_operand.vmem [shape: bf16[2,80,40], index: 0, kind: input, shape index: {}]
  %s1 = inlined_call_operand.hbm [shape: bf16[40,256], index: 1, kind: input, shape index: {}]
  %s2 = inlined_call_operand.vmem [shape: f32[1,256], index: 2, kind: input, shape index: {}]
  %s3 = inlined_call_operand.vmem [shape: bf16[5,256,128], index: 3, kind: input, shape index: {}]
  %s4 = inlined_call_operand.vmem [shape: f32[1,128], index: 4, kind: input, shape index: {}]
  %s5 = inlined_call_operand.hbm [shape: bf16[5,128,128], index: 5, kind: input, shape index: {}]
  %s6 = inlined_call_operand.vmem [shape: f32[1,128], index: 6, kind: input, shape index: {}]
  %s7 = inlined_call_operand.vmem [shape: bf16[5,128,64], index: 7, kind: input, shape index: {}]
  %s8 = inlined_call_operand.vmem [shape: f32[1,64], index: 8, kind: input, shape index: {}]
  %s9 = inlined_call_operand.hbm [shape: bf16[5,64,64], index: 9, kind: input, shape index: {}]
  %s10 = inlined_call_operand.vmem [shape: f32[1,64], index: 10, kind: input, shape index: {}]
  %s11 = inlined_call_operand.vmem [shape: bf16[3,64,64], index: 11, kind: input, shape index: {}]
  %s12 = inlined_call_operand.vmem [shape: f32[1,64], index: 12, kind: input, shape index: {}]
  %s13 = inlined_call_operand.vmem [shape: bf16[3,64,32], index: 13, kind: input, shape index: {}]
  %s14 = inlined_call_operand.vmem [shape: f32[1,32], index: 14, kind: input, shape index: {}]
  %s15 = inlined_call_operand.vmem [shape: f32[3,1,32], index: 15, kind: input, shape index: {}]
  %s16 = inlined_call_operand.<no memory space> [shape: f32[1,1], index: 16, kind: input, shape index: {}]
  %s17 = inlined_call_operand.vmem [shape: f32[2,80,1], index: 17, kind: output, shape index: {0}]
  %s18 = inlined_call_operand.vmem [shape: f32[2,80,1], index: 18, kind: output, shape index: {1}]
  %19 = xla_tuple %s17, %s18
  %s20 = sld [smem:[#allocation0]]
  $region121: #{tpu_custom_call.1} parent=0
    _
  %s22 = ssub.s32 1, %s20
  %s23 = scalar_select 0, %s22, %s20
  %v24 = vstv %s16
  %25 = vst [vmem:[#allocation2] sm:$0x1] %v24
  $region1: #{tpu_custom_call.1} parent=0
    #allocation3 [shape = 'u8[20480]{0}', space=vmem, size = 0x5000, scoped, tag = 'input window, operand 1, single buffered']
    #allocation4 [shape = 's32[2]{0}', space=sflag, size = 0x8, scoped, tag = 'scoped memory for tpu_custom_call.1']
    #allocation5 [shape = 'u8[163840]{0}', space=vmem, size = 0x28000, scoped, tag = 'input window, operand 5, single buffered']
    #allocation6 [shape = 's32[1]{0}', space=sflag, size = 0x4, scoped, tag = 'scoped memory for tpu_custom_call.1']
    #allocation7 [shape = 'u8[81920]{0}', space=vmem, size = 0x14000, scoped, tag = 'input window, operand 9, single buffered']
    %26 = vsyncpa [#allocation4], 0
    %27 = vsyncpa [#allocation6], 0
    loop: start=0, step=1, limit=4
    $region2: #{tpu_custom_call.1} parent=1 // loop_pre_header
      _
    $region3: #{tpu_custom_call.1} parent=1 // loop_header
      %s29 = sphi 0, %s33
      %p30 = scmp.ge.s32.totalorder %s29, 4
      %s39 = sphi 0, %s41
      %s42 = sphi 0, %s39
      %s43 = sphi 0, %s42
      %s59 = sphi 0, %s43
      %s63 = sphi 0, %s63
      %s65 = sphi 0, %s63
      %s66 = sphi 0, %s65
      %s80 = sphi 0, %s66
      %s84 = sphi 0, %s84
      %s86 = sphi 0, %s84
      %s87 = sphi 0, %s86
      %s101 = sphi 0, %s87
      %s105 = sphi 0, %s105
      %s107 = sphi 0, %s105
      %s108 = sphi 0, %s107
      %s122 = sphi 0, %s108
      %s126 = sphi 0, %s126
      %s128 = sphi 0, %s126
      %s129 = sphi 0, %s128
      %s143 = sphi 0, %s129
      %s147 = sphi 0, %s147
      %s149 = sphi 0, %s147
      %s150 = sphi 0, %s149
      %s164 = sphi 0, %s150
      %s168 = sphi 0, %s168
      %s170 = sphi 0, %s168
      %s171 = sphi 0, %s170
      %s185 = sphi 0, %s171
      %s189 = sphi 0, %s189
      %s191 = sphi 0, %s189
      %s192 = sphi 0, %s191
      %s206 = sphi 0, %s192
      %s210 = sphi 0, %s210
      %s212 = sphi 0, %s210
      %s213 = sphi 0, %s212
      %s227 = sphi 0, %s213
      %s231 = sphi 0, %s231
      %s233 = sphi 0, %s231
      %s234 = sphi 0, %s233
      %s248 = sphi 0, %s234
      %s252 = sphi 0, %s252
      %s254 = sphi 0, %s252
      %s255 = sphi 0, %s254
      %s269 = sphi 0, %s255
      %s273 = sphi 0, %s273
      %s275 = sphi 0, %s273
      %s276 = sphi 0, %s275
      %s290 = sphi 0, %s276
      %s294 = sphi 0, %s294
      %s296 = sphi 0, %s294
      %s297 = sphi 0, %s296
      %s311 = sphi 0, %s297
      %s315 = sphi 0, %s315
      %s317 = sphi 0, %s315
      %s318 = sphi 0, %s317
      %s332 = sphi 0, %s318
      %s336 = sphi 0, %s336
      %s338 = sphi 0, %s336
      %s339 = sphi 0, %s338
      %s353 = sphi 0, %s339
      %s357 = sphi 0, %s357
      %s359 = sphi 0, %s357
      %s360 = sphi 0, %s359
      %s374 = sphi 0, %s360
      %s378 = sphi 0, %s378
      %s380 = sphi 0, %s378
      %s381 = sphi 0, %s380
      %s395 = sphi 0, %s381
      %s401 = sphi 0, %s403
      %s404 = sphi 0, %s401
      %s405 = sphi 0, %s404
      %s421 = sphi 0, %s405
      %s427 = sphi 0, %s429
      %s430 = sphi 0, %s427
      %s431 = sphi 0, %s430
      %s447 = sphi 0, %s431
    $region4: #{tpu_custom_call.1} parent=1 // loop_header_branch
      %32 = sbr.rel (%p30) target = $region8
    $region5: #{tpu_custom_call.1} parent=1 // loop_body
      %s34 = ssub.s32 %s29, 1
      %s35 = ssub.s32 %s29, 2
      %s36 = sadd.s32 %s29, 1
      %s37 = ssub.s32 %s29, %s36
      %p38 = scmp.eq.s32.totalorder %s37, 0
      %s40 = sadd.s32 %s39, 1
      %s41 = scalar_select %p38, %s39, %s40
      %p44 = pneg %p38
      %p45 = scmp.eq.s32.totalorder %s29, 1
      %p46 = por %p44, %p45
      %p47 = scmp.ne.s32.totalorder %s39, %s42
      %p48 = scmp.eq.s32.totalorder %s29, 0
      %p49 = por %p47, %p48
      %p50 = scmp.ne.s32.totalorder %s39, %s42
      %p51 = scmp.eq.s32.totalorder %s34, 1
      %p52 = por %p50, %p51
      %p53 = scmp.ne.s32.totalorder %s42, %s43
      %p54 = scmp.eq.s32.totalorder %s34, 0
      %p55 = por %p53, %p54
      %p56 = scmp.ne.s32.totalorder %s42, %s43
      %p57 = scmp.eq.s32.totalorder %s35, 1
      %p58 = por %p56, %p57
      %p60 = scmp.ne.s32.totalorder %s43, %s59
      %p61 = scmp.eq.s32.totalorder %s35, 0
      %p62 = por %p60, %p61
      %s64 = sadd.s32 %s63, 1
      %p67 = scmp.eq.s32.totalorder %s29, 1
      %p68 = scmp.ne.s32.totalorder %s63, %s65
      %p69 = scmp.eq.s32.totalorder %s29, 0
      %p70 = por %p68, %p69
      %p71 = scmp.ne.s32.totalorder %s63, %s65
      %p72 = scmp.eq.s32.totalorder %s34, 1
      %p73 = por %p71, %p72
      %p74 = scmp.ne.s32.totalorder %s65, %s66
      %p75 = scmp.eq.s32.totalorder %s34, 0
      %p76 = por %p74, %p75
      %p77 = scmp.ne.s32.totalorder %s65, %s66
      %p78 = scmp.eq.s32.totalorder %s35, 1
      %p79 = por %p77, %p78
      %p81 = scmp.ne.s32.totalorder %s66, %s80
      %p82 = scmp.eq.s32.totalorder %s35, 0
      %p83 = por %p81, %p82
      %s85 = sadd.s32 %s84, 1
      %p88 = scmp.eq.s32.totalorder %s29, 1
      %p89 = scmp.ne.s32.totalorder %s84, %s86
      %p90 = scmp.eq.s32.totalorder %s29, 0
      %p91 = por %p89, %p90
      %p92 = scmp.ne.s32.totalorder %s84, %s86
      %p93 = scmp.eq.s32.totalorder %s34, 1
      %p94 = por %p92, %p93
      %p95 = scmp.ne.s32.totalorder %s86, %s87
      %p96 = scmp.eq.s32.totalorder %s34, 0
      %p97 = por %p95, %p96
      %p98 = scmp.ne.s32.totalorder %s86, %s87
      %p99 = scmp.eq.s32.totalorder %s35, 1
      %p100 = por %p98, %p99
      %p102 = scmp.ne.s32.totalorder %s87, %s101
      %p103 = scmp.eq.s32.totalorder %s35, 0
      %p104 = por %p102, %p103
      %s106 = sadd.s32 %s105, 1
      %p109 = scmp.eq.s32.totalorder %s29, 1
      %p110 = scmp.ne.s32.totalorder %s105, %s107
      %p111 = scmp.eq.s32.totalorder %s29, 0
      %p112 = por %p110, %p111
      %p113 = scmp.ne.s32.totalorder %s105, %s107
      %p114 = scmp.eq.s32.totalorder %s34, 1
      %p115 = por %p113, %p114
      %p116 = scmp.ne.s32.totalorder %s107, %s108
      %p117 = scmp.eq.s32.totalorder %s34, 0
      %p118 = por %p116, %p117
      %p119 = scmp.ne.s32.totalorder %s107, %s108
      %p120 = scmp.eq.s32.totalorder %s35, 1
      %p121 = por %p119, %p120
      %p123 = scmp.ne.s32.totalorder %s108, %s122
      %p124 = scmp.eq.s32.totalorder %s35, 0
      %p125 = por %p123, %p124
      %s127 = sadd.s32 %s126, 1
      %p130 = scmp.eq.s32.totalorder %s29, 1
      %p131 = scmp.ne.s32.totalorder %s126, %s128
      %p132 = scmp.eq.s32.totalorder %s29, 0
      %p133 = por %p131, %p132
      %p134 = scmp.ne.s32.totalorder %s126, %s128
      %p135 = scmp.eq.s32.totalorder %s34, 1
      %p136 = por %p134, %p135
      %p137 = scmp.ne.s32.totalorder %s128, %s129
      %p138 = scmp.eq.s32.totalorder %s34, 0
      %p139 = por %p137, %p138
      %p140 = scmp.ne.s32.totalorder %s128, %s129
      %p141 = scmp.eq.s32.totalorder %s35, 1
      %p142 = por %p140, %p141
      %p144 = scmp.ne.s32.totalorder %s129, %s143
      %p145 = scmp.eq.s32.totalorder %s35, 0
      %p146 = por %p144, %p145
      %s148 = sadd.s32 %s147, 1
      %p151 = scmp.eq.s32.totalorder %s29, 1
      %p152 = scmp.ne.s32.totalorder %s147, %s149
      %p153 = scmp.eq.s32.totalorder %s29, 0
      %p154 = por %p152, %p153
      %p155 = scmp.ne.s32.totalorder %s147, %s149
      %p156 = scmp.eq.s32.totalorder %s34, 1
      %p157 = por %p155, %p156
      %p158 = scmp.ne.s32.totalorder %s149, %s150
      %p159 = scmp.eq.s32.totalorder %s34, 0
      %p160 = por %p158, %p159
      %p161 = scmp.ne.s32.totalorder %s149, %s150
      %p162 = scmp.eq.s32.totalorder %s35, 1
      %p163 = por %p161, %p162
      %p165 = scmp.ne.s32.totalorder %s150, %s164
      %p166 = scmp.eq.s32.totalorder %s35, 0
      %p167 = por %p165, %p166
      %s169 = sadd.s32 %s168, 1
      %p172 = scmp.eq.s32.totalorder %s29, 1
      %p173 = scmp.ne.s32.totalorder %s168, %s170
      %p174 = scmp.eq.s32.totalorder %s29, 0
      %p175 = por %p173, %p174
      %p176 = scmp.ne.s32.totalorder %s168, %s170
      %p177 = scmp.eq.s32.totalorder %s34, 1
      %p178 = por %p176, %p177
      %p179 = scmp.ne.s32.totalorder %s170, %s171
      %p180 = scmp.eq.s32.totalorder %s34, 0
      %p181 = por %p179, %p180
      %p182 = scmp.ne.s32.totalorder %s170, %s171
      %p183 = scmp.eq.s32.totalorder %s35, 1
      %p184 = por %p182, %p183
      %p186 = scmp.ne.s32.totalorder %s171, %s185
      %p187 = scmp.eq.s32.totalorder %s35, 0
      %p188 = por %p186, %p187
      %s190 = sadd.s32 %s189, 1
      %p193 = scmp.eq.s32.totalorder %s29, 1
      %p194 = scmp.ne.s32.totalorder %s189, %s191
      %p195 = scmp.eq.s32.totalorder %s29, 0
      %p196 = por %p194, %p195
      %p197 = scmp.ne.s32.totalorder %s189, %s191
      %p198 = scmp.eq.s32.totalorder %s34, 1
      %p199 = por %p197, %p198
      %p200 = scmp.ne.s32.totalorder %s191, %s192
      %p201 = scmp.eq.s32.totalorder %s34, 0
      %p202 = por %p200, %p201
      %p203 = scmp.ne.s32.totalorder %s191, %s192
      %p204 = scmp.eq.s32.totalorder %s35, 1
      %p205 = por %p203, %p204
      %p207 = scmp.ne.s32.totalorder %s192, %s206
      %p208 = scmp.eq.s32.totalorder %s35, 0
      %p209 = por %p207, %p208
      %s211 = sadd.s32 %s210, 1
      %p214 = scmp.eq.s32.totalorder %s29, 1
      %p215 = scmp.ne.s32.totalorder %s210, %s212
      %p216 = scmp.eq.s32.totalorder %s29, 0
      %p217 = por %p215, %p216
      %p218 = scmp.ne.s32.totalorder %s210, %s212
      %p219 = scmp.eq.s32.totalorder %s34, 1
      %p220 = por %p218, %p219
      %p221 = scmp.ne.s32.totalorder %s212, %s213
      %p222 = scmp.eq.s32.totalorder %s34, 0
      %p223 = por %p221, %p222
      %p224 = scmp.ne.s32.totalorder %s212, %s213
      %p225 = scmp.eq.s32.totalorder %s35, 1
      %p226 = por %p224, %p225
      %p228 = scmp.ne.s32.totalorder %s213, %s227
      %p229 = scmp.eq.s32.totalorder %s35, 0
      %p230 = por %p228, %p229
      %s232 = sadd.s32 %s231, 1
      %p235 = scmp.eq.s32.totalorder %s29, 1
      %p236 = scmp.ne.s32.totalorder %s231, %s233
      %p237 = scmp.eq.s32.totalorder %s29, 0
      %p238 = por %p236, %p237
      %p239 = scmp.ne.s32.totalorder %s231, %s233
      %p240 = scmp.eq.s32.totalorder %s34, 1
      %p241 = por %p239, %p240
      %p242 = scmp.ne.s32.totalorder %s233, %s234
      %p243 = scmp.eq.s32.totalorder %s34, 0
      %p244 = por %p242, %p243
      %p245 = scmp.ne.s32.totalorder %s233, %s234
      %p246 = scmp.eq.s32.totalorder %s35, 1
      %p247 = por %p245, %p246
      %p249 = scmp.ne.s32.totalorder %s234, %s248
      %p250 = scmp.eq.s32.totalorder %s35, 0
      %p251 = por %p249, %p250
      %s253 = sadd.s32 %s252, 1
      %p256 = scmp.eq.s32.totalorder %s29, 1
      %p257 = scmp.ne.s32.totalorder %s252, %s254
      %p258 = scmp.eq.s32.totalorder %s29, 0
      %p259 = por %p257, %p258
      %p260 = scmp.ne.s32.totalorder %s252, %s254
      %p261 = scmp.eq.s32.totalorder %s34, 1
      %p262 = por %p260, %p261
      %p263 = scmp.ne.s32.totalorder %s254, %s255
      %p264 = scmp.eq.s32.totalorder %s34, 0
      %p265 = por %p263, %p264
      %p266 = scmp.ne.s32.totalorder %s254, %s255
      %p267 = scmp.eq.s32.totalorder %s35, 1
      %p268 = por %p266, %p267
      %p270 = scmp.ne.s32.totalorder %s255, %s269
      %p271 = scmp.eq.s32.totalorder %s35, 0
      %p272 = por %p270, %p271
      %s274 = sadd.s32 %s273, 1
      %p277 = scmp.eq.s32.totalorder %s29, 1
      %p278 = scmp.ne.s32.totalorder %s273, %s275
      %p279 = scmp.eq.s32.totalorder %s29, 0
      %p280 = por %p278, %p279
      %p281 = scmp.ne.s32.totalorder %s273, %s275
      %p282 = scmp.eq.s32.totalorder %s34, 1
      %p283 = por %p281, %p282
      %p284 = scmp.ne.s32.totalorder %s275, %s276
      %p285 = scmp.eq.s32.totalorder %s34, 0
      %p286 = por %p284, %p285
      %p287 = scmp.ne.s32.totalorder %s275, %s276
      %p288 = scmp.eq.s32.totalorder %s35, 1
      %p289 = por %p287, %p288
      %p291 = scmp.ne.s32.totalorder %s276, %s290
      %p292 = scmp.eq.s32.totalorder %s35, 0
      %p293 = por %p291, %p292
      %s295 = sadd.s32 %s294, 1
      %p298 = scmp.eq.s32.totalorder %s29, 1
      %p299 = scmp.ne.s32.totalorder %s294, %s296
      %p300 = scmp.eq.s32.totalorder %s29, 0
      %p301 = por %p299, %p300
      %p302 = scmp.ne.s32.totalorder %s294, %s296
      %p303 = scmp.eq.s32.totalorder %s34, 1
      %p304 = por %p302, %p303
      %p305 = scmp.ne.s32.totalorder %s296, %s297
      %p306 = scmp.eq.s32.totalorder %s34, 0
      %p307 = por %p305, %p306
      %p308 = scmp.ne.s32.totalorder %s296, %s297
      %p309 = scmp.eq.s32.totalorder %s35, 1
      %p310 = por %p308, %p309
      %p312 = scmp.ne.s32.totalorder %s297, %s311
      %p313 = scmp.eq.s32.totalorder %s35, 0
      %p314 = por %p312, %p313
      %s316 = sadd.s32 %s315, 1
      %p319 = scmp.eq.s32.totalorder %s29, 1
      %p320 = scmp.ne.s32.totalorder %s315, %s317
      %p321 = scmp.eq.s32.totalorder %s29, 0
      %p322 = por %p320, %p321
      %p323 = scmp.ne.s32.totalorder %s315, %s317
      %p324 = scmp.eq.s32.totalorder %s34, 1
      %p325 = por %p323, %p324
      %p326 = scmp.ne.s32.totalorder %s317, %s318
      %p327 = scmp.eq.s32.totalorder %s34, 0
      %p328 = por %p326, %p327
      %p329 = scmp.ne.s32.totalorder %s317, %s318
      %p330 = scmp.eq.s32.totalorder %s35, 1
      %p331 = por %p329, %p330
      %p333 = scmp.ne.s32.totalorder %s318, %s332
      %p334 = scmp.eq.s32.totalorder %s35, 0
      %p335 = por %p333, %p334
      %s337 = sadd.s32 %s336, 1
      %p340 = scmp.eq.s32.totalorder %s29, 1
      %p341 = scmp.ne.s32.totalorder %s336, %s338
      %p342 = scmp.eq.s32.totalorder %s29, 0
      %p343 = por %p341, %p342
      %p344 = scmp.ne.s32.totalorder %s336, %s338
      %p345 = scmp.eq.s32.totalorder %s34, 1
      %p346 = por %p344, %p345
      %p347 = scmp.ne.s32.totalorder %s338, %s339
      %p348 = scmp.eq.s32.totalorder %s34, 0
      %p349 = por %p347, %p348
      %p350 = scmp.ne.s32.totalorder %s338, %s339
      %p351 = scmp.eq.s32.totalorder %s35, 1
      %p352 = por %p350, %p351
      %p354 = scmp.ne.s32.totalorder %s339, %s353
      %p355 = scmp.eq.s32.totalorder %s35, 0
      %p356 = por %p354, %p355
      %s358 = sadd.s32 %s357, 1
      %p361 = scmp.eq.s32.totalorder %s29, 1
      %p362 = scmp.ne.s32.totalorder %s357, %s359
      %p363 = scmp.eq.s32.totalorder %s29, 0
      %p364 = por %p362, %p363
      %p365 = scmp.ne.s32.totalorder %s357, %s359
      %p366 = scmp.eq.s32.totalorder %s34, 1
      %p367 = por %p365, %p366
      %p368 = scmp.ne.s32.totalorder %s359, %s360
      %p369 = scmp.eq.s32.totalorder %s34, 0
      %p370 = por %p368, %p369
      %p371 = scmp.ne.s32.totalorder %s359, %s360
      %p372 = scmp.eq.s32.totalorder %s35, 1
      %p373 = por %p371, %p372
      %p375 = scmp.ne.s32.totalorder %s360, %s374
      %p376 = scmp.eq.s32.totalorder %s35, 0
      %p377 = por %p375, %p376
      %s379 = sadd.s32 %s378, 1
      %p382 = scmp.eq.s32.totalorder %s29, 1
      %p383 = scmp.ne.s32.totalorder %s378, %s380
      %p384 = scmp.eq.s32.totalorder %s29, 0
      %p385 = por %p383, %p384
      %p386 = scmp.ne.s32.totalorder %s378, %s380
      %p387 = scmp.eq.s32.totalorder %s34, 1
      %p388 = por %p386, %p387
      %p389 = scmp.ne.s32.totalorder %s380, %s381
      %p390 = scmp.eq.s32.totalorder %s34, 0
      %p391 = por %p389, %p390
      %p392 = scmp.ne.s32.totalorder %s380, %s381
      %p393 = scmp.eq.s32.totalorder %s35, 1
      %p394 = por %p392, %p393
      %p396 = scmp.ne.s32.totalorder %s381, %s395
      %p397 = scmp.eq.s32.totalorder %s35, 0
      %p398 = por %p396, %p397
      %s399 = ssub.s32 %s29, %s36
      %p400 = scmp.eq.s32.totalorder %s399, 0
      %s402 = sadd.s32 %s401, 1
      %s403 = scalar_select %p400, %s401, %s402
      %p406 = pneg %p400
      %p407 = scmp.eq.s32.totalorder %s29, 1
      %p408 = por %p406, %p407
      %p409 = scmp.ne.s32.totalorder %s401, %s404
      %p410 = scmp.eq.s32.totalorder %s29, 0
      %p411 = por %p409, %p410
      %p412 = scmp.ne.s32.totalorder %s401, %s404
      %p413 = scmp.eq.s32.totalorder %s34, 1
      %p414 = por %p412, %p413
      %p415 = scmp.ne.s32.totalorder %s404, %s405
      %p416 = scmp.eq.s32.totalorder %s34, 0
      %p417 = por %p415, %p416
      %p418 = scmp.ne.s32.totalorder %s404, %s405
      %p419 = scmp.eq.s32.totalorder %s35, 1
      %p420 = por %p418, %p419
      %p422 = scmp.ne.s32.totalorder %s405, %s421
      %p423 = scmp.eq.s32.totalorder %s35, 0
      %p424 = por %p422, %p423
      %s425 = ssub.s32 %s29, %s36
      %p426 = scmp.eq.s32.totalorder %s425, 0
      %s428 = sadd.s32 %s427, 1
      %s429 = scalar_select %p426, %s427, %s428
      %p432 = pneg %p426
      %p433 = scmp.eq.s32.totalorder %s29, 1
      %p434 = por %p432, %p433
      %p435 = scmp.ne.s32.totalorder %s427, %s430
      %p436 = scmp.eq.s32.totalorder %s29, 0
      %p437 = por %p435, %p436
      %p438 = scmp.ne.s32.totalorder %s427, %s430
      %p439 = scmp.eq.s32.totalorder %s34, 1
      %p440 = por %p438, %p439
      %p441 = scmp.ne.s32.totalorder %s430, %s431
      %p442 = scmp.eq.s32.totalorder %s34, 0
      %p443 = por %p441, %p442
      %p444 = scmp.ne.s32.totalorder %s430, %s431
      %p445 = scmp.eq.s32.totalorder %s35, 1
      %p446 = por %p444, %p445
      %p448 = scmp.ne.s32.totalorder %s431, %s447
      %p449 = scmp.eq.s32.totalorder %s35, 0
      %p450 = por %p448, %p449
      %p451 = scmp.le.s32.totalorder 1, %s29
      %p452 = scmp.lt.s32.totalorder %s29, 3
      %p453 = pnand %p451, %p452
      %p454 = pneg %p453
      // Predicated region
      $region9: #{tpu_custom_call.1} parent=5 // pred_check
        _
      $region10: #{tpu_custom_call.1} parent=5 // pred_check_branch
        %456 = sbr.rel (%p453) target = $region12
      $region11: #{tpu_custom_call.1} parent=5 // pred_region
        %s457 = ssub.s32 %s29, 1
        // Predicated region
        $region13: #{tpu_custom_call.1} parent=11 // pred_check
          %p458 = pneg %p76
        $region14: #{tpu_custom_call.1} parent=11 // pred_check_branch
          %460 = sbr.rel (%p458) target = $region16
        $region15: #{tpu_custom_call.1} parent=11 // pred_region
          %s462 = ssub.s32 640, 640
          %463 = vsyncadd [#allocation4], %s462
          %s464 = sshll.u32 [#allocation3], 4
          %s465 = int_to_ptr.vmem [resolvable:$true] %s464
          %470 = dma.hbm_to_vmem [thread:$0]  %s1, 640, %s465, [#allocation4], 128, 128, 8
        $region16: #{tpu_custom_call.1} parent=11 // pred_fallthru
          _
        // Predicated region
        $region17: #{tpu_custom_call.1} parent=11 // pred_check
          %p471 = pneg %p97
        $region18: #{tpu_custom_call.1} parent=11 // pred_check_branch
          %473 = sbr.rel (%p471) target = $region20
        $region19: #{tpu_custom_call.1} parent=11 // pred_region
          _
        $region20: #{tpu_custom_call.1} parent=11 // pred_fallthru
          _
        // Predicated region
        $region21: #{tpu_custom_call.1} parent=11 // pred_check
          %p474 = pneg %p118
        $region22: #{tpu_custom_call.1} parent=11 // pred_check_branch
          %476 = sbr.rel (%p474) target = $region24
        $region23: #{tpu_custom_call.1} parent=11 // pred_region
          _
        $region24: #{tpu_custom_call.1} parent=11 // pred_fallthru
          _
        // Predicated region
        $region25: #{tpu_custom_call.1} parent=11 // pred_check
          %p477 = pneg %p139
        $region26: #{tpu_custom_call.1} parent=11 // pred_check_branch
          %479 = sbr.rel (%p477) target = $region28
        $region27: #{tpu_custom_call.1} parent=11 // pred_region
          _
        $region28: #{tpu_custom_call.1} parent=11 // pred_fallthru
          _
        // Predicated region
        $region29: #{tpu_custom_call.1} parent=11 // pred_check
          %p480 = pneg %p160
        $region30: #{tpu_custom_call.1} parent=11 // pred_check_branch
          %482 = sbr.rel (%p480) target = $region32
        $region31: #{tpu_custom_call.1} parent=11 // pred_region
          %s484 = ssub.s32 5120, 5120
          %485 = vsyncadd [#allocation6], %s484
          %s486 = sshll.u32 [#allocation5], 4
          %s487 = int_to_ptr.vmem [resolvable:$true] %s486
          %492 = dma.hbm_to_vmem [thread:$0]  %s5, 5120, %s487, [#allocation6], 64, 64, 4
        $region32: #{tpu_custom_call.1} parent=11 // pred_fallthru
          _
        // Predicated region
        $region33: #{tpu_custom_call.1} parent=11 // pred_check
          %p493 = pneg %p181
        $region34: #{tpu_custom_call.1} parent=11 // pred_check_branch
          %495 = sbr.rel (%p493) target = $region36
        $region35: #{tpu_custom_call.1} parent=11 // pred_region
          _
        $region36: #{tpu_custom_call.1} parent=11 // pred_fallthru
          _
        // Predicated region
        $region37: #{tpu_custom_call.1} parent=11 // pred_check
          %p496 = pneg %p202
        $region38: #{tpu_custom_call.1} parent=11 // pred_check_branch
          %498 = sbr.rel (%p496) target = $region40
        $region39: #{tpu_custom_call.1} parent=11 // pred_region
          _
        $region40: #{tpu_custom_call.1} parent=11 // pred_fallthru
          _
        // Predicated region
        $region41: #{tpu_custom_call.1} parent=11 // pred_check
          %p499 = pneg %p223
        $region42: #{tpu_custom_call.1} parent=11 // pred_check_branch
          %501 = sbr.rel (%p499) target = $region44
        $region43: #{tpu_custom_call.1} parent=11 // pred_region
          _
        $region44: #{tpu_custom_call.1} parent=11 // pred_fallthru
          _
        // Predicated region
        $region45: #{tpu_custom_call.1} parent=11 // pred_check
          %p502 = pneg %p244
        $region46: #{tpu_custom_call.1} parent=11 // pred_check_branch
          %504 = sbr.rel (%p502) target = $region48
        $region47: #{tpu_custom_call.1} parent=11 // pred_region
          %s506 = ssub.s32 2560, 2560
          %507 = vsyncadd [#allocation6], %s506
          %s508 = sshll.u32 [#allocation7], 4
          %s509 = int_to_ptr.vmem [resolvable:$true] %s508
          %514 = dma.hbm_to_vmem [thread:$0]  %s9, 2560, %s509, [#allocation6], 64, 64, 4
        $region48: #{tpu_custom_call.1} parent=11 // pred_fallthru
          _
        // Predicated region
        $region49: #{tpu_custom_call.1} parent=11 // pred_check
          %p515 = pneg %p265
        $region50: #{tpu_custom_call.1} parent=11 // pred_check_branch
          %517 = sbr.rel (%p515) target = $region52
        $region51: #{tpu_custom_call.1} parent=11 // pred_region
          _
        $region52: #{tpu_custom_call.1} parent=11 // pred_fallthru
          _
        // Predicated region
        $region53: #{tpu_custom_call.1} parent=11 // pred_check
          %p518 = pneg %p286
        $region54: #{tpu_custom_call.1} parent=11 // pred_check_branch
          %520 = sbr.rel (%p518) target = $region56
        $region55: #{tpu_custom_call.1} parent=11 // pred_region
          _
        $region56: #{tpu_custom_call.1} parent=11 // pred_fallthru
          _
        // Predicated region
        $region57: #{tpu_custom_call.1} parent=11 // pred_check
          %p521 = pneg %p307
        $region58: #{tpu_custom_call.1} parent=11 // pred_check_branch
          %523 = sbr.rel (%p521) target = $region60
        $region59: #{tpu_custom_call.1} parent=11 // pred_region
          _
        $region60: #{tpu_custom_call.1} parent=11 // pred_fallthru
          _
        // Predicated region
        $region61: #{tpu_custom_call.1} parent=11 // pred_check
          %p524 = pneg %p328
        $region62: #{tpu_custom_call.1} parent=11 // pred_check_branch
          %526 = sbr.rel (%p524) target = $region64
        $region63: #{tpu_custom_call.1} parent=11 // pred_region
          _
        $region64: #{tpu_custom_call.1} parent=11 // pred_fallthru
          _
        // Predicated region
        $region65: #{tpu_custom_call.1} parent=11 // pred_check
          %p527 = pneg %p349
        $region66: #{tpu_custom_call.1} parent=11 // pred_check_branch
          %529 = sbr.rel (%p527) target = $region68
        $region67: #{tpu_custom_call.1} parent=11 // pred_region
          _
        $region68: #{tpu_custom_call.1} parent=11 // pred_fallthru
          _
        // Predicated region
        $region69: #{tpu_custom_call.1} parent=11 // pred_check
          %p530 = pneg %p370
        $region70: #{tpu_custom_call.1} parent=11 // pred_check_branch
          %532 = sbr.rel (%p530) target = $region72
        $region71: #{tpu_custom_call.1} parent=11 // pred_region
          _
        $region72: #{tpu_custom_call.1} parent=11 // pred_fallthru
          _
        // Predicated region
        $region73: #{tpu_custom_call.1} parent=11 // pred_check
          %p533 = pneg %p391
        $region74: #{tpu_custom_call.1} parent=11 // pred_check_branch
          %535 = sbr.rel (%p533) target = $region76
        $region75: #{tpu_custom_call.1} parent=11 // pred_region
          _
        $region76: #{tpu_custom_call.1} parent=11 // pred_fallthru
          _
      $region12: #{tpu_custom_call.1} parent=5 // pred_fallthru
        _
      %p536 = scmp.lt.s32.totalorder %s29, 2
      // Predicated region
      $region77: #{tpu_custom_call.1} parent=5 // pred_check
        %p537 = pneg %p536
      $region78: #{tpu_custom_call.1} parent=5 // pred_check_branch
        %539 = sbr.rel (%p537) target = $region80
      $region79: #{tpu_custom_call.1} parent=5 // pred_region
        // Predicated region
        $region81: #{tpu_custom_call.1} parent=79 // pred_check
          %p540 = pneg %p49
        $region82: #{tpu_custom_call.1} parent=79 // pred_check_branch
          %542 = sbr.rel (%p540) target = $region84
        $region83: #{tpu_custom_call.1} parent=79 // pred_region
          %p543 = scmp.lt.s32.totalorder %s29, 1
          %s544 = scalar_select %p543, %s29, 1
          %s545 = smul.addr %s544, 10
          %s546 = smul.addr %s545, 4
          %s547 = scalar_lea.vmem %s0, %s546
        $region84: #{tpu_custom_call.1} parent=79 // pred_fallthru
          _
      $region80: #{tpu_custom_call.1} parent=5 // pred_fallthru
        _
      %p548 = scmp.le.s32.totalorder 1, %s29
      %p549 = scmp.lt.s32.totalorder %s29, 3
      %p550 = pnand %p548, %p549
      %p551 = pneg %p550
      // Predicated region
      $region85: #{tpu_custom_call.1} parent=5 // pred_check
        _
      $region86: #{tpu_custom_call.1} parent=5 // pred_check_branch
        %553 = sbr.rel (%p550) target = $region88
      $region87: #{tpu_custom_call.1} parent=5 // pred_region
        %s554 = ssub.s32 %s29, 1
        // Predicated region
        $region89: #{tpu_custom_call.1} parent=87 // pred_check
          %p555 = pneg %p76
        $region90: #{tpu_custom_call.1} parent=87 // pred_check_branch
          %557 = sbr.rel (%p555) target = $region92
        $region91: #{tpu_custom_call.1} parent=87 // pred_region
          %558 = dma.done [#allocation4], 640
        $region92: #{tpu_custom_call.1} parent=87 // pred_fallthru
          _
        // Predicated region
        $region93: #{tpu_custom_call.1} parent=87 // pred_check
          %p559 = pneg %p160
        $region94: #{tpu_custom_call.1} parent=87 // pred_check_branch
          %561 = sbr.rel (%p559) target = $region96
        $region95: #{tpu_custom_call.1} parent=87 // pred_region
          %562 = dma.done [#allocation6], 5120
        $region96: #{tpu_custom_call.1} parent=87 // pred_fallthru
          _
        // Predicated region
        $region97: #{tpu_custom_call.1} parent=87 // pred_check
          %p563 = pneg %p244
        $region98: #{tpu_custom_call.1} parent=87 // pred_check_branch
          %565 = sbr.rel (%p563) target = $region100
        $region99: #{tpu_custom_call.1} parent=87 // pred_region
          %566 = dma.done [#allocation6], 2560
        $region100: #{tpu_custom_call.1} parent=87 // pred_fallthru
          _
        %p567 = scmp.lt.s32.totalorder %s34, 1
        %s568 = scalar_select %p567, %s34, 1
        %s569 = smul.addr %s568, 10
        %s570 = smul.addr %s569, 4
        %s571 = scalar_lea.vmem %s0, %s570
        %p572 = pneg %p55
        %p573 = pneg %p52
        %p574 = pneg %p76
        %p575 = pneg %p73
        %p576 = pneg %p97
        %p577 = pneg %p94
        %p578 = pneg %p118
        %p579 = pneg %p115
        %p580 = pneg %p139
        %p581 = pneg %p136
        %p582 = pneg %p160
        %p583 = pneg %p157
        %p584 = pneg %p181
        %p585 = pneg %p178
        %p586 = pneg %p202
        %p587 = pneg %p199
        %p588 = pneg %p223
        %p589 = pneg %p220
        %p590 = pneg %p244
        %p591 = pneg %p241
        %p592 = pneg %p265
        %p593 = pneg %p262
        %p594 = pneg %p286
        %p595 = pneg %p283
        %p596 = pneg %p307
        %p597 = pneg %p304
        %p598 = pneg %p328
        %p599 = pneg %p325
        %p600 = pneg %p349
        %p601 = pneg %p346
        %p602 = pneg %p370
        %p603 = pneg %p367
        %p604 = pneg %p391
        %p605 = pneg %p388
        %p606 = pneg %p417
        %p607 = pneg %p414
        %p608 = scmp.lt.s32.totalorder %s34, 1
        %s609 = scalar_select %p608, %s34, 1
        %s610 = smul.addr %s609, 10
        %s611 = smul.addr %s610, 8
        %s612 = scalar_lea.vmem %s17, %s611
        %p613 = pneg %p443
        %p614 = pneg %p440
        %p615 = scmp.lt.s32.totalorder %s34, 1
        %s616 = scalar_select %p615, %s34, 1
        %s617 = smul.addr %s616, 10
        %s618 = smul.addr %s617, 8
        %s619 = scalar_lea.vmem %s18, %s618
        %p620 = scmp.lt.s32.totalorder %s34, 1
        %s621 = scalar_select %p620, %s34, 1
        %s622 = smul.addr %s621, 10
        %s623 = smul.addr %s622, 4
        %s624 = scalar_lea.vmem %s0, %s623
        %p625 = scmp.lt.s32.totalorder %s34, 1
        %s626 = scalar_select %p625, %s34, 1
        %s627 = smul.addr %s626, 10
        %s628 = smul.addr %s627, 8
        %s629 = scalar_lea.vmem %s17, %s628
        %p630 = scmp.lt.s32.totalorder %s34, 1
        %s631 = scalar_select %p630, %s34, 1
        %s632 = smul.addr %s631, 10
        %s633 = smul.addr %s632, 8
        %s634 = scalar_lea.vmem %s18, %s633
        %v636 = vld [vmem:[%s624] sm:$0xf]
        %v637 = vld [vmem:[%s624 + $0x4] sm:$0xf]
        %v638 = vld [vmem:[%s624 + $0x8] sm:$0xf]
        %v639 = vld [vmem:[%s624 + $0xc] sm:$0xf]
        %v640 = vld [vmem:[%s624 + $0x10] sm:$0xf]
        %v641 = vld [vmem:[%s624 + $0x14] sm:$0xf]
        %v642 = vld [vmem:[%s624 + $0x18] sm:$0xf]
        %v643 = vld [vmem:[%s624 + $0x1c] sm:$0xf]
        %v644 = vld [vmem:[%s624 + $0x20] sm:$0xf]
        %v645 = vld [vmem:[%s624 + $0x24] sm:$0xf]
        %v646 = vld [vmem:[%s2] sm:$0x3]
        %v647 = vld [vmem:[#allocation3] sm:$0xff]
        %v648 = vld [vmem:[#allocation3 + $0x8] sm:$0xff]
        %v649 = vld [vmem:[#allocation3 + $0x10] sm:$0xff]
        %v650 = vld [vmem:[#allocation3 + $0x18] sm:$0xff]
        %v651 = vld [vmem:[#allocation3 + $0x20] sm:$0xff]
        %v662 = vunpack.c.l.b16 %v636
        %v663 = vunpack.c.l.b16 %v637
        %v664 = vunpack.c.l.b16 %v638
        %v665 = vunpack.c.l.b16 %v639
        %v666 = vunpack.c.l.b16 %v640
        %v667 = vunpack.c.l.b16 %v641
        %v668 = vunpack.c.l.b16 %v642
        %v669 = vunpack.c.l.b16 %v643
        %v670 = vunpack.c.l.b16 %v644
        %v671 = vunpack.c.l.b16 %v645
        %v672 = vpack.c.b16 %v663, %v662
        %v673 = vpack.c.b16 %v665, %v664
        %v674 = vpack.c.b16 %v667, %v666
        %v675 = vpack.c.b16 %v669, %v668
        %v676 = vpack.c.b16 %v671, %v670
        %v682 = vunpack.c.l.b16 %v647
        %v683 = vunpack.c.h.b16 %v647
        %v684 = vunpack.c.l.b16 %v648
        %v685 = vunpack.c.h.b16 %v648
        %v686 = vunpack.c.l.b16 %v649
        %v687 = vunpack.c.h.b16 %v649
        %v688 = vunpack.c.l.b16 %v650
        %v689 = vunpack.c.h.b16 %v650
        %v690 = vunpack.c.l.b16 %v651
        %v691 = vunpack.c.h.b16 %v651
        %v692 = vpack.c.b16 %v684, %v682
        %v693 = vpack.c.b16 %v685, %v683
        %v694 = vpack.c.b16 %v688, %v686
        %v695 = vpack.c.b16 %v689, %v687
        %v696 = vpack.c.b16 %v690, %v690
        %v697 = vpack.c.b16 %v691, %v691
        %vm702 = vcmask 326656
        %v704 = vsel %vm702, %v672, 0
        %v707 = vsel %vm702, %v673, 0
        %v710 = vsel %vm702, %v674, 0
        %v713 = vsel %vm702, %v675, 0
        %v716 = vsel %vm702, %v676, 0
        %vm718 = vcmask 1043456
        %v720 = vsel %vm718, %v696, 0
        %v723 = vsel %vm718, %v697, 0
        %725 = vmatprep.subr.bf16.mxu0 0
        %726 = vmatpush1.bf16.msra.mxu0 0
        %727 = vmatprep.subr.bf16.mxu0 0
        %728 = vmatpush1.bf16.msra.mxu0 0
        %729 = vmatprep.subr.bf16.mxu0 0
        %730 = vmatpush1.bf16.msra.mxu0 0
        %731 = vmatprep.subr.bf16.mxu0 0
        %732 = vmatpush1.bf16.msra.mxu0 0
        %733 = vmatprep.subr.bf16.mxu0 0
        %734 = vmatpush1.bf16.msra.mxu0 0
        %735 = vmatprep.subr.bf16.mxu0 %v723
        %736 = vmatpush1.bf16.msra.mxu0 %v720
        %737 = vmatprep.subr.bf16.mxu0 %v695
        %738 = vmatpush1.bf16.msra.mxu0 %v694
        %739 = vmatprep.subr.bf16.mxu0 %v693
        %740 = vmatpush1.bf16.msra.mxu0 %v692
        %741 = vmatprep.subr.bf16.mxu0 0
        %742 = vmatpush2.bf16.msra.mxu0 0
        %743 = vmatprep.subr.bf16.mxu0 0
        %744 = vmatpush2.bf16.msra.mxu0 0
        %745 = vmatprep.subr.bf16.mxu0 0
        %746 = vmatpush2.bf16.msra.mxu0 0
        %747 = vmatprep.subr.bf16.mxu0 0
        %748 = vmatpush2.bf16.msra.mxu0 0
        %749 = vmatprep.subr.bf16.mxu0 0
        %750 = vmatpush2.bf16.msra.mxu0 0
        %751 = vmatprep.subr.bf16.mxu0 0
        %752 = vmatpush2.bf16.msra.mxu0 0
        %753 = vmatprep.subr.bf16.mxu0 0
        %754 = vmatpush2.bf16.msra.mxu0 0
        %755 = vmatprep.subr.bf16.mxu0 0
        %756 = vmatpush2.bf16.msra.mxu0 0
        %757 = vmatprep.mubr.bf16.mxu0 0
        %758 = vmatmul.mubr.bf16.gmra.mxu0 %v704
        %v759 = vpop.f32.mrf.mxu0
        %v760 = vadd.f32 0.0, %v759
        %v761 = vpop.f32.mrf.mxu0
        %v762 = vadd.f32 0.0, %v761
        %v763 = vpop.f32.mrf.mxu0
        %v764 = vadd.f32 0.0, %v763
        %v765 = vpop.f32.mrf.mxu0
        %v766 = vadd.f32 0.0, %v765
        %767 = vmatprep.mubr.bf16.mxu0 0
        %768 = vmatmul.mubr.bf16.gmra.mxu0 %v707
        %v769 = vpop.f32.mrf.mxu0
        %v770 = vadd.f32 0.0, %v769
        %v771 = vpop.f32.mrf.mxu0
        %v772 = vadd.f32 0.0, %v771
        %v773 = vpop.f32.mrf.mxu0
        %v774 = vadd.f32 0.0, %v773
        %v775 = vpop.f32.mrf.mxu0
        %v776 = vadd.f32 0.0, %v775
        %777 = vmatprep.mubr.bf16.mxu0 0
        %778 = vmatmul.mubr.bf16.gmra.mxu0 %v710
        %v779 = vpop.f32.mrf.mxu0
        %v780 = vadd.f32 0.0, %v779
        %v781 = vpop.f32.mrf.mxu0
        %v782 = vadd.f32 0.0, %v781
        %v783 = vpop.f32.mrf.mxu0
        %v784 = vadd.f32 0.0, %v783
        %v785 = vpop.f32.mrf.mxu0
        %v786 = vadd.f32 0.0, %v785
        %787 = vmatprep.mubr.bf16.mxu0 0
        %788 = vmatmul.mubr.bf16.gmra.mxu0 %v713
        %v789 = vpop.f32.mrf.mxu0
        %v790 = vadd.f32 0.0, %v789
        %v791 = vpop.f32.mrf.mxu0
        %v792 = vadd.f32 0.0, %v791
        %v793 = vpop.f32.mrf.mxu0
        %v794 = vadd.f32 0.0, %v793
        %v795 = vpop.f32.mrf.mxu0
        %v796 = vadd.f32 0.0, %v795
        %797 = vmatprep.mubr.bf16.mxu0 0
        %798 = vmatmul.mubr.bf16.gmra.mxu0 %v716
        %v799 = vpop.f32.mrf.mxu0
        %v800 = vadd.f32 0.0, %v799
        %v801 = vpop.f32.mrf.mxu0
        %v802 = vadd.f32 0.0, %v801
        %v803 = vpop.f32.mrf.mxu0
        %v804 = vadd.f32 0.0, %v803
        %v805 = vpop.f32.mrf.mxu0
        %v806 = vadd.f32 0.0, %v805
        %807 = vdwg.mxu0
        %v809 = vlaneseq
        %v810 = vshrl.u32 %v809, 7
        %v811 = vsub.s32 0, %v810
        %v812 = vrot.slane %v646, %v811
        %v813 = vlaneseq
        %v814 = vshrl.u32 %v813, 7
        %v815 = vsub.s32 1, %v814
        %v816 = vrot.slane %v646, %v815
        %v819 = vadd.f32 %v812, %v760
        %v820 = vadd.f32 %v816, %v762
        %v821 = vadd.f32 %v812, %v764
        %v822 = vadd.f32 %v816, %v766
        %v823 = vadd.f32 %v812, %v770
        %v824 = vadd.f32 %v816, %v772
        %v825 = vadd.f32 %v812, %v774
        %v826 = vadd.f32 %v816, %v776
        %v827 = vadd.f32 %v812, %v780
        %v828 = vadd.f32 %v816, %v782
        %v829 = vadd.f32 %v812, %v784
        %v830 = vadd.f32 %v816, %v786
        %v831 = vadd.f32 %v812, %v790
        %v832 = vadd.f32 %v816, %v792
        %v833 = vadd.f32 %v812, %v794
        %v834 = vadd.f32 %v816, %v796
        %v835 = vadd.f32 %v812, %v800
        %v836 = vadd.f32 %v816, %v802
        %v837 = vadd.f32 %v812, %v804
        %v838 = vadd.f32 %v816, %v806
        %v839 = vmax.f32 %v819, 0.0
        %v840 = vmax.f32 %v820, 0.0
        %v841 = vmax.f32 %v821, 0.0
        %v842 = vmax.f32 %v822, 0.0
        %v843 = vmax.f32 %v823, 0.0
        %v844 = vmax.f32 %v824, 0.0
        %v845 = vmax.f32 %v825, 0.0
        %v846 = vmax.f32 %v826, 0.0
        %v847 = vmax.f32 %v827, 0.0
        %v848 = vmax.f32 %v828, 0.0
        %v849 = vmax.f32 %v829, 0.0
        %v850 = vmax.f32 %v830, 0.0
        %v851 = vmax.f32 %v831, 0.0
        %v852 = vmax.f32 %v832, 0.0
        %v853 = vmax.f32 %v833, 0.0
        %v854 = vmax.f32 %v834, 0.0
        %v855 = vmax.f32 %v835, 0.0
        %v856 = vmax.f32 %v836, 0.0
        %v857 = vmax.f32 %v837, 0.0
        %v858 = vmax.f32 %v838, 0.0
        %v859 = vlaneseq
        %v860 = vshrl.u32 %v859, 7
        %v861 = vadd.s32 %v860, 8
        %v862 = vadd.s32 %v860, 16
        %v863 = vadd.s32 %v860, 24
        %v864 = vadd.s32 %v860, 32
        %v865 = vadd.s32 %v860, 40
        %v866 = vadd.s32 %v860, 48
        %v867 = vadd.s32 %v860, 56
        %v868 = vadd.s32 %v860, 64
        %v869 = vadd.s32 %v860, 72
        %v870 = vld [vmem:[%s4] sm:$0x1]
        %v871 = vrot.slane %v839, 6
        %v872 = vrot.slane %v840, 6
        %v873 = vrot.slane %v841, 6
        %v874 = vrot.slane %v842, 6
        %v875 = vrot.slane %v843, 6
        %v876 = vrot.slane %v844, 6
        %v877 = vrot.slane %v845, 6
        %v878 = vrot.slane %v846, 6
        %v879 = vrot.slane %v847, 6
        %v880 = vrot.slane %v848, 6
        %v881 = vrot.slane %v849, 6
        %v882 = vrot.slane %v850, 6
        %v883 = vrot.slane %v851, 6
        %v884 = vrot.slane %v852, 6
        %v885 = vrot.slane %v853, 6
        %v886 = vrot.slane %v854, 6
        %v887 = vrot.slane %v855, 6
        %v888 = vrot.slane %v856, 6
        %v889 = vrot.slane %v857, 6
        %v890 = vrot.slane %v858, 6
        %vm891 = vcmp.lt.s32.totalorder %v860, 2
        %v892 = vsel %vm891, %v887, %v889
        %v893 = vsel %vm891, %v888, %v890
        %v894 = vsel %vm891, %v885, %v887
        %v895 = vsel %vm891, %v886, %v888
        %v896 = vsel %vm891, %v883, %v885
        %v897 = vsel %vm891, %v884, %v886
        %v898 = vsel %vm891, %v881, %v883
        %v899 = vsel %vm891, %v882, %v884
        %v900 = vsel %vm891, %v879, %v881
        %v901 = vsel %vm891, %v880, %v882
        %v902 = vsel %vm891, %v877, %v879
        %v903 = vsel %vm891, %v878, %v880
        %v904 = vsel %vm891, %v875, %v877
        %v905 = vsel %vm891, %v876, %v878
        %v906 = vsel %vm891, %v873, %v875
        %v907 = vsel %vm891, %v874, %v876
        %v908 = vsel %vm891, %v871, %v873
        %v909 = vsel %vm891, %v872, %v874
        %v910 = vsel %vm891, %v889, %v871
        %v911 = vsel %vm891, %v890, %v872
        %vm912 = vcmp.ge.s32.totalorder %v860, 2
        %vm913 = vcmp.ge.s32.totalorder %v861, 2
        %vm914 = vcmp.ge.s32.totalorder %v862, 2
        %vm915 = vcmp.ge.s32.totalorder %v863, 2
        %vm916 = vcmp.ge.s32.totalorder %v864, 2
        %vm917 = vcmp.ge.s32.totalorder %v865, 2
        %vm918 = vcmp.ge.s32.totalorder %v866, 2
        %vm919 = vcmp.ge.s32.totalorder %v867, 2
        %vm920 = vcmp.ge.s32.totalorder %v868, 2
        %vm921 = vcmp.ge.s32.totalorder %v869, 2
        %v922 = vsel %vm912, 1, 0
        %v923 = vsel %vm913, 1, 0
        %v924 = vsel %vm914, 1, 0
        %v925 = vsel %vm915, 1, 0
        %v926 = vsel %vm916, 1, 0
        %v927 = vsel %vm917, 1, 0
        %v928 = vsel %vm918, 1, 0
        %v929 = vsel %vm919, 1, 0
        %v930 = vsel %vm920, 1, 0
        %v931 = vsel %vm921, 1, 0
        %vm932 = vcmp.eq.s32.totalorder %v922, 1
        %vm933 = vcmp.eq.s32.totalorder %v923, 1
        %vm934 = vcmp.eq.s32.totalorder %v924, 1
        %vm935 = vcmp.eq.s32.totalorder %v925, 1
        %vm936 = vcmp.eq.s32.totalorder %v926, 1
        %vm937 = vcmp.eq.s32.totalorder %v927, 1
        %vm938 = vcmp.eq.s32.totalorder %v928, 1
        %vm939 = vcmp.eq.s32.totalorder %v929, 1
        %vm940 = vcmp.eq.s32.totalorder %v930, 1
        %vm941 = vcmp.eq.s32.totalorder %v931, 1
        %v942 = vsel %vm932, %v910, 0.0
        %v943 = vsel %vm932, %v911, 0.0
        %v944 = vsel %vm933, %v908, 0.0
        %v945 = vsel %vm933, %v909, 0.0
        %v946 = vsel %vm934, %v906, 0.0
        %v947 = vsel %vm934, %v907, 0.0
        %v948 = vsel %vm935, %v904, 0.0
        %v949 = vsel %vm935, %v905, 0.0
        %v950 = vsel %vm936, %v902, 0.0
        %v951 = vsel %vm936, %v903, 0.0
        %v952 = vsel %vm937, %v900, 0.0
        %v953 = vsel %vm937, %v901, 0.0
        %v954 = vsel %vm938, %v898, 0.0
        %v955 = vsel %vm938, %v899, 0.0
        %v956 = vsel %vm939, %v896, 0.0
        %v957 = vsel %vm939, %v897, 0.0
        %v958 = vsel %vm940, %v894, 0.0
        %v959 = vsel %vm940, %v895, 0.0
        %v960 = vsel %vm941, %v892, 0.0
        %v961 = vsel %vm941, %v893, 0.0
        %v962 = vpack.c.bf16 %v944, %v942
        %v963 = vpack.c.bf16 %v945, %v943
        %v964 = vpack.c.bf16 %v948, %v946
        %v965 = vpack.c.bf16 %v949, %v947
        %v966 = vpack.c.bf16 %v952, %v950
        %v967 = vpack.c.bf16 %v953, %v951
        %v968 = vpack.c.bf16 %v956, %v954
        %v969 = vpack.c.bf16 %v957, %v955
        %v970 = vpack.c.bf16 %v960, %v958
        %v971 = vpack.c.bf16 %v961, %v959
        %v972 = vld [vmem:[%s3] sm:$0xf]
        %v973 = vld [vmem:[%s3 + $0x4] sm:$0xf]
        %v974 = vld [vmem:[%s3 + $0x8] sm:$0xf]
        %v975 = vld [vmem:[%s3 + $0xc] sm:$0xf]
        %v976 = vld [vmem:[%s3 + $0x10] sm:$0xf]
        %v977 = vld [vmem:[%s3 + $0x14] sm:$0xf]
        %v978 = vld [vmem:[%s3 + $0x18] sm:$0xf]
        %v979 = vld [vmem:[%s3 + $0x1c] sm:$0xf]
        %v980 = vld [vmem:[%s3 + $0x20] sm:$0xf]
        %v981 = vld [vmem:[%s3 + $0x24] sm:$0xf]
        %v982 = vld [vmem:[%s3 + $0x28] sm:$0xf]
        %v983 = vld [vmem:[%s3 + $0x2c] sm:$0xf]
        %v984 = vld [vmem:[%s3 + $0x30] sm:$0xf]
        %v985 = vld [vmem:[%s3 + $0x34] sm:$0xf]
        %v986 = vld [vmem:[%s3 + $0x38] sm:$0xf]
        %v987 = vld [vmem:[%s3 + $0x3c] sm:$0xf]
        %v988 = vld [vmem:[%s3 + $0x40] sm:$0xf]
        %v989 = vld [vmem:[%s3 + $0x44] sm:$0xf]
        %v990 = vld [vmem:[%s3 + $0x48] sm:$0xf]
        %v991 = vld [vmem:[%s3 + $0x4c] sm:$0xf]
        %v992 = vld [vmem:[%s3 + $0x50] sm:$0xf]
        %v993 = vld [vmem:[%s3 + $0x54] sm:$0xf]
        %v994 = vld [vmem:[%s3 + $0x58] sm:$0xf]
        %v995 = vld [vmem:[%s3 + $0x5c] sm:$0xf]
        %v996 = vld [vmem:[%s3 + $0x60] sm:$0xf]
        %v997 = vld [vmem:[%s3 + $0x64] sm:$0xf]
        %v998 = vld [vmem:[%s3 + $0x68] sm:$0xf]
        %v999 = vld [vmem:[%s3 + $0x6c] sm:$0xf]
        %v1000 = vld [vmem:[%s3 + $0x70] sm:$0xf]
        %v1001 = vld [vmem:[%s3 + $0x74] sm:$0xf]
        %v1002 = vld [vmem:[%s3 + $0x78] sm:$0xf]
        %v1003 = vld [vmem:[%s3 + $0x7c] sm:$0xf]
        %v1036 = vunpack.c.l.b16 %v972
        %v1037 = vunpack.c.l.b16 %v973
        %v1038 = vunpack.c.l.b16 %v974
        %v1039 = vunpack.c.l.b16 %v975
        %v1040 = vunpack.c.l.b16 %v976
        %v1041 = vunpack.c.l.b16 %v977
        %v1042 = vunpack.c.l.b16 %v978
        %v1043 = vunpack.c.l.b16 %v979
        %v1044 = vunpack.c.l.b16 %v980
        %v1045 = vunpack.c.l.b16 %v981
        %v1046 = vunpack.c.l.b16 %v982
        %v1047 = vunpack.c.l.b16 %v983
        %v1048 = vunpack.c.l.b16 %v984
        %v1049 = vunpack.c.l.b16 %v985
        %v1050 = vunpack.c.l.b16 %v986
        %v1051 = vunpack.c.l.b16 %v987
        %v1052 = vunpack.c.l.b16 %v988
        %v1053 = vunpack.c.l.b16 %v989
        %v1054 = vunpack.c.l.b16 %v990
        %v1055 = vunpack.c.l.b16 %v991
        %v1056 = vunpack.c.l.b16 %v992
        %v1057 = vunpack.c.l.b16 %v993
        %v1058 = vunpack.c.l.b16 %v994
        %v1059 = vunpack.c.l.b16 %v995
        %v1060 = vunpack.c.l.b16 %v996
        %v1061 = vunpack.c.l.b16 %v997
        %v1062 = vunpack.c.l.b16 %v998
        %v1063 = vunpack.c.l.b16 %v999
        %v1064 = vunpack.c.l.b16 %v1000
        %v1065 = vunpack.c.l.b16 %v1001
        %v1066 = vunpack.c.l.b16 %v1002
        %v1067 = vunpack.c.l.b16 %v1003
        %v1068 = vpack.c.b16 %v1037, %v1036
        %v1069 = vpack.c.b16 %v1039, %v1038
        %v1070 = vpack.c.b16 %v1041, %v1040
        %v1071 = vpack.c.b16 %v1043, %v1042
        %v1072 = vpack.c.b16 %v1045, %v1044
        %v1073 = vpack.c.b16 %v1047, %v1046
        %v1074 = vpack.c.b16 %v1049, %v1048
        %v1075 = vpack.c.b16 %v1051, %v1050
        %v1076 = vpack.c.b16 %v1053, %v1052
        %v1077 = vpack.c.b16 %v1055, %v1054
        %v1078 = vpack.c.b16 %v1057, %v1056
        %v1079 = vpack.c.b16 %v1059, %v1058
        %v1080 = vpack.c.b16 %v1061, %v1060
        %v1081 = vpack.c.b16 %v1063, %v1062
        %v1082 = vpack.c.b16 %v1065, %v1064
        %v1083 = vpack.c.b16 %v1067, %v1066
        %1100 = vmatprep.subr.bf16.mxu0 0
        %1101 = vmatpush1.bf16.msra.mxu0 %v1075
        %1102 = vmatprep.subr.bf16.mxu0 0
        %1103 = vmatpush1.bf16.msra.mxu0 %v1074
        %1104 = vmatprep.subr.bf16.mxu0 0
        %1105 = vmatpush1.bf16.msra.mxu0 %v1073
        %1106 = vmatprep.subr.bf16.mxu0 0
        %1107 = vmatpush1.bf16.msra.mxu0 %v1072
        %1108 = vmatprep.subr.bf16.mxu0 0
        %1109 = vmatpush1.bf16.msra.mxu0 %v1071
        %1110 = vmatprep.subr.bf16.mxu0 0
        %1111 = vmatpush1.bf16.msra.mxu0 %v1070
        %1112 = vmatprep.subr.bf16.mxu0 0
        %1113 = vmatpush1.bf16.msra.mxu0 %v1069
        %1114 = vmatprep.subr.bf16.mxu0 0
        %1115 = vmatpush1.bf16.msra.mxu0 %v1068
        %1116 = vmatprep.subr.bf16.mxu0 0
        %1117 = vmatpush2.bf16.msra.mxu0 %v1083
        %1118 = vmatprep.subr.bf16.mxu0 0
        %1119 = vmatpush2.bf16.msra.mxu0 %v1082
        %1120 = vmatprep.subr.bf16.mxu0 0
        %1121 = vmatpush2.bf16.msra.mxu0 %v1081
        %1122 = vmatprep.subr.bf16.mxu0 0
        %1123 = vmatpush2.bf16.msra.mxu0 %v1080
        %1124 = vmatprep.subr.bf16.mxu0 0
        %1125 = vmatpush2.bf16.msra.mxu0 %v1079
        %1126 = vmatprep.subr.bf16.mxu0 0
        %1127 = vmatpush2.bf16.msra.mxu0 %v1078
        %1128 = vmatprep.subr.bf16.mxu0 0
        %1129 = vmatpush2.bf16.msra.mxu0 %v1077
        %1130 = vmatprep.subr.bf16.mxu0 0
        %1131 = vmatpush2.bf16.msra.mxu0 %v1076
        %1132 = vmatprep.mubr.bf16.mxu0 %v963
        %1133 = vmatmul.mubr.bf16.gmra.mxu0 %v962
        %v1134 = vpop.f32.mrf.mxu0
        %v1135 = vadd.f32 0.0, %v1134
        %v1136 = vpop.f32.mrf.mxu0
        %v1137 = vpop.f32.mrf.mxu0
        %v1138 = vadd.f32 0.0, %v1137
        %v1139 = vpop.f32.mrf.mxu0
        %1140 = vmatprep.mubr.bf16.mxu0 %v965
        %1141 = vmatmul.mubr.bf16.gmra.mxu0 %v964
        %v1142 = vpop.f32.mrf.mxu0
        %v1143 = vadd.f32 0.0, %v1142
        %v1144 = vpop.f32.mrf.mxu0
        %v1145 = vpop.f32.mrf.mxu0
        %v1146 = vadd.f32 0.0, %v1145
        %v1147 = vpop.f32.mrf.mxu0
        %1148 = vmatprep.mubr.bf16.mxu0 %v967
        %1149 = vmatmul.mubr.bf16.gmra.mxu0 %v966
        %v1150 = vpop.f32.mrf.mxu0
        %v1151 = vadd.f32 0.0, %v1150
        %v1152 = vpop.f32.mrf.mxu0
        %v1153 = vpop.f32.mrf.mxu0
        %v1154 = vadd.f32 0.0, %v1153
        %v1155 = vpop.f32.mrf.mxu0
        %1156 = vmatprep.mubr.bf16.mxu0 %v969
        %1157 = vmatmul.mubr.bf16.gmra.mxu0 %v968
        %v1158 = vpop.f32.mrf.mxu0
        %v1159 = vadd.f32 0.0, %v1158
        %v1160 = vpop.f32.mrf.mxu0
        %v1161 = vpop.f32.mrf.mxu0
        %v1162 = vadd.f32 0.0, %v1161
        %v1163 = vpop.f32.mrf.mxu0
        %1164 = vmatprep.mubr.bf16.mxu0 %v971
        %1165 = vmatmul.mubr.bf16.gmra.mxu0 %v970
        %v1166 = vpop.f32.mrf.mxu0
        %v1167 = vadd.f32 0.0, %v1166
        %v1168 = vpop.f32.mrf.mxu0
        %v1169 = vpop.f32.mrf.mxu0
        %v1170 = vadd.f32 0.0, %v1169
        %v1171 = vpop.f32.mrf.mxu0
        %1172 = vdwg.mxu0
        %v1174 = vlaneseq
        %v1175 = vshrl.u32 %v1174, 7
        %v1176 = vsub.s32 0, %v1175
        %v1177 = vrot.slane %v870, %v1176
        %v1179 = vadd.f32 %v1177, %v1135
        %v1180 = vadd.f32 %v1177, %v1138
        %v1181 = vadd.f32 %v1177, %v1143
        %v1182 = vadd.f32 %v1177, %v1146
        %v1183 = vadd.f32 %v1177, %v1151
        %v1184 = vadd.f32 %v1177, %v1154
        %v1185 = vadd.f32 %v1177, %v1159
        %v1186 = vadd.f32 %v1177, %v1162
        %v1187 = vadd.f32 %v1177, %v1167
        %v1188 = vadd.f32 %v1177, %v1170
        %v1189 = vrot.slane %v839, 7
        %v1190 = vrot.slane %v840, 7
        %v1191 = vrot.slane %v841, 7
        %v1192 = vrot.slane %v842, 7
        %v1193 = vrot.slane %v843, 7
        %v1194 = vrot.slane %v844, 7
        %v1195 = vrot.slane %v845, 7
        %v1196 = vrot.slane %v846, 7
        %v1197 = vrot.slane %v847, 7
        %v1198 = vrot.slane %v848, 7
        %v1199 = vrot.slane %v849, 7
        %v1200 = vrot.slane %v850, 7
        %v1201 = vrot.slane %v851, 7
        %v1202 = vrot.slane %v852, 7
        %v1203 = vrot.slane %v853, 7
        %v1204 = vrot.slane %v854, 7
        %v1205 = vrot.slane %v855, 7
        %v1206 = vrot.slane %v856, 7
        %v1207 = vrot.slane %v857, 7
        %v1208 = vrot.slane %v858, 7
        %vm1209 = vcmp.lt.s32.totalorder %v860, 1
        %v1210 = vsel %vm1209, %v1205, %v1207
        %v1211 = vsel %vm1209, %v1206, %v1208
        %v1212 = vsel %vm1209, %v1203, %v1205
        %v1213 = vsel %vm1209, %v1204, %v1206
        %v1214 = vsel %vm1209, %v1201, %v1203
        %v1215 = vsel %vm1209, %v1202, %v1204
        %v1216 = vsel %vm1209, %v1199, %v1201
        %v1217 = vsel %vm1209, %v1200, %v1202
        %v1218 = vsel %vm1209, %v1197, %v1199
        %v1219 = vsel %vm1209, %v1198, %v1200
        %v1220 = vsel %vm1209, %v1195, %v1197
        %v1221 = vsel %vm1209, %v1196, %v1198
        %v1222 = vsel %vm1209, %v1193, %v1195
        %v1223 = vsel %vm1209, %v1194, %v1196
        %v1224 = vsel %vm1209, %v1191, %v1193
        %v1225 = vsel %vm1209, %v1192, %v1194
        %v1226 = vsel %vm1209, %v1189, %v1191
        %v1227 = vsel %vm1209, %v1190, %v1192
        %v1228 = vsel %vm1209, %v1207, %v1189
        %v1229 = vsel %vm1209, %v1208, %v1190
        %vm1230 = vcmp.ge.s32.totalorder %v860, 1
        %vm1231 = vcmp.ge.s32.totalorder %v861, 1
        %vm1232 = vcmp.ge.s32.totalorder %v862, 1
        %vm1233 = vcmp.ge.s32.totalorder %v863, 1
        %vm1234 = vcmp.ge.s32.totalorder %v864, 1
        %vm1235 = vcmp.ge.s32.totalorder %v865, 1
        %vm1236 = vcmp.ge.s32.totalorder %v866, 1
        %vm1237 = vcmp.ge.s32.totalorder %v867, 1
        %vm1238 = vcmp.ge.s32.totalorder %v868, 1
        %vm1239 = vcmp.ge.s32.totalorder %v869, 1
        %v1240 = vsel %vm1230, 1, 0
        %v1241 = vsel %vm1231, 1, 0
        %v1242 = vsel %vm1232, 1, 0
        %v1243 = vsel %vm1233, 1, 0
        %v1244 = vsel %vm1234, 1, 0
        %v1245 = vsel %vm1235, 1, 0
        %v1246 = vsel %vm1236, 1, 0
        %v1247 = vsel %vm1237, 1, 0
        %v1248 = vsel %vm1238, 1, 0
        %v1249 = vsel %vm1239, 1, 0
        %vm1250 = vcmp.eq.s32.totalorder %v1240, 1
        %vm1251 = vcmp.eq.s32.totalorder %v1241, 1
        %vm1252 = vcmp.eq.s32.totalorder %v1242, 1
        %vm1253 = vcmp.eq.s32.totalorder %v1243, 1
        %vm1254 = vcmp.eq.s32.totalorder %v1244, 1
        %vm1255 = vcmp.eq.s32.totalorder %v1245, 1
        %vm1256 = vcmp.eq.s32.totalorder %v1246, 1
        %vm1257 = vcmp.eq.s32.totalorder %v1247, 1
        %vm1258 = vcmp.eq.s32.totalorder %v1248, 1
        %vm1259 = vcmp.eq.s32.totalorder %v1249, 1
        %v1260 = vsel %vm1250, %v1228, 0.0
        %v1261 = vsel %vm1250, %v1229, 0.0
        %v1262 = vsel %vm1251, %v1226, 0.0
        %v1263 = vsel %vm1251, %v1227, 0.0
        %v1264 = vsel %vm1252, %v1224, 0.0
        %v1265 = vsel %vm1252, %v1225, 0.0
        %v1266 = vsel %vm1253, %v1222, 0.0
        %v1267 = vsel %vm1253, %v1223, 0.0
        %v1268 = vsel %vm1254, %v1220, 0.0
        %v1269 = vsel %vm1254, %v1221, 0.0
        %v1270 = vsel %vm1255, %v1218, 0.0
        %v1271 = vsel %vm1255, %v1219, 0.0
        %v1272 = vsel %vm1256, %v1216, 0.0
        %v1273 = vsel %vm1256, %v1217, 0.0
        %v1274 = vsel %vm1257, %v1214, 0.0
        %v1275 = vsel %vm1257, %v1215, 0.0
        %v1276 = vsel %vm1258, %v1212, 0.0
        %v1277 = vsel %vm1258, %v1213, 0.0
        %v1278 = vsel %vm1259, %v1210, 0.0
        %v1279 = vsel %vm1259, %v1211, 0.0
        %v1280 = vpack.c.bf16 %v1262, %v1260
        %v1281 = vpack.c.bf16 %v1263, %v1261
        %v1282 = vpack.c.bf16 %v1266, %v1264
        %v1283 = vpack.c.bf16 %v1267, %v1265
        %v1284 = vpack.c.bf16 %v1270, %v1268
        %v1285 = vpack.c.bf16 %v1271, %v1269
        %v1286 = vpack.c.bf16 %v1274, %v1272
        %v1287 = vpack.c.bf16 %v1275, %v1273
        %v1288 = vpack.c.bf16 %v1278, %v1276
        %v1289 = vpack.c.bf16 %v1279, %v1277
        %s1290 = scalar_lea.vmem %s3, 128
        %v1291 = vld [vmem:[%s1290] sm:$0xf]
        %v1292 = vld [vmem:[%s1290 + $0x4] sm:$0xf]
        %v1293 = vld [vmem:[%s1290 + $0x8] sm:$0xf]
        %v1294 = vld [vmem:[%s1290 + $0xc] sm:$0xf]
        %v1295 = vld [vmem:[%s1290 + $0x10] sm:$0xf]
        %v1296 = vld [vmem:[%s1290 + $0x14] sm:$0xf]
        %v1297 = vld [vmem:[%s1290 + $0x18] sm:$0xf]
        %v1298 = vld [vmem:[%s1290 + $0x1c] sm:$0xf]
        %v1299 = vld [vmem:[%s1290 + $0x20] sm:$0xf]
        %v1300 = vld [vmem:[%s1290 + $0x24] sm:$0xf]
        %v1301 = vld [vmem:[%s1290 + $0x28] sm:$0xf]
        %v1302 = vld [vmem:[%s1290 + $0x2c] sm:$0xf]
        %v1303 = vld [vmem:[%s1290 + $0x30] sm:$0xf]
        %v1304 = vld [vmem:[%s1290 + $0x34] sm:$0xf]
        %v1305 = vld [vmem:[%s1290 + $0x38] sm:$0xf]
        %v1306 = vld [vmem:[%s1290 + $0x3c] sm:$0xf]
        %v1307 = vld [vmem:[%s1290 + $0x40] sm:$0xf]
        %v1308 = vld [vmem:[%s1290 + $0x44] sm:$0xf]
        %v1309 = vld [vmem:[%s1290 + $0x48] sm:$0xf]
        %v1310 = vld [vmem:[%s1290 + $0x4c] sm:$0xf]
        %v1311 = vld [vmem:[%s1290 + $0x50] sm:$0xf]
        %v1312 = vld [vmem:[%s1290 + $0x54] sm:$0xf]
        %v1313 = vld [vmem:[%s1290 + $0x58] sm:$0xf]
        %v1314 = vld [vmem:[%s1290 + $0x5c] sm:$0xf]
        %v1315 = vld [vmem:[%s1290 + $0x60] sm:$0xf]
        %v1316 = vld [vmem:[%s1290 + $0x64] sm:$0xf]
        %v1317 = vld [vmem:[%s1290 + $0x68] sm:$0xf]
        %v1318 = vld [vmem:[%s1290 + $0x6c] sm:$0xf]
        %v1319 = vld [vmem:[%s1290 + $0x70] sm:$0xf]
        %v1320 = vld [vmem:[%s1290 + $0x74] sm:$0xf]
        %v1321 = vld [vmem:[%s1290 + $0x78] sm:$0xf]
        %v1322 = vld [vmem:[%s1290 + $0x7c] sm:$0xf]
        %v1355 = vunpack.c.l.b16 %v1291
        %v1356 = vunpack.c.l.b16 %v1292
        %v1357 = vunpack.c.l.b16 %v1293
        %v1358 = vunpack.c.l.b16 %v1294
        %v1359 = vunpack.c.l.b16 %v1295
        %v1360 = vunpack.c.l.b16 %v1296
        %v1361 = vunpack.c.l.b16 %v1297
        %v1362 = vunpack.c.l.b16 %v1298
        %v1363 = vunpack.c.l.b16 %v1299
        %v1364 = vunpack.c.l.b16 %v1300
        %v1365 = vunpack.c.l.b16 %v1301
        %v1366 = vunpack.c.l.b16 %v1302
        %v1367 = vunpack.c.l.b16 %v1303
        %v1368 = vunpack.c.l.b16 %v1304
        %v1369 = vunpack.c.l.b16 %v1305
        %v1370 = vunpack.c.l.b16 %v1306
        %v1371 = vunpack.c.l.b16 %v1307
        %v1372 = vunpack.c.l.b16 %v1308
        %v1373 = vunpack.c.l.b16 %v1309
        %v1374 = vunpack.c.l.b16 %v1310
        %v1375 = vunpack.c.l.b16 %v1311
        %v1376 = vunpack.c.l.b16 %v1312
        %v1377 = vunpack.c.l.b16 %v1313
        %v1378 = vunpack.c.l.b16 %v1314
        %v1379 = vunpack.c.l.b16 %v1315
        %v1380 = vunpack.c.l.b16 %v1316
        %v1381 = vunpack.c.l.b16 %v1317
        %v1382 = vunpack.c.l.b16 %v1318
        %v1383 = vunpack.c.l.b16 %v1319
        %v1384 = vunpack.c.l.b16 %v1320
        %v1385 = vunpack.c.l.b16 %v1321
        %v1386 = vunpack.c.l.b16 %v1322
        %v1387 = vpack.c.b16 %v1356, %v1355
        %v1388 = vpack.c.b16 %v1358, %v1357
        %v1389 = vpack.c.b16 %v1360, %v1359
        %v1390 = vpack.c.b16 %v1362, %v1361
        %v1391 = vpack.c.b16 %v1364, %v1363
        %v1392 = vpack.c.b16 %v1366, %v1365
        %v1393 = vpack.c.b16 %v1368, %v1367
        %v1394 = vpack.c.b16 %v1370, %v1369
        %v1395 = vpack.c.b16 %v1372, %v1371
        %v1396 = vpack.c.b16 %v1374, %v1373
        %v1397 = vpack.c.b16 %v1376, %v1375
        %v1398 = vpack.c.b16 %v1378, %v1377
        %v1399 = vpack.c.b16 %v1380, %v1379
        %v1400 = vpack.c.b16 %v1382, %v1381
        %v1401 = vpack.c.b16 %v1384, %v1383
        %v1402 = vpack.c.b16 %v1386, %v1385
        %1419 = vmatprep.subr.bf16.mxu0 0
        %1420 = vmatpush1.bf16.msra.mxu0 %v1394
        %1421 = vmatprep.subr.bf16.mxu0 0
        %1422 = vmatpush1.bf16.msra.mxu0 %v1393
        %1423 = vmatprep.subr.bf16.mxu0 0
        %1424 = vmatpush1.bf16.msra.mxu0 %v1392
        %1425 = vmatprep.subr.bf16.mxu0 0
        %1426 = vmatpush1.bf16.msra.mxu0 %v1391
        %1427 = vmatprep.subr.bf16.mxu0 0
        %1428 = vmatpush1.bf16.msra.mxu0 %v1390
        %1429 = vmatprep.subr.bf16.mxu0 0
        %1430 = vmatpush1.bf16.msra.mxu0 %v1389
        %1431 = vmatprep.subr.bf16.mxu0 0
        %1432 = vmatpush1.bf16.msra.mxu0 %v1388
        %1433 = vmatprep.subr.bf16.mxu0 0
        %1434 = vmatpush1.bf16.msra.mxu0 %v1387
        %1435 = vmatprep.subr.bf16.mxu0 0
        %1436 = vmatpush2.bf16.msra.mxu0 %v1402
        %1437 = vmatprep.subr.bf16.mxu0 0
        %1438 = vmatpush2.bf16.msra.mxu0 %v1401
        %1439 = vmatprep.subr.bf16.mxu0 0
        %1440 = vmatpush2.bf16.msra.mxu0 %v1400
        %1441 = vmatprep.subr.bf16.mxu0 0
        %1442 = vmatpush2.bf16.msra.mxu0 %v1399
        %1443 = vmatprep.subr.bf16.mxu0 0
        %1444 = vmatpush2.bf16.msra.mxu0 %v1398
        %1445 = vmatprep.subr.bf16.mxu0 0
        %1446 = vmatpush2.bf16.msra.mxu0 %v1397
        %1447 = vmatprep.subr.bf16.mxu0 0
        %1448 = vmatpush2.bf16.msra.mxu0 %v1396
        %1449 = vmatprep.subr.bf16.mxu0 0
        %1450 = vmatpush2.bf16.msra.mxu0 %v1395
        %1451 = vmatprep.mubr.bf16.mxu0 %v1281
        %1452 = vmatmul.mubr.bf16.gmra.mxu0 %v1280
        %v1453 = vpop.f32.mrf.mxu0
        %v1454 = vadd.f32 0.0, %v1453
        %v1455 = vpop.f32.mrf.mxu0
        %v1456 = vpop.f32.mrf.mxu0
        %v1457 = vadd.f32 0.0, %v1456
        %v1458 = vpop.f32.mrf.mxu0
        %1459 = vmatprep.mubr.bf16.mxu0 %v1283
        %1460 = vmatmul.mubr.bf16.gmra.mxu0 %v1282
        %v1461 = vpop.f32.mrf.mxu0
        %v1462 = vadd.f32 0.0, %v1461
        %v1463 = vpop.f32.mrf.mxu0
        %v1464 = vpop.f32.mrf.mxu0
        %v1465 = vadd.f32 0.0, %v1464
        %v1466 = vpop.f32.mrf.mxu0
        %1467 = vmatprep.mubr.bf16.mxu0 %v1285
        %1468 = vmatmul.mubr.bf16.gmra.mxu0 %v1284
        %v1469 = vpop.f32.mrf.mxu0
        %v1470 = vadd.f32 0.0, %v1469
        %v1471 = vpop.f32.mrf.mxu0
        %v1472 = vpop.f32.mrf.mxu0
        %v1473 = vadd.f32 0.0, %v1472
        %v1474 = vpop.f32.mrf.mxu0
        %1475 = vmatprep.mubr.bf16.mxu0 %v1287
        %1476 = vmatmul.mubr.bf16.gmra.mxu0 %v1286
        %v1477 = vpop.f32.mrf.mxu0
        %v1478 = vadd.f32 0.0, %v1477
        %v1479 = vpop.f32.mrf.mxu0
        %v1480 = vpop.f32.mrf.mxu0
        %v1481 = vadd.f32 0.0, %v1480
        %v1482 = vpop.f32.mrf.mxu0
        %1483 = vmatprep.mubr.bf16.mxu0 %v1289
        %1484 = vmatmul.mubr.bf16.gmra.mxu0 %v1288
        %v1485 = vpop.f32.mrf.mxu0
        %v1486 = vadd.f32 0.0, %v1485
        %v1487 = vpop.f32.mrf.mxu0
        %v1488 = vpop.f32.mrf.mxu0
        %v1489 = vadd.f32 0.0, %v1488
        %v1490 = vpop.f32.mrf.mxu0
        %1491 = vdwg.mxu0
        %v1492 = vadd.f32 %v1179, %v1454
        %v1493 = vadd.f32 %v1180, %v1457
        %v1494 = vadd.f32 %v1181, %v1462
        %v1495 = vadd.f32 %v1182, %v1465
        %v1496 = vadd.f32 %v1183, %v1470
        %v1497 = vadd.f32 %v1184, %v1473
        %v1498 = vadd.f32 %v1185, %v1478
        %v1499 = vadd.f32 %v1186, %v1481
        %v1500 = vadd.f32 %v1187, %v1486
        %v1501 = vadd.f32 %v1188, %v1489
        %v1502 = vpack.c.bf16 %v841, %v839
        %v1503 = vpack.c.bf16 %v842, %v840
        %v1504 = vpack.c.bf16 %v845, %v843
        %v1505 = vpack.c.bf16 %v846, %v844
        %v1506 = vpack.c.bf16 %v849, %v847
        %v1507 = vpack.c.bf16 %v850, %v848
        %v1508 = vpack.c.bf16 %v853, %v851
        %v1509 = vpack.c.bf16 %v854, %v852
        %v1510 = vpack.c.bf16 %v857, %v855
        %v1511 = vpack.c.bf16 %v858, %v856
        %s1512 = scalar_lea.vmem %s3, 256
        %v1513 = vld [vmem:[%s1512] sm:$0xf]
        %v1514 = vld [vmem:[%s1512 + $0x4] sm:$0xf]
        %v1515 = vld [vmem:[%s1512 + $0x8] sm:$0xf]
        %v1516 = vld [vmem:[%s1512 + $0xc] sm:$0xf]
        %v1517 = vld [vmem:[%s1512 + $0x10] sm:$0xf]
        %v1518 = vld [vmem:[%s1512 + $0x14] sm:$0xf]
        %v1519 = vld [vmem:[%s1512 + $0x18] sm:$0xf]
        %v1520 = vld [vmem:[%s1512 + $0x1c] sm:$0xf]
        %v1521 = vld [vmem:[%s1512 + $0x20] sm:$0xf]
        %v1522 = vld [vmem:[%s1512 + $0x24] sm:$0xf]
        %v1523 = vld [vmem:[%s1512 + $0x28] sm:$0xf]
        %v1524 = vld [vmem:[%s1512 + $0x2c] sm:$0xf]
        %v1525 = vld [vmem:[%s1512 + $0x30] sm:$0xf]
        %v1526 = vld [vmem:[%s1512 + $0x34] sm:$0xf]
        %v1527 = vld [vmem:[%s1512 + $0x38] sm:$0xf]
        %v1528 = vld [vmem:[%s1512 + $0x3c] sm:$0xf]
        %v1529 = vld [vmem:[%s1512 + $0x40] sm:$0xf]
        %v1530 = vld [vmem:[%s1512 + $0x44] sm:$0xf]
        %v1531 = vld [vmem:[%s1512 + $0x48] sm:$0xf]
        %v1532 = vld [vmem:[%s1512 + $0x4c] sm:$0xf]
        %v1533 = vld [vmem:[%s1512 + $0x50] sm:$0xf]
        %v1534 = vld [vmem:[%s1512 + $0x54] sm:$0xf]
        %v1535 = vld [vmem:[%s1512 + $0x58] sm:$0xf]
        %v1536 = vld [vmem:[%s1512 + $0x5c] sm:$0xf]
        %v1537 = vld [vmem:[%s1512 + $0x60] sm:$0xf]
        %v1538 = vld [vmem:[%s1512 + $0x64] sm:$0xf]
        %v1539 = vld [vmem:[%s1512 + $0x68] sm:$0xf]
        %v1540 = vld [vmem:[%s1512 + $0x6c] sm:$0xf]
        %v1541 = vld [vmem:[%s1512 + $0x70] sm:$0xf]
        %v1542 = vld [vmem:[%s1512 + $0x74] sm:$0xf]
        %v1543 = vld [vmem:[%s1512 + $0x78] sm:$0xf]
        %v1544 = vld [vmem:[%s1512 + $0x7c] sm:$0xf]
        %v1577 = vunpack.c.l.b16 %v1513
        %v1578 = vunpack.c.l.b16 %v1514
        %v1579 = vunpack.c.l.b16 %v1515
        %v1580 = vunpack.c.l.b16 %v1516
        %v1581 = vunpack.c.l.b16 %v1517
        %v1582 = vunpack.c.l.b16 %v1518
        %v1583 = vunpack.c.l.b16 %v1519
        %v1584 = vunpack.c.l.b16 %v1520
        %v1585 = vunpack.c.l.b16 %v1521
        %v1586 = vunpack.c.l.b16 %v1522
        %v1587 = vunpack.c.l.b16 %v1523
        %v1588 = vunpack.c.l.b16 %v1524
        %v1589 = vunpack.c.l.b16 %v1525
        %v1590 = vunpack.c.l.b16 %v1526
        %v1591 = vunpack.c.l.b16 %v1527
        %v1592 = vunpack.c.l.b16 %v1528
        %v1593 = vunpack.c.l.b16 %v1529
        %v1594 = vunpack.c.l.b16 %v1530
        %v1595 = vunpack.c.l.b16 %v1531
        %v1596 = vunpack.c.l.b16 %v1532
        %v1597 = vunpack.c.l.b16 %v1533
        %v1598 = vunpack.c.l.b16 %v1534
        %v1599 = vunpack.c.l.b16 %v1535
        %v1600 = vunpack.c.l.b16 %v1536
        %v1601 = vunpack.c.l.b16 %v1537
        %v1602 = vunpack.c.l.b16 %v1538
        %v1603 = vunpack.c.l.b16 %v1539
        %v1604 = vunpack.c.l.b16 %v1540
        %v1605 = vunpack.c.l.b16 %v1541
        %v1606 = vunpack.c.l.b16 %v1542
        %v1607 = vunpack.c.l.b16 %v1543
        %v1608 = vunpack.c.l.b16 %v1544
        %v1609 = vpack.c.b16 %v1578, %v1577
        %v1610 = vpack.c.b16 %v1580, %v1579
        %v1611 = vpack.c.b16 %v1582, %v1581
        %v1612 = vpack.c.b16 %v1584, %v1583
        %v1613 = vpack.c.b16 %v1586, %v1585
        %v1614 = vpack.c.b16 %v1588, %v1587
        %v1615 = vpack.c.b16 %v1590, %v1589
        %v1616 = vpack.c.b16 %v1592, %v1591
        %v1617 = vpack.c.b16 %v1594, %v1593
        %v1618 = vpack.c.b16 %v1596, %v1595
        %v1619 = vpack.c.b16 %v1598, %v1597
        %v1620 = vpack.c.b16 %v1600, %v1599
        %v1621 = vpack.c.b16 %v1602, %v1601
        %v1622 = vpack.c.b16 %v1604, %v1603
        %v1623 = vpack.c.b16 %v1606, %v1605
        %v1624 = vpack.c.b16 %v1608, %v1607
        %1641 = vmatprep.subr.bf16.mxu0 0
        %1642 = vmatpush1.bf16.msra.mxu0 %v1616
        %1643 = vmatprep.subr.bf16.mxu0 0
        %1644 = vmatpush1.bf16.msra.mxu0 %v1615
        %1645 = vmatprep.subr.bf16.mxu0 0
        %1646 = vmatpush1.bf16.msra.mxu0 %v1614
        %1647 = vmatprep.subr.bf16.mxu0 0
        %1648 = vmatpush1.bf16.msra.mxu0 %v1613
        %1649 = vmatprep.subr.bf16.mxu0 0
        %1650 = vmatpush1.bf16.msra.mxu0 %v1612
        %1651 = vmatprep.subr.bf16.mxu0 0
        %1652 = vmatpush1.bf16.msra.mxu0 %v1611
        %1653 = vmatprep.subr.bf16.mxu0 0
        %1654 = vmatpush1.bf16.msra.mxu0 %v1610
        %1655 = vmatprep.subr.bf16.mxu0 0
        %1656 = vmatpush1.bf16.msra.mxu0 %v1609
        %1657 = vmatprep.subr.bf16.mxu0 0
        %1658 = vmatpush2.bf16.msra.mxu0 %v1624
        %1659 = vmatprep.subr.bf16.mxu0 0
        %1660 = vmatpush2.bf16.msra.mxu0 %v1623
        %1661 = vmatprep.subr.bf16.mxu0 0
        %1662 = vmatpush2.bf16.msra.mxu0 %v1622
        %1663 = vmatprep.subr.bf16.mxu0 0
        %1664 = vmatpush2.bf16.msra.mxu0 %v1621
        %1665 = vmatprep.subr.bf16.mxu0 0
        %1666 = vmatpush2.bf16.msra.mxu0 %v1620
        %1667 = vmatprep.subr.bf16.mxu0 0
        %1668 = vmatpush2.bf16.msra.mxu0 %v1619
        %1669 = vmatprep.subr.bf16.mxu0 0
        %1670 = vmatpush2.bf16.msra.mxu0 %v1618
        %1671 = vmatprep.subr.bf16.mxu0 0
        %1672 = vmatpush2.bf16.msra.mxu0 %v1617
        %1673 = vmatprep.mubr.bf16.mxu0 %v1503
        %1674 = vmatmul.mubr.bf16.gmra.mxu0 %v1502
        %v1675 = vpop.f32.mrf.mxu0
        %v1676 = vadd.f32 0.0, %v1675
        %v1677 = vpop.f32.mrf.mxu0
        %v1678 = vpop.f32.mrf.mxu0
        %v1679 = vadd.f32 0.0, %v1678
        %v1680 = vpop.f32.mrf.mxu0
        %1681 = vmatprep.mubr.bf16.mxu0 %v1505
        %1682 = vmatmul.mubr.bf16.gmra.mxu0 %v1504
        %v1683 = vpop.f32.mrf.mxu0
        %v1684 = vadd.f32 0.0, %v1683
        %v1685 = vpop.f32.mrf.mxu0
        %v1686 = vpop.f32.mrf.mxu0
        %v1687 = vadd.f32 0.0, %v1686
        %v1688 = vpop.f32.mrf.mxu0
        %1689 = vmatprep.mubr.bf16.mxu0 %v1507
        %1690 = vmatmul.mubr.bf16.gmra.mxu0 %v1506
        %v1691 = vpop.f32.mrf.mxu0
        %v1692 = vadd.f32 0.0, %v1691
        %v1693 = vpop.f32.mrf.mxu0
        %v1694 = vpop.f32.mrf.mxu0
        %v1695 = vadd.f32 0.0, %v1694
        %v1696 = vpop.f32.mrf.mxu0
        %1697 = vmatprep.mubr.bf16.mxu0 %v1509
        %1698 = vmatmul.mubr.bf16.gmra.mxu0 %v1508
        %v1699 = vpop.f32.mrf.mxu0
        %v1700 = vadd.f32 0.0, %v1699
        %v1701 = vpop.f32.mrf.mxu0
        %v1702 = vpop.f32.mrf.mxu0
        %v1703 = vadd.f32 0.0, %v1702
        %v1704 = vpop.f32.mrf.mxu0
        %1705 = vmatprep.mubr.bf16.mxu0 %v1511
        %1706 = vmatmul.mubr.bf16.gmra.mxu0 %v1510
        %v1707 = vpop.f32.mrf.mxu0
        %v1708 = vadd.f32 0.0, %v1707
        %v1709 = vpop.f32.mrf.mxu0
        %v1710 = vpop.f32.mrf.mxu0
        %v1711 = vadd.f32 0.0, %v1710
        %v1712 = vpop.f32.mrf.mxu0
        %1713 = vdwg.mxu0
        %v1714 = vadd.f32 %v1492, %v1676
        %v1715 = vadd.f32 %v1493, %v1679
        %v1716 = vadd.f32 %v1494, %v1684
        %v1717 = vadd.f32 %v1495, %v1687
        %v1718 = vadd.f32 %v1496, %v1692
        %v1719 = vadd.f32 %v1497, %v1695
        %v1720 = vadd.f32 %v1498, %v1700
        %v1721 = vadd.f32 %v1499, %v1703
        %v1722 = vadd.f32 %v1500, %v1708
        %v1723 = vadd.f32 %v1501, %v1711
        %v1724 = vrot.slane %v839, 1
        %v1725 = vrot.slane %v840, 1
        %v1726 = vrot.slane %v841, 1
        %v1727 = vrot.slane %v842, 1
        %v1728 = vrot.slane %v843, 1
        %v1729 = vrot.slane %v844, 1
        %v1730 = vrot.slane %v845, 1
        %v1731 = vrot.slane %v846, 1
        %v1732 = vrot.slane %v847, 1
        %v1733 = vrot.slane %v848, 1
        %v1734 = vrot.slane %v849, 1
        %v1735 = vrot.slane %v850, 1
        %v1736 = vrot.slane %v851, 1
        %v1737 = vrot.slane %v852, 1
        %v1738 = vrot.slane %v853, 1
        %v1739 = vrot.slane %v854, 1
        %v1740 = vrot.slane %v855, 1
        %v1741 = vrot.slane %v856, 1
        %v1742 = vrot.slane %v857, 1
        %v1743 = vrot.slane %v858, 1
        %vm1744 = vcmp.lt.s32.totalorder %v860, 7
        %v1745 = vsel %vm1744, %v1740, %v1742
        %v1746 = vsel %vm1744, %v1741, %v1743
        %v1747 = vsel %vm1744, %v1738, %v1740
        %v1748 = vsel %vm1744, %v1739, %v1741
        %v1749 = vsel %vm1744, %v1736, %v1738
        %v1750 = vsel %vm1744, %v1737, %v1739
        %v1751 = vsel %vm1744, %v1734, %v1736
        %v1752 = vsel %vm1744, %v1735, %v1737
        %v1753 = vsel %vm1744, %v1732, %v1734
        %v1754 = vsel %vm1744, %v1733, %v1735
        %v1755 = vsel %vm1744, %v1730, %v1732
        %v1756 = vsel %vm1744, %v1731, %v1733
        %v1757 = vsel %vm1744, %v1728, %v1730
        %v1758 = vsel %vm1744, %v1729, %v1731
        %v1759 = vsel %vm1744, %v1726, %v1728
        %v1760 = vsel %vm1744, %v1727, %v1729
        %v1761 = vsel %vm1744, %v1724, %v1726
        %v1762 = vsel %vm1744, %v1725, %v1727
        %v1763 = vsel %vm1744, %v1742, %v1724
        %v1764 = vsel %vm1744, %v1743, %v1725
        %vm1765 = vcmp.lt.s32.totalorder %v860, 79
        %vm1766 = vcmp.lt.s32.totalorder %v861, 79
        %vm1767 = vcmp.lt.s32.totalorder %v862, 79
        %vm1768 = vcmp.lt.s32.totalorder %v863, 79
        %vm1769 = vcmp.lt.s32.totalorder %v864, 79
        %vm1770 = vcmp.lt.s32.totalorder %v865, 79
        %vm1771 = vcmp.lt.s32.totalorder %v866, 79
        %vm1772 = vcmp.lt.s32.totalorder %v867, 79
        %vm1773 = vcmp.lt.s32.totalorder %v868, 79
        %vm1774 = vcmp.lt.s32.totalorder %v869, 79
        %v1775 = vsel %vm1765, 1, 0
        %v1776 = vsel %vm1766, 1, 0
        %v1777 = vsel %vm1767, 1, 0
        %v1778 = vsel %vm1768, 1, 0
        %v1779 = vsel %vm1769, 1, 0
        %v1780 = vsel %vm1770, 1, 0
        %v1781 = vsel %vm1771, 1, 0
        %v1782 = vsel %vm1772, 1, 0
        %v1783 = vsel %vm1773, 1, 0
        %v1784 = vsel %vm1774, 1, 0
        %vm1785 = vcmp.eq.s32.totalorder %v1775, 1
        %vm1786 = vcmp.eq.s32.totalorder %v1776, 1
        %vm1787 = vcmp.eq.s32.totalorder %v1777, 1
        %vm1788 = vcmp.eq.s32.totalorder %v1778, 1
        %vm1789 = vcmp.eq.s32.totalorder %v1779, 1
        %vm1790 = vcmp.eq.s32.totalorder %v1780, 1
        %vm1791 = vcmp.eq.s32.totalorder %v1781, 1
        %vm1792 = vcmp.eq.s32.totalorder %v1782, 1
        %vm1793 = vcmp.eq.s32.totalorder %v1783, 1
        %vm1794 = vcmp.eq.s32.totalorder %v1784, 1
        %v1795 = vsel %vm1785, %v1761, 0.0
        %v1796 = vsel %vm1785, %v1762, 0.0
        %v1797 = vsel %vm1786, %v1759, 0.0
        %v1798 = vsel %vm1786, %v1760, 0.0
        %v1799 = vsel %vm1787, %v1757, 0.0
        %v1800 = vsel %vm1787, %v1758, 0.0
        %v1801 = vsel %vm1788, %v1755, 0.0
        %v1802 = vsel %vm1788, %v1756, 0.0
        %v1803 = vsel %vm1789, %v1753, 0.0
        %v1804 = vsel %vm1789, %v1754, 0.0
        %v1805 = vsel %vm1790, %v1751, 0.0
        %v1806 = vsel %vm1790, %v1752, 0.0
        %v1807 = vsel %vm1791, %v1749, 0.0
        %v1808 = vsel %vm1791, %v1750, 0.0
        %v1809 = vsel %vm1792, %v1747, 0.0
        %v1810 = vsel %vm1792, %v1748, 0.0
        %v1811 = vsel %vm1793, %v1745, 0.0
        %v1812 = vsel %vm1793, %v1746, 0.0
        %v1813 = vsel %vm1794, %v1763, 0.0
        %v1814 = vsel %vm1794, %v1764, 0.0
        %v1815 = vpack.c.bf16 %v1797, %v1795
        %v1816 = vpack.c.bf16 %v1798, %v1796
        %v1817 = vpack.c.bf16 %v1801, %v1799
        %v1818 = vpack.c.bf16 %v1802, %v1800
        %v1819 = vpack.c.bf16 %v1805, %v1803
        %v1820 = vpack.c.bf16 %v1806, %v1804
        %v1821 = vpack.c.bf16 %v1809, %v1807
        %v1822 = vpack.c.bf16 %v1810, %v1808
        %v1823 = vpack.c.bf16 %v1813, %v1811
        %v1824 = vpack.c.bf16 %v1814, %v1812
        %s1825 = scalar_lea.vmem %s3, 384
        %v1826 = vld [vmem:[%s1825] sm:$0xf]
        %v1827 = vld [vmem:[%s1825 + $0x4] sm:$0xf]
        %v1828 = vld [vmem:[%s1825 + $0x8] sm:$0xf]
        %v1829 = vld [vmem:[%s1825 + $0xc] sm:$0xf]
        %v1830 = vld [vmem:[%s1825 + $0x10] sm:$0xf]
        %v1831 = vld [vmem:[%s1825 + $0x14] sm:$0xf]
        %v1832 = vld [vmem:[%s1825 + $0x18] sm:$0xf]
        %v1833 = vld [vmem:[%s1825 + $0x1c] sm:$0xf]
        %v1834 = vld [vmem:[%s1825 + $0x20] sm:$0xf]
        %v1835 = vld [vmem:[%s1825 + $0x24] sm:$0xf]
        %v1836 = vld [vmem:[%s1825 + $0x28] sm:$0xf]
        %v1837 = vld [vmem:[%s1825 + $0x2c] sm:$0xf]
        %v1838 = vld [vmem:[%s1825 + $0x30] sm:$0xf]
        %v1839 = vld [vmem:[%s1825 + $0x34] sm:$0xf]
        %v1840 = vld [vmem:[%s1825 + $0x38] sm:$0xf]
        %v1841 = vld [vmem:[%s1825 + $0x3c] sm:$0xf]
        %v1842 = vld [vmem:[%s1825 + $0x40] sm:$0xf]
        %v1843 = vld [vmem:[%s1825 + $0x44] sm:$0xf]
        %v1844 = vld [vmem:[%s1825 + $0x48] sm:$0xf]
        %v1845 = vld [vmem:[%s1825 + $0x4c] sm:$0xf]
        %v1846 = vld [vmem:[%s1825 + $0x50] sm:$0xf]
        %v1847 = vld [vmem:[%s1825 + $0x54] sm:$0xf]
        %v1848 = vld [vmem:[%s1825 + $0x58] sm:$0xf]
        %v1849 = vld [vmem:[%s1825 + $0x5c] sm:$0xf]
        %v1850 = vld [vmem:[%s1825 + $0x60] sm:$0xf]
        %v1851 = vld [vmem:[%s1825 + $0x64] sm:$0xf]
        %v1852 = vld [vmem:[%s1825 + $0x68] sm:$0xf]
        %v1853 = vld [vmem:[%s1825 + $0x6c] sm:$0xf]
        %v1854 = vld [vmem:[%s1825 + $0x70] sm:$0xf]
        %v1855 = vld [vmem:[%s1825 + $0x74] sm:$0xf]
        %v1856 = vld [vmem:[%s1825 + $0x78] sm:$0xf]
        %v1857 = vld [vmem:[%s1825 + $0x7c] sm:$0xf]
        %v1890 = vunpack.c.l.b16 %v1826
        %v1891 = vunpack.c.l.b16 %v1827
        %v1892 = vunpack.c.l.b16 %v1828
        %v1893 = vunpack.c.l.b16 %v1829
        %v1894 = vunpack.c.l.b16 %v1830
        %v1895 = vunpack.c.l.b16 %v1831
        %v1896 = vunpack.c.l.b16 %v1832
        %v1897 = vunpack.c.l.b16 %v1833
        %v1898 = vunpack.c.l.b16 %v1834
        %v1899 = vunpack.c.l.b16 %v1835
        %v1900 = vunpack.c.l.b16 %v1836
        %v1901 = vunpack.c.l.b16 %v1837
        %v1902 = vunpack.c.l.b16 %v1838
        %v1903 = vunpack.c.l.b16 %v1839
        %v1904 = vunpack.c.l.b16 %v1840
        %v1905 = vunpack.c.l.b16 %v1841
        %v1906 = vunpack.c.l.b16 %v1842
        %v1907 = vunpack.c.l.b16 %v1843
        %v1908 = vunpack.c.l.b16 %v1844
        %v1909 = vunpack.c.l.b16 %v1845
        %v1910 = vunpack.c.l.b16 %v1846
        %v1911 = vunpack.c.l.b16 %v1847
        %v1912 = vunpack.c.l.b16 %v1848
        %v1913 = vunpack.c.l.b16 %v1849
        %v1914 = vunpack.c.l.b16 %v1850
        %v1915 = vunpack.c.l.b16 %v1851
        %v1916 = vunpack.c.l.b16 %v1852
        %v1917 = vunpack.c.l.b16 %v1853
        %v1918 = vunpack.c.l.b16 %v1854
        %v1919 = vunpack.c.l.b16 %v1855
        %v1920 = vunpack.c.l.b16 %v1856
        %v1921 = vunpack.c.l.b16 %v1857
        %v1922 = vpack.c.b16 %v1891, %v1890
        %v1923 = vpack.c.b16 %v1893, %v1892
        %v1924 = vpack.c.b16 %v1895, %v1894
        %v1925 = vpack.c.b16 %v1897, %v1896
        %v1926 = vpack.c.b16 %v1899, %v1898
        %v1927 = vpack.c.b16 %v1901, %v1900
        %v1928 = vpack.c.b16 %v1903, %v1902
        %v1929 = vpack.c.b16 %v1905, %v1904
        %v1930 = vpack.c.b16 %v1907, %v1906
        %v1931 = vpack.c.b16 %v1909, %v1908
        %v1932 = vpack.c.b16 %v1911, %v1910
        %v1933 = vpack.c.b16 %v1913, %v1912
        %v1934 = vpack.c.b16 %v1915, %v1914
        %v1935 = vpack.c.b16 %v1917, %v1916
        %v1936 = vpack.c.b16 %v1919, %v1918
        %v1937 = vpack.c.b16 %v1921, %v1920
        %1954 = vmatprep.subr.bf16.mxu0 0
        %1955 = vmatpush1.bf16.msra.mxu0 %v1929
        %1956 = vmatprep.subr.bf16.mxu0 0
        %1957 = vmatpush1.bf16.msra.mxu0 %v1928
        %1958 = vmatprep.subr.bf16.mxu0 0
        %1959 = vmatpush1.bf16.msra.mxu0 %v1927
        %1960 = vmatprep.subr.bf16.mxu0 0
        %1961 = vmatpush1.bf16.msra.mxu0 %v1926
        %1962 = vmatprep.subr.bf16.mxu0 0
        %1963 = vmatpush1.bf16.msra.mxu0 %v1925
        %1964 = vmatprep.subr.bf16.mxu0 0
        %1965 = vmatpush1.bf16.msra.mxu0 %v1924
        %1966 = vmatprep.subr.bf16.mxu0 0
        %1967 = vmatpush1.bf16.msra.mxu0 %v1923
        %1968 = vmatprep.subr.bf16.mxu0 0
        %1969 = vmatpush1.bf16.msra.mxu0 %v1922
        %1970 = vmatprep.subr.bf16.mxu0 0
        %1971 = vmatpush2.bf16.msra.mxu0 %v1937
        %1972 = vmatprep.subr.bf16.mxu0 0
        %1973 = vmatpush2.bf16.msra.mxu0 %v1936
        %1974 = vmatprep.subr.bf16.mxu0 0
        %1975 = vmatpush2.bf16.msra.mxu0 %v1935
        %1976 = vmatprep.subr.bf16.mxu0 0
        %1977 = vmatpush2.bf16.msra.mxu0 %v1934
        %1978 = vmatprep.subr.bf16.mxu0 0
        %1979 = vmatpush2.bf16.msra.mxu0 %v1933
        %1980 = vmatprep.subr.bf16.mxu0 0
        %1981 = vmatpush2.bf16.msra.mxu0 %v1932
        %1982 = vmatprep.subr.bf16.mxu0 0
        %1983 = vmatpush2.bf16.msra.mxu0 %v1931
        %1984 = vmatprep.subr.bf16.mxu0 0
        %1985 = vmatpush2.bf16.msra.mxu0 %v1930
        %1986 = vmatprep.mubr.bf16.mxu0 %v1816
        %1987 = vmatmul.mubr.bf16.gmra.mxu0 %v1815
        %v1988 = vpop.f32.mrf.mxu0
        %v1989 = vadd.f32 0.0, %v1988
        %v1990 = vpop.f32.mrf.mxu0
        %v1991 = vpop.f32.mrf.mxu0
        %v1992 = vadd.f32 0.0, %v1991
        %v1993 = vpop.f32.mrf.mxu0
        %1994 = vmatprep.mubr.bf16.mxu0 %v1818
        %1995 = vmatmul.mubr.bf16.gmra.mxu0 %v1817
        %v1996 = vpop.f32.mrf.mxu0
        %v1997 = vadd.f32 0.0, %v1996
        %v1998 = vpop.f32.mrf.mxu0
        %v1999 = vpop.f32.mrf.mxu0
        %v2000 = vadd.f32 0.0, %v1999
        %v2001 = vpop.f32.mrf.mxu0
        %2002 = vmatprep.mubr.bf16.mxu0 %v1820
        %2003 = vmatmul.mubr.bf16.gmra.mxu0 %v1819
        %v2004 = vpop.f32.mrf.mxu0
        %v2005 = vadd.f32 0.0, %v2004
        %v2006 = vpop.f32.mrf.mxu0
        %v2007 = vpop.f32.mrf.mxu0
        %v2008 = vadd.f32 0.0, %v2007
        %v2009 = vpop.f32.mrf.mxu0
        %2010 = vmatprep.mubr.bf16.mxu0 %v1822
        %2011 = vmatmul.mubr.bf16.gmra.mxu0 %v1821
        %v2012 = vpop.f32.mrf.mxu0
        %v2013 = vadd.f32 0.0, %v2012
        %v2014 = vpop.f32.mrf.mxu0
        %v2015 = vpop.f32.mrf.mxu0
        %v2016 = vadd.f32 0.0, %v2015
        %v2017 = vpop.f32.mrf.mxu0
        %2018 = vmatprep.mubr.bf16.mxu0 %v1824
        %2019 = vmatmul.mubr.bf16.gmra.mxu0 %v1823
        %v2020 = vpop.f32.mrf.mxu0
        %v2021 = vadd.f32 0.0, %v2020
        %v2022 = vpop.f32.mrf.mxu0
        %v2023 = vpop.f32.mrf.mxu0
        %v2024 = vadd.f32 0.0, %v2023
        %v2025 = vpop.f32.mrf.mxu0
        %2026 = vdwg.mxu0
        %v2027 = vadd.f32 %v1714, %v1989
        %v2028 = vadd.f32 %v1715, %v1992
        %v2029 = vadd.f32 %v1716, %v1997
        %v2030 = vadd.f32 %v1717, %v2000
        %v2031 = vadd.f32 %v1718, %v2005
        %v2032 = vadd.f32 %v1719, %v2008
        %v2033 = vadd.f32 %v1720, %v2013
        %v2034 = vadd.f32 %v1721, %v2016
        %v2035 = vadd.f32 %v1722, %v2021
        %v2036 = vadd.f32 %v1723, %v2024
        %v2037 = vrot.slane %v839, 2
        %v2038 = vrot.slane %v840, 2
        %v2039 = vrot.slane %v841, 2
        %v2040 = vrot.slane %v842, 2
        %v2041 = vrot.slane %v843, 2
        %v2042 = vrot.slane %v844, 2
        %v2043 = vrot.slane %v845, 2
        %v2044 = vrot.slane %v846, 2
        %v2045 = vrot.slane %v847, 2
        %v2046 = vrot.slane %v848, 2
        %v2047 = vrot.slane %v849, 2
        %v2048 = vrot.slane %v850, 2
        %v2049 = vrot.slane %v851, 2
        %v2050 = vrot.slane %v852, 2
        %v2051 = vrot.slane %v853, 2
        %v2052 = vrot.slane %v854, 2
        %v2053 = vrot.slane %v855, 2
        %v2054 = vrot.slane %v856, 2
        %v2055 = vrot.slane %v857, 2
        %v2056 = vrot.slane %v858, 2
        %vm2057 = vcmp.lt.s32.totalorder %v860, 6
        %v2058 = vsel %vm2057, %v2053, %v2055
        %v2059 = vsel %vm2057, %v2054, %v2056
        %v2060 = vsel %vm2057, %v2051, %v2053
        %v2061 = vsel %vm2057, %v2052, %v2054
        %v2062 = vsel %vm2057, %v2049, %v2051
        %v2063 = vsel %vm2057, %v2050, %v2052
        %v2064 = vsel %vm2057, %v2047, %v2049
        %v2065 = vsel %vm2057, %v2048, %v2050
        %v2066 = vsel %vm2057, %v2045, %v2047
        %v2067 = vsel %vm2057, %v2046, %v2048
        %v2068 = vsel %vm2057, %v2043, %v2045
        %v2069 = vsel %vm2057, %v2044, %v2046
        %v2070 = vsel %vm2057, %v2041, %v2043
        %v2071 = vsel %vm2057, %v2042, %v2044
        %v2072 = vsel %vm2057, %v2039, %v2041
        %v2073 = vsel %vm2057, %v2040, %v2042
        %v2074 = vsel %vm2057, %v2037, %v2039
        %v2075 = vsel %vm2057, %v2038, %v2040
        %v2076 = vsel %vm2057, %v2055, %v2037
        %v2077 = vsel %vm2057, %v2056, %v2038
        %vm2078 = vcmp.lt.s32.totalorder %v860, 78
        %vm2079 = vcmp.lt.s32.totalorder %v861, 78
        %vm2080 = vcmp.lt.s32.totalorder %v862, 78
        %vm2081 = vcmp.lt.s32.totalorder %v863, 78
        %vm2082 = vcmp.lt.s32.totalorder %v864, 78
        %vm2083 = vcmp.lt.s32.totalorder %v865, 78
        %vm2084 = vcmp.lt.s32.totalorder %v866, 78
        %vm2085 = vcmp.lt.s32.totalorder %v867, 78
        %vm2086 = vcmp.lt.s32.totalorder %v868, 78
        %vm2087 = vcmp.lt.s32.totalorder %v869, 78
        %v2088 = vsel %vm2078, 1, 0
        %v2089 = vsel %vm2079, 1, 0
        %v2090 = vsel %vm2080, 1, 0
        %v2091 = vsel %vm2081, 1, 0
        %v2092 = vsel %vm2082, 1, 0
        %v2093 = vsel %vm2083, 1, 0
        %v2094 = vsel %vm2084, 1, 0
        %v2095 = vsel %vm2085, 1, 0
        %v2096 = vsel %vm2086, 1, 0
        %v2097 = vsel %vm2087, 1, 0
        %vm2098 = vcmp.eq.s32.totalorder %v2088, 1
        %vm2099 = vcmp.eq.s32.totalorder %v2089, 1
        %vm2100 = vcmp.eq.s32.totalorder %v2090, 1
        %vm2101 = vcmp.eq.s32.totalorder %v2091, 1
        %vm2102 = vcmp.eq.s32.totalorder %v2092, 1
        %vm2103 = vcmp.eq.s32.totalorder %v2093, 1
        %vm2104 = vcmp.eq.s32.totalorder %v2094, 1
        %vm2105 = vcmp.eq.s32.totalorder %v2095, 1
        %vm2106 = vcmp.eq.s32.totalorder %v2096, 1
        %vm2107 = vcmp.eq.s32.totalorder %v2097, 1
        %v2108 = vsel %vm2098, %v2074, 0.0
        %v2109 = vsel %vm2098, %v2075, 0.0
        %v2110 = vsel %vm2099, %v2072, 0.0
        %v2111 = vsel %vm2099, %v2073, 0.0
        %v2112 = vsel %vm2100, %v2070, 0.0
        %v2113 = vsel %vm2100, %v2071, 0.0
        %v2114 = vsel %vm2101, %v2068, 0.0
        %v2115 = vsel %vm2101, %v2069, 0.0
        %v2116 = vsel %vm2102, %v2066, 0.0
        %v2117 = vsel %vm2102, %v2067, 0.0
        %v2118 = vsel %vm2103, %v2064, 0.0
        %v2119 = vsel %vm2103, %v2065, 0.0
        %v2120 = vsel %vm2104, %v2062, 0.0
        %v2121 = vsel %vm2104, %v2063, 0.0
        %v2122 = vsel %vm2105, %v2060, 0.0
        %v2123 = vsel %vm2105, %v2061, 0.0
        %v2124 = vsel %vm2106, %v2058, 0.0
        %v2125 = vsel %vm2106, %v2059, 0.0
        %v2126 = vsel %vm2107, %v2076, 0.0
        %v2127 = vsel %vm2107, %v2077, 0.0
        %v2128 = vpack.c.bf16 %v2110, %v2108
        %v2129 = vpack.c.bf16 %v2111, %v2109
        %v2130 = vpack.c.bf16 %v2114, %v2112
        %v2131 = vpack.c.bf16 %v2115, %v2113
        %v2132 = vpack.c.bf16 %v2118, %v2116
        %v2133 = vpack.c.bf16 %v2119, %v2117
        %v2134 = vpack.c.bf16 %v2122, %v2120
        %v2135 = vpack.c.bf16 %v2123, %v2121
        %v2136 = vpack.c.bf16 %v2126, %v2124
        %v2137 = vpack.c.bf16 %v2127, %v2125
        %s2138 = scalar_lea.vmem %s3, 512
        %v2139 = vld [vmem:[%s2138] sm:$0xf]
        %v2140 = vld [vmem:[%s2138 + $0x4] sm:$0xf]
        %v2141 = vld [vmem:[%s2138 + $0x8] sm:$0xf]
        %v2142 = vld [vmem:[%s2138 + $0xc] sm:$0xf]
        %v2143 = vld [vmem:[%s2138 + $0x10] sm:$0xf]
        %v2144 = vld [vmem:[%s2138 + $0x14] sm:$0xf]
        %v2145 = vld [vmem:[%s2138 + $0x18] sm:$0xf]
        %v2146 = vld [vmem:[%s2138 + $0x1c] sm:$0xf]
        %v2147 = vld [vmem:[%s2138 + $0x20] sm:$0xf]
        %v2148 = vld [vmem:[%s2138 + $0x24] sm:$0xf]
        %v2149 = vld [vmem:[%s2138 + $0x28] sm:$0xf]
        %v2150 = vld [vmem:[%s2138 + $0x2c] sm:$0xf]
        %v2151 = vld [vmem:[%s2138 + $0x30] sm:$0xf]
        %v2152 = vld [vmem:[%s2138 + $0x34] sm:$0xf]
        %v2153 = vld [vmem:[%s2138 + $0x38] sm:$0xf]
        %v2154 = vld [vmem:[%s2138 + $0x3c] sm:$0xf]
        %v2155 = vld [vmem:[%s2138 + $0x40] sm:$0xf]
        %v2156 = vld [vmem:[%s2138 + $0x44] sm:$0xf]
        %v2157 = vld [vmem:[%s2138 + $0x48] sm:$0xf]
        %v2158 = vld [vmem:[%s2138 + $0x4c] sm:$0xf]
        %v2159 = vld [vmem:[%s2138 + $0x50] sm:$0xf]
        %v2160 = vld [vmem:[%s2138 + $0x54] sm:$0xf]
        %v2161 = vld [vmem:[%s2138 + $0x58] sm:$0xf]
        %v2162 = vld [vmem:[%s2138 + $0x5c] sm:$0xf]
        %v2163 = vld [vmem:[%s2138 + $0x60] sm:$0xf]
        %v2164 = vld [vmem:[%s2138 + $0x64] sm:$0xf]
        %v2165 = vld [vmem:[%s2138 + $0x68] sm:$0xf]
        %v2166 = vld [vmem:[%s2138 + $0x6c] sm:$0xf]
        %v2167 = vld [vmem:[%s2138 + $0x70] sm:$0xf]
        %v2168 = vld [vmem:[%s2138 + $0x74] sm:$0xf]
        %v2169 = vld [vmem:[%s2138 + $0x78] sm:$0xf]
        %v2170 = vld [vmem:[%s2138 + $0x7c] sm:$0xf]
        %v2203 = vunpack.c.l.b16 %v2139
        %v2204 = vunpack.c.l.b16 %v2140
        %v2205 = vunpack.c.l.b16 %v2141
        %v2206 = vunpack.c.l.b16 %v2142
        %v2207 = vunpack.c.l.b16 %v2143
        %v2208 = vunpack.c.l.b16 %v2144
        %v2209 = vunpack.c.l.b16 %v2145
        %v2210 = vunpack.c.l.b16 %v2146
        %v2211 = vunpack.c.l.b16 %v2147
        %v2212 = vunpack.c.l.b16 %v2148
        %v2213 = vunpack.c.l.b16 %v2149
        %v2214 = vunpack.c.l.b16 %v2150
        %v2215 = vunpack.c.l.b16 %v2151
        %v2216 = vunpack.c.l.b16 %v2152
        %v2217 = vunpack.c.l.b16 %v2153
        %v2218 = vunpack.c.l.b16 %v2154
        %v2219 = vunpack.c.l.b16 %v2155
        %v2220 = vunpack.c.l.b16 %v2156
        %v2221 = vunpack.c.l.b16 %v2157
        %v2222 = vunpack.c.l.b16 %v2158
        %v2223 = vunpack.c.l.b16 %v2159
        %v2224 = vunpack.c.l.b16 %v2160
        %v2225 = vunpack.c.l.b16 %v2161
        %v2226 = vunpack.c.l.b16 %v2162
        %v2227 = vunpack.c.l.b16 %v2163
        %v2228 = vunpack.c.l.b16 %v2164
        %v2229 = vunpack.c.l.b16 %v2165
        %v2230 = vunpack.c.l.b16 %v2166
        %v2231 = vunpack.c.l.b16 %v2167
        %v2232 = vunpack.c.l.b16 %v2168
        %v2233 = vunpack.c.l.b16 %v2169
        %v2234 = vunpack.c.l.b16 %v2170
        %v2235 = vpack.c.b16 %v2204, %v2203
        %v2236 = vpack.c.b16 %v2206, %v2205
        %v2237 = vpack.c.b16 %v2208, %v2207
        %v2238 = vpack.c.b16 %v2210, %v2209
        %v2239 = vpack.c.b16 %v2212, %v2211
        %v2240 = vpack.c.b16 %v2214, %v2213
        %v2241 = vpack.c.b16 %v2216, %v2215
        %v2242 = vpack.c.b16 %v2218, %v2217
        %v2243 = vpack.c.b16 %v2220, %v2219
        %v2244 = vpack.c.b16 %v2222, %v2221
        %v2245 = vpack.c.b16 %v2224, %v2223
        %v2246 = vpack.c.b16 %v2226, %v2225
        %v2247 = vpack.c.b16 %v2228, %v2227
        %v2248 = vpack.c.b16 %v2230, %v2229
        %v2249 = vpack.c.b16 %v2232, %v2231
        %v2250 = vpack.c.b16 %v2234, %v2233
        %2267 = vmatprep.subr.bf16.mxu0 0
        %2268 = vmatpush1.bf16.msra.mxu0 %v2242
        %2269 = vmatprep.subr.bf16.mxu0 0
        %2270 = vmatpush1.bf16.msra.mxu0 %v2241
        %2271 = vmatprep.subr.bf16.mxu0 0
        %2272 = vmatpush1.bf16.msra.mxu0 %v2240
        %2273 = vmatprep.subr.bf16.mxu0 0
        %2274 = vmatpush1.bf16.msra.mxu0 %v2239
        %2275 = vmatprep.subr.bf16.mxu0 0
        %2276 = vmatpush1.bf16.msra.mxu0 %v2238
        %2277 = vmatprep.subr.bf16.mxu0 0
        %2278 = vmatpush1.bf16.msra.mxu0 %v2237
        %2279 = vmatprep.subr.bf16.mxu0 0
        %2280 = vmatpush1.bf16.msra.mxu0 %v2236
        %2281 = vmatprep.subr.bf16.mxu0 0
        %2282 = vmatpush1.bf16.msra.mxu0 %v2235
        %2283 = vmatprep.subr.bf16.mxu0 0
        %2284 = vmatpush2.bf16.msra.mxu0 %v2250
        %2285 = vmatprep.subr.bf16.mxu0 0
        %2286 = vmatpush2.bf16.msra.mxu0 %v2249
        %2287 = vmatprep.subr.bf16.mxu0 0
        %2288 = vmatpush2.bf16.msra.mxu0 %v2248
        %2289 = vmatprep.subr.bf16.mxu0 0
        %2290 = vmatpush2.bf16.msra.mxu0 %v2247
        %2291 = vmatprep.subr.bf16.mxu0 0
        %2292 = vmatpush2.bf16.msra.mxu0 %v2246
        %2293 = vmatprep.subr.bf16.mxu0 0
        %2294 = vmatpush2.bf16.msra.mxu0 %v2245
        %2295 = vmatprep.subr.bf16.mxu0 0
        %2296 = vmatpush2.bf16.msra.mxu0 %v2244
        %2297 = vmatprep.subr.bf16.mxu0 0
        %2298 = vmatpush2.bf16.msra.mxu0 %v2243
        %2299 = vmatprep.mubr.bf16.mxu0 %v2129
        %2300 = vmatmul.mubr.bf16.gmra.mxu0 %v2128
        %v2301 = vpop.f32.mrf.mxu0
        %v2302 = vadd.f32 0.0, %v2301
        %v2303 = vpop.f32.mrf.mxu0
        %v2304 = vpop.f32.mrf.mxu0
        %v2305 = vadd.f32 0.0, %v2304
        %v2306 = vpop.f32.mrf.mxu0
        %2307 = vmatprep.mubr.bf16.mxu0 %v2131
        %2308 = vmatmul.mubr.bf16.gmra.mxu0 %v2130
        %v2309 = vpop.f32.mrf.mxu0
        %v2310 = vadd.f32 0.0, %v2309
        %v2311 = vpop.f32.mrf.mxu0
        %v2312 = vpop.f32.mrf.mxu0
        %v2313 = vadd.f32 0.0, %v2312
        %v2314 = vpop.f32.mrf.mxu0
        %2315 = vmatprep.mubr.bf16.mxu0 %v2133
        %2316 = vmatmul.mubr.bf16.gmra.mxu0 %v2132
        %v2317 = vpop.f32.mrf.mxu0
        %v2318 = vadd.f32 0.0, %v2317
        %v2319 = vpop.f32.mrf.mxu0
        %v2320 = vpop.f32.mrf.mxu0
        %v2321 = vadd.f32 0.0, %v2320
        %v2322 = vpop.f32.mrf.mxu0
        %2323 = vmatprep.mubr.bf16.mxu0 %v2135
        %2324 = vmatmul.mubr.bf16.gmra.mxu0 %v2134
        %v2325 = vpop.f32.mrf.mxu0
        %v2326 = vadd.f32 0.0, %v2325
        %v2327 = vpop.f32.mrf.mxu0
        %v2328 = vpop.f32.mrf.mxu0
        %v2329 = vadd.f32 0.0, %v2328
        %v2330 = vpop.f32.mrf.mxu0
        %2331 = vmatprep.mubr.bf16.mxu0 %v2137
        %2332 = vmatmul.mubr.bf16.gmra.mxu0 %v2136
        %v2333 = vpop.f32.mrf.mxu0
        %v2334 = vadd.f32 0.0, %v2333
        %v2335 = vpop.f32.mrf.mxu0
        %v2336 = vpop.f32.mrf.mxu0
        %v2337 = vadd.f32 0.0, %v2336
        %v2338 = vpop.f32.mrf.mxu0
        %2339 = vdwg.mxu0
        %v2340 = vadd.f32 %v2027, %v2302
        %v2341 = vadd.f32 %v2028, %v2305
        %v2342 = vadd.f32 %v2029, %v2310
        %v2343 = vadd.f32 %v2030, %v2313
        %v2344 = vadd.f32 %v2031, %v2318
        %v2345 = vadd.f32 %v2032, %v2321
        %v2346 = vadd.f32 %v2033, %v2326
        %v2347 = vadd.f32 %v2034, %v2329
        %v2348 = vadd.f32 %v2035, %v2334
        %v2349 = vadd.f32 %v2036, %v2337
        %v2350 = vmax.f32 %v2340, 0.0
        %v2351 = vmax.f32 %v2341, 0.0
        %v2352 = vmax.f32 %v2342, 0.0
        %v2353 = vmax.f32 %v2343, 0.0
        %v2354 = vmax.f32 %v2344, 0.0
        %v2355 = vmax.f32 %v2345, 0.0
        %v2356 = vmax.f32 %v2346, 0.0
        %v2357 = vmax.f32 %v2347, 0.0
        %v2358 = vmax.f32 %v2348, 0.0
        %v2359 = vmax.f32 %v2349, 0.0
        %v2360 = vld [vmem:[%s6] sm:$0x1]
        %v2361 = vrot.slane %v2350, 6
        %v2362 = vrot.slane %v2351, 6
        %v2363 = vrot.slane %v2352, 6
        %v2364 = vrot.slane %v2353, 6
        %v2365 = vrot.slane %v2354, 6
        %v2366 = vrot.slane %v2355, 6
        %v2367 = vrot.slane %v2356, 6
        %v2368 = vrot.slane %v2357, 6
        %v2369 = vrot.slane %v2358, 6
        %v2370 = vrot.slane %v2359, 6
        %v2371 = vsel %vm891, %v2369, %v2370
        %v2372 = vsel %vm891, %v2368, %v2369
        %v2373 = vsel %vm891, %v2367, %v2368
        %v2374 = vsel %vm891, %v2366, %v2367
        %v2375 = vsel %vm891, %v2365, %v2366
        %v2376 = vsel %vm891, %v2364, %v2365
        %v2377 = vsel %vm891, %v2363, %v2364
        %v2378 = vsel %vm891, %v2362, %v2363
        %v2379 = vsel %vm891, %v2361, %v2362
        %v2380 = vsel %vm891, %v2370, %v2361
        %v2381 = vsel %vm932, %v2380, 0.0
        %v2382 = vsel %vm933, %v2379, 0.0
        %v2383 = vsel %vm934, %v2378, 0.0
        %v2384 = vsel %vm935, %v2377, 0.0
        %v2385 = vsel %vm936, %v2376, 0.0
        %v2386 = vsel %vm937, %v2375, 0.0
        %v2387 = vsel %vm938, %v2374, 0.0
        %v2388 = vsel %vm939, %v2373, 0.0
        %v2389 = vsel %vm940, %v2372, 0.0
        %v2390 = vsel %vm941, %v2371, 0.0
        %v2391 = vpack.c.bf16 %v2382, %v2381
        %v2392 = vpack.c.bf16 %v2384, %v2383
        %v2393 = vpack.c.bf16 %v2386, %v2385
        %v2394 = vpack.c.bf16 %v2388, %v2387
        %v2395 = vpack.c.bf16 %v2390, %v2389
        %v2396 = vld [vmem:[#allocation5] sm:$0xf]
        %v2397 = vld [vmem:[#allocation5 + $0x4] sm:$0xf]
        %v2398 = vld [vmem:[#allocation5 + $0x8] sm:$0xf]
        %v2399 = vld [vmem:[#allocation5 + $0xc] sm:$0xf]
        %v2400 = vld [vmem:[#allocation5 + $0x10] sm:$0xf]
        %v2401 = vld [vmem:[#allocation5 + $0x14] sm:$0xf]
        %v2402 = vld [vmem:[#allocation5 + $0x18] sm:$0xf]
        %v2403 = vld [vmem:[#allocation5 + $0x1c] sm:$0xf]
        %v2404 = vld [vmem:[#allocation5 + $0x20] sm:$0xf]
        %v2405 = vld [vmem:[#allocation5 + $0x24] sm:$0xf]
        %v2406 = vld [vmem:[#allocation5 + $0x28] sm:$0xf]
        %v2407 = vld [vmem:[#allocation5 + $0x2c] sm:$0xf]
        %v2408 = vld [vmem:[#allocation5 + $0x30] sm:$0xf]
        %v2409 = vld [vmem:[#allocation5 + $0x34] sm:$0xf]
        %v2410 = vld [vmem:[#allocation5 + $0x38] sm:$0xf]
        %v2411 = vld [vmem:[#allocation5 + $0x3c] sm:$0xf]
        %v2428 = vunpack.c.l.b16 %v2396
        %v2429 = vunpack.c.l.b16 %v2397
        %v2430 = vunpack.c.l.b16 %v2398
        %v2431 = vunpack.c.l.b16 %v2399
        %v2432 = vunpack.c.l.b16 %v2400
        %v2433 = vunpack.c.l.b16 %v2401
        %v2434 = vunpack.c.l.b16 %v2402
        %v2435 = vunpack.c.l.b16 %v2403
        %v2436 = vunpack.c.l.b16 %v2404
        %v2437 = vunpack.c.l.b16 %v2405
        %v2438 = vunpack.c.l.b16 %v2406
        %v2439 = vunpack.c.l.b16 %v2407
        %v2440 = vunpack.c.l.b16 %v2408
        %v2441 = vunpack.c.l.b16 %v2409
        %v2442 = vunpack.c.l.b16 %v2410
        %v2443 = vunpack.c.l.b16 %v2411
        %v2444 = vpack.c.b16 %v2429, %v2428
        %v2445 = vpack.c.b16 %v2431, %v2430
        %v2446 = vpack.c.b16 %v2433, %v2432
        %v2447 = vpack.c.b16 %v2435, %v2434
        %v2448 = vpack.c.b16 %v2437, %v2436
        %v2449 = vpack.c.b16 %v2439, %v2438
        %v2450 = vpack.c.b16 %v2441, %v2440
        %v2451 = vpack.c.b16 %v2443, %v2442
        %2460 = vmatprep.subr.bf16.mxu0 0
        %2461 = vmatpush1.bf16.msra.mxu0 %v2451
        %2462 = vmatprep.subr.bf16.mxu0 0
        %2463 = vmatpush1.bf16.msra.mxu0 %v2450
        %2464 = vmatprep.subr.bf16.mxu0 0
        %2465 = vmatpush1.bf16.msra.mxu0 %v2449
        %2466 = vmatprep.subr.bf16.mxu0 0
        %2467 = vmatpush1.bf16.msra.mxu0 %v2448
        %2468 = vmatprep.subr.bf16.mxu0 0
        %2469 = vmatpush1.bf16.msra.mxu0 %v2447
        %2470 = vmatprep.subr.bf16.mxu0 0
        %2471 = vmatpush1.bf16.msra.mxu0 %v2446
        %2472 = vmatprep.subr.bf16.mxu0 0
        %2473 = vmatpush1.bf16.msra.mxu0 %v2445
        %2474 = vmatprep.subr.bf16.mxu0 0
        %2475 = vmatpush1.bf16.msra.mxu0 %v2444
        %2476 = vmatprep.subr.bf16.mxu0 0
        %2477 = vmatpush2.bf16.msra.mxu0 0
        %2478 = vmatprep.subr.bf16.mxu0 0
        %2479 = vmatpush2.bf16.msra.mxu0 0
        %2480 = vmatprep.subr.bf16.mxu0 0
        %2481 = vmatpush2.bf16.msra.mxu0 0
        %2482 = vmatprep.subr.bf16.mxu0 0
        %2483 = vmatpush2.bf16.msra.mxu0 0
        %2484 = vmatprep.subr.bf16.mxu0 0
        %2485 = vmatpush2.bf16.msra.mxu0 0
        %2486 = vmatprep.subr.bf16.mxu0 0
        %2487 = vmatpush2.bf16.msra.mxu0 0
        %2488 = vmatprep.subr.bf16.mxu0 0
        %2489 = vmatpush2.bf16.msra.mxu0 0
        %2490 = vmatprep.subr.bf16.mxu0 0
        %2491 = vmatpush2.bf16.msra.mxu0 0
        %2492 = vmatprep.mubr.bf16.mxu0 0
        %2493 = vmatmul.mubr.bf16.gmra.mxu0 %v2391
        %v2494 = vpop.f32.mrf.mxu0
        %v2495 = vadd.f32 0.0, %v2494
        %v2496 = vpop.f32.mrf.mxu0
        %v2497 = vpop.f32.mrf.mxu0
        %v2498 = vadd.f32 0.0, %v2497
        %v2499 = vpop.f32.mrf.mxu0
        %2500 = vmatprep.mubr.bf16.mxu0 0
        %2501 = vmatmul.mubr.bf16.gmra.mxu0 %v2392
        %v2502 = vpop.f32.mrf.mxu0
        %v2503 = vadd.f32 0.0, %v2502
        %v2504 = vpop.f32.mrf.mxu0
        %v2505 = vpop.f32.mrf.mxu0
        %v2506 = vadd.f32 0.0, %v2505
        %v2507 = vpop.f32.mrf.mxu0
        %2508 = vmatprep.mubr.bf16.mxu0 0
        %2509 = vmatmul.mubr.bf16.gmra.mxu0 %v2393
        %v2510 = vpop.f32.mrf.mxu0
        %v2511 = vadd.f32 0.0, %v2510
        %v2512 = vpop.f32.mrf.mxu0
        %v2513 = vpop.f32.mrf.mxu0
        %v2514 = vadd.f32 0.0, %v2513
        %v2515 = vpop.f32.mrf.mxu0
        %2516 = vmatprep.mubr.bf16.mxu0 0
        %2517 = vmatmul.mubr.bf16.gmra.mxu0 %v2394
        %v2518 = vpop.f32.mrf.mxu0
        %v2519 = vadd.f32 0.0, %v2518
        %v2520 = vpop.f32.mrf.mxu0
        %v2521 = vpop.f32.mrf.mxu0
        %v2522 = vadd.f32 0.0, %v2521
        %v2523 = vpop.f32.mrf.mxu0
        %2524 = vmatprep.mubr.bf16.mxu0 0
        %2525 = vmatmul.mubr.bf16.gmra.mxu0 %v2395
        %v2526 = vpop.f32.mrf.mxu0
        %v2527 = vadd.f32 0.0, %v2526
        %v2528 = vpop.f32.mrf.mxu0
        %v2529 = vpop.f32.mrf.mxu0
        %v2530 = vadd.f32 0.0, %v2529
        %v2531 = vpop.f32.mrf.mxu0
        %2532 = vdwg.mxu0
        %v2534 = vlaneseq
        %v2535 = vshrl.u32 %v2534, 7
        %v2536 = vsub.s32 0, %v2535
        %v2537 = vrot.slane %v2360, %v2536
        %v2539 = vadd.f32 %v2537, %v2495
        %v2540 = vadd.f32 %v2537, %v2498
        %v2541 = vadd.f32 %v2537, %v2503
        %v2542 = vadd.f32 %v2537, %v2506
        %v2543 = vadd.f32 %v2537, %v2511
        %v2544 = vadd.f32 %v2537, %v2514
        %v2545 = vadd.f32 %v2537, %v2519
        %v2546 = vadd.f32 %v2537, %v2522
        %v2547 = vadd.f32 %v2537, %v2527
        %v2548 = vadd.f32 %v2537, %v2530
        %v2549 = vrot.slane %v2350, 7
        %v2550 = vrot.slane %v2351, 7
        %v2551 = vrot.slane %v2352, 7
        %v2552 = vrot.slane %v2353, 7
        %v2553 = vrot.slane %v2354, 7
        %v2554 = vrot.slane %v2355, 7
        %v2555 = vrot.slane %v2356, 7
        %v2556 = vrot.slane %v2357, 7
        %v2557 = vrot.slane %v2358, 7
        %v2558 = vrot.slane %v2359, 7
        %v2559 = vsel %vm1209, %v2557, %v2558
        %v2560 = vsel %vm1209, %v2556, %v2557
        %v2561 = vsel %vm1209, %v2555, %v2556
        %v2562 = vsel %vm1209, %v2554, %v2555
        %v2563 = vsel %vm1209, %v2553, %v2554
        %v2564 = vsel %vm1209, %v2552, %v2553
        %v2565 = vsel %vm1209, %v2551, %v2552
        %v2566 = vsel %vm1209, %v2550, %v2551
        %v2567 = vsel %vm1209, %v2549, %v2550
        %v2568 = vsel %vm1209, %v2558, %v2549
        %v2569 = vsel %vm1250, %v2568, 0.0
        %v2570 = vsel %vm1251, %v2567, 0.0
        %v2571 = vsel %vm1252, %v2566, 0.0
        %v2572 = vsel %vm1253, %v2565, 0.0
        %v2573 = vsel %vm1254, %v2564, 0.0
        %v2574 = vsel %vm1255, %v2563, 0.0
        %v2575 = vsel %vm1256, %v2562, 0.0
        %v2576 = vsel %vm1257, %v2561, 0.0
        %v2577 = vsel %vm1258, %v2560, 0.0
        %v2578 = vsel %vm1259, %v2559, 0.0
        %v2579 = vpack.c.bf16 %v2570, %v2569
        %v2580 = vpack.c.bf16 %v2572, %v2571
        %v2581 = vpack.c.bf16 %v2574, %v2573
        %v2582 = vpack.c.bf16 %v2576, %v2575
        %v2583 = vpack.c.bf16 %v2578, %v2577
        %s2584 = scalar_lea.vmem [#allocation5], 64
        %v2585 = vld [vmem:[%s2584] sm:$0xf]
        %v2586 = vld [vmem:[%s2584 + $0x4] sm:$0xf]
        %v2587 = vld [vmem:[%s2584 + $0x8] sm:$0xf]
        %v2588 = vld [vmem:[%s2584 + $0xc] sm:$0xf]
        %v2589 = vld [vmem:[%s2584 + $0x10] sm:$0xf]
        %v2590 = vld [vmem:[%s2584 + $0x14] sm:$0xf]
        %v2591 = vld [vmem:[%s2584 + $0x18] sm:$0xf]
        %v2592 = vld [vmem:[%s2584 + $0x1c] sm:$0xf]
        %v2593 = vld [vmem:[%s2584 + $0x20] sm:$0xf]
        %v2594 = vld [vmem:[%s2584 + $0x24] sm:$0xf]
        %v2595 = vld [vmem:[%s2584 + $0x28] sm:$0xf]
        %v2596 = vld [vmem:[%s2584 + $0x2c] sm:$0xf]
        %v2597 = vld [vmem:[%s2584 + $0x30] sm:$0xf]
        %v2598 = vld [vmem:[%s2584 + $0x34] sm:$0xf]
        %v2599 = vld [vmem:[%s2584 + $0x38] sm:$0xf]
        %v2600 = vld [vmem:[%s2584 + $0x3c] sm:$0xf]
        %v2617 = vunpack.c.l.b16 %v2585
        %v2618 = vunpack.c.l.b16 %v2586
        %v2619 = vunpack.c.l.b16 %v2587
        %v2620 = vunpack.c.l.b16 %v2588
        %v2621 = vunpack.c.l.b16 %v2589
        %v2622 = vunpack.c.l.b16 %v2590
        %v2623 = vunpack.c.l.b16 %v2591
        %v2624 = vunpack.c.l.b16 %v2592
        %v2625 = vunpack.c.l.b16 %v2593
        %v2626 = vunpack.c.l.b16 %v2594
        %v2627 = vunpack.c.l.b16 %v2595
        %v2628 = vunpack.c.l.b16 %v2596
        %v2629 = vunpack.c.l.b16 %v2597
        %v2630 = vunpack.c.l.b16 %v2598
        %v2631 = vunpack.c.l.b16 %v2599
        %v2632 = vunpack.c.l.b16 %v2600
        %v2633 = vpack.c.b16 %v2618, %v2617
        %v2634 = vpack.c.b16 %v2620, %v2619
        %v2635 = vpack.c.b16 %v2622, %v2621
        %v2636 = vpack.c.b16 %v2624, %v2623
        %v2637 = vpack.c.b16 %v2626, %v2625
        %v2638 = vpack.c.b16 %v2628, %v2627
        %v2639 = vpack.c.b16 %v2630, %v2629
        %v2640 = vpack.c.b16 %v2632, %v2631
        %2649 = vmatprep.subr.bf16.mxu0 0
        %2650 = vmatpush1.bf16.msra.mxu0 %v2640
        %2651 = vmatprep.subr.bf16.mxu0 0
        %2652 = vmatpush1.bf16.msra.mxu0 %v2639
        %2653 = vmatprep.subr.bf16.mxu0 0
        %2654 = vmatpush1.bf16.msra.mxu0 %v2638
        %2655 = vmatprep.subr.bf16.mxu0 0
        %2656 = vmatpush1.bf16.msra.mxu0 %v2637
        %2657 = vmatprep.subr.bf16.mxu0 0
        %2658 = vmatpush1.bf16.msra.mxu0 %v2636
        %2659 = vmatprep.subr.bf16.mxu0 0
        %2660 = vmatpush1.bf16.msra.mxu0 %v2635
        %2661 = vmatprep.subr.bf16.mxu0 0
        %2662 = vmatpush1.bf16.msra.mxu0 %v2634
        %2663 = vmatprep.subr.bf16.mxu0 0
        %2664 = vmatpush1.bf16.msra.mxu0 %v2633
        %2665 = vmatprep.subr.bf16.mxu0 0
        %2666 = vmatpush2.bf16.msra.mxu0 0
        %2667 = vmatprep.subr.bf16.mxu0 0
        %2668 = vmatpush2.bf16.msra.mxu0 0
        %2669 = vmatprep.subr.bf16.mxu0 0
        %2670 = vmatpush2.bf16.msra.mxu0 0
        %2671 = vmatprep.subr.bf16.mxu0 0
        %2672 = vmatpush2.bf16.msra.mxu0 0
        %2673 = vmatprep.subr.bf16.mxu0 0
        %2674 = vmatpush2.bf16.msra.mxu0 0
        %2675 = vmatprep.subr.bf16.mxu0 0
        %2676 = vmatpush2.bf16.msra.mxu0 0
        %2677 = vmatprep.subr.bf16.mxu0 0
        %2678 = vmatpush2.bf16.msra.mxu0 0
        %2679 = vmatprep.subr.bf16.mxu0 0
        %2680 = vmatpush2.bf16.msra.mxu0 0
        %2681 = vmatprep.mubr.bf16.mxu0 0
        %2682 = vmatmul.mubr.bf16.gmra.mxu0 %v2579
        %v2683 = vpop.f32.mrf.mxu0
        %v2684 = vadd.f32 0.0, %v2683
        %v2685 = vpop.f32.mrf.mxu0
        %v2686 = vpop.f32.mrf.mxu0
        %v2687 = vadd.f32 0.0, %v2686
        %v2688 = vpop.f32.mrf.mxu0
        %2689 = vmatprep.mubr.bf16.mxu0 0
        %2690 = vmatmul.mubr.bf16.gmra.mxu0 %v2580
        %v2691 = vpop.f32.mrf.mxu0
        %v2692 = vadd.f32 0.0, %v2691
        %v2693 = vpop.f32.mrf.mxu0
        %v2694 = vpop.f32.mrf.mxu0
        %v2695 = vadd.f32 0.0, %v2694
        %v2696 = vpop.f32.mrf.mxu0
        %2697 = vmatprep.mubr.bf16.mxu0 0
        %2698 = vmatmul.mubr.bf16.gmra.mxu0 %v2581
        %v2699 = vpop.f32.mrf.mxu0
        %v2700 = vadd.f32 0.0, %v2699
        %v2701 = vpop.f32.mrf.mxu0
        %v2702 = vpop.f32.mrf.mxu0
        %v2703 = vadd.f32 0.0, %v2702
        %v2704 = vpop.f32.mrf.mxu0
        %2705 = vmatprep.mubr.bf16.mxu0 0
        %2706 = vmatmul.mubr.bf16.gmra.mxu0 %v2582
        %v2707 = vpop.f32.mrf.mxu0
        %v2708 = vadd.f32 0.0, %v2707
        %v2709 = vpop.f32.mrf.mxu0
        %v2710 = vpop.f32.mrf.mxu0
        %v2711 = vadd.f32 0.0, %v2710
        %v2712 = vpop.f32.mrf.mxu0
        %2713 = vmatprep.mubr.bf16.mxu0 0
        %2714 = vmatmul.mubr.bf16.gmra.mxu0 %v2583
        %v2715 = vpop.f32.mrf.mxu0
        %v2716 = vadd.f32 0.0, %v2715
        %v2717 = vpop.f32.mrf.mxu0
        %v2718 = vpop.f32.mrf.mxu0
        %v2719 = vadd.f32 0.0, %v2718
        %v2720 = vpop.f32.mrf.mxu0
        %2721 = vdwg.mxu0
        %v2722 = vadd.f32 %v2539, %v2684
        %v2723 = vadd.f32 %v2540, %v2687
        %v2724 = vadd.f32 %v2541, %v2692
        %v2725 = vadd.f32 %v2542, %v2695
        %v2726 = vadd.f32 %v2543, %v2700
        %v2727 = vadd.f32 %v2544, %v2703
        %v2728 = vadd.f32 %v2545, %v2708
        %v2729 = vadd.f32 %v2546, %v2711
        %v2730 = vadd.f32 %v2547, %v2716
        %v2731 = vadd.f32 %v2548, %v2719
        %v2732 = vpack.c.bf16 %v2351, %v2350
        %v2733 = vpack.c.bf16 %v2353, %v2352
        %v2734 = vpack.c.bf16 %v2355, %v2354
        %v2735 = vpack.c.bf16 %v2357, %v2356
        %v2736 = vpack.c.bf16 %v2359, %v2358
        %s2737 = scalar_lea.vmem [#allocation5], 128
        %v2738 = vld [vmem:[%s2737] sm:$0xf]
        %v2739 = vld [vmem:[%s2737 + $0x4] sm:$0xf]
        %v2740 = vld [vmem:[%s2737 + $0x8] sm:$0xf]
        %v2741 = vld [vmem:[%s2737 + $0xc] sm:$0xf]
        %v2742 = vld [vmem:[%s2737 + $0x10] sm:$0xf]
        %v2743 = vld [vmem:[%s2737 + $0x14] sm:$0xf]
        %v2744 = vld [vmem:[%s2737 + $0x18] sm:$0xf]
        %v2745 = vld [vmem:[%s2737 + $0x1c] sm:$0xf]
        %v2746 = vld [vmem:[%s2737 + $0x20] sm:$0xf]
        %v2747 = vld [vmem:[%s2737 + $0x24] sm:$0xf]
        %v2748 = vld [vmem:[%s2737 + $0x28] sm:$0xf]
        %v2749 = vld [vmem:[%s2737 + $0x2c] sm:$0xf]
        %v2750 = vld [vmem:[%s2737 + $0x30] sm:$0xf]
        %v2751 = vld [vmem:[%s2737 + $0x34] sm:$0xf]
        %v2752 = vld [vmem:[%s2737 + $0x38] sm:$0xf]
        %v2753 = vld [vmem:[%s2737 + $0x3c] sm:$0xf]
        %v2770 = vunpack.c.l.b16 %v2738
        %v2771 = vunpack.c.l.b16 %v2739
        %v2772 = vunpack.c.l.b16 %v2740
        %v2773 = vunpack.c.l.b16 %v2741
        %v2774 = vunpack.c.l.b16 %v2742
        %v2775 = vunpack.c.l.b16 %v2743
        %v2776 = vunpack.c.l.b16 %v2744
        %v2777 = vunpack.c.l.b16 %v2745
        %v2778 = vunpack.c.l.b16 %v2746
        %v2779 = vunpack.c.l.b16 %v2747
        %v2780 = vunpack.c.l.b16 %v2748
        %v2781 = vunpack.c.l.b16 %v2749
        %v2782 = vunpack.c.l.b16 %v2750
        %v2783 = vunpack.c.l.b16 %v2751
        %v2784 = vunpack.c.l.b16 %v2752
        %v2785 = vunpack.c.l.b16 %v2753
        %v2786 = vpack.c.b16 %v2771, %v2770
        %v2787 = vpack.c.b16 %v2773, %v2772
        %v2788 = vpack.c.b16 %v2775, %v2774
        %v2789 = vpack.c.b16 %v2777, %v2776
        %v2790 = vpack.c.b16 %v2779, %v2778
        %v2791 = vpack.c.b16 %v2781, %v2780
        %v2792 = vpack.c.b16 %v2783, %v2782
        %v2793 = vpack.c.b16 %v2785, %v2784
        %2802 = vmatprep.subr.bf16.mxu0 0
        %2803 = vmatpush1.bf16.msra.mxu0 %v2793
        %2804 = vmatprep.subr.bf16.mxu0 0
        %2805 = vmatpush1.bf16.msra.mxu0 %v2792
        %2806 = vmatprep.subr.bf16.mxu0 0
        %2807 = vmatpush1.bf16.msra.mxu0 %v2791
        %2808 = vmatprep.subr.bf16.mxu0 0
        %2809 = vmatpush1.bf16.msra.mxu0 %v2790
        %2810 = vmatprep.subr.bf16.mxu0 0
        %2811 = vmatpush1.bf16.msra.mxu0 %v2789
        %2812 = vmatprep.subr.bf16.mxu0 0
        %2813 = vmatpush1.bf16.msra.mxu0 %v2788
        %2814 = vmatprep.subr.bf16.mxu0 0
        %2815 = vmatpush1.bf16.msra.mxu0 %v2787
        %2816 = vmatprep.subr.bf16.mxu0 0
        %2817 = vmatpush1.bf16.msra.mxu0 %v2786
        %2818 = vmatprep.subr.bf16.mxu0 0
        %2819 = vmatpush2.bf16.msra.mxu0 0
        %2820 = vmatprep.subr.bf16.mxu0 0
        %2821 = vmatpush2.bf16.msra.mxu0 0
        %2822 = vmatprep.subr.bf16.mxu0 0
        %2823 = vmatpush2.bf16.msra.mxu0 0
        %2824 = vmatprep.subr.bf16.mxu0 0
        %2825 = vmatpush2.bf16.msra.mxu0 0
        %2826 = vmatprep.subr.bf16.mxu0 0
        %2827 = vmatpush2.bf16.msra.mxu0 0
        %2828 = vmatprep.subr.bf16.mxu0 0
        %2829 = vmatpush2.bf16.msra.mxu0 0
        %2830 = vmatprep.subr.bf16.mxu0 0
        %2831 = vmatpush2.bf16.msra.mxu0 0
        %2832 = vmatprep.subr.bf16.mxu0 0
        %2833 = vmatpush2.bf16.msra.mxu0 0
        %2834 = vmatprep.mubr.bf16.mxu0 0
        %2835 = vmatmul.mubr.bf16.gmra.mxu0 %v2732
        %v2836 = vpop.f32.mrf.mxu0
        %v2837 = vadd.f32 0.0, %v2836
        %v2838 = vpop.f32.mrf.mxu0
        %v2839 = vpop.f32.mrf.mxu0
        %v2840 = vadd.f32 0.0, %v2839
        %v2841 = vpop.f32.mrf.mxu0
        %2842 = vmatprep.mubr.bf16.mxu0 0
        %2843 = vmatmul.mubr.bf16.gmra.mxu0 %v2733
        %v2844 = vpop.f32.mrf.mxu0
        %v2845 = vadd.f32 0.0, %v2844
        %v2846 = vpop.f32.mrf.mxu0
        %v2847 = vpop.f32.mrf.mxu0
        %v2848 = vadd.f32 0.0, %v2847
        %v2849 = vpop.f32.mrf.mxu0
        %2850 = vmatprep.mubr.bf16.mxu0 0
        %2851 = vmatmul.mubr.bf16.gmra.mxu0 %v2734
        %v2852 = vpop.f32.mrf.mxu0
        %v2853 = vadd.f32 0.0, %v2852
        %v2854 = vpop.f32.mrf.mxu0
        %v2855 = vpop.f32.mrf.mxu0
        %v2856 = vadd.f32 0.0, %v2855
        %v2857 = vpop.f32.mrf.mxu0
        %2858 = vmatprep.mubr.bf16.mxu0 0
        %2859 = vmatmul.mubr.bf16.gmra.mxu0 %v2735
        %v2860 = vpop.f32.mrf.mxu0
        %v2861 = vadd.f32 0.0, %v2860
        %v2862 = vpop.f32.mrf.mxu0
        %v2863 = vpop.f32.mrf.mxu0
        %v2864 = vadd.f32 0.0, %v2863
        %v2865 = vpop.f32.mrf.mxu0
        %2866 = vmatprep.mubr.bf16.mxu0 0
        %2867 = vmatmul.mubr.bf16.gmra.mxu0 %v2736
        %v2868 = vpop.f32.mrf.mxu0
        %v2869 = vadd.f32 0.0, %v2868
        %v2870 = vpop.f32.mrf.mxu0
        %v2871 = vpop.f32.mrf.mxu0
        %v2872 = vadd.f32 0.0, %v2871
        %v2873 = vpop.f32.mrf.mxu0
        %2874 = vdwg.mxu0
        %v2875 = vadd.f32 %v2722, %v2837
        %v2876 = vadd.f32 %v2723, %v2840
        %v2877 = vadd.f32 %v2724, %v2845
        %v2878 = vadd.f32 %v2725, %v2848
        %v2879 = vadd.f32 %v2726, %v2853
        %v2880 = vadd.f32 %v2727, %v2856
        %v2881 = vadd.f32 %v2728, %v2861
        %v2882 = vadd.f32 %v2729, %v2864
        %v2883 = vadd.f32 %v2730, %v2869
        %v2884 = vadd.f32 %v2731, %v2872
        %v2885 = vrot.slane %v2350, 1
        %v2886 = vrot.slane %v2351, 1
        %v2887 = vrot.slane %v2352, 1
        %v2888 = vrot.slane %v2353, 1
        %v2889 = vrot.slane %v2354, 1
        %v2890 = vrot.slane %v2355, 1
        %v2891 = vrot.slane %v2356, 1
        %v2892 = vrot.slane %v2357, 1
        %v2893 = vrot.slane %v2358, 1
        %v2894 = vrot.slane %v2359, 1
        %v2895 = vsel %vm1744, %v2893, %v2894
        %v2896 = vsel %vm1744, %v2892, %v2893
        %v2897 = vsel %vm1744, %v2891, %v2892
        %v2898 = vsel %vm1744, %v2890, %v2891
        %v2899 = vsel %vm1744, %v2889, %v2890
        %v2900 = vsel %vm1744, %v2888, %v2889
        %v2901 = vsel %vm1744, %v2887, %v2888
        %v2902 = vsel %vm1744, %v2886, %v2887
        %v2903 = vsel %vm1744, %v2885, %v2886
        %v2904 = vsel %vm1744, %v2894, %v2885
        %v2905 = vsel %vm1785, %v2903, 0.0
        %v2906 = vsel %vm1786, %v2902, 0.0
        %v2907 = vsel %vm1787, %v2901, 0.0
        %v2908 = vsel %vm1788, %v2900, 0.0
        %v2909 = vsel %vm1789, %v2899, 0.0
        %v2910 = vsel %vm1790, %v2898, 0.0
        %v2911 = vsel %vm1791, %v2897, 0.0
        %v2912 = vsel %vm1792, %v2896, 0.0
        %v2913 = vsel %vm1793, %v2895, 0.0
        %v2914 = vsel %vm1794, %v2904, 0.0
        %v2915 = vpack.c.bf16 %v2906, %v2905
        %v2916 = vpack.c.bf16 %v2908, %v2907
        %v2917 = vpack.c.bf16 %v2910, %v2909
        %v2918 = vpack.c.bf16 %v2912, %v2911
        %v2919 = vpack.c.bf16 %v2914, %v2913
        %s2920 = scalar_lea.vmem [#allocation5], 192
        %v2921 = vld [vmem:[%s2920] sm:$0xf]
        %v2922 = vld [vmem:[%s2920 + $0x4] sm:$0xf]
        %v2923 = vld [vmem:[%s2920 + $0x8] sm:$0xf]
        %v2924 = vld [vmem:[%s2920 + $0xc] sm:$0xf]
        %v2925 = vld [vmem:[%s2920 + $0x10] sm:$0xf]
        %v2926 = vld [vmem:[%s2920 + $0x14] sm:$0xf]
        %v2927 = vld [vmem:[%s2920 + $0x18] sm:$0xf]
        %v2928 = vld [vmem:[%s2920 + $0x1c] sm:$0xf]
        %v2929 = vld [vmem:[%s2920 + $0x20] sm:$0xf]
        %v2930 = vld [vmem:[%s2920 + $0x24] sm:$0xf]
        %v2931 = vld [vmem:[%s2920 + $0x28] sm:$0xf]
        %v2932 = vld [vmem:[%s2920 + $0x2c] sm:$0xf]
        %v2933 = vld [vmem:[%s2920 + $0x30] sm:$0xf]
        %v2934 = vld [vmem:[%s2920 + $0x34] sm:$0xf]
        %v2935 = vld [vmem:[%s2920 + $0x38] sm:$0xf]
        %v2936 = vld [vmem:[%s2920 + $0x3c] sm:$0xf]
        %v2953 = vunpack.c.l.b16 %v2921
        %v2954 = vunpack.c.l.b16 %v2922
        %v2955 = vunpack.c.l.b16 %v2923
        %v2956 = vunpack.c.l.b16 %v2924
        %v2957 = vunpack.c.l.b16 %v2925
        %v2958 = vunpack.c.l.b16 %v2926
        %v2959 = vunpack.c.l.b16 %v2927
        %v2960 = vunpack.c.l.b16 %v2928
        %v2961 = vunpack.c.l.b16 %v2929
        %v2962 = vunpack.c.l.b16 %v2930
        %v2963 = vunpack.c.l.b16 %v2931
        %v2964 = vunpack.c.l.b16 %v2932
        %v2965 = vunpack.c.l.b16 %v2933
        %v2966 = vunpack.c.l.b16 %v2934
        %v2967 = vunpack.c.l.b16 %v2935
        %v2968 = vunpack.c.l.b16 %v2936
        %v2969 = vpack.c.b16 %v2954, %v2953
        %v2970 = vpack.c.b16 %v2956, %v2955
        %v2971 = vpack.c.b16 %v2958, %v2957
        %v2972 = vpack.c.b16 %v2960, %v2959
        %v2973 = vpack.c.b16 %v2962, %v2961
        %v2974 = vpack.c.b16 %v2964, %v2963
        %v2975 = vpack.c.b16 %v2966, %v2965
        %v2976 = vpack.c.b16 %v2968, %v2967
        %2985 = vmatprep.subr.bf16.mxu0 0
        %2986 = vmatpush1.bf16.msra.mxu0 %v2976
        %2987 = vmatprep.subr.bf16.mxu0 0
        %2988 = vmatpush1.bf16.msra.mxu0 %v2975
        %2989 = vmatprep.subr.bf16.mxu0 0
        %2990 = vmatpush1.bf16.msra.mxu0 %v2974
        %2991 = vmatprep.subr.bf16.mxu0 0
        %2992 = vmatpush1.bf16.msra.mxu0 %v2973
        %2993 = vmatprep.subr.bf16.mxu0 0
        %2994 = vmatpush1.bf16.msra.mxu0 %v2972
        %2995 = vmatprep.subr.bf16.mxu0 0
        %2996 = vmatpush1.bf16.msra.mxu0 %v2971
        %2997 = vmatprep.subr.bf16.mxu0 0
        %2998 = vmatpush1.bf16.msra.mxu0 %v2970
        %2999 = vmatprep.subr.bf16.mxu0 0
        %3000 = vmatpush1.bf16.msra.mxu0 %v2969
        %3001 = vmatprep.subr.bf16.mxu0 0
        %3002 = vmatpush2.bf16.msra.mxu0 0
        %3003 = vmatprep.subr.bf16.mxu0 0
        %3004 = vmatpush2.bf16.msra.mxu0 0
        %3005 = vmatprep.subr.bf16.mxu0 0
        %3006 = vmatpush2.bf16.msra.mxu0 0
        %3007 = vmatprep.subr.bf16.mxu0 0
        %3008 = vmatpush2.bf16.msra.mxu0 0
        %3009 = vmatprep.subr.bf16.mxu0 0
        %3010 = vmatpush2.bf16.msra.mxu0 0
        %3011 = vmatprep.subr.bf16.mxu0 0
        %3012 = vmatpush2.bf16.msra.mxu0 0
        %3013 = vmatprep.subr.bf16.mxu0 0
        %3014 = vmatpush2.bf16.msra.mxu0 0
        %3015 = vmatprep.subr.bf16.mxu0 0
        %3016 = vmatpush2.bf16.msra.mxu0 0
        %3017 = vmatprep.mubr.bf16.mxu0 0
        %3018 = vmatmul.mubr.bf16.gmra.mxu0 %v2915
        %v3019 = vpop.f32.mrf.mxu0
        %v3020 = vadd.f32 0.0, %v3019
        %v3021 = vpop.f32.mrf.mxu0
        %v3022 = vpop.f32.mrf.mxu0
        %v3023 = vadd.f32 0.0, %v3022
        %v3024 = vpop.f32.mrf.mxu0
        %3025 = vmatprep.mubr.bf16.mxu0 0
        %3026 = vmatmul.mubr.bf16.gmra.mxu0 %v2916
        %v3027 = vpop.f32.mrf.mxu0
        %v3028 = vadd.f32 0.0, %v3027
        %v3029 = vpop.f32.mrf.mxu0
        %v3030 = vpop.f32.mrf.mxu0
        %v3031 = vadd.f32 0.0, %v3030
        %v3032 = vpop.f32.mrf.mxu0
        %3033 = vmatprep.mubr.bf16.mxu0 0
        %3034 = vmatmul.mubr.bf16.gmra.mxu0 %v2917
        %v3035 = vpop.f32.mrf.mxu0
        %v3036 = vadd.f32 0.0, %v3035
        %v3037 = vpop.f32.mrf.mxu0
        %v3038 = vpop.f32.mrf.mxu0
        %v3039 = vadd.f32 0.0, %v3038
        %v3040 = vpop.f32.mrf.mxu0
        %3041 = vmatprep.mubr.bf16.mxu0 0
        %3042 = vmatmul.mubr.bf16.gmra.mxu0 %v2918
        %v3043 = vpop.f32.mrf.mxu0
        %v3044 = vadd.f32 0.0, %v3043
        %v3045 = vpop.f32.mrf.mxu0
        %v3046 = vpop.f32.mrf.mxu0
        %v3047 = vadd.f32 0.0, %v3046
        %v3048 = vpop.f32.mrf.mxu0
        %3049 = vmatprep.mubr.bf16.mxu0 0
        %3050 = vmatmul.mubr.bf16.gmra.mxu0 %v2919
        %v3051 = vpop.f32.mrf.mxu0
        %v3052 = vadd.f32 0.0, %v3051
        %v3053 = vpop.f32.mrf.mxu0
        %v3054 = vpop.f32.mrf.mxu0
        %v3055 = vadd.f32 0.0, %v3054
        %v3056 = vpop.f32.mrf.mxu0
        %3057 = vdwg.mxu0
        %v3058 = vadd.f32 %v2875, %v3020
        %v3059 = vadd.f32 %v2876, %v3023
        %v3060 = vadd.f32 %v2877, %v3028
        %v3061 = vadd.f32 %v2878, %v3031
        %v3062 = vadd.f32 %v2879, %v3036
        %v3063 = vadd.f32 %v2880, %v3039
        %v3064 = vadd.f32 %v2881, %v3044
        %v3065 = vadd.f32 %v2882, %v3047
        %v3066 = vadd.f32 %v2883, %v3052
        %v3067 = vadd.f32 %v2884, %v3055
        %v3068 = vrot.slane %v2350, 2
        %v3069 = vrot.slane %v2351, 2
        %v3070 = vrot.slane %v2352, 2
        %v3071 = vrot.slane %v2353, 2
        %v3072 = vrot.slane %v2354, 2
        %v3073 = vrot.slane %v2355, 2
        %v3074 = vrot.slane %v2356, 2
        %v3075 = vrot.slane %v2357, 2
        %v3076 = vrot.slane %v2358, 2
        %v3077 = vrot.slane %v2359, 2
        %v3078 = vsel %vm2057, %v3076, %v3077
        %v3079 = vsel %vm2057, %v3075, %v3076
        %v3080 = vsel %vm2057, %v3074, %v3075
        %v3081 = vsel %vm2057, %v3073, %v3074
        %v3082 = vsel %vm2057, %v3072, %v3073
        %v3083 = vsel %vm2057, %v3071, %v3072
        %v3084 = vsel %vm2057, %v3070, %v3071
        %v3085 = vsel %vm2057, %v3069, %v3070
        %v3086 = vsel %vm2057, %v3068, %v3069
        %v3087 = vsel %vm2057, %v3077, %v3068
        %v3088 = vsel %vm2098, %v3086, 0.0
        %v3089 = vsel %vm2099, %v3085, 0.0
        %v3090 = vsel %vm2100, %v3084, 0.0
        %v3091 = vsel %vm2101, %v3083, 0.0
        %v3092 = vsel %vm2102, %v3082, 0.0
        %v3093 = vsel %vm2103, %v3081, 0.0
        %v3094 = vsel %vm2104, %v3080, 0.0
        %v3095 = vsel %vm2105, %v3079, 0.0
        %v3096 = vsel %vm2106, %v3078, 0.0
        %v3097 = vsel %vm2107, %v3087, 0.0
        %v3098 = vpack.c.bf16 %v3089, %v3088
        %v3099 = vpack.c.bf16 %v3091, %v3090
        %v3100 = vpack.c.bf16 %v3093, %v3092
        %v3101 = vpack.c.bf16 %v3095, %v3094
        %v3102 = vpack.c.bf16 %v3097, %v3096
        %s3103 = scalar_lea.vmem [#allocation5], 256
        %v3104 = vld [vmem:[%s3103] sm:$0xf]
        %v3105 = vld [vmem:[%s3103 + $0x4] sm:$0xf]
        %v3106 = vld [vmem:[%s3103 + $0x8] sm:$0xf]
        %v3107 = vld [vmem:[%s3103 + $0xc] sm:$0xf]
        %v3108 = vld [vmem:[%s3103 + $0x10] sm:$0xf]
        %v3109 = vld [vmem:[%s3103 + $0x14] sm:$0xf]
        %v3110 = vld [vmem:[%s3103 + $0x18] sm:$0xf]
        %v3111 = vld [vmem:[%s3103 + $0x1c] sm:$0xf]
        %v3112 = vld [vmem:[%s3103 + $0x20] sm:$0xf]
        %v3113 = vld [vmem:[%s3103 + $0x24] sm:$0xf]
        %v3114 = vld [vmem:[%s3103 + $0x28] sm:$0xf]
        %v3115 = vld [vmem:[%s3103 + $0x2c] sm:$0xf]
        %v3116 = vld [vmem:[%s3103 + $0x30] sm:$0xf]
        %v3117 = vld [vmem:[%s3103 + $0x34] sm:$0xf]
        %v3118 = vld [vmem:[%s3103 + $0x38] sm:$0xf]
        %v3119 = vld [vmem:[%s3103 + $0x3c] sm:$0xf]
        %v3136 = vunpack.c.l.b16 %v3104
        %v3137 = vunpack.c.l.b16 %v3105
        %v3138 = vunpack.c.l.b16 %v3106
        %v3139 = vunpack.c.l.b16 %v3107
        %v3140 = vunpack.c.l.b16 %v3108
        %v3141 = vunpack.c.l.b16 %v3109
        %v3142 = vunpack.c.l.b16 %v3110
        %v3143 = vunpack.c.l.b16 %v3111
        %v3144 = vunpack.c.l.b16 %v3112
        %v3145 = vunpack.c.l.b16 %v3113
        %v3146 = vunpack.c.l.b16 %v3114
        %v3147 = vunpack.c.l.b16 %v3115
        %v3148 = vunpack.c.l.b16 %v3116
        %v3149 = vunpack.c.l.b16 %v3117
        %v3150 = vunpack.c.l.b16 %v3118
        %v3151 = vunpack.c.l.b16 %v3119
        %v3152 = vpack.c.b16 %v3137, %v3136
        %v3153 = vpack.c.b16 %v3139, %v3138
        %v3154 = vpack.c.b16 %v3141, %v3140
        %v3155 = vpack.c.b16 %v3143, %v3142
        %v3156 = vpack.c.b16 %v3145, %v3144
        %v3157 = vpack.c.b16 %v3147, %v3146
        %v3158 = vpack.c.b16 %v3149, %v3148
        %v3159 = vpack.c.b16 %v3151, %v3150
        %3168 = vmatprep.subr.bf16.mxu0 0
        %3169 = vmatpush1.bf16.msra.mxu0 %v3159
        %3170 = vmatprep.subr.bf16.mxu0 0
        %3171 = vmatpush1.bf16.msra.mxu0 %v3158
        %3172 = vmatprep.subr.bf16.mxu0 0
        %3173 = vmatpush1.bf16.msra.mxu0 %v3157
        %3174 = vmatprep.subr.bf16.mxu0 0
        %3175 = vmatpush1.bf16.msra.mxu0 %v3156
        %3176 = vmatprep.subr.bf16.mxu0 0
        %3177 = vmatpush1.bf16.msra.mxu0 %v3155
        %3178 = vmatprep.subr.bf16.mxu0 0
        %3179 = vmatpush1.bf16.msra.mxu0 %v3154
        %3180 = vmatprep.subr.bf16.mxu0 0
        %3181 = vmatpush1.bf16.msra.mxu0 %v3153
        %3182 = vmatprep.subr.bf16.mxu0 0
        %3183 = vmatpush1.bf16.msra.mxu0 %v3152
        %3184 = vmatprep.subr.bf16.mxu0 0
        %3185 = vmatpush2.bf16.msra.mxu0 0
        %3186 = vmatprep.subr.bf16.mxu0 0
        %3187 = vmatpush2.bf16.msra.mxu0 0
        %3188 = vmatprep.subr.bf16.mxu0 0
        %3189 = vmatpush2.bf16.msra.mxu0 0
        %3190 = vmatprep.subr.bf16.mxu0 0
        %3191 = vmatpush2.bf16.msra.mxu0 0
        %3192 = vmatprep.subr.bf16.mxu0 0
        %3193 = vmatpush2.bf16.msra.mxu0 0
        %3194 = vmatprep.subr.bf16.mxu0 0
        %3195 = vmatpush2.bf16.msra.mxu0 0
        %3196 = vmatprep.subr.bf16.mxu0 0
        %3197 = vmatpush2.bf16.msra.mxu0 0
        %3198 = vmatprep.subr.bf16.mxu0 0
        %3199 = vmatpush2.bf16.msra.mxu0 0
        %3200 = vmatprep.mubr.bf16.mxu0 0
        %3201 = vmatmul.mubr.bf16.gmra.mxu0 %v3098
        %v3202 = vpop.f32.mrf.mxu0
        %v3203 = vadd.f32 0.0, %v3202
        %v3204 = vpop.f32.mrf.mxu0
        %v3205 = vpop.f32.mrf.mxu0
        %v3206 = vadd.f32 0.0, %v3205
        %v3207 = vpop.f32.mrf.mxu0
        %3208 = vmatprep.mubr.bf16.mxu0 0
        %3209 = vmatmul.mubr.bf16.gmra.mxu0 %v3099
        %v3210 = vpop.f32.mrf.mxu0
        %v3211 = vadd.f32 0.0, %v3210
        %v3212 = vpop.f32.mrf.mxu0
        %v3213 = vpop.f32.mrf.mxu0
        %v3214 = vadd.f32 0.0, %v3213
        %v3215 = vpop.f32.mrf.mxu0
        %3216 = vmatprep.mubr.bf16.mxu0 0
        %3217 = vmatmul.mubr.bf16.gmra.mxu0 %v3100
        %v3218 = vpop.f32.mrf.mxu0
        %v3219 = vadd.f32 0.0, %v3218
        %v3220 = vpop.f32.mrf.mxu0
        %v3221 = vpop.f32.mrf.mxu0
        %v3222 = vadd.f32 0.0, %v3221
        %v3223 = vpop.f32.mrf.mxu0
        %3224 = vmatprep.mubr.bf16.mxu0 0
        %3225 = vmatmul.mubr.bf16.gmra.mxu0 %v3101
        %v3226 = vpop.f32.mrf.mxu0
        %v3227 = vadd.f32 0.0, %v3226
        %v3228 = vpop.f32.mrf.mxu0
        %v3229 = vpop.f32.mrf.mxu0
        %v3230 = vadd.f32 0.0, %v3229
        %v3231 = vpop.f32.mrf.mxu0
        %3232 = vmatprep.mubr.bf16.mxu0 0
        %3233 = vmatmul.mubr.bf16.gmra.mxu0 %v3102
        %v3234 = vpop.f32.mrf.mxu0
        %v3235 = vadd.f32 0.0, %v3234
        %v3236 = vpop.f32.mrf.mxu0
        %v3237 = vpop.f32.mrf.mxu0
        %v3238 = vadd.f32 0.0, %v3237
        %v3239 = vpop.f32.mrf.mxu0
        %3240 = vdwg.mxu0
        %v3241 = vadd.f32 %v3058, %v3203
        %v3242 = vadd.f32 %v3059, %v3206
        %v3243 = vadd.f32 %v3060, %v3211
        %v3244 = vadd.f32 %v3061, %v3214
        %v3245 = vadd.f32 %v3062, %v3219
        %v3246 = vadd.f32 %v3063, %v3222
        %v3247 = vadd.f32 %v3064, %v3227
        %v3248 = vadd.f32 %v3065, %v3230
        %v3249 = vadd.f32 %v3066, %v3235
        %v3250 = vadd.f32 %v3067, %v3238
        %v3251 = vmax.f32 %v3241, 0.0
        %v3252 = vmax.f32 %v3242, 0.0
        %v3253 = vmax.f32 %v3243, 0.0
        %v3254 = vmax.f32 %v3244, 0.0
        %v3255 = vmax.f32 %v3245, 0.0
        %v3256 = vmax.f32 %v3246, 0.0
        %v3257 = vmax.f32 %v3247, 0.0
        %v3258 = vmax.f32 %v3248, 0.0
        %v3259 = vmax.f32 %v3249, 0.0
        %v3260 = vmax.f32 %v3250, 0.0
        %v3261 = vrot.slane %v3251, 6
        %v3262 = vrot.slane %v3252, 6
        %v3263 = vrot.slane %v3253, 6
        %v3264 = vrot.slane %v3254, 6
        %v3265 = vrot.slane %v3255, 6
        %v3266 = vrot.slane %v3256, 6
        %v3267 = vrot.slane %v3257, 6
        %v3268 = vrot.slane %v3258, 6
        %v3269 = vrot.slane %v3259, 6
        %v3270 = vrot.slane %v3260, 6
        %v3271 = vsel %vm891, %v3269, %v3270
        %v3272 = vsel %vm891, %v3268, %v3269
        %v3273 = vsel %vm891, %v3267, %v3268
        %v3274 = vsel %vm891, %v3266, %v3267
        %v3275 = vsel %vm891, %v3265, %v3266
        %v3276 = vsel %vm891, %v3264, %v3265
        %v3277 = vsel %vm891, %v3263, %v3264
        %v3278 = vsel %vm891, %v3262, %v3263
        %v3279 = vsel %vm891, %v3261, %v3262
        %v3280 = vsel %vm891, %v3270, %v3261
        %v3281 = vsel %vm932, %v3280, 0.0
        %v3282 = vsel %vm933, %v3279, 0.0
        %v3283 = vsel %vm934, %v3278, 0.0
        %v3284 = vsel %vm935, %v3277, 0.0
        %v3285 = vsel %vm936, %v3276, 0.0
        %v3286 = vsel %vm937, %v3275, 0.0
        %v3287 = vsel %vm938, %v3274, 0.0
        %v3288 = vsel %vm939, %v3273, 0.0
        %v3289 = vsel %vm940, %v3272, 0.0
        %v3290 = vsel %vm941, %v3271, 0.0
        %v3291 = vpack.c.bf16 %v3282, %v3281
        %v3292 = vpack.c.bf16 %v3284, %v3283
        %v3293 = vpack.c.bf16 %v3286, %v3285
        %v3294 = vpack.c.bf16 %v3288, %v3287
        %v3295 = vpack.c.bf16 %v3290, %v3289
        %3296 = vmatprep.subr.bf16.mxu0 0
        %3297 = vmatpush1.bf16.msra.mxu0 %v2451
        %3298 = vmatprep.subr.bf16.mxu0 0
        %3299 = vmatpush1.bf16.msra.mxu0 %v2450
        %3300 = vmatprep.subr.bf16.mxu0 0
        %3301 = vmatpush1.bf16.msra.mxu0 %v2449
        %3302 = vmatprep.subr.bf16.mxu0 0
        %3303 = vmatpush1.bf16.msra.mxu0 %v2448
        %3304 = vmatprep.subr.bf16.mxu0 0
        %3305 = vmatpush1.bf16.msra.mxu0 %v2447
        %3306 = vmatprep.subr.bf16.mxu0 0
        %3307 = vmatpush1.bf16.msra.mxu0 %v2446
        %3308 = vmatprep.subr.bf16.mxu0 0
        %3309 = vmatpush1.bf16.msra.mxu0 %v2445
        %3310 = vmatprep.subr.bf16.mxu0 0
        %3311 = vmatpush1.bf16.msra.mxu0 %v2444
        %3312 = vmatprep.subr.bf16.mxu0 0
        %3313 = vmatpush2.bf16.msra.mxu0 0
        %3314 = vmatprep.subr.bf16.mxu0 0
        %3315 = vmatpush2.bf16.msra.mxu0 0
        %3316 = vmatprep.subr.bf16.mxu0 0
        %3317 = vmatpush2.bf16.msra.mxu0 0
        %3318 = vmatprep.subr.bf16.mxu0 0
        %3319 = vmatpush2.bf16.msra.mxu0 0
        %3320 = vmatprep.subr.bf16.mxu0 0
        %3321 = vmatpush2.bf16.msra.mxu0 0
        %3322 = vmatprep.subr.bf16.mxu0 0
        %3323 = vmatpush2.bf16.msra.mxu0 0
        %3324 = vmatprep.subr.bf16.mxu0 0
        %3325 = vmatpush2.bf16.msra.mxu0 0
        %3326 = vmatprep.subr.bf16.mxu0 0
        %3327 = vmatpush2.bf16.msra.mxu0 0
        %3328 = vmatprep.mubr.bf16.mxu0 0
        %3329 = vmatmul.mubr.bf16.gmra.mxu0 %v3291
        %v3330 = vpop.f32.mrf.mxu0
        %v3331 = vadd.f32 0.0, %v3330
        %v3332 = vpop.f32.mrf.mxu0
        %v3333 = vpop.f32.mrf.mxu0
        %v3334 = vadd.f32 0.0, %v3333
        %v3335 = vpop.f32.mrf.mxu0
        %3336 = vmatprep.mubr.bf16.mxu0 0
        %3337 = vmatmul.mubr.bf16.gmra.mxu0 %v3292
        %v3338 = vpop.f32.mrf.mxu0
        %v3339 = vadd.f32 0.0, %v3338
        %v3340 = vpop.f32.mrf.mxu0
        %v3341 = vpop.f32.mrf.mxu0
        %v3342 = vadd.f32 0.0, %v3341
        %v3343 = vpop.f32.mrf.mxu0
        %3344 = vmatprep.mubr.bf16.mxu0 0
        %3345 = vmatmul.mubr.bf16.gmra.mxu0 %v3293
        %v3346 = vpop.f32.mrf.mxu0
        %v3347 = vadd.f32 0.0, %v3346
        %v3348 = vpop.f32.mrf.mxu0
        %v3349 = vpop.f32.mrf.mxu0
        %v3350 = vadd.f32 0.0, %v3349
        %v3351 = vpop.f32.mrf.mxu0
        %3352 = vmatprep.mubr.bf16.mxu0 0
        %3353 = vmatmul.mubr.bf16.gmra.mxu0 %v3294
        %v3354 = vpop.f32.mrf.mxu0
        %v3355 = vadd.f32 0.0, %v3354
        %v3356 = vpop.f32.mrf.mxu0
        %v3357 = vpop.f32.mrf.mxu0
        %v3358 = vadd.f32 0.0, %v3357
        %v3359 = vpop.f32.mrf.mxu0
        %3360 = vmatprep.mubr.bf16.mxu0 0
        %3361 = vmatmul.mubr.bf16.gmra.mxu0 %v3295
        %v3362 = vpop.f32.mrf.mxu0
        %v3363 = vadd.f32 0.0, %v3362
        %v3364 = vpop.f32.mrf.mxu0
        %v3365 = vpop.f32.mrf.mxu0
        %v3366 = vadd.f32 0.0, %v3365
        %v3367 = vpop.f32.mrf.mxu0
        %3368 = vdwg.mxu0
        %v3369 = vadd.f32 %v2537, %v3331
        %v3370 = vadd.f32 %v2537, %v3334
        %v3371 = vadd.f32 %v2537, %v3339
        %v3372 = vadd.f32 %v2537, %v3342
        %v3373 = vadd.f32 %v2537, %v3347
        %v3374 = vadd.f32 %v2537, %v3350
        %v3375 = vadd.f32 %v2537, %v3355
        %v3376 = vadd.f32 %v2537, %v3358
        %v3377 = vadd.f32 %v2537, %v3363
        %v3378 = vadd.f32 %v2537, %v3366
        %v3379 = vrot.slane %v3251, 7
        %v3380 = vrot.slane %v3252, 7
        %v3381 = vrot.slane %v3253, 7
        %v3382 = vrot.slane %v3254, 7
        %v3383 = vrot.slane %v3255, 7
        %v3384 = vrot.slane %v3256, 7
        %v3385 = vrot.slane %v3257, 7
        %v3386 = vrot.slane %v3258, 7
        %v3387 = vrot.slane %v3259, 7
        %v3388 = vrot.slane %v3260, 7
        %v3389 = vsel %vm1209, %v3387, %v3388
        %v3390 = vsel %vm1209, %v3386, %v3387
        %v3391 = vsel %vm1209, %v3385, %v3386
        %v3392 = vsel %vm1209, %v3384, %v3385
        %v3393 = vsel %vm1209, %v3383, %v3384
        %v3394 = vsel %vm1209, %v3382, %v3383
        %v3395 = vsel %vm1209, %v3381, %v3382
        %v3396 = vsel %vm1209, %v3380, %v3381
        %v3397 = vsel %vm1209, %v3379, %v3380
        %v3398 = vsel %vm1209, %v3388, %v3379
        %v3399 = vsel %vm1250, %v3398, 0.0
        %v3400 = vsel %vm1251, %v3397, 0.0
        %v3401 = vsel %vm1252, %v3396, 0.0
        %v3402 = vsel %vm1253, %v3395, 0.0
        %v3403 = vsel %vm1254, %v3394, 0.0
        %v3404 = vsel %vm1255, %v3393, 0.0
        %v3405 = vsel %vm1256, %v3392, 0.0
        %v3406 = vsel %vm1257, %v3391, 0.0
        %v3407 = vsel %vm1258, %v3390, 0.0
        %v3408 = vsel %vm1259, %v3389, 0.0
        %v3409 = vpack.c.bf16 %v3400, %v3399
        %v3410 = vpack.c.bf16 %v3402, %v3401
        %v3411 = vpack.c.bf16 %v3404, %v3403
        %v3412 = vpack.c.bf16 %v3406, %v3405
        %v3413 = vpack.c.bf16 %v3408, %v3407
        %3414 = vmatprep.subr.bf16.mxu0 0
        %3415 = vmatpush1.bf16.msra.mxu0 %v2640
        %3416 = vmatprep.subr.bf16.mxu0 0
        %3417 = vmatpush1.bf16.msra.mxu0 %v2639
        %3418 = vmatprep.subr.bf16.mxu0 0
        %3419 = vmatpush1.bf16.msra.mxu0 %v2638
        %3420 = vmatprep.subr.bf16.mxu0 0
        %3421 = vmatpush1.bf16.msra.mxu0 %v2637
        %3422 = vmatprep.subr.bf16.mxu0 0
        %3423 = vmatpush1.bf16.msra.mxu0 %v2636
        %3424 = vmatprep.subr.bf16.mxu0 0
        %3425 = vmatpush1.bf16.msra.mxu0 %v2635
        %3426 = vmatprep.subr.bf16.mxu0 0
        %3427 = vmatpush1.bf16.msra.mxu0 %v2634
        %3428 = vmatprep.subr.bf16.mxu0 0
        %3429 = vmatpush1.bf16.msra.mxu0 %v2633
        %3430 = vmatprep.subr.bf16.mxu0 0
        %3431 = vmatpush2.bf16.msra.mxu0 0
        %3432 = vmatprep.subr.bf16.mxu0 0
        %3433 = vmatpush2.bf16.msra.mxu0 0
        %3434 = vmatprep.subr.bf16.mxu0 0
        %3435 = vmatpush2.bf16.msra.mxu0 0
        %3436 = vmatprep.subr.bf16.mxu0 0
        %3437 = vmatpush2.bf16.msra.mxu0 0
        %3438 = vmatprep.subr.bf16.mxu0 0
        %3439 = vmatpush2.bf16.msra.mxu0 0
        %3440 = vmatprep.subr.bf16.mxu0 0
        %3441 = vmatpush2.bf16.msra.mxu0 0
        %3442 = vmatprep.subr.bf16.mxu0 0
        %3443 = vmatpush2.bf16.msra.mxu0 0
        %3444 = vmatprep.subr.bf16.mxu0 0
        %3445 = vmatpush2.bf16.msra.mxu0 0
        %3446 = vmatprep.mubr.bf16.mxu0 0
        %3447 = vmatmul.mubr.bf16.gmra.mxu0 %v3409
        %v3448 = vpop.f32.mrf.mxu0
        %v3449 = vadd.f32 0.0, %v3448
        %v3450 = vpop.f32.mrf.mxu0
        %v3451 = vpop.f32.mrf.mxu0
        %v3452 = vadd.f32 0.0, %v3451
        %v3453 = vpop.f32.mrf.mxu0
        %3454 = vmatprep.mubr.bf16.mxu0 0
        %3455 = vmatmul.mubr.bf16.gmra.mxu0 %v3410
        %v3456 = vpop.f32.mrf.mxu0
        %v3457 = vadd.f32 0.0, %v3456
        %v3458 = vpop.f32.mrf.mxu0
        %v3459 = vpop.f32.mrf.mxu0
        %v3460 = vadd.f32 0.0, %v3459
        %v3461 = vpop.f32.mrf.mxu0
        %3462 = vmatprep.mubr.bf16.mxu0 0
        %3463 = vmatmul.mubr.bf16.gmra.mxu0 %v3411
        %v3464 = vpop.f32.mrf.mxu0
        %v3465 = vadd.f32 0.0, %v3464
        %v3466 = vpop.f32.mrf.mxu0
        %v3467 = vpop.f32.mrf.mxu0
        %v3468 = vadd.f32 0.0, %v3467
        %v3469 = vpop.f32.mrf.mxu0
        %3470 = vmatprep.mubr.bf16.mxu0 0
        %3471 = vmatmul.mubr.bf16.gmra.mxu0 %v3412
        %v3472 = vpop.f32.mrf.mxu0
        %v3473 = vadd.f32 0.0, %v3472
        %v3474 = vpop.f32.mrf.mxu0
        %v3475 = vpop.f32.mrf.mxu0
        %v3476 = vadd.f32 0.0, %v3475
        %v3477 = vpop.f32.mrf.mxu0
        %3478 = vmatprep.mubr.bf16.mxu0 0
        %3479 = vmatmul.mubr.bf16.gmra.mxu0 %v3413
        %v3480 = vpop.f32.mrf.mxu0
        %v3481 = vadd.f32 0.0, %v3480
        %v3482 = vpop.f32.mrf.mxu0
        %v3483 = vpop.f32.mrf.mxu0
        %v3484 = vadd.f32 0.0, %v3483
        %v3485 = vpop.f32.mrf.mxu0
        %3486 = vdwg.mxu0
        %v3487 = vadd.f32 %v3369, %v3449
        %v3488 = vadd.f32 %v3370, %v3452
        %v3489 = vadd.f32 %v3371, %v3457
        %v3490 = vadd.f32 %v3372, %v3460
        %v3491 = vadd.f32 %v3373, %v3465
        %v3492 = vadd.f32 %v3374, %v3468
        %v3493 = vadd.f32 %v3375, %v3473
        %v3494 = vadd.f32 %v3376, %v3476
        %v3495 = vadd.f32 %v3377, %v3481
        %v3496 = vadd.f32 %v3378, %v3484
        %v3497 = vpack.c.bf16 %v3252, %v3251
        %v3498 = vpack.c.bf16 %v3254, %v3253
        %v3499 = vpack.c.bf16 %v3256, %v3255
        %v3500 = vpack.c.bf16 %v3258, %v3257
        %v3501 = vpack.c.bf16 %v3260, %v3259
        %3502 = vmatprep.subr.bf16.mxu0 0
        %3503 = vmatpush1.bf16.msra.mxu0 %v2793
        %3504 = vmatprep.subr.bf16.mxu0 0
        %3505 = vmatpush1.bf16.msra.mxu0 %v2792
        %3506 = vmatprep.subr.bf16.mxu0 0
        %3507 = vmatpush1.bf16.msra.mxu0 %v2791
        %3508 = vmatprep.subr.bf16.mxu0 0
        %3509 = vmatpush1.bf16.msra.mxu0 %v2790
        %3510 = vmatprep.subr.bf16.mxu0 0
        %3511 = vmatpush1.bf16.msra.mxu0 %v2789
        %3512 = vmatprep.subr.bf16.mxu0 0
        %3513 = vmatpush1.bf16.msra.mxu0 %v2788
        %3514 = vmatprep.subr.bf16.mxu0 0
        %3515 = vmatpush1.bf16.msra.mxu0 %v2787
        %3516 = vmatprep.subr.bf16.mxu0 0
        %3517 = vmatpush1.bf16.msra.mxu0 %v2786
        %3518 = vmatprep.subr.bf16.mxu0 0
        %3519 = vmatpush2.bf16.msra.mxu0 0
        %3520 = vmatprep.subr.bf16.mxu0 0
        %3521 = vmatpush2.bf16.msra.mxu0 0
        %3522 = vmatprep.subr.bf16.mxu0 0
        %3523 = vmatpush2.bf16.msra.mxu0 0
        %3524 = vmatprep.subr.bf16.mxu0 0
        %3525 = vmatpush2.bf16.msra.mxu0 0
        %3526 = vmatprep.subr.bf16.mxu0 0
        %3527 = vmatpush2.bf16.msra.mxu0 0
        %3528 = vmatprep.subr.bf16.mxu0 0
        %3529 = vmatpush2.bf16.msra.mxu0 0
        %3530 = vmatprep.subr.bf16.mxu0 0
        %3531 = vmatpush2.bf16.msra.mxu0 0
        %3532 = vmatprep.subr.bf16.mxu0 0
        %3533 = vmatpush2.bf16.msra.mxu0 0
        %3534 = vmatprep.mubr.bf16.mxu0 0
        %3535 = vmatmul.mubr.bf16.gmra.mxu0 %v3497
        %v3536 = vpop.f32.mrf.mxu0
        %v3537 = vadd.f32 0.0, %v3536
        %v3538 = vpop.f32.mrf.mxu0
        %v3539 = vpop.f32.mrf.mxu0
        %v3540 = vadd.f32 0.0, %v3539
        %v3541 = vpop.f32.mrf.mxu0
        %3542 = vmatprep.mubr.bf16.mxu0 0
        %3543 = vmatmul.mubr.bf16.gmra.mxu0 %v3498
        %v3544 = vpop.f32.mrf.mxu0
        %v3545 = vadd.f32 0.0, %v3544
        %v3546 = vpop.f32.mrf.mxu0
        %v3547 = vpop.f32.mrf.mxu0
        %v3548 = vadd.f32 0.0, %v3547
        %v3549 = vpop.f32.mrf.mxu0
        %3550 = vmatprep.mubr.bf16.mxu0 0
        %3551 = vmatmul.mubr.bf16.gmra.mxu0 %v3499
        %v3552 = vpop.f32.mrf.mxu0
        %v3553 = vadd.f32 0.0, %v3552
        %v3554 = vpop.f32.mrf.mxu0
        %v3555 = vpop.f32.mrf.mxu0
        %v3556 = vadd.f32 0.0, %v3555
        %v3557 = vpop.f32.mrf.mxu0
        %3558 = vmatprep.mubr.bf16.mxu0 0
        %3559 = vmatmul.mubr.bf16.gmra.mxu0 %v3500
        %v3560 = vpop.f32.mrf.mxu0
        %v3561 = vadd.f32 0.0, %v3560
        %v3562 = vpop.f32.mrf.mxu0
        %v3563 = vpop.f32.mrf.mxu0
        %v3564 = vadd.f32 0.0, %v3563
        %v3565 = vpop.f32.mrf.mxu0
        %3566 = vmatprep.mubr.bf16.mxu0 0
        %3567 = vmatmul.mubr.bf16.gmra.mxu0 %v3501
        %v3568 = vpop.f32.mrf.mxu0
        %v3569 = vadd.f32 0.0, %v3568
        %v3570 = vpop.f32.mrf.mxu0
        %v3571 = vpop.f32.mrf.mxu0
        %v3572 = vadd.f32 0.0, %v3571
        %v3573 = vpop.f32.mrf.mxu0
        %3574 = vdwg.mxu0
        %v3575 = vadd.f32 %v3487, %v3537
        %v3576 = vadd.f32 %v3488, %v3540
        %v3577 = vadd.f32 %v3489, %v3545
        %v3578 = vadd.f32 %v3490, %v3548
        %v3579 = vadd.f32 %v3491, %v3553
        %v3580 = vadd.f32 %v3492, %v3556
        %v3581 = vadd.f32 %v3493, %v3561
        %v3582 = vadd.f32 %v3494, %v3564
        %v3583 = vadd.f32 %v3495, %v3569
        %v3584 = vadd.f32 %v3496, %v3572
        %v3585 = vrot.slane %v3251, 1
        %v3586 = vrot.slane %v3252, 1
        %v3587 = vrot.slane %v3253, 1
        %v3588 = vrot.slane %v3254, 1
        %v3589 = vrot.slane %v3255, 1
        %v3590 = vrot.slane %v3256, 1
        %v3591 = vrot.slane %v3257, 1
        %v3592 = vrot.slane %v3258, 1
        %v3593 = vrot.slane %v3259, 1
        %v3594 = vrot.slane %v3260, 1
        %v3595 = vsel %vm1744, %v3593, %v3594
        %v3596 = vsel %vm1744, %v3592, %v3593
        %v3597 = vsel %vm1744, %v3591, %v3592
        %v3598 = vsel %vm1744, %v3590, %v3591
        %v3599 = vsel %vm1744, %v3589, %v3590
        %v3600 = vsel %vm1744, %v3588, %v3589
        %v3601 = vsel %vm1744, %v3587, %v3588
        %v3602 = vsel %vm1744, %v3586, %v3587
        %v3603 = vsel %vm1744, %v3585, %v3586
        %v3604 = vsel %vm1744, %v3594, %v3585
        %v3605 = vsel %vm1785, %v3603, 0.0
        %v3606 = vsel %vm1786, %v3602, 0.0
        %v3607 = vsel %vm1787, %v3601, 0.0
        %v3608 = vsel %vm1788, %v3600, 0.0
        %v3609 = vsel %vm1789, %v3599, 0.0
        %v3610 = vsel %vm1790, %v3598, 0.0
        %v3611 = vsel %vm1791, %v3597, 0.0
        %v3612 = vsel %vm1792, %v3596, 0.0
        %v3613 = vsel %vm1793, %v3595, 0.0
        %v3614 = vsel %vm1794, %v3604, 0.0
        %v3615 = vpack.c.bf16 %v3606, %v3605
        %v3616 = vpack.c.bf16 %v3608, %v3607
        %v3617 = vpack.c.bf16 %v3610, %v3609
        %v3618 = vpack.c.bf16 %v3612, %v3611
        %v3619 = vpack.c.bf16 %v3614, %v3613
        %3620 = vmatprep.subr.bf16.mxu0 0
        %3621 = vmatpush1.bf16.msra.mxu0 %v2976
        %3622 = vmatprep.subr.bf16.mxu0 0
        %3623 = vmatpush1.bf16.msra.mxu0 %v2975
        %3624 = vmatprep.subr.bf16.mxu0 0
        %3625 = vmatpush1.bf16.msra.mxu0 %v2974
        %3626 = vmatprep.subr.bf16.mxu0 0
        %3627 = vmatpush1.bf16.msra.mxu0 %v2973
        %3628 = vmatprep.subr.bf16.mxu0 0
        %3629 = vmatpush1.bf16.msra.mxu0 %v2972
        %3630 = vmatprep.subr.bf16.mxu0 0
        %3631 = vmatpush1.bf16.msra.mxu0 %v2971
        %3632 = vmatprep.subr.bf16.mxu0 0
        %3633 = vmatpush1.bf16.msra.mxu0 %v2970
        %3634 = vmatprep.subr.bf16.mxu0 0
        %3635 = vmatpush1.bf16.msra.mxu0 %v2969
        %3636 = vmatprep.subr.bf16.mxu0 0
        %3637 = vmatpush2.bf16.msra.mxu0 0
        %3638 = vmatprep.subr.bf16.mxu0 0
        %3639 = vmatpush2.bf16.msra.mxu0 0
        %3640 = vmatprep.subr.bf16.mxu0 0
        %3641 = vmatpush2.bf16.msra.mxu0 0
        %3642 = vmatprep.subr.bf16.mxu0 0
        %3643 = vmatpush2.bf16.msra.mxu0 0
        %3644 = vmatprep.subr.bf16.mxu0 0
        %3645 = vmatpush2.bf16.msra.mxu0 0
        %3646 = vmatprep.subr.bf16.mxu0 0
        %3647 = vmatpush2.bf16.msra.mxu0 0
        %3648 = vmatprep.subr.bf16.mxu0 0
        %3649 = vmatpush2.bf16.msra.mxu0 0
        %3650 = vmatprep.subr.bf16.mxu0 0
        %3651 = vmatpush2.bf16.msra.mxu0 0
        %3652 = vmatprep.mubr.bf16.mxu0 0
        %3653 = vmatmul.mubr.bf16.gmra.mxu0 %v3615
        %v3654 = vpop.f32.mrf.mxu0
        %v3655 = vadd.f32 0.0, %v3654
        %v3656 = vpop.f32.mrf.mxu0
        %v3657 = vpop.f32.mrf.mxu0
        %v3658 = vadd.f32 0.0, %v3657
        %v3659 = vpop.f32.mrf.mxu0
        %3660 = vmatprep.mubr.bf16.mxu0 0
        %3661 = vmatmul.mubr.bf16.gmra.mxu0 %v3616
        %v3662 = vpop.f32.mrf.mxu0
        %v3663 = vadd.f32 0.0, %v3662
        %v3664 = vpop.f32.mrf.mxu0
        %v3665 = vpop.f32.mrf.mxu0
        %v3666 = vadd.f32 0.0, %v3665
        %v3667 = vpop.f32.mrf.mxu0
        %3668 = vmatprep.mubr.bf16.mxu0 0
        %3669 = vmatmul.mubr.bf16.gmra.mxu0 %v3617
        %v3670 = vpop.f32.mrf.mxu0
        %v3671 = vadd.f32 0.0, %v3670
        %v3672 = vpop.f32.mrf.mxu0
        %v3673 = vpop.f32.mrf.mxu0
        %v3674 = vadd.f32 0.0, %v3673
        %v3675 = vpop.f32.mrf.mxu0
        %3676 = vmatprep.mubr.bf16.mxu0 0
        %3677 = vmatmul.mubr.bf16.gmra.mxu0 %v3618
        %v3678 = vpop.f32.mrf.mxu0
        %v3679 = vadd.f32 0.0, %v3678
        %v3680 = vpop.f32.mrf.mxu0
        %v3681 = vpop.f32.mrf.mxu0
        %v3682 = vadd.f32 0.0, %v3681
        %v3683 = vpop.f32.mrf.mxu0
        %3684 = vmatprep.mubr.bf16.mxu0 0
        %3685 = vmatmul.mubr.bf16.gmra.mxu0 %v3619
        %v3686 = vpop.f32.mrf.mxu0
        %v3687 = vadd.f32 0.0, %v3686
        %v3688 = vpop.f32.mrf.mxu0
        %v3689 = vpop.f32.mrf.mxu0
        %v3690 = vadd.f32 0.0, %v3689
        %v3691 = vpop.f32.mrf.mxu0
        %3692 = vdwg.mxu0
        %v3693 = vadd.f32 %v3575, %v3655
        %v3694 = vadd.f32 %v3576, %v3658
        %v3695 = vadd.f32 %v3577, %v3663
        %v3696 = vadd.f32 %v3578, %v3666
        %v3697 = vadd.f32 %v3579, %v3671
        %v3698 = vadd.f32 %v3580, %v3674
        %v3699 = vadd.f32 %v3581, %v3679
        %v3700 = vadd.f32 %v3582, %v3682
        %v3701 = vadd.f32 %v3583, %v3687
        %v3702 = vadd.f32 %v3584, %v3690
        %v3703 = vrot.slane %v3251, 2
        %v3704 = vrot.slane %v3252, 2
        %v3705 = vrot.slane %v3253, 2
        %v3706 = vrot.slane %v3254, 2
        %v3707 = vrot.slane %v3255, 2
        %v3708 = vrot.slane %v3256, 2
        %v3709 = vrot.slane %v3257, 2
        %v3710 = vrot.slane %v3258, 2
        %v3711 = vrot.slane %v3259, 2
        %v3712 = vrot.slane %v3260, 2
        %v3713 = vsel %vm2057, %v3711, %v3712
        %v3714 = vsel %vm2057, %v3710, %v3711
        %v3715 = vsel %vm2057, %v3709, %v3710
        %v3716 = vsel %vm2057, %v3708, %v3709
        %v3717 = vsel %vm2057, %v3707, %v3708
        %v3718 = vsel %vm2057, %v3706, %v3707
        %v3719 = vsel %vm2057, %v3705, %v3706
        %v3720 = vsel %vm2057, %v3704, %v3705
        %v3721 = vsel %vm2057, %v3703, %v3704
        %v3722 = vsel %vm2057, %v3712, %v3703
        %v3723 = vsel %vm2098, %v3721, 0.0
        %v3724 = vsel %vm2099, %v3720, 0.0
        %v3725 = vsel %vm2100, %v3719, 0.0
        %v3726 = vsel %vm2101, %v3718, 0.0
        %v3727 = vsel %vm2102, %v3717, 0.0
        %v3728 = vsel %vm2103, %v3716, 0.0
        %v3729 = vsel %vm2104, %v3715, 0.0
        %v3730 = vsel %vm2105, %v3714, 0.0
        %v3731 = vsel %vm2106, %v3713, 0.0
        %v3732 = vsel %vm2107, %v3722, 0.0
        %v3733 = vpack.c.bf16 %v3724, %v3723
        %v3734 = vpack.c.bf16 %v3726, %v3725
        %v3735 = vpack.c.bf16 %v3728, %v3727
        %v3736 = vpack.c.bf16 %v3730, %v3729
        %v3737 = vpack.c.bf16 %v3732, %v3731
        %3738 = vmatprep.subr.bf16.mxu0 0
        %3739 = vmatpush1.bf16.msra.mxu0 %v3159
        %3740 = vmatprep.subr.bf16.mxu0 0
        %3741 = vmatpush1.bf16.msra.mxu0 %v3158
        %3742 = vmatprep.subr.bf16.mxu0 0
        %3743 = vmatpush1.bf16.msra.mxu0 %v3157
        %3744 = vmatprep.subr.bf16.mxu0 0
        %3745 = vmatpush1.bf16.msra.mxu0 %v3156
        %3746 = vmatprep.subr.bf16.mxu0 0
        %3747 = vmatpush1.bf16.msra.mxu0 %v3155
        %3748 = vmatprep.subr.bf16.mxu0 0
        %3749 = vmatpush1.bf16.msra.mxu0 %v3154
        %3750 = vmatprep.subr.bf16.mxu0 0
        %3751 = vmatpush1.bf16.msra.mxu0 %v3153
        %3752 = vmatprep.subr.bf16.mxu0 0
        %3753 = vmatpush1.bf16.msra.mxu0 %v3152
        %3754 = vmatprep.subr.bf16.mxu0 0
        %3755 = vmatpush2.bf16.msra.mxu0 0
        %3756 = vmatprep.subr.bf16.mxu0 0
        %3757 = vmatpush2.bf16.msra.mxu0 0
        %3758 = vmatprep.subr.bf16.mxu0 0
        %3759 = vmatpush2.bf16.msra.mxu0 0
        %3760 = vmatprep.subr.bf16.mxu0 0
        %3761 = vmatpush2.bf16.msra.mxu0 0
        %3762 = vmatprep.subr.bf16.mxu0 0
        %3763 = vmatpush2.bf16.msra.mxu0 0
        %3764 = vmatprep.subr.bf16.mxu0 0
        %3765 = vmatpush2.bf16.msra.mxu0 0
        %3766 = vmatprep.subr.bf16.mxu0 0
        %3767 = vmatpush2.bf16.msra.mxu0 0
        %3768 = vmatprep.subr.bf16.mxu0 0
        %3769 = vmatpush2.bf16.msra.mxu0 0
        %3770 = vmatprep.mubr.bf16.mxu0 0
        %3771 = vmatmul.mubr.bf16.gmra.mxu0 %v3733
        %v3772 = vpop.f32.mrf.mxu0
        %v3773 = vadd.f32 0.0, %v3772
        %v3774 = vpop.f32.mrf.mxu0
        %v3775 = vpop.f32.mrf.mxu0
        %v3776 = vadd.f32 0.0, %v3775
        %v3777 = vpop.f32.mrf.mxu0
        %3778 = vmatprep.mubr.bf16.mxu0 0
        %3779 = vmatmul.mubr.bf16.gmra.mxu0 %v3734
        %v3780 = vpop.f32.mrf.mxu0
        %v3781 = vadd.f32 0.0, %v3780
        %v3782 = vpop.f32.mrf.mxu0
        %v3783 = vpop.f32.mrf.mxu0
        %v3784 = vadd.f32 0.0, %v3783
        %v3785 = vpop.f32.mrf.mxu0
        %3786 = vmatprep.mubr.bf16.mxu0 0
        %3787 = vmatmul.mubr.bf16.gmra.mxu0 %v3735
        %v3788 = vpop.f32.mrf.mxu0
        %v3789 = vadd.f32 0.0, %v3788
        %v3790 = vpop.f32.mrf.mxu0
        %v3791 = vpop.f32.mrf.mxu0
        %v3792 = vadd.f32 0.0, %v3791
        %v3793 = vpop.f32.mrf.mxu0
        %3794 = vmatprep.mubr.bf16.mxu0 0
        %3795 = vmatmul.mubr.bf16.gmra.mxu0 %v3736
        %v3796 = vpop.f32.mrf.mxu0
        %v3797 = vadd.f32 0.0, %v3796
        %v3798 = vpop.f32.mrf.mxu0
        %v3799 = vpop.f32.mrf.mxu0
        %v3800 = vadd.f32 0.0, %v3799
        %v3801 = vpop.f32.mrf.mxu0
        %3802 = vmatprep.mubr.bf16.mxu0 0
        %3803 = vmatmul.mubr.bf16.gmra.mxu0 %v3737
        %v3804 = vpop.f32.mrf.mxu0
        %v3805 = vadd.f32 0.0, %v3804
        %v3806 = vpop.f32.mrf.mxu0
        %v3807 = vpop.f32.mrf.mxu0
        %v3808 = vadd.f32 0.0, %v3807
        %v3809 = vpop.f32.mrf.mxu0
        %3810 = vdwg.mxu0
        %v3811 = vadd.f32 %v3693, %v3773
        %v3812 = vadd.f32 %v3694, %v3776
        %v3813 = vadd.f32 %v3695, %v3781
        %v3814 = vadd.f32 %v3696, %v3784
        %v3815 = vadd.f32 %v3697, %v3789
        %v3816 = vadd.f32 %v3698, %v3792
        %v3817 = vadd.f32 %v3699, %v3797
        %v3818 = vadd.f32 %v3700, %v3800
        %v3819 = vadd.f32 %v3701, %v3805
        %v3820 = vadd.f32 %v3702, %v3808
        %v3821 = vadd.f32 %v3811, %v2340
        %v3822 = vadd.f32 %v3812, %v2341
        %v3823 = vadd.f32 %v3813, %v2342
        %v3824 = vadd.f32 %v3814, %v2343
        %v3825 = vadd.f32 %v3815, %v2344
        %v3826 = vadd.f32 %v3816, %v2345
        %v3827 = vadd.f32 %v3817, %v2346
        %v3828 = vadd.f32 %v3818, %v2347
        %v3829 = vadd.f32 %v3819, %v2348
        %v3830 = vadd.f32 %v3820, %v2349
        %v3831 = vmax.f32 %v3821, 0.0
        %v3832 = vmax.f32 %v3822, 0.0
        %v3833 = vmax.f32 %v3823, 0.0
        %v3834 = vmax.f32 %v3824, 0.0
        %v3835 = vmax.f32 %v3825, 0.0
        %v3836 = vmax.f32 %v3826, 0.0
        %v3837 = vmax.f32 %v3827, 0.0
        %v3838 = vmax.f32 %v3828, 0.0
        %v3839 = vmax.f32 %v3829, 0.0
        %v3840 = vmax.f32 %v3830, 0.0
        %v3841 = vld [vmem:[%s8] sm:$0x1]
        %v3842 = vrot.slane %v3831, 6
        %v3843 = vrot.slane %v3832, 6
        %v3844 = vrot.slane %v3833, 6
        %v3845 = vrot.slane %v3834, 6
        %v3846 = vrot.slane %v3835, 6
        %v3847 = vrot.slane %v3836, 6
        %v3848 = vrot.slane %v3837, 6
        %v3849 = vrot.slane %v3838, 6
        %v3850 = vrot.slane %v3839, 6
        %v3851 = vrot.slane %v3840, 6
        %v3852 = vsel %vm891, %v3850, %v3851
        %v3853 = vsel %vm891, %v3849, %v3850
        %v3854 = vsel %vm891, %v3848, %v3849
        %v3855 = vsel %vm891, %v3847, %v3848
        %v3856 = vsel %vm891, %v3846, %v3847
        %v3857 = vsel %vm891, %v3845, %v3846
        %v3858 = vsel %vm891, %v3844, %v3845
        %v3859 = vsel %vm891, %v3843, %v3844
        %v3860 = vsel %vm891, %v3842, %v3843
        %v3861 = vsel %vm891, %v3851, %v3842
        %v3862 = vsel %vm932, %v3861, 0.0
        %v3863 = vsel %vm933, %v3860, 0.0
        %v3864 = vsel %vm934, %v3859, 0.0
        %v3865 = vsel %vm935, %v3858, 0.0
        %v3866 = vsel %vm936, %v3857, 0.0
        %v3867 = vsel %vm937, %v3856, 0.0
        %v3868 = vsel %vm938, %v3855, 0.0
        %v3869 = vsel %vm939, %v3854, 0.0
        %v3870 = vsel %vm940, %v3853, 0.0
        %v3871 = vsel %vm941, %v3852, 0.0
        %v3872 = vpack.c.bf16 %v3863, %v3862
        %v3873 = vpack.c.bf16 %v3865, %v3864
        %v3874 = vpack.c.bf16 %v3867, %v3866
        %v3875 = vpack.c.bf16 %v3869, %v3868
        %v3876 = vpack.c.bf16 %v3871, %v3870
        %v3877 = vld [vmem:[%s7] sm:$0xf]
        %v3878 = vld [vmem:[%s7 + $0x4] sm:$0xf]
        %v3879 = vld [vmem:[%s7 + $0x8] sm:$0xf]
        %v3880 = vld [vmem:[%s7 + $0xc] sm:$0xf]
        %v3881 = vld [vmem:[%s7 + $0x10] sm:$0xf]
        %v3882 = vld [vmem:[%s7 + $0x14] sm:$0xf]
        %v3883 = vld [vmem:[%s7 + $0x18] sm:$0xf]
        %v3884 = vld [vmem:[%s7 + $0x1c] sm:$0xf]
        %v3885 = vld [vmem:[%s7 + $0x20] sm:$0xf]
        %v3886 = vld [vmem:[%s7 + $0x24] sm:$0xf]
        %v3887 = vld [vmem:[%s7 + $0x28] sm:$0xf]
        %v3888 = vld [vmem:[%s7 + $0x2c] sm:$0xf]
        %v3889 = vld [vmem:[%s7 + $0x30] sm:$0xf]
        %v3890 = vld [vmem:[%s7 + $0x34] sm:$0xf]
        %v3891 = vld [vmem:[%s7 + $0x38] sm:$0xf]
        %v3892 = vld [vmem:[%s7 + $0x3c] sm:$0xf]
        %v3909 = vunpack.c.l.b16 %v3877
        %v3910 = vunpack.c.l.b16 %v3878
        %v3911 = vunpack.c.l.b16 %v3879
        %v3912 = vunpack.c.l.b16 %v3880
        %v3913 = vunpack.c.l.b16 %v3881
        %v3914 = vunpack.c.l.b16 %v3882
        %v3915 = vunpack.c.l.b16 %v3883
        %v3916 = vunpack.c.l.b16 %v3884
        %v3917 = vunpack.c.l.b16 %v3885
        %v3918 = vunpack.c.l.b16 %v3886
        %v3919 = vunpack.c.l.b16 %v3887
        %v3920 = vunpack.c.l.b16 %v3888
        %v3921 = vunpack.c.l.b16 %v3889
        %v3922 = vunpack.c.l.b16 %v3890
        %v3923 = vunpack.c.l.b16 %v3891
        %v3924 = vunpack.c.l.b16 %v3892
        %v3925 = vpack.c.b16 %v3910, %v3909
        %v3926 = vpack.c.b16 %v3912, %v3911
        %v3927 = vpack.c.b16 %v3914, %v3913
        %v3928 = vpack.c.b16 %v3916, %v3915
        %v3929 = vpack.c.b16 %v3918, %v3917
        %v3930 = vpack.c.b16 %v3920, %v3919
        %v3931 = vpack.c.b16 %v3922, %v3921
        %v3932 = vpack.c.b16 %v3924, %v3923
        %3941 = vmatprep.subr.bf16.mxu0 0
        %3942 = vmatpush1.bf16.msra.mxu0 %v3932
        %3943 = vmatprep.subr.bf16.mxu0 0
        %3944 = vmatpush1.bf16.msra.mxu0 %v3931
        %3945 = vmatprep.subr.bf16.mxu0 0
        %3946 = vmatpush1.bf16.msra.mxu0 %v3930
        %3947 = vmatprep.subr.bf16.mxu0 0
        %3948 = vmatpush1.bf16.msra.mxu0 %v3929
        %3949 = vmatprep.subr.bf16.mxu0 0
        %3950 = vmatpush1.bf16.msra.mxu0 %v3928
        %3951 = vmatprep.subr.bf16.mxu0 0
        %3952 = vmatpush1.bf16.msra.mxu0 %v3927
        %3953 = vmatprep.subr.bf16.mxu0 0
        %3954 = vmatpush1.bf16.msra.mxu0 %v3926
        %3955 = vmatprep.subr.bf16.mxu0 0
        %3956 = vmatpush1.bf16.msra.mxu0 %v3925
        %3957 = vmatprep.subr.bf16.mxu0 0
        %3958 = vmatpush2.bf16.msra.mxu0 0
        %3959 = vmatprep.subr.bf16.mxu0 0
        %3960 = vmatpush2.bf16.msra.mxu0 0
        %3961 = vmatprep.subr.bf16.mxu0 0
        %3962 = vmatpush2.bf16.msra.mxu0 0
        %3963 = vmatprep.subr.bf16.mxu0 0
        %3964 = vmatpush2.bf16.msra.mxu0 0
        %3965 = vmatprep.subr.bf16.mxu0 0
        %3966 = vmatpush2.bf16.msra.mxu0 0
        %3967 = vmatprep.subr.bf16.mxu0 0
        %3968 = vmatpush2.bf16.msra.mxu0 0
        %3969 = vmatprep.subr.bf16.mxu0 0
        %3970 = vmatpush2.bf16.msra.mxu0 0
        %3971 = vmatprep.subr.bf16.mxu0 0
        %3972 = vmatpush2.bf16.msra.mxu0 0
        %3973 = vmatprep.mubr.bf16.mxu0 0
        %3974 = vmatmul.mubr.bf16.gmra.mxu0 %v3872
        %v3975 = vpop.f32.mrf.mxu0
        %v3976 = vadd.f32 0.0, %v3975
        %v3977 = vpop.f32.mrf.mxu0
        %v3978 = vpop.f32.mrf.mxu0
        %v3979 = vadd.f32 0.0, %v3978
        %v3980 = vpop.f32.mrf.mxu0
        %3981 = vmatprep.mubr.bf16.mxu0 0
        %3982 = vmatmul.mubr.bf16.gmra.mxu0 %v3873
        %v3983 = vpop.f32.mrf.mxu0
        %v3984 = vadd.f32 0.0, %v3983
        %v3985 = vpop.f32.mrf.mxu0
        %v3986 = vpop.f32.mrf.mxu0
        %v3987 = vadd.f32 0.0, %v3986
        %v3988 = vpop.f32.mrf.mxu0
        %3989 = vmatprep.mubr.bf16.mxu0 0
        %3990 = vmatmul.mubr.bf16.gmra.mxu0 %v3874
        %v3991 = vpop.f32.mrf.mxu0
        %v3992 = vadd.f32 0.0, %v3991
        %v3993 = vpop.f32.mrf.mxu0
        %v3994 = vpop.f32.mrf.mxu0
        %v3995 = vadd.f32 0.0, %v3994
        %v3996 = vpop.f32.mrf.mxu0
        %3997 = vmatprep.mubr.bf16.mxu0 0
        %3998 = vmatmul.mubr.bf16.gmra.mxu0 %v3875
        %v3999 = vpop.f32.mrf.mxu0
        %v4000 = vadd.f32 0.0, %v3999
        %v4001 = vpop.f32.mrf.mxu0
        %v4002 = vpop.f32.mrf.mxu0
        %v4003 = vadd.f32 0.0, %v4002
        %v4004 = vpop.f32.mrf.mxu0
        %4005 = vmatprep.mubr.bf16.mxu0 0
        %4006 = vmatmul.mubr.bf16.gmra.mxu0 %v3876
        %v4007 = vpop.f32.mrf.mxu0
        %v4008 = vadd.f32 0.0, %v4007
        %v4009 = vpop.f32.mrf.mxu0
        %v4010 = vpop.f32.mrf.mxu0
        %v4011 = vadd.f32 0.0, %v4010
        %v4012 = vpop.f32.mrf.mxu0
        %4013 = vdwg.mxu0
        %v4015 = vlaneseq
        %v4016 = vshrl.u32 %v4015, 7
        %v4017 = vsub.s32 0, %v4016
        %v4018 = vrot.slane %v3841, %v4017
        %v4020 = vadd.f32 %v4018, %v3976
        %v4021 = vadd.f32 %v4018, %v3979
        %v4022 = vadd.f32 %v4018, %v3984
        %v4023 = vadd.f32 %v4018, %v3987
        %v4024 = vadd.f32 %v4018, %v3992
        %v4025 = vadd.f32 %v4018, %v3995
        %v4026 = vadd.f32 %v4018, %v4000
        %v4027 = vadd.f32 %v4018, %v4003
        %v4028 = vadd.f32 %v4018, %v4008
        %v4029 = vadd.f32 %v4018, %v4011
        %v4030 = vrot.slane %v3831, 7
        %v4031 = vrot.slane %v3832, 7
        %v4032 = vrot.slane %v3833, 7
        %v4033 = vrot.slane %v3834, 7
        %v4034 = vrot.slane %v3835, 7
        %v4035 = vrot.slane %v3836, 7
        %v4036 = vrot.slane %v3837, 7
        %v4037 = vrot.slane %v3838, 7
        %v4038 = vrot.slane %v3839, 7
        %v4039 = vrot.slane %v3840, 7
        %v4040 = vsel %vm1209, %v4038, %v4039
        %v4041 = vsel %vm1209, %v4037, %v4038
        %v4042 = vsel %vm1209, %v4036, %v4037
        %v4043 = vsel %vm1209, %v4035, %v4036
        %v4044 = vsel %vm1209, %v4034, %v4035
        %v4045 = vsel %vm1209, %v4033, %v4034
        %v4046 = vsel %vm1209, %v4032, %v4033
        %v4047 = vsel %vm1209, %v4031, %v4032
        %v4048 = vsel %vm1209, %v4030, %v4031
        %v4049 = vsel %vm1209, %v4039, %v4030
        %v4050 = vsel %vm1250, %v4049, 0.0
        %v4051 = vsel %vm1251, %v4048, 0.0
        %v4052 = vsel %vm1252, %v4047, 0.0
        %v4053 = vsel %vm1253, %v4046, 0.0
        %v4054 = vsel %vm1254, %v4045, 0.0
        %v4055 = vsel %vm1255, %v4044, 0.0
        %v4056 = vsel %vm1256, %v4043, 0.0
        %v4057 = vsel %vm1257, %v4042, 0.0
        %v4058 = vsel %vm1258, %v4041, 0.0
        %v4059 = vsel %vm1259, %v4040, 0.0
        %v4060 = vpack.c.bf16 %v4051, %v4050
        %v4061 = vpack.c.bf16 %v4053, %v4052
        %v4062 = vpack.c.bf16 %v4055, %v4054
        %v4063 = vpack.c.bf16 %v4057, %v4056
        %v4064 = vpack.c.bf16 %v4059, %v4058
        %s4065 = scalar_lea.vmem %s7, 64
        %v4066 = vld [vmem:[%s4065] sm:$0xf]
        %v4067 = vld [vmem:[%s4065 + $0x4] sm:$0xf]
        %v4068 = vld [vmem:[%s4065 + $0x8] sm:$0xf]
        %v4069 = vld [vmem:[%s4065 + $0xc] sm:$0xf]
        %v4070 = vld [vmem:[%s4065 + $0x10] sm:$0xf]
        %v4071 = vld [vmem:[%s4065 + $0x14] sm:$0xf]
        %v4072 = vld [vmem:[%s4065 + $0x18] sm:$0xf]
        %v4073 = vld [vmem:[%s4065 + $0x1c] sm:$0xf]
        %v4074 = vld [vmem:[%s4065 + $0x20] sm:$0xf]
        %v4075 = vld [vmem:[%s4065 + $0x24] sm:$0xf]
        %v4076 = vld [vmem:[%s4065 + $0x28] sm:$0xf]
        %v4077 = vld [vmem:[%s4065 + $0x2c] sm:$0xf]
        %v4078 = vld [vmem:[%s4065 + $0x30] sm:$0xf]
        %v4079 = vld [vmem:[%s4065 + $0x34] sm:$0xf]
        %v4080 = vld [vmem:[%s4065 + $0x38] sm:$0xf]
        %v4081 = vld [vmem:[%s4065 + $0x3c] sm:$0xf]
        %v4098 = vunpack.c.l.b16 %v4066
        %v4099 = vunpack.c.l.b16 %v4067
        %v4100 = vunpack.c.l.b16 %v4068
        %v4101 = vunpack.c.l.b16 %v4069
        %v4102 = vunpack.c.l.b16 %v4070
        %v4103 = vunpack.c.l.b16 %v4071
        %v4104 = vunpack.c.l.b16 %v4072
        %v4105 = vunpack.c.l.b16 %v4073
        %v4106 = vunpack.c.l.b16 %v4074
        %v4107 = vunpack.c.l.b16 %v4075
        %v4108 = vunpack.c.l.b16 %v4076
        %v4109 = vunpack.c.l.b16 %v4077
        %v4110 = vunpack.c.l.b16 %v4078
        %v4111 = vunpack.c.l.b16 %v4079
        %v4112 = vunpack.c.l.b16 %v4080
        %v4113 = vunpack.c.l.b16 %v4081
        %v4114 = vpack.c.b16 %v4099, %v4098
        %v4115 = vpack.c.b16 %v4101, %v4100
        %v4116 = vpack.c.b16 %v4103, %v4102
        %v4117 = vpack.c.b16 %v4105, %v4104
        %v4118 = vpack.c.b16 %v4107, %v4106
        %v4119 = vpack.c.b16 %v4109, %v4108
        %v4120 = vpack.c.b16 %v4111, %v4110
        %v4121 = vpack.c.b16 %v4113, %v4112
        %4130 = vmatprep.subr.bf16.mxu0 0
        %4131 = vmatpush1.bf16.msra.mxu0 %v4121
        %4132 = vmatprep.subr.bf16.mxu0 0
        %4133 = vmatpush1.bf16.msra.mxu0 %v4120
        %4134 = vmatprep.subr.bf16.mxu0 0
        %4135 = vmatpush1.bf16.msra.mxu0 %v4119
        %4136 = vmatprep.subr.bf16.mxu0 0
        %4137 = vmatpush1.bf16.msra.mxu0 %v4118
        %4138 = vmatprep.subr.bf16.mxu0 0
        %4139 = vmatpush1.bf16.msra.mxu0 %v4117
        %4140 = vmatprep.subr.bf16.mxu0 0
        %4141 = vmatpush1.bf16.msra.mxu0 %v4116
        %4142 = vmatprep.subr.bf16.mxu0 0
        %4143 = vmatpush1.bf16.msra.mxu0 %v4115
        %4144 = vmatprep.subr.bf16.mxu0 0
        %4145 = vmatpush1.bf16.msra.mxu0 %v4114
        %4146 = vmatprep.subr.bf16.mxu0 0
        %4147 = vmatpush2.bf16.msra.mxu0 0
        %4148 = vmatprep.subr.bf16.mxu0 0
        %4149 = vmatpush2.bf16.msra.mxu0 0
        %4150 = vmatprep.subr.bf16.mxu0 0
        %4151 = vmatpush2.bf16.msra.mxu0 0
        %4152 = vmatprep.subr.bf16.mxu0 0
        %4153 = vmatpush2.bf16.msra.mxu0 0
        %4154 = vmatprep.subr.bf16.mxu0 0
        %4155 = vmatpush2.bf16.msra.mxu0 0
        %4156 = vmatprep.subr.bf16.mxu0 0
        %4157 = vmatpush2.bf16.msra.mxu0 0
        %4158 = vmatprep.subr.bf16.mxu0 0
        %4159 = vmatpush2.bf16.msra.mxu0 0
        %4160 = vmatprep.subr.bf16.mxu0 0
        %4161 = vmatpush2.bf16.msra.mxu0 0
        %4162 = vmatprep.mubr.bf16.mxu0 0
        %4163 = vmatmul.mubr.bf16.gmra.mxu0 %v4060
        %v4164 = vpop.f32.mrf.mxu0
        %v4165 = vadd.f32 0.0, %v4164
        %v4166 = vpop.f32.mrf.mxu0
        %v4167 = vpop.f32.mrf.mxu0
        %v4168 = vadd.f32 0.0, %v4167
        %v4169 = vpop.f32.mrf.mxu0
        %4170 = vmatprep.mubr.bf16.mxu0 0
        %4171 = vmatmul.mubr.bf16.gmra.mxu0 %v4061
        %v4172 = vpop.f32.mrf.mxu0
        %v4173 = vadd.f32 0.0, %v4172
        %v4174 = vpop.f32.mrf.mxu0
        %v4175 = vpop.f32.mrf.mxu0
        %v4176 = vadd.f32 0.0, %v4175
        %v4177 = vpop.f32.mrf.mxu0
        %4178 = vmatprep.mubr.bf16.mxu0 0
        %4179 = vmatmul.mubr.bf16.gmra.mxu0 %v4062
        %v4180 = vpop.f32.mrf.mxu0
        %v4181 = vadd.f32 0.0, %v4180
        %v4182 = vpop.f32.mrf.mxu0
        %v4183 = vpop.f32.mrf.mxu0
        %v4184 = vadd.f32 0.0, %v4183
        %v4185 = vpop.f32.mrf.mxu0
        %4186 = vmatprep.mubr.bf16.mxu0 0
        %4187 = vmatmul.mubr.bf16.gmra.mxu0 %v4063
        %v4188 = vpop.f32.mrf.mxu0
        %v4189 = vadd.f32 0.0, %v4188
        %v4190 = vpop.f32.mrf.mxu0
        %v4191 = vpop.f32.mrf.mxu0
        %v4192 = vadd.f32 0.0, %v4191
        %v4193 = vpop.f32.mrf.mxu0
        %4194 = vmatprep.mubr.bf16.mxu0 0
        %4195 = vmatmul.mubr.bf16.gmra.mxu0 %v4064
        %v4196 = vpop.f32.mrf.mxu0
        %v4197 = vadd.f32 0.0, %v4196
        %v4198 = vpop.f32.mrf.mxu0
        %v4199 = vpop.f32.mrf.mxu0
        %v4200 = vadd.f32 0.0, %v4199
        %v4201 = vpop.f32.mrf.mxu0
        %4202 = vdwg.mxu0
        %v4203 = vadd.f32 %v4020, %v4165
        %v4204 = vadd.f32 %v4021, %v4168
        %v4205 = vadd.f32 %v4022, %v4173
        %v4206 = vadd.f32 %v4023, %v4176
        %v4207 = vadd.f32 %v4024, %v4181
        %v4208 = vadd.f32 %v4025, %v4184
        %v4209 = vadd.f32 %v4026, %v4189
        %v4210 = vadd.f32 %v4027, %v4192
        %v4211 = vadd.f32 %v4028, %v4197
        %v4212 = vadd.f32 %v4029, %v4200
        %v4213 = vpack.c.bf16 %v3832, %v3831
        %v4214 = vpack.c.bf16 %v3834, %v3833
        %v4215 = vpack.c.bf16 %v3836, %v3835
        %v4216 = vpack.c.bf16 %v3838, %v3837
        %v4217 = vpack.c.bf16 %v3840, %v3839
        %s4218 = scalar_lea.vmem %s7, 128
        %v4219 = vld [vmem:[%s4218] sm:$0xf]
        %v4220 = vld [vmem:[%s4218 + $0x4] sm:$0xf]
        %v4221 = vld [vmem:[%s4218 + $0x8] sm:$0xf]
        %v4222 = vld [vmem:[%s4218 + $0xc] sm:$0xf]
        %v4223 = vld [vmem:[%s4218 + $0x10] sm:$0xf]
        %v4224 = vld [vmem:[%s4218 + $0x14] sm:$0xf]
        %v4225 = vld [vmem:[%s4218 + $0x18] sm:$0xf]
        %v4226 = vld [vmem:[%s4218 + $0x1c] sm:$0xf]
        %v4227 = vld [vmem:[%s4218 + $0x20] sm:$0xf]
        %v4228 = vld [vmem:[%s4218 + $0x24] sm:$0xf]
        %v4229 = vld [vmem:[%s4218 + $0x28] sm:$0xf]
        %v4230 = vld [vmem:[%s4218 + $0x2c] sm:$0xf]
        %v4231 = vld [vmem:[%s4218 + $0x30] sm:$0xf]
        %v4232 = vld [vmem:[%s4218 + $0x34] sm:$0xf]
        %v4233 = vld [vmem:[%s4218 + $0x38] sm:$0xf]
        %v4234 = vld [vmem:[%s4218 + $0x3c] sm:$0xf]
        %v4251 = vunpack.c.l.b16 %v4219
        %v4252 = vunpack.c.l.b16 %v4220
        %v4253 = vunpack.c.l.b16 %v4221
        %v4254 = vunpack.c.l.b16 %v4222
        %v4255 = vunpack.c.l.b16 %v4223
        %v4256 = vunpack.c.l.b16 %v4224
        %v4257 = vunpack.c.l.b16 %v4225
        %v4258 = vunpack.c.l.b16 %v4226
        %v4259 = vunpack.c.l.b16 %v4227
        %v4260 = vunpack.c.l.b16 %v4228
        %v4261 = vunpack.c.l.b16 %v4229
        %v4262 = vunpack.c.l.b16 %v4230
        %v4263 = vunpack.c.l.b16 %v4231
        %v4264 = vunpack.c.l.b16 %v4232
        %v4265 = vunpack.c.l.b16 %v4233
        %v4266 = vunpack.c.l.b16 %v4234
        %v4267 = vpack.c.b16 %v4252, %v4251
        %v4268 = vpack.c.b16 %v4254, %v4253
        %v4269 = vpack.c.b16 %v4256, %v4255
        %v4270 = vpack.c.b16 %v4258, %v4257
        %v4271 = vpack.c.b16 %v4260, %v4259
        %v4272 = vpack.c.b16 %v4262, %v4261
        %v4273 = vpack.c.b16 %v4264, %v4263
        %v4274 = vpack.c.b16 %v4266, %v4265
        %4283 = vmatprep.subr.bf16.mxu0 0
        %4284 = vmatpush1.bf16.msra.mxu0 %v4274
        %4285 = vmatprep.subr.bf16.mxu0 0
        %4286 = vmatpush1.bf16.msra.mxu0 %v4273
        %4287 = vmatprep.subr.bf16.mxu0 0
        %4288 = vmatpush1.bf16.msra.mxu0 %v4272
        %4289 = vmatprep.subr.bf16.mxu0 0
        %4290 = vmatpush1.bf16.msra.mxu0 %v4271
        %4291 = vmatprep.subr.bf16.mxu0 0
        %4292 = vmatpush1.bf16.msra.mxu0 %v4270
        %4293 = vmatprep.subr.bf16.mxu0 0
        %4294 = vmatpush1.bf16.msra.mxu0 %v4269
        %4295 = vmatprep.subr.bf16.mxu0 0
        %4296 = vmatpush1.bf16.msra.mxu0 %v4268
        %4297 = vmatprep.subr.bf16.mxu0 0
        %4298 = vmatpush1.bf16.msra.mxu0 %v4267
        %4299 = vmatprep.subr.bf16.mxu0 0
        %4300 = vmatpush2.bf16.msra.mxu0 0
        %4301 = vmatprep.subr.bf16.mxu0 0
        %4302 = vmatpush2.bf16.msra.mxu0 0
        %4303 = vmatprep.subr.bf16.mxu0 0
        %4304 = vmatpush2.bf16.msra.mxu0 0
        %4305 = vmatprep.subr.bf16.mxu0 0
        %4306 = vmatpush2.bf16.msra.mxu0 0
        %4307 = vmatprep.subr.bf16.mxu0 0
        %4308 = vmatpush2.bf16.msra.mxu0 0
        %4309 = vmatprep.subr.bf16.mxu0 0
        %4310 = vmatpush2.bf16.msra.mxu0 0
        %4311 = vmatprep.subr.bf16.mxu0 0
        %4312 = vmatpush2.bf16.msra.mxu0 0
        %4313 = vmatprep.subr.bf16.mxu0 0
        %4314 = vmatpush2.bf16.msra.mxu0 0
        %4315 = vmatprep.mubr.bf16.mxu0 0
        %4316 = vmatmul.mubr.bf16.gmra.mxu0 %v4213
        %v4317 = vpop.f32.mrf.mxu0
        %v4318 = vadd.f32 0.0, %v4317
        %v4319 = vpop.f32.mrf.mxu0
        %v4320 = vpop.f32.mrf.mxu0
        %v4321 = vadd.f32 0.0, %v4320
        %v4322 = vpop.f32.mrf.mxu0
        %4323 = vmatprep.mubr.bf16.mxu0 0
        %4324 = vmatmul.mubr.bf16.gmra.mxu0 %v4214
        %v4325 = vpop.f32.mrf.mxu0
        %v4326 = vadd.f32 0.0, %v4325
        %v4327 = vpop.f32.mrf.mxu0
        %v4328 = vpop.f32.mrf.mxu0
        %v4329 = vadd.f32 0.0, %v4328
        %v4330 = vpop.f32.mrf.mxu0
        %4331 = vmatprep.mubr.bf16.mxu0 0
        %4332 = vmatmul.mubr.bf16.gmra.mxu0 %v4215
        %v4333 = vpop.f32.mrf.mxu0
        %v4334 = vadd.f32 0.0, %v4333
        %v4335 = vpop.f32.mrf.mxu0
        %v4336 = vpop.f32.mrf.mxu0
        %v4337 = vadd.f32 0.0, %v4336
        %v4338 = vpop.f32.mrf.mxu0
        %4339 = vmatprep.mubr.bf16.mxu0 0
        %4340 = vmatmul.mubr.bf16.gmra.mxu0 %v4216
        %v4341 = vpop.f32.mrf.mxu0
        %v4342 = vadd.f32 0.0, %v4341
        %v4343 = vpop.f32.mrf.mxu0
        %v4344 = vpop.f32.mrf.mxu0
        %v4345 = vadd.f32 0.0, %v4344
        %v4346 = vpop.f32.mrf.mxu0
        %4347 = vmatprep.mubr.bf16.mxu0 0
        %4348 = vmatmul.mubr.bf16.gmra.mxu0 %v4217
        %v4349 = vpop.f32.mrf.mxu0
        %v4350 = vadd.f32 0.0, %v4349
        %v4351 = vpop.f32.mrf.mxu0
        %v4352 = vpop.f32.mrf.mxu0
        %v4353 = vadd.f32 0.0, %v4352
        %v4354 = vpop.f32.mrf.mxu0
        %4355 = vdwg.mxu0
        %v4356 = vadd.f32 %v4203, %v4318
        %v4357 = vadd.f32 %v4204, %v4321
        %v4358 = vadd.f32 %v4205, %v4326
        %v4359 = vadd.f32 %v4206, %v4329
        %v4360 = vadd.f32 %v4207, %v4334
        %v4361 = vadd.f32 %v4208, %v4337
        %v4362 = vadd.f32 %v4209, %v4342
        %v4363 = vadd.f32 %v4210, %v4345
        %v4364 = vadd.f32 %v4211, %v4350
        %v4365 = vadd.f32 %v4212, %v4353
        %v4366 = vrot.slane %v3831, 1
        %v4367 = vrot.slane %v3832, 1
        %v4368 = vrot.slane %v3833, 1
        %v4369 = vrot.slane %v3834, 1
        %v4370 = vrot.slane %v3835, 1
        %v4371 = vrot.slane %v3836, 1
        %v4372 = vrot.slane %v3837, 1
        %v4373 = vrot.slane %v3838, 1
        %v4374 = vrot.slane %v3839, 1
        %v4375 = vrot.slane %v3840, 1
        %v4376 = vsel %vm1744, %v4374, %v4375
        %v4377 = vsel %vm1744, %v4373, %v4374
        %v4378 = vsel %vm1744, %v4372, %v4373
        %v4379 = vsel %vm1744, %v4371, %v4372
        %v4380 = vsel %vm1744, %v4370, %v4371
        %v4381 = vsel %vm1744, %v4369, %v4370
        %v4382 = vsel %vm1744, %v4368, %v4369
        %v4383 = vsel %vm1744, %v4367, %v4368
        %v4384 = vsel %vm1744, %v4366, %v4367
        %v4385 = vsel %vm1744, %v4375, %v4366
        %v4386 = vsel %vm1785, %v4384, 0.0
        %v4387 = vsel %vm1786, %v4383, 0.0
        %v4388 = vsel %vm1787, %v4382, 0.0
        %v4389 = vsel %vm1788, %v4381, 0.0
        %v4390 = vsel %vm1789, %v4380, 0.0
        %v4391 = vsel %vm1790, %v4379, 0.0
        %v4392 = vsel %vm1791, %v4378, 0.0
        %v4393 = vsel %vm1792, %v4377, 0.0
        %v4394 = vsel %vm1793, %v4376, 0.0
        %v4395 = vsel %vm1794, %v4385, 0.0
        %v4396 = vpack.c.bf16 %v4387, %v4386
        %v4397 = vpack.c.bf16 %v4389, %v4388
        %v4398 = vpack.c.bf16 %v4391, %v4390
        %v4399 = vpack.c.bf16 %v4393, %v4392
        %v4400 = vpack.c.bf16 %v4395, %v4394
        %s4401 = scalar_lea.vmem %s7, 192
        %v4402 = vld [vmem:[%s4401] sm:$0xf]
        %v4403 = vld [vmem:[%s4401 + $0x4] sm:$0xf]
        %v4404 = vld [vmem:[%s4401 + $0x8] sm:$0xf]
        %v4405 = vld [vmem:[%s4401 + $0xc] sm:$0xf]
        %v4406 = vld [vmem:[%s4401 + $0x10] sm:$0xf]
        %v4407 = vld [vmem:[%s4401 + $0x14] sm:$0xf]
        %v4408 = vld [vmem:[%s4401 + $0x18] sm:$0xf]
        %v4409 = vld [vmem:[%s4401 + $0x1c] sm:$0xf]
        %v4410 = vld [vmem:[%s4401 + $0x20] sm:$0xf]
        %v4411 = vld [vmem:[%s4401 + $0x24] sm:$0xf]
        %v4412 = vld [vmem:[%s4401 + $0x28] sm:$0xf]
        %v4413 = vld [vmem:[%s4401 + $0x2c] sm:$0xf]
        %v4414 = vld [vmem:[%s4401 + $0x30] sm:$0xf]
        %v4415 = vld [vmem:[%s4401 + $0x34] sm:$0xf]
        %v4416 = vld [vmem:[%s4401 + $0x38] sm:$0xf]
        %v4417 = vld [vmem:[%s4401 + $0x3c] sm:$0xf]
        %v4434 = vunpack.c.l.b16 %v4402
        %v4435 = vunpack.c.l.b16 %v4403
        %v4436 = vunpack.c.l.b16 %v4404
        %v4437 = vunpack.c.l.b16 %v4405
        %v4438 = vunpack.c.l.b16 %v4406
        %v4439 = vunpack.c.l.b16 %v4407
        %v4440 = vunpack.c.l.b16 %v4408
        %v4441 = vunpack.c.l.b16 %v4409
        %v4442 = vunpack.c.l.b16 %v4410
        %v4443 = vunpack.c.l.b16 %v4411
        %v4444 = vunpack.c.l.b16 %v4412
        %v4445 = vunpack.c.l.b16 %v4413
        %v4446 = vunpack.c.l.b16 %v4414
        %v4447 = vunpack.c.l.b16 %v4415
        %v4448 = vunpack.c.l.b16 %v4416
        %v4449 = vunpack.c.l.b16 %v4417
        %v4450 = vpack.c.b16 %v4435, %v4434
        %v4451 = vpack.c.b16 %v4437, %v4436
        %v4452 = vpack.c.b16 %v4439, %v4438
        %v4453 = vpack.c.b16 %v4441, %v4440
        %v4454 = vpack.c.b16 %v4443, %v4442
        %v4455 = vpack.c.b16 %v4445, %v4444
        %v4456 = vpack.c.b16 %v4447, %v4446
        %v4457 = vpack.c.b16 %v4449, %v4448
        %4466 = vmatprep.subr.bf16.mxu0 0
        %4467 = vmatpush1.bf16.msra.mxu0 %v4457
        %4468 = vmatprep.subr.bf16.mxu0 0
        %4469 = vmatpush1.bf16.msra.mxu0 %v4456
        %4470 = vmatprep.subr.bf16.mxu0 0
        %4471 = vmatpush1.bf16.msra.mxu0 %v4455
        %4472 = vmatprep.subr.bf16.mxu0 0
        %4473 = vmatpush1.bf16.msra.mxu0 %v4454
        %4474 = vmatprep.subr.bf16.mxu0 0
        %4475 = vmatpush1.bf16.msra.mxu0 %v4453
        %4476 = vmatprep.subr.bf16.mxu0 0
        %4477 = vmatpush1.bf16.msra.mxu0 %v4452
        %4478 = vmatprep.subr.bf16.mxu0 0
        %4479 = vmatpush1.bf16.msra.mxu0 %v4451
        %4480 = vmatprep.subr.bf16.mxu0 0
        %4481 = vmatpush1.bf16.msra.mxu0 %v4450
        %4482 = vmatprep.subr.bf16.mxu0 0
        %4483 = vmatpush2.bf16.msra.mxu0 0
        %4484 = vmatprep.subr.bf16.mxu0 0
        %4485 = vmatpush2.bf16.msra.mxu0 0
        %4486 = vmatprep.subr.bf16.mxu0 0
        %4487 = vmatpush2.bf16.msra.mxu0 0
        %4488 = vmatprep.subr.bf16.mxu0 0
        %4489 = vmatpush2.bf16.msra.mxu0 0
        %4490 = vmatprep.subr.bf16.mxu0 0
        %4491 = vmatpush2.bf16.msra.mxu0 0
        %4492 = vmatprep.subr.bf16.mxu0 0
        %4493 = vmatpush2.bf16.msra.mxu0 0
        %4494 = vmatprep.subr.bf16.mxu0 0
        %4495 = vmatpush2.bf16.msra.mxu0 0
        %4496 = vmatprep.subr.bf16.mxu0 0
        %4497 = vmatpush2.bf16.msra.mxu0 0
        %4498 = vmatprep.mubr.bf16.mxu0 0
        %4499 = vmatmul.mubr.bf16.gmra.mxu0 %v4396
        %v4500 = vpop.f32.mrf.mxu0
        %v4501 = vadd.f32 0.0, %v4500
        %v4502 = vpop.f32.mrf.mxu0
        %v4503 = vpop.f32.mrf.mxu0
        %v4504 = vadd.f32 0.0, %v4503
        %v4505 = vpop.f32.mrf.mxu0
        %4506 = vmatprep.mubr.bf16.mxu0 0
        %4507 = vmatmul.mubr.bf16.gmra.mxu0 %v4397
        %v4508 = vpop.f32.mrf.mxu0
        %v4509 = vadd.f32 0.0, %v4508
        %v4510 = vpop.f32.mrf.mxu0
        %v4511 = vpop.f32.mrf.mxu0
        %v4512 = vadd.f32 0.0, %v4511
        %v4513 = vpop.f32.mrf.mxu0
        %4514 = vmatprep.mubr.bf16.mxu0 0
        %4515 = vmatmul.mubr.bf16.gmra.mxu0 %v4398
        %v4516 = vpop.f32.mrf.mxu0
        %v4517 = vadd.f32 0.0, %v4516
        %v4518 = vpop.f32.mrf.mxu0
        %v4519 = vpop.f32.mrf.mxu0
        %v4520 = vadd.f32 0.0, %v4519
        %v4521 = vpop.f32.mrf.mxu0
        %4522 = vmatprep.mubr.bf16.mxu0 0
        %4523 = vmatmul.mubr.bf16.gmra.mxu0 %v4399
        %v4524 = vpop.f32.mrf.mxu0
        %v4525 = vadd.f32 0.0, %v4524
        %v4526 = vpop.f32.mrf.mxu0
        %v4527 = vpop.f32.mrf.mxu0
        %v4528 = vadd.f32 0.0, %v4527
        %v4529 = vpop.f32.mrf.mxu0
        %4530 = vmatprep.mubr.bf16.mxu0 0
        %4531 = vmatmul.mubr.bf16.gmra.mxu0 %v4400
        %v4532 = vpop.f32.mrf.mxu0
        %v4533 = vadd.f32 0.0, %v4532
        %v4534 = vpop.f32.mrf.mxu0
        %v4535 = vpop.f32.mrf.mxu0
        %v4536 = vadd.f32 0.0, %v4535
        %v4537 = vpop.f32.mrf.mxu0
        %4538 = vdwg.mxu0
        %v4539 = vadd.f32 %v4356, %v4501
        %v4540 = vadd.f32 %v4357, %v4504
        %v4541 = vadd.f32 %v4358, %v4509
        %v4542 = vadd.f32 %v4359, %v4512
        %v4543 = vadd.f32 %v4360, %v4517
        %v4544 = vadd.f32 %v4361, %v4520
        %v4545 = vadd.f32 %v4362, %v4525
        %v4546 = vadd.f32 %v4363, %v4528
        %v4547 = vadd.f32 %v4364, %v4533
        %v4548 = vadd.f32 %v4365, %v4536
        %v4549 = vrot.slane %v3831, 2
        %v4550 = vrot.slane %v3832, 2
        %v4551 = vrot.slane %v3833, 2
        %v4552 = vrot.slane %v3834, 2
        %v4553 = vrot.slane %v3835, 2
        %v4554 = vrot.slane %v3836, 2
        %v4555 = vrot.slane %v3837, 2
        %v4556 = vrot.slane %v3838, 2
        %v4557 = vrot.slane %v3839, 2
        %v4558 = vrot.slane %v3840, 2
        %v4559 = vsel %vm2057, %v4557, %v4558
        %v4560 = vsel %vm2057, %v4556, %v4557
        %v4561 = vsel %vm2057, %v4555, %v4556
        %v4562 = vsel %vm2057, %v4554, %v4555
        %v4563 = vsel %vm2057, %v4553, %v4554
        %v4564 = vsel %vm2057, %v4552, %v4553
        %v4565 = vsel %vm2057, %v4551, %v4552
        %v4566 = vsel %vm2057, %v4550, %v4551
        %v4567 = vsel %vm2057, %v4549, %v4550
        %v4568 = vsel %vm2057, %v4558, %v4549
        %v4569 = vsel %vm2098, %v4567, 0.0
        %v4570 = vsel %vm2099, %v4566, 0.0
        %v4571 = vsel %vm2100, %v4565, 0.0
        %v4572 = vsel %vm2101, %v4564, 0.0
        %v4573 = vsel %vm2102, %v4563, 0.0
        %v4574 = vsel %vm2103, %v4562, 0.0
        %v4575 = vsel %vm2104, %v4561, 0.0
        %v4576 = vsel %vm2105, %v4560, 0.0
        %v4577 = vsel %vm2106, %v4559, 0.0
        %v4578 = vsel %vm2107, %v4568, 0.0
        %v4579 = vpack.c.bf16 %v4570, %v4569
        %v4580 = vpack.c.bf16 %v4572, %v4571
        %v4581 = vpack.c.bf16 %v4574, %v4573
        %v4582 = vpack.c.bf16 %v4576, %v4575
        %v4583 = vpack.c.bf16 %v4578, %v4577
        %s4584 = scalar_lea.vmem %s7, 256
        %v4585 = vld [vmem:[%s4584] sm:$0xf]
        %v4586 = vld [vmem:[%s4584 + $0x4] sm:$0xf]
        %v4587 = vld [vmem:[%s4584 + $0x8] sm:$0xf]
        %v4588 = vld [vmem:[%s4584 + $0xc] sm:$0xf]
        %v4589 = vld [vmem:[%s4584 + $0x10] sm:$0xf]
        %v4590 = vld [vmem:[%s4584 + $0x14] sm:$0xf]
        %v4591 = vld [vmem:[%s4584 + $0x18] sm:$0xf]
        %v4592 = vld [vmem:[%s4584 + $0x1c] sm:$0xf]
        %v4593 = vld [vmem:[%s4584 + $0x20] sm:$0xf]
        %v4594 = vld [vmem:[%s4584 + $0x24] sm:$0xf]
        %v4595 = vld [vmem:[%s4584 + $0x28] sm:$0xf]
        %v4596 = vld [vmem:[%s4584 + $0x2c] sm:$0xf]
        %v4597 = vld [vmem:[%s4584 + $0x30] sm:$0xf]
        %v4598 = vld [vmem:[%s4584 + $0x34] sm:$0xf]
        %v4599 = vld [vmem:[%s4584 + $0x38] sm:$0xf]
        %v4600 = vld [vmem:[%s4584 + $0x3c] sm:$0xf]
        %v4617 = vunpack.c.l.b16 %v4585
        %v4618 = vunpack.c.l.b16 %v4586
        %v4619 = vunpack.c.l.b16 %v4587
        %v4620 = vunpack.c.l.b16 %v4588
        %v4621 = vunpack.c.l.b16 %v4589
        %v4622 = vunpack.c.l.b16 %v4590
        %v4623 = vunpack.c.l.b16 %v4591
        %v4624 = vunpack.c.l.b16 %v4592
        %v4625 = vunpack.c.l.b16 %v4593
        %v4626 = vunpack.c.l.b16 %v4594
        %v4627 = vunpack.c.l.b16 %v4595
        %v4628 = vunpack.c.l.b16 %v4596
        %v4629 = vunpack.c.l.b16 %v4597
        %v4630 = vunpack.c.l.b16 %v4598
        %v4631 = vunpack.c.l.b16 %v4599
        %v4632 = vunpack.c.l.b16 %v4600
        %v4633 = vpack.c.b16 %v4618, %v4617
        %v4634 = vpack.c.b16 %v4620, %v4619
        %v4635 = vpack.c.b16 %v4622, %v4621
        %v4636 = vpack.c.b16 %v4624, %v4623
        %v4637 = vpack.c.b16 %v4626, %v4625
        %v4638 = vpack.c.b16 %v4628, %v4627
        %v4639 = vpack.c.b16 %v4630, %v4629
        %v4640 = vpack.c.b16 %v4632, %v4631
        %4649 = vmatprep.subr.bf16.mxu0 0
        %4650 = vmatpush1.bf16.msra.mxu0 %v4640
        %4651 = vmatprep.subr.bf16.mxu0 0
        %4652 = vmatpush1.bf16.msra.mxu0 %v4639
        %4653 = vmatprep.subr.bf16.mxu0 0
        %4654 = vmatpush1.bf16.msra.mxu0 %v4638
        %4655 = vmatprep.subr.bf16.mxu0 0
        %4656 = vmatpush1.bf16.msra.mxu0 %v4637
        %4657 = vmatprep.subr.bf16.mxu0 0
        %4658 = vmatpush1.bf16.msra.mxu0 %v4636
        %4659 = vmatprep.subr.bf16.mxu0 0
        %4660 = vmatpush1.bf16.msra.mxu0 %v4635
        %4661 = vmatprep.subr.bf16.mxu0 0
        %4662 = vmatpush1.bf16.msra.mxu0 %v4634
        %4663 = vmatprep.subr.bf16.mxu0 0
        %4664 = vmatpush1.bf16.msra.mxu0 %v4633
        %4665 = vmatprep.subr.bf16.mxu0 0
        %4666 = vmatpush2.bf16.msra.mxu0 0
        %4667 = vmatprep.subr.bf16.mxu0 0
        %4668 = vmatpush2.bf16.msra.mxu0 0
        %4669 = vmatprep.subr.bf16.mxu0 0
        %4670 = vmatpush2.bf16.msra.mxu0 0
        %4671 = vmatprep.subr.bf16.mxu0 0
        %4672 = vmatpush2.bf16.msra.mxu0 0
        %4673 = vmatprep.subr.bf16.mxu0 0
        %4674 = vmatpush2.bf16.msra.mxu0 0
        %4675 = vmatprep.subr.bf16.mxu0 0
        %4676 = vmatpush2.bf16.msra.mxu0 0
        %4677 = vmatprep.subr.bf16.mxu0 0
        %4678 = vmatpush2.bf16.msra.mxu0 0
        %4679 = vmatprep.subr.bf16.mxu0 0
        %4680 = vmatpush2.bf16.msra.mxu0 0
        %4681 = vmatprep.mubr.bf16.mxu0 0
        %4682 = vmatmul.mubr.bf16.gmra.mxu0 %v4579
        %v4683 = vpop.f32.mrf.mxu0
        %v4684 = vadd.f32 0.0, %v4683
        %v4685 = vpop.f32.mrf.mxu0
        %v4686 = vpop.f32.mrf.mxu0
        %v4687 = vadd.f32 0.0, %v4686
        %v4688 = vpop.f32.mrf.mxu0
        %4689 = vmatprep.mubr.bf16.mxu0 0
        %4690 = vmatmul.mubr.bf16.gmra.mxu0 %v4580
        %v4691 = vpop.f32.mrf.mxu0
        %v4692 = vadd.f32 0.0, %v4691
        %v4693 = vpop.f32.mrf.mxu0
        %v4694 = vpop.f32.mrf.mxu0
        %v4695 = vadd.f32 0.0, %v4694
        %v4696 = vpop.f32.mrf.mxu0
        %4697 = vmatprep.mubr.bf16.mxu0 0
        %4698 = vmatmul.mubr.bf16.gmra.mxu0 %v4581
        %v4699 = vpop.f32.mrf.mxu0
        %v4700 = vadd.f32 0.0, %v4699
        %v4701 = vpop.f32.mrf.mxu0
        %v4702 = vpop.f32.mrf.mxu0
        %v4703 = vadd.f32 0.0, %v4702
        %v4704 = vpop.f32.mrf.mxu0
        %4705 = vmatprep.mubr.bf16.mxu0 0
        %4706 = vmatmul.mubr.bf16.gmra.mxu0 %v4582
        %v4707 = vpop.f32.mrf.mxu0
        %v4708 = vadd.f32 0.0, %v4707
        %v4709 = vpop.f32.mrf.mxu0
        %v4710 = vpop.f32.mrf.mxu0
        %v4711 = vadd.f32 0.0, %v4710
        %v4712 = vpop.f32.mrf.mxu0
        %4713 = vmatprep.mubr.bf16.mxu0 0
        %4714 = vmatmul.mubr.bf16.gmra.mxu0 %v4583
        %v4715 = vpop.f32.mrf.mxu0
        %v4716 = vadd.f32 0.0, %v4715
        %v4717 = vpop.f32.mrf.mxu0
        %v4718 = vpop.f32.mrf.mxu0
        %v4719 = vadd.f32 0.0, %v4718
        %v4720 = vpop.f32.mrf.mxu0
        %4721 = vdwg.mxu0
        %v4722 = vadd.f32 %v4539, %v4684
        %v4723 = vadd.f32 %v4540, %v4687
        %v4724 = vadd.f32 %v4541, %v4692
        %v4725 = vadd.f32 %v4542, %v4695
        %v4726 = vadd.f32 %v4543, %v4700
        %v4727 = vadd.f32 %v4544, %v4703
        %v4728 = vadd.f32 %v4545, %v4708
        %v4729 = vadd.f32 %v4546, %v4711
        %v4730 = vadd.f32 %v4547, %v4716
        %v4731 = vadd.f32 %v4548, %v4719
        %v4732 = vmax.f32 %v4722, 0.0
        %v4733 = vmax.f32 %v4723, 0.0
        %v4734 = vmax.f32 %v4724, 0.0
        %v4735 = vmax.f32 %v4725, 0.0
        %v4736 = vmax.f32 %v4726, 0.0
        %v4737 = vmax.f32 %v4727, 0.0
        %v4738 = vmax.f32 %v4728, 0.0
        %v4739 = vmax.f32 %v4729, 0.0
        %v4740 = vmax.f32 %v4730, 0.0
        %v4741 = vmax.f32 %v4731, 0.0
        %v4742 = vld [vmem:[%s10] sm:$0x1]
        %v4743 = vrot.slane %v4732, 6
        %v4744 = vrot.slane %v4733, 6
        %v4745 = vrot.slane %v4734, 6
        %v4746 = vrot.slane %v4735, 6
        %v4747 = vrot.slane %v4736, 6
        %v4748 = vrot.slane %v4737, 6
        %v4749 = vrot.slane %v4738, 6
        %v4750 = vrot.slane %v4739, 6
        %v4751 = vrot.slane %v4740, 6
        %v4752 = vrot.slane %v4741, 6
        %v4753 = vsel %vm891, %v4751, %v4752
        %v4754 = vsel %vm891, %v4750, %v4751
        %v4755 = vsel %vm891, %v4749, %v4750
        %v4756 = vsel %vm891, %v4748, %v4749
        %v4757 = vsel %vm891, %v4747, %v4748
        %v4758 = vsel %vm891, %v4746, %v4747
        %v4759 = vsel %vm891, %v4745, %v4746
        %v4760 = vsel %vm891, %v4744, %v4745
        %v4761 = vsel %vm891, %v4743, %v4744
        %v4762 = vsel %vm891, %v4752, %v4743
        %v4763 = vsel %vm932, %v4762, 0.0
        %v4764 = vsel %vm933, %v4761, 0.0
        %v4765 = vsel %vm934, %v4760, 0.0
        %v4766 = vsel %vm935, %v4759, 0.0
        %v4767 = vsel %vm936, %v4758, 0.0
        %v4768 = vsel %vm937, %v4757, 0.0
        %v4769 = vsel %vm938, %v4756, 0.0
        %v4770 = vsel %vm939, %v4755, 0.0
        %v4771 = vsel %vm940, %v4754, 0.0
        %v4772 = vsel %vm941, %v4753, 0.0
        %v4773 = vpack.c.bf16 %v4764, %v4763
        %v4774 = vpack.c.bf16 %v4766, %v4765
        %v4775 = vpack.c.bf16 %v4768, %v4767
        %v4776 = vpack.c.bf16 %v4770, %v4769
        %v4777 = vpack.c.bf16 %v4772, %v4771
        %v4778 = vld [vmem:[#allocation7] sm:$0xf]
        %v4779 = vld [vmem:[#allocation7 + $0x4] sm:$0xf]
        %v4780 = vld [vmem:[#allocation7 + $0x8] sm:$0xf]
        %v4781 = vld [vmem:[#allocation7 + $0xc] sm:$0xf]
        %v4782 = vld [vmem:[#allocation7 + $0x10] sm:$0xf]
        %v4783 = vld [vmem:[#allocation7 + $0x14] sm:$0xf]
        %v4784 = vld [vmem:[#allocation7 + $0x18] sm:$0xf]
        %v4785 = vld [vmem:[#allocation7 + $0x1c] sm:$0xf]
        %v4794 = vunpack.c.l.b16 %v4778
        %v4795 = vunpack.c.l.b16 %v4779
        %v4796 = vunpack.c.l.b16 %v4780
        %v4797 = vunpack.c.l.b16 %v4781
        %v4798 = vunpack.c.l.b16 %v4782
        %v4799 = vunpack.c.l.b16 %v4783
        %v4800 = vunpack.c.l.b16 %v4784
        %v4801 = vunpack.c.l.b16 %v4785
        %v4802 = vpack.c.b16 %v4795, %v4794
        %v4803 = vpack.c.b16 %v4797, %v4796
        %v4804 = vpack.c.b16 %v4799, %v4798
        %v4805 = vpack.c.b16 %v4801, %v4800
        %vm4810 = vcmask 523264
        %v4812 = vsel %vm4810, %v4773, 0
        %v4815 = vsel %vm4810, %v4774, 0
        %v4818 = vsel %vm4810, %v4775, 0
        %v4821 = vsel %vm4810, %v4776, 0
        %v4824 = vsel %vm4810, %v4777, 0
        %4826 = vmatprep.subr.bf16.mxu0 0
        %4827 = vmatpush1.bf16.msra.mxu0 0
        %4828 = vmatprep.subr.bf16.mxu0 0
        %4829 = vmatpush1.bf16.msra.mxu0 0
        %4830 = vmatprep.subr.bf16.mxu0 0
        %4831 = vmatpush1.bf16.msra.mxu0 0
        %4832 = vmatprep.subr.bf16.mxu0 0
        %4833 = vmatpush1.bf16.msra.mxu0 0
        %4834 = vmatprep.subr.bf16.mxu0 0
        %4835 = vmatpush1.bf16.msra.mxu0 %v4805
        %4836 = vmatprep.subr.bf16.mxu0 0
        %4837 = vmatpush1.bf16.msra.mxu0 %v4804
        %4838 = vmatprep.subr.bf16.mxu0 0
        %4839 = vmatpush1.bf16.msra.mxu0 %v4803
        %4840 = vmatprep.subr.bf16.mxu0 0
        %4841 = vmatpush1.bf16.msra.mxu0 %v4802
        %4842 = vmatprep.subr.bf16.mxu0 0
        %4843 = vmatpush2.bf16.msra.mxu0 0
        %4844 = vmatprep.subr.bf16.mxu0 0
        %4845 = vmatpush2.bf16.msra.mxu0 0
        %4846 = vmatprep.subr.bf16.mxu0 0
        %4847 = vmatpush2.bf16.msra.mxu0 0
        %4848 = vmatprep.subr.bf16.mxu0 0
        %4849 = vmatpush2.bf16.msra.mxu0 0
        %4850 = vmatprep.subr.bf16.mxu0 0
        %4851 = vmatpush2.bf16.msra.mxu0 0
        %4852 = vmatprep.subr.bf16.mxu0 0
        %4853 = vmatpush2.bf16.msra.mxu0 0
        %4854 = vmatprep.subr.bf16.mxu0 0
        %4855 = vmatpush2.bf16.msra.mxu0 0
        %4856 = vmatprep.subr.bf16.mxu0 0
        %4857 = vmatpush2.bf16.msra.mxu0 0
        %4858 = vmatprep.mubr.bf16.mxu0 0
        %4859 = vmatmul.mubr.bf16.gmra.mxu0 %v4812
        %v4860 = vpop.f32.mrf.mxu0
        %v4861 = vadd.f32 0.0, %v4860
        %v4862 = vpop.f32.mrf.mxu0
        %v4863 = vpop.f32.mrf.mxu0
        %v4864 = vadd.f32 0.0, %v4863
        %v4865 = vpop.f32.mrf.mxu0
        %4866 = vmatprep.mubr.bf16.mxu0 0
        %4867 = vmatmul.mubr.bf16.gmra.mxu0 %v4815
        %v4868 = vpop.f32.mrf.mxu0
        %v4869 = vadd.f32 0.0, %v4868
        %v4870 = vpop.f32.mrf.mxu0
        %v4871 = vpop.f32.mrf.mxu0
        %v4872 = vadd.f32 0.0, %v4871
        %v4873 = vpop.f32.mrf.mxu0
        %4874 = vmatprep.mubr.bf16.mxu0 0
        %4875 = vmatmul.mubr.bf16.gmra.mxu0 %v4818
        %v4876 = vpop.f32.mrf.mxu0
        %v4877 = vadd.f32 0.0, %v4876
        %v4878 = vpop.f32.mrf.mxu0
        %v4879 = vpop.f32.mrf.mxu0
        %v4880 = vadd.f32 0.0, %v4879
        %v4881 = vpop.f32.mrf.mxu0
        %4882 = vmatprep.mubr.bf16.mxu0 0
        %4883 = vmatmul.mubr.bf16.gmra.mxu0 %v4821
        %v4884 = vpop.f32.mrf.mxu0
        %v4885 = vadd.f32 0.0, %v4884
        %v4886 = vpop.f32.mrf.mxu0
        %v4887 = vpop.f32.mrf.mxu0
        %v4888 = vadd.f32 0.0, %v4887
        %v4889 = vpop.f32.mrf.mxu0
        %4890 = vmatprep.mubr.bf16.mxu0 0
        %4891 = vmatmul.mubr.bf16.gmra.mxu0 %v4824
        %v4892 = vpop.f32.mrf.mxu0
        %v4893 = vadd.f32 0.0, %v4892
        %v4894 = vpop.f32.mrf.mxu0
        %v4895 = vpop.f32.mrf.mxu0
        %v4896 = vadd.f32 0.0, %v4895
        %v4897 = vpop.f32.mrf.mxu0
        %4898 = vdwg.mxu0
        %v4900 = vlaneseq
        %v4901 = vshrl.u32 %v4900, 7
        %v4902 = vsub.s32 0, %v4901
        %v4903 = vrot.slane %v4742, %v4902
        %v4905 = vadd.f32 %v4903, %v4861
        %v4906 = vadd.f32 %v4903, %v4864
        %v4907 = vadd.f32 %v4903, %v4869
        %v4908 = vadd.f32 %v4903, %v4872
        %v4909 = vadd.f32 %v4903, %v4877
        %v4910 = vadd.f32 %v4903, %v4880
        %v4911 = vadd.f32 %v4903, %v4885
        %v4912 = vadd.f32 %v4903, %v4888
        %v4913 = vadd.f32 %v4903, %v4893
        %v4914 = vadd.f32 %v4903, %v4896
        %v4915 = vrot.slane %v4732, 7
        %v4916 = vrot.slane %v4733, 7
        %v4917 = vrot.slane %v4734, 7
        %v4918 = vrot.slane %v4735, 7
        %v4919 = vrot.slane %v4736, 7
        %v4920 = vrot.slane %v4737, 7
        %v4921 = vrot.slane %v4738, 7
        %v4922 = vrot.slane %v4739, 7
        %v4923 = vrot.slane %v4740, 7
        %v4924 = vrot.slane %v4741, 7
        %v4925 = vsel %vm1209, %v4923, %v4924
        %v4926 = vsel %vm1209, %v4922, %v4923
        %v4927 = vsel %vm1209, %v4921, %v4922
        %v4928 = vsel %vm1209, %v4920, %v4921
        %v4929 = vsel %vm1209, %v4919, %v4920
        %v4930 = vsel %vm1209, %v4918, %v4919
        %v4931 = vsel %vm1209, %v4917, %v4918
        %v4932 = vsel %vm1209, %v4916, %v4917
        %v4933 = vsel %vm1209, %v4915, %v4916
        %v4934 = vsel %vm1209, %v4924, %v4915
        %v4935 = vsel %vm1250, %v4934, 0.0
        %v4936 = vsel %vm1251, %v4933, 0.0
        %v4937 = vsel %vm1252, %v4932, 0.0
        %v4938 = vsel %vm1253, %v4931, 0.0
        %v4939 = vsel %vm1254, %v4930, 0.0
        %v4940 = vsel %vm1255, %v4929, 0.0
        %v4941 = vsel %vm1256, %v4928, 0.0
        %v4942 = vsel %vm1257, %v4927, 0.0
        %v4943 = vsel %vm1258, %v4926, 0.0
        %v4944 = vsel %vm1259, %v4925, 0.0
        %v4945 = vpack.c.bf16 %v4936, %v4935
        %v4946 = vpack.c.bf16 %v4938, %v4937
        %v4947 = vpack.c.bf16 %v4940, %v4939
        %v4948 = vpack.c.bf16 %v4942, %v4941
        %v4949 = vpack.c.bf16 %v4944, %v4943
        %s4950 = scalar_lea.vmem [#allocation7], 32
        %v4951 = vld [vmem:[%s4950] sm:$0xf]
        %v4952 = vld [vmem:[%s4950 + $0x4] sm:$0xf]
        %v4953 = vld [vmem:[%s4950 + $0x8] sm:$0xf]
        %v4954 = vld [vmem:[%s4950 + $0xc] sm:$0xf]
        %v4955 = vld [vmem:[%s4950 + $0x10] sm:$0xf]
        %v4956 = vld [vmem:[%s4950 + $0x14] sm:$0xf]
        %v4957 = vld [vmem:[%s4950 + $0x18] sm:$0xf]
        %v4958 = vld [vmem:[%s4950 + $0x1c] sm:$0xf]
        %v4967 = vunpack.c.l.b16 %v4951
        %v4968 = vunpack.c.l.b16 %v4952
        %v4969 = vunpack.c.l.b16 %v4953
        %v4970 = vunpack.c.l.b16 %v4954
        %v4971 = vunpack.c.l.b16 %v4955
        %v4972 = vunpack.c.l.b16 %v4956
        %v4973 = vunpack.c.l.b16 %v4957
        %v4974 = vunpack.c.l.b16 %v4958
        %v4975 = vpack.c.b16 %v4968, %v4967
        %v4976 = vpack.c.b16 %v4970, %v4969
        %v4977 = vpack.c.b16 %v4972, %v4971
        %v4978 = vpack.c.b16 %v4974, %v4973
        %v4984 = vsel %vm4810, %v4945, 0
        %v4987 = vsel %vm4810, %v4946, 0
        %v4990 = vsel %vm4810, %v4947, 0
        %v4993 = vsel %vm4810, %v4948, 0
        %v4996 = vsel %vm4810, %v4949, 0
        %4998 = vmatprep.subr.bf16.mxu0 0
        %4999 = vmatpush1.bf16.msra.mxu0 0
        %5000 = vmatprep.subr.bf16.mxu0 0
        %5001 = vmatpush1.bf16.msra.mxu0 0
        %5002 = vmatprep.subr.bf16.mxu0 0
        %5003 = vmatpush1.bf16.msra.mxu0 0
        %5004 = vmatprep.subr.bf16.mxu0 0
        %5005 = vmatpush1.bf16.msra.mxu0 0
        %5006 = vmatprep.subr.bf16.mxu0 0
        %5007 = vmatpush1.bf16.msra.mxu0 %v4978
        %5008 = vmatprep.subr.bf16.mxu0 0
        %5009 = vmatpush1.bf16.msra.mxu0 %v4977
        %5010 = vmatprep.subr.bf16.mxu0 0
        %5011 = vmatpush1.bf16.msra.mxu0 %v4976
        %5012 = vmatprep.subr.bf16.mxu0 0
        %5013 = vmatpush1.bf16.msra.mxu0 %v4975
        %5014 = vmatprep.subr.bf16.mxu0 0
        %5015 = vmatpush2.bf16.msra.mxu0 0
        %5016 = vmatprep.subr.bf16.mxu0 0
        %5017 = vmatpush2.bf16.msra.mxu0 0
        %5018 = vmatprep.subr.bf16.mxu0 0
        %5019 = vmatpush2.bf16.msra.mxu0 0
        %5020 = vmatprep.subr.bf16.mxu0 0
        %5021 = vmatpush2.bf16.msra.mxu0 0
        %5022 = vmatprep.subr.bf16.mxu0 0
        %5023 = vmatpush2.bf16.msra.mxu0 0
        %5024 = vmatprep.subr.bf16.mxu0 0
        %5025 = vmatpush2.bf16.msra.mxu0 0
        %5026 = vmatprep.subr.bf16.mxu0 0
        %5027 = vmatpush2.bf16.msra.mxu0 0
        %5028 = vmatprep.subr.bf16.mxu0 0
        %5029 = vmatpush2.bf16.msra.mxu0 0
        %5030 = vmatprep.mubr.bf16.mxu0 0
        %5031 = vmatmul.mubr.bf16.gmra.mxu0 %v4984
        %v5032 = vpop.f32.mrf.mxu0
        %v5033 = vadd.f32 0.0, %v5032
        %v5034 = vpop.f32.mrf.mxu0
        %v5035 = vpop.f32.mrf.mxu0
        %v5036 = vadd.f32 0.0, %v5035
        %v5037 = vpop.f32.mrf.mxu0
        %5038 = vmatprep.mubr.bf16.mxu0 0
        %5039 = vmatmul.mubr.bf16.gmra.mxu0 %v4987
        %v5040 = vpop.f32.mrf.mxu0
        %v5041 = vadd.f32 0.0, %v5040
        %v5042 = vpop.f32.mrf.mxu0
        %v5043 = vpop.f32.mrf.mxu0
        %v5044 = vadd.f32 0.0, %v5043
        %v5045 = vpop.f32.mrf.mxu0
        %5046 = vmatprep.mubr.bf16.mxu0 0
        %5047 = vmatmul.mubr.bf16.gmra.mxu0 %v4990
        %v5048 = vpop.f32.mrf.mxu0
        %v5049 = vadd.f32 0.0, %v5048
        %v5050 = vpop.f32.mrf.mxu0
        %v5051 = vpop.f32.mrf.mxu0
        %v5052 = vadd.f32 0.0, %v5051
        %v5053 = vpop.f32.mrf.mxu0
        %5054 = vmatprep.mubr.bf16.mxu0 0
        %5055 = vmatmul.mubr.bf16.gmra.mxu0 %v4993
        %v5056 = vpop.f32.mrf.mxu0
        %v5057 = vadd.f32 0.0, %v5056
        %v5058 = vpop.f32.mrf.mxu0
        %v5059 = vpop.f32.mrf.mxu0
        %v5060 = vadd.f32 0.0, %v5059
        %v5061 = vpop.f32.mrf.mxu0
        %5062 = vmatprep.mubr.bf16.mxu0 0
        %5063 = vmatmul.mubr.bf16.gmra.mxu0 %v4996
        %v5064 = vpop.f32.mrf.mxu0
        %v5065 = vadd.f32 0.0, %v5064
        %v5066 = vpop.f32.mrf.mxu0
        %v5067 = vpop.f32.mrf.mxu0
        %v5068 = vadd.f32 0.0, %v5067
        %v5069 = vpop.f32.mrf.mxu0
        %5070 = vdwg.mxu0
        %v5071 = vadd.f32 %v4905, %v5033
        %v5072 = vadd.f32 %v4906, %v5036
        %v5073 = vadd.f32 %v4907, %v5041
        %v5074 = vadd.f32 %v4908, %v5044
        %v5075 = vadd.f32 %v4909, %v5049
        %v5076 = vadd.f32 %v4910, %v5052
        %v5077 = vadd.f32 %v4911, %v5057
        %v5078 = vadd.f32 %v4912, %v5060
        %v5079 = vadd.f32 %v4913, %v5065
        %v5080 = vadd.f32 %v4914, %v5068
        %v5081 = vpack.c.bf16 %v4733, %v4732
        %v5082 = vpack.c.bf16 %v4735, %v4734
        %v5083 = vpack.c.bf16 %v4737, %v4736
        %v5084 = vpack.c.bf16 %v4739, %v4738
        %v5085 = vpack.c.bf16 %v4741, %v4740
        %s5086 = scalar_lea.vmem [#allocation7], 64
        %v5087 = vld [vmem:[%s5086] sm:$0xf]
        %v5088 = vld [vmem:[%s5086 + $0x4] sm:$0xf]
        %v5089 = vld [vmem:[%s5086 + $0x8] sm:$0xf]
        %v5090 = vld [vmem:[%s5086 + $0xc] sm:$0xf]
        %v5091 = vld [vmem:[%s5086 + $0x10] sm:$0xf]
        %v5092 = vld [vmem:[%s5086 + $0x14] sm:$0xf]
        %v5093 = vld [vmem:[%s5086 + $0x18] sm:$0xf]
        %v5094 = vld [vmem:[%s5086 + $0x1c] sm:$0xf]
        %v5103 = vunpack.c.l.b16 %v5087
        %v5104 = vunpack.c.l.b16 %v5088
        %v5105 = vunpack.c.l.b16 %v5089
        %v5106 = vunpack.c.l.b16 %v5090
        %v5107 = vunpack.c.l.b16 %v5091
        %v5108 = vunpack.c.l.b16 %v5092
        %v5109 = vunpack.c.l.b16 %v5093
        %v5110 = vunpack.c.l.b16 %v5094
        %v5111 = vpack.c.b16 %v5104, %v5103
        %v5112 = vpack.c.b16 %v5106, %v5105
        %v5113 = vpack.c.b16 %v5108, %v5107
        %v5114 = vpack.c.b16 %v5110, %v5109
        %v5120 = vsel %vm4810, %v5081, 0
        %v5123 = vsel %vm4810, %v5082, 0
        %v5126 = vsel %vm4810, %v5083, 0
        %v5129 = vsel %vm4810, %v5084, 0
        %v5132 = vsel %vm4810, %v5085, 0
        %5134 = vmatprep.subr.bf16.mxu0 0
        %5135 = vmatpush1.bf16.msra.mxu0 0
        %5136 = vmatprep.subr.bf16.mxu0 0
        %5137 = vmatpush1.bf16.msra.mxu0 0
        %5138 = vmatprep.subr.bf16.mxu0 0
        %5139 = vmatpush1.bf16.msra.mxu0 0
        %5140 = vmatprep.subr.bf16.mxu0 0
        %5141 = vmatpush1.bf16.msra.mxu0 0
        %5142 = vmatprep.subr.bf16.mxu0 0
        %5143 = vmatpush1.bf16.msra.mxu0 %v5114
        %5144 = vmatprep.subr.bf16.mxu0 0
        %5145 = vmatpush1.bf16.msra.mxu0 %v5113
        %5146 = vmatprep.subr.bf16.mxu0 0
        %5147 = vmatpush1.bf16.msra.mxu0 %v5112
        %5148 = vmatprep.subr.bf16.mxu0 0
        %5149 = vmatpush1.bf16.msra.mxu0 %v5111
        %5150 = vmatprep.subr.bf16.mxu0 0
        %5151 = vmatpush2.bf16.msra.mxu0 0
        %5152 = vmatprep.subr.bf16.mxu0 0
        %5153 = vmatpush2.bf16.msra.mxu0 0
        %5154 = vmatprep.subr.bf16.mxu0 0
        %5155 = vmatpush2.bf16.msra.mxu0 0
        %5156 = vmatprep.subr.bf16.mxu0 0
        %5157 = vmatpush2.bf16.msra.mxu0 0
        %5158 = vmatprep.subr.bf16.mxu0 0
        %5159 = vmatpush2.bf16.msra.mxu0 0
        %5160 = vmatprep.subr.bf16.mxu0 0
        %5161 = vmatpush2.bf16.msra.mxu0 0
        %5162 = vmatprep.subr.bf16.mxu0 0
        %5163 = vmatpush2.bf16.msra.mxu0 0
        %5164 = vmatprep.subr.bf16.mxu0 0
        %5165 = vmatpush2.bf16.msra.mxu0 0
        %5166 = vmatprep.mubr.bf16.mxu0 0
        %5167 = vmatmul.mubr.bf16.gmra.mxu0 %v5120
        %v5168 = vpop.f32.mrf.mxu0
        %v5169 = vadd.f32 0.0, %v5168
        %v5170 = vpop.f32.mrf.mxu0
        %v5171 = vpop.f32.mrf.mxu0
        %v5172 = vadd.f32 0.0, %v5171
        %v5173 = vpop.f32.mrf.mxu0
        %5174 = vmatprep.mubr.bf16.mxu0 0
        %5175 = vmatmul.mubr.bf16.gmra.mxu0 %v5123
        %v5176 = vpop.f32.mrf.mxu0
        %v5177 = vadd.f32 0.0, %v5176
        %v5178 = vpop.f32.mrf.mxu0
        %v5179 = vpop.f32.mrf.mxu0
        %v5180 = vadd.f32 0.0, %v5179
        %v5181 = vpop.f32.mrf.mxu0
        %5182 = vmatprep.mubr.bf16.mxu0 0
        %5183 = vmatmul.mubr.bf16.gmra.mxu0 %v5126
        %v5184 = vpop.f32.mrf.mxu0
        %v5185 = vadd.f32 0.0, %v5184
        %v5186 = vpop.f32.mrf.mxu0
        %v5187 = vpop.f32.mrf.mxu0
        %v5188 = vadd.f32 0.0, %v5187
        %v5189 = vpop.f32.mrf.mxu0
        %5190 = vmatprep.mubr.bf16.mxu0 0
        %5191 = vmatmul.mubr.bf16.gmra.mxu0 %v5129
        %v5192 = vpop.f32.mrf.mxu0
        %v5193 = vadd.f32 0.0, %v5192
        %v5194 = vpop.f32.mrf.mxu0
        %v5195 = vpop.f32.mrf.mxu0
        %v5196 = vadd.f32 0.0, %v5195
        %v5197 = vpop.f32.mrf.mxu0
        %5198 = vmatprep.mubr.bf16.mxu0 0
        %5199 = vmatmul.mubr.bf16.gmra.mxu0 %v5132
        %v5200 = vpop.f32.mrf.mxu0
        %v5201 = vadd.f32 0.0, %v5200
        %v5202 = vpop.f32.mrf.mxu0
        %v5203 = vpop.f32.mrf.mxu0
        %v5204 = vadd.f32 0.0, %v5203
        %v5205 = vpop.f32.mrf.mxu0
        %5206 = vdwg.mxu0
        %v5207 = vadd.f32 %v5071, %v5169
        %v5208 = vadd.f32 %v5072, %v5172
        %v5209 = vadd.f32 %v5073, %v5177
        %v5210 = vadd.f32 %v5074, %v5180
        %v5211 = vadd.f32 %v5075, %v5185
        %v5212 = vadd.f32 %v5076, %v5188
        %v5213 = vadd.f32 %v5077, %v5193
        %v5214 = vadd.f32 %v5078, %v5196
        %v5215 = vadd.f32 %v5079, %v5201
        %v5216 = vadd.f32 %v5080, %v5204
        %v5217 = vrot.slane %v4732, 1
        %v5218 = vrot.slane %v4733, 1
        %v5219 = vrot.slane %v4734, 1
        %v5220 = vrot.slane %v4735, 1
        %v5221 = vrot.slane %v4736, 1
        %v5222 = vrot.slane %v4737, 1
        %v5223 = vrot.slane %v4738, 1
        %v5224 = vrot.slane %v4739, 1
        %v5225 = vrot.slane %v4740, 1
        %v5226 = vrot.slane %v4741, 1
        %v5227 = vsel %vm1744, %v5225, %v5226
        %v5228 = vsel %vm1744, %v5224, %v5225
        %v5229 = vsel %vm1744, %v5223, %v5224
        %v5230 = vsel %vm1744, %v5222, %v5223
        %v5231 = vsel %vm1744, %v5221, %v5222
        %v5232 = vsel %vm1744, %v5220, %v5221
        %v5233 = vsel %vm1744, %v5219, %v5220
        %v5234 = vsel %vm1744, %v5218, %v5219
        %v5235 = vsel %vm1744, %v5217, %v5218
        %v5236 = vsel %vm1744, %v5226, %v5217
        %v5237 = vsel %vm1785, %v5235, 0.0
        %v5238 = vsel %vm1786, %v5234, 0.0
        %v5239 = vsel %vm1787, %v5233, 0.0
        %v5240 = vsel %vm1788, %v5232, 0.0
        %v5241 = vsel %vm1789, %v5231, 0.0
        %v5242 = vsel %vm1790, %v5230, 0.0
        %v5243 = vsel %vm1791, %v5229, 0.0
        %v5244 = vsel %vm1792, %v5228, 0.0
        %v5245 = vsel %vm1793, %v5227, 0.0
        %v5246 = vsel %vm1794, %v5236, 0.0
        %v5247 = vpack.c.bf16 %v5238, %v5237
        %v5248 = vpack.c.bf16 %v5240, %v5239
        %v5249 = vpack.c.bf16 %v5242, %v5241
        %v5250 = vpack.c.bf16 %v5244, %v5243
        %v5251 = vpack.c.bf16 %v5246, %v5245
        %s5252 = scalar_lea.vmem [#allocation7], 96
        %v5253 = vld [vmem:[%s5252] sm:$0xf]
        %v5254 = vld [vmem:[%s5252 + $0x4] sm:$0xf]
        %v5255 = vld [vmem:[%s5252 + $0x8] sm:$0xf]
        %v5256 = vld [vmem:[%s5252 + $0xc] sm:$0xf]
        %v5257 = vld [vmem:[%s5252 + $0x10] sm:$0xf]
        %v5258 = vld [vmem:[%s5252 + $0x14] sm:$0xf]
        %v5259 = vld [vmem:[%s5252 + $0x18] sm:$0xf]
        %v5260 = vld [vmem:[%s5252 + $0x1c] sm:$0xf]
        %v5269 = vunpack.c.l.b16 %v5253
        %v5270 = vunpack.c.l.b16 %v5254
        %v5271 = vunpack.c.l.b16 %v5255
        %v5272 = vunpack.c.l.b16 %v5256
        %v5273 = vunpack.c.l.b16 %v5257
        %v5274 = vunpack.c.l.b16 %v5258
        %v5275 = vunpack.c.l.b16 %v5259
        %v5276 = vunpack.c.l.b16 %v5260
        %v5277 = vpack.c.b16 %v5270, %v5269
        %v5278 = vpack.c.b16 %v5272, %v5271
        %v5279 = vpack.c.b16 %v5274, %v5273
        %v5280 = vpack.c.b16 %v5276, %v5275
        %v5286 = vsel %vm4810, %v5247, 0
        %v5289 = vsel %vm4810, %v5248, 0
        %v5292 = vsel %vm4810, %v5249, 0
        %v5295 = vsel %vm4810, %v5250, 0
        %v5298 = vsel %vm4810, %v5251, 0
        %5300 = vmatprep.subr.bf16.mxu0 0
        %5301 = vmatpush1.bf16.msra.mxu0 0
        %5302 = vmatprep.subr.bf16.mxu0 0
        %5303 = vmatpush1.bf16.msra.mxu0 0
        %5304 = vmatprep.subr.bf16.mxu0 0
        %5305 = vmatpush1.bf16.msra.mxu0 0
        %5306 = vmatprep.subr.bf16.mxu0 0
        %5307 = vmatpush1.bf16.msra.mxu0 0
        %5308 = vmatprep.subr.bf16.mxu0 0
        %5309 = vmatpush1.bf16.msra.mxu0 %v5280
        %5310 = vmatprep.subr.bf16.mxu0 0
        %5311 = vmatpush1.bf16.msra.mxu0 %v5279
        %5312 = vmatprep.subr.bf16.mxu0 0
        %5313 = vmatpush1.bf16.msra.mxu0 %v5278
        %5314 = vmatprep.subr.bf16.mxu0 0
        %5315 = vmatpush1.bf16.msra.mxu0 %v5277
        %5316 = vmatprep.subr.bf16.mxu0 0
        %5317 = vmatpush2.bf16.msra.mxu0 0
        %5318 = vmatprep.subr.bf16.mxu0 0
        %5319 = vmatpush2.bf16.msra.mxu0 0
        %5320 = vmatprep.subr.bf16.mxu0 0
        %5321 = vmatpush2.bf16.msra.mxu0 0
        %5322 = vmatprep.subr.bf16.mxu0 0
        %5323 = vmatpush2.bf16.msra.mxu0 0
        %5324 = vmatprep.subr.bf16.mxu0 0
        %5325 = vmatpush2.bf16.msra.mxu0 0
        %5326 = vmatprep.subr.bf16.mxu0 0
        %5327 = vmatpush2.bf16.msra.mxu0 0
        %5328 = vmatprep.subr.bf16.mxu0 0
        %5329 = vmatpush2.bf16.msra.mxu0 0
        %5330 = vmatprep.subr.bf16.mxu0 0
        %5331 = vmatpush2.bf16.msra.mxu0 0
        %5332 = vmatprep.mubr.bf16.mxu0 0
        %5333 = vmatmul.mubr.bf16.gmra.mxu0 %v5286
        %v5334 = vpop.f32.mrf.mxu0
        %v5335 = vadd.f32 0.0, %v5334
        %v5336 = vpop.f32.mrf.mxu0
        %v5337 = vpop.f32.mrf.mxu0
        %v5338 = vadd.f32 0.0, %v5337
        %v5339 = vpop.f32.mrf.mxu0
        %5340 = vmatprep.mubr.bf16.mxu0 0
        %5341 = vmatmul.mubr.bf16.gmra.mxu0 %v5289
        %v5342 = vpop.f32.mrf.mxu0
        %v5343 = vadd.f32 0.0, %v5342
        %v5344 = vpop.f32.mrf.mxu0
        %v5345 = vpop.f32.mrf.mxu0
        %v5346 = vadd.f32 0.0, %v5345
        %v5347 = vpop.f32.mrf.mxu0
        %5348 = vmatprep.mubr.bf16.mxu0 0
        %5349 = vmatmul.mubr.bf16.gmra.mxu0 %v5292
        %v5350 = vpop.f32.mrf.mxu0
        %v5351 = vadd.f32 0.0, %v5350
        %v5352 = vpop.f32.mrf.mxu0
        %v5353 = vpop.f32.mrf.mxu0
        %v5354 = vadd.f32 0.0, %v5353
        %v5355 = vpop.f32.mrf.mxu0
        %5356 = vmatprep.mubr.bf16.mxu0 0
        %5357 = vmatmul.mubr.bf16.gmra.mxu0 %v5295
        %v5358 = vpop.f32.mrf.mxu0
        %v5359 = vadd.f32 0.0, %v5358
        %v5360 = vpop.f32.mrf.mxu0
        %v5361 = vpop.f32.mrf.mxu0
        %v5362 = vadd.f32 0.0, %v5361
        %v5363 = vpop.f32.mrf.mxu0
        %5364 = vmatprep.mubr.bf16.mxu0 0
        %5365 = vmatmul.mubr.bf16.gmra.mxu0 %v5298
        %v5366 = vpop.f32.mrf.mxu0
        %v5367 = vadd.f32 0.0, %v5366
        %v5368 = vpop.f32.mrf.mxu0
        %v5369 = vpop.f32.mrf.mxu0
        %v5370 = vadd.f32 0.0, %v5369
        %v5371 = vpop.f32.mrf.mxu0
        %5372 = vdwg.mxu0
        %v5373 = vadd.f32 %v5207, %v5335
        %v5374 = vadd.f32 %v5208, %v5338
        %v5375 = vadd.f32 %v5209, %v5343
        %v5376 = vadd.f32 %v5210, %v5346
        %v5377 = vadd.f32 %v5211, %v5351
        %v5378 = vadd.f32 %v5212, %v5354
        %v5379 = vadd.f32 %v5213, %v5359
        %v5380 = vadd.f32 %v5214, %v5362
        %v5381 = vadd.f32 %v5215, %v5367
        %v5382 = vadd.f32 %v5216, %v5370
        %v5383 = vrot.slane %v4732, 2
        %v5384 = vrot.slane %v4733, 2
        %v5385 = vrot.slane %v4734, 2
        %v5386 = vrot.slane %v4735, 2
        %v5387 = vrot.slane %v4736, 2
        %v5388 = vrot.slane %v4737, 2
        %v5389 = vrot.slane %v4738, 2
        %v5390 = vrot.slane %v4739, 2
        %v5391 = vrot.slane %v4740, 2
        %v5392 = vrot.slane %v4741, 2
        %v5393 = vsel %vm2057, %v5391, %v5392
        %v5394 = vsel %vm2057, %v5390, %v5391
        %v5395 = vsel %vm2057, %v5389, %v5390
        %v5396 = vsel %vm2057, %v5388, %v5389
        %v5397 = vsel %vm2057, %v5387, %v5388
        %v5398 = vsel %vm2057, %v5386, %v5387
        %v5399 = vsel %vm2057, %v5385, %v5386
        %v5400 = vsel %vm2057, %v5384, %v5385
        %v5401 = vsel %vm2057, %v5383, %v5384
        %v5402 = vsel %vm2057, %v5392, %v5383
        %v5403 = vsel %vm2098, %v5401, 0.0
        %v5404 = vsel %vm2099, %v5400, 0.0
        %v5405 = vsel %vm2100, %v5399, 0.0
        %v5406 = vsel %vm2101, %v5398, 0.0
        %v5407 = vsel %vm2102, %v5397, 0.0
        %v5408 = vsel %vm2103, %v5396, 0.0
        %v5409 = vsel %vm2104, %v5395, 0.0
        %v5410 = vsel %vm2105, %v5394, 0.0
        %v5411 = vsel %vm2106, %v5393, 0.0
        %v5412 = vsel %vm2107, %v5402, 0.0
        %v5413 = vpack.c.bf16 %v5404, %v5403
        %v5414 = vpack.c.bf16 %v5406, %v5405
        %v5415 = vpack.c.bf16 %v5408, %v5407
        %v5416 = vpack.c.bf16 %v5410, %v5409
        %v5417 = vpack.c.bf16 %v5412, %v5411
        %s5418 = scalar_lea.vmem [#allocation7], 128
        %v5419 = vld [vmem:[%s5418] sm:$0xf]
        %v5420 = vld [vmem:[%s5418 + $0x4] sm:$0xf]
        %v5421 = vld [vmem:[%s5418 + $0x8] sm:$0xf]
        %v5422 = vld [vmem:[%s5418 + $0xc] sm:$0xf]
        %v5423 = vld [vmem:[%s5418 + $0x10] sm:$0xf]
        %v5424 = vld [vmem:[%s5418 + $0x14] sm:$0xf]
        %v5425 = vld [vmem:[%s5418 + $0x18] sm:$0xf]
        %v5426 = vld [vmem:[%s5418 + $0x1c] sm:$0xf]
        %v5435 = vunpack.c.l.b16 %v5419
        %v5436 = vunpack.c.l.b16 %v5420
        %v5437 = vunpack.c.l.b16 %v5421
        %v5438 = vunpack.c.l.b16 %v5422
        %v5439 = vunpack.c.l.b16 %v5423
        %v5440 = vunpack.c.l.b16 %v5424
        %v5441 = vunpack.c.l.b16 %v5425
        %v5442 = vunpack.c.l.b16 %v5426
        %v5443 = vpack.c.b16 %v5436, %v5435
        %v5444 = vpack.c.b16 %v5438, %v5437
        %v5445 = vpack.c.b16 %v5440, %v5439
        %v5446 = vpack.c.b16 %v5442, %v5441
        %v5452 = vsel %vm4810, %v5413, 0
        %v5455 = vsel %vm4810, %v5414, 0
        %v5458 = vsel %vm4810, %v5415, 0
        %v5461 = vsel %vm4810, %v5416, 0
        %v5464 = vsel %vm4810, %v5417, 0
        %5466 = vmatprep.subr.bf16.mxu0 0
        %5467 = vmatpush1.bf16.msra.mxu0 0
        %5468 = vmatprep.subr.bf16.mxu0 0
        %5469 = vmatpush1.bf16.msra.mxu0 0
        %5470 = vmatprep.subr.bf16.mxu0 0
        %5471 = vmatpush1.bf16.msra.mxu0 0
        %5472 = vmatprep.subr.bf16.mxu0 0
        %5473 = vmatpush1.bf16.msra.mxu0 0
        %5474 = vmatprep.subr.bf16.mxu0 0
        %5475 = vmatpush1.bf16.msra.mxu0 %v5446
        %5476 = vmatprep.subr.bf16.mxu0 0
        %5477 = vmatpush1.bf16.msra.mxu0 %v5445
        %5478 = vmatprep.subr.bf16.mxu0 0
        %5479 = vmatpush1.bf16.msra.mxu0 %v5444
        %5480 = vmatprep.subr.bf16.mxu0 0
        %5481 = vmatpush1.bf16.msra.mxu0 %v5443
        %5482 = vmatprep.subr.bf16.mxu0 0
        %5483 = vmatpush2.bf16.msra.mxu0 0
        %5484 = vmatprep.subr.bf16.mxu0 0
        %5485 = vmatpush2.bf16.msra.mxu0 0
        %5486 = vmatprep.subr.bf16.mxu0 0
        %5487 = vmatpush2.bf16.msra.mxu0 0
        %5488 = vmatprep.subr.bf16.mxu0 0
        %5489 = vmatpush2.bf16.msra.mxu0 0
        %5490 = vmatprep.subr.bf16.mxu0 0
        %5491 = vmatpush2.bf16.msra.mxu0 0
        %5492 = vmatprep.subr.bf16.mxu0 0
        %5493 = vmatpush2.bf16.msra.mxu0 0
        %5494 = vmatprep.subr.bf16.mxu0 0
        %5495 = vmatpush2.bf16.msra.mxu0 0
        %5496 = vmatprep.subr.bf16.mxu0 0
        %5497 = vmatpush2.bf16.msra.mxu0 0
        %5498 = vmatprep.mubr.bf16.mxu0 0
        %5499 = vmatmul.mubr.bf16.gmra.mxu0 %v5452
        %v5500 = vpop.f32.mrf.mxu0
        %v5501 = vadd.f32 0.0, %v5500
        %v5502 = vpop.f32.mrf.mxu0
        %v5503 = vpop.f32.mrf.mxu0
        %v5504 = vadd.f32 0.0, %v5503
        %v5505 = vpop.f32.mrf.mxu0
        %5506 = vmatprep.mubr.bf16.mxu0 0
        %5507 = vmatmul.mubr.bf16.gmra.mxu0 %v5455
        %v5508 = vpop.f32.mrf.mxu0
        %v5509 = vadd.f32 0.0, %v5508
        %v5510 = vpop.f32.mrf.mxu0
        %v5511 = vpop.f32.mrf.mxu0
        %v5512 = vadd.f32 0.0, %v5511
        %v5513 = vpop.f32.mrf.mxu0
        %5514 = vmatprep.mubr.bf16.mxu0 0
        %5515 = vmatmul.mubr.bf16.gmra.mxu0 %v5458
        %v5516 = vpop.f32.mrf.mxu0
        %v5517 = vadd.f32 0.0, %v5516
        %v5518 = vpop.f32.mrf.mxu0
        %v5519 = vpop.f32.mrf.mxu0
        %v5520 = vadd.f32 0.0, %v5519
        %v5521 = vpop.f32.mrf.mxu0
        %5522 = vmatprep.mubr.bf16.mxu0 0
        %5523 = vmatmul.mubr.bf16.gmra.mxu0 %v5461
        %v5524 = vpop.f32.mrf.mxu0
        %v5525 = vadd.f32 0.0, %v5524
        %v5526 = vpop.f32.mrf.mxu0
        %v5527 = vpop.f32.mrf.mxu0
        %v5528 = vadd.f32 0.0, %v5527
        %v5529 = vpop.f32.mrf.mxu0
        %5530 = vmatprep.mubr.bf16.mxu0 0
        %5531 = vmatmul.mubr.bf16.gmra.mxu0 %v5464
        %v5532 = vpop.f32.mrf.mxu0
        %v5533 = vadd.f32 0.0, %v5532
        %v5534 = vpop.f32.mrf.mxu0
        %v5535 = vpop.f32.mrf.mxu0
        %v5536 = vadd.f32 0.0, %v5535
        %v5537 = vpop.f32.mrf.mxu0
        %5538 = vdwg.mxu0
        %v5539 = vadd.f32 %v5373, %v5501
        %v5540 = vadd.f32 %v5374, %v5504
        %v5541 = vadd.f32 %v5375, %v5509
        %v5542 = vadd.f32 %v5376, %v5512
        %v5543 = vadd.f32 %v5377, %v5517
        %v5544 = vadd.f32 %v5378, %v5520
        %v5545 = vadd.f32 %v5379, %v5525
        %v5546 = vadd.f32 %v5380, %v5528
        %v5547 = vadd.f32 %v5381, %v5533
        %v5548 = vadd.f32 %v5382, %v5536
        %v5549 = vmax.f32 %v5539, 0.0
        %v5550 = vmax.f32 %v5540, 0.0
        %v5551 = vmax.f32 %v5541, 0.0
        %v5552 = vmax.f32 %v5542, 0.0
        %v5553 = vmax.f32 %v5543, 0.0
        %v5554 = vmax.f32 %v5544, 0.0
        %v5555 = vmax.f32 %v5545, 0.0
        %v5556 = vmax.f32 %v5546, 0.0
        %v5557 = vmax.f32 %v5547, 0.0
        %v5558 = vmax.f32 %v5548, 0.0
        %v5559 = vld [vmem:[%s12] sm:$0x1]
        %v5560 = vrot.slane %v5549, 7
        %v5561 = vrot.slane %v5550, 7
        %v5562 = vrot.slane %v5551, 7
        %v5563 = vrot.slane %v5552, 7
        %v5564 = vrot.slane %v5553, 7
        %v5565 = vrot.slane %v5554, 7
        %v5566 = vrot.slane %v5555, 7
        %v5567 = vrot.slane %v5556, 7
        %v5568 = vrot.slane %v5557, 7
        %v5569 = vrot.slane %v5558, 7
        %v5570 = vsel %vm1209, %v5568, %v5569
        %v5571 = vsel %vm1209, %v5567, %v5568
        %v5572 = vsel %vm1209, %v5566, %v5567
        %v5573 = vsel %vm1209, %v5565, %v5566
        %v5574 = vsel %vm1209, %v5564, %v5565
        %v5575 = vsel %vm1209, %v5563, %v5564
        %v5576 = vsel %vm1209, %v5562, %v5563
        %v5577 = vsel %vm1209, %v5561, %v5562
        %v5578 = vsel %vm1209, %v5560, %v5561
        %v5579 = vsel %vm1209, %v5569, %v5560
        %v5580 = vsel %vm1250, %v5579, 0.0
        %v5581 = vsel %vm1251, %v5578, 0.0
        %v5582 = vsel %vm1252, %v5577, 0.0
        %v5583 = vsel %vm1253, %v5576, 0.0
        %v5584 = vsel %vm1254, %v5575, 0.0
        %v5585 = vsel %vm1255, %v5574, 0.0
        %v5586 = vsel %vm1256, %v5573, 0.0
        %v5587 = vsel %vm1257, %v5572, 0.0
        %v5588 = vsel %vm1258, %v5571, 0.0
        %v5589 = vsel %vm1259, %v5570, 0.0
        %v5590 = vpack.c.bf16 %v5581, %v5580
        %v5591 = vpack.c.bf16 %v5583, %v5582
        %v5592 = vpack.c.bf16 %v5585, %v5584
        %v5593 = vpack.c.bf16 %v5587, %v5586
        %v5594 = vpack.c.bf16 %v5589, %v5588
        %v5595 = vld [vmem:[%s11] sm:$0xf]
        %v5596 = vld [vmem:[%s11 + $0x4] sm:$0xf]
        %v5597 = vld [vmem:[%s11 + $0x8] sm:$0xf]
        %v5598 = vld [vmem:[%s11 + $0xc] sm:$0xf]
        %v5599 = vld [vmem:[%s11 + $0x10] sm:$0xf]
        %v5600 = vld [vmem:[%s11 + $0x14] sm:$0xf]
        %v5601 = vld [vmem:[%s11 + $0x18] sm:$0xf]
        %v5602 = vld [vmem:[%s11 + $0x1c] sm:$0xf]
        %v5611 = vunpack.c.l.b16 %v5595
        %v5612 = vunpack.c.l.b16 %v5596
        %v5613 = vunpack.c.l.b16 %v5597
        %v5614 = vunpack.c.l.b16 %v5598
        %v5615 = vunpack.c.l.b16 %v5599
        %v5616 = vunpack.c.l.b16 %v5600
        %v5617 = vunpack.c.l.b16 %v5601
        %v5618 = vunpack.c.l.b16 %v5602
        %v5619 = vpack.c.b16 %v5612, %v5611
        %v5620 = vpack.c.b16 %v5614, %v5613
        %v5621 = vpack.c.b16 %v5616, %v5615
        %v5622 = vpack.c.b16 %v5618, %v5617
        %v5628 = vsel %vm4810, %v5590, 0
        %v5631 = vsel %vm4810, %v5591, 0
        %v5634 = vsel %vm4810, %v5592, 0
        %v5637 = vsel %vm4810, %v5593, 0
        %v5640 = vsel %vm4810, %v5594, 0
        %5642 = vmatprep.subr.bf16.mxu0 0
        %5643 = vmatpush1.bf16.msra.mxu0 0
        %5644 = vmatprep.subr.bf16.mxu0 0
        %5645 = vmatpush1.bf16.msra.mxu0 0
        %5646 = vmatprep.subr.bf16.mxu0 0
        %5647 = vmatpush1.bf16.msra.mxu0 0
        %5648 = vmatprep.subr.bf16.mxu0 0
        %5649 = vmatpush1.bf16.msra.mxu0 0
        %5650 = vmatprep.subr.bf16.mxu0 0
        %5651 = vmatpush1.bf16.msra.mxu0 %v5622
        %5652 = vmatprep.subr.bf16.mxu0 0
        %5653 = vmatpush1.bf16.msra.mxu0 %v5621
        %5654 = vmatprep.subr.bf16.mxu0 0
        %5655 = vmatpush1.bf16.msra.mxu0 %v5620
        %5656 = vmatprep.subr.bf16.mxu0 0
        %5657 = vmatpush1.bf16.msra.mxu0 %v5619
        %5658 = vmatprep.subr.bf16.mxu0 0
        %5659 = vmatpush2.bf16.msra.mxu0 0
        %5660 = vmatprep.subr.bf16.mxu0 0
        %5661 = vmatpush2.bf16.msra.mxu0 0
        %5662 = vmatprep.subr.bf16.mxu0 0
        %5663 = vmatpush2.bf16.msra.mxu0 0
        %5664 = vmatprep.subr.bf16.mxu0 0
        %5665 = vmatpush2.bf16.msra.mxu0 0
        %5666 = vmatprep.subr.bf16.mxu0 0
        %5667 = vmatpush2.bf16.msra.mxu0 0
        %5668 = vmatprep.subr.bf16.mxu0 0
        %5669 = vmatpush2.bf16.msra.mxu0 0
        %5670 = vmatprep.subr.bf16.mxu0 0
        %5671 = vmatpush2.bf16.msra.mxu0 0
        %5672 = vmatprep.subr.bf16.mxu0 0
        %5673 = vmatpush2.bf16.msra.mxu0 0
        %5674 = vmatprep.mubr.bf16.mxu0 0
        %5675 = vmatmul.mubr.bf16.gmra.mxu0 %v5628
        %v5676 = vpop.f32.mrf.mxu0
        %v5677 = vadd.f32 0.0, %v5676
        %v5678 = vpop.f32.mrf.mxu0
        %v5679 = vpop.f32.mrf.mxu0
        %v5680 = vadd.f32 0.0, %v5679
        %v5681 = vpop.f32.mrf.mxu0
        %5682 = vmatprep.mubr.bf16.mxu0 0
        %5683 = vmatmul.mubr.bf16.gmra.mxu0 %v5631
        %v5684 = vpop.f32.mrf.mxu0
        %v5685 = vadd.f32 0.0, %v5684
        %v5686 = vpop.f32.mrf.mxu0
        %v5687 = vpop.f32.mrf.mxu0
        %v5688 = vadd.f32 0.0, %v5687
        %v5689 = vpop.f32.mrf.mxu0
        %5690 = vmatprep.mubr.bf16.mxu0 0
        %5691 = vmatmul.mubr.bf16.gmra.mxu0 %v5634
        %v5692 = vpop.f32.mrf.mxu0
        %v5693 = vadd.f32 0.0, %v5692
        %v5694 = vpop.f32.mrf.mxu0
        %v5695 = vpop.f32.mrf.mxu0
        %v5696 = vadd.f32 0.0, %v5695
        %v5697 = vpop.f32.mrf.mxu0
        %5698 = vmatprep.mubr.bf16.mxu0 0
        %5699 = vmatmul.mubr.bf16.gmra.mxu0 %v5637
        %v5700 = vpop.f32.mrf.mxu0
        %v5701 = vadd.f32 0.0, %v5700
        %v5702 = vpop.f32.mrf.mxu0
        %v5703 = vpop.f32.mrf.mxu0
        %v5704 = vadd.f32 0.0, %v5703
        %v5705 = vpop.f32.mrf.mxu0
        %5706 = vmatprep.mubr.bf16.mxu0 0
        %5707 = vmatmul.mubr.bf16.gmra.mxu0 %v5640
        %v5708 = vpop.f32.mrf.mxu0
        %v5709 = vadd.f32 0.0, %v5708
        %v5710 = vpop.f32.mrf.mxu0
        %v5711 = vpop.f32.mrf.mxu0
        %v5712 = vadd.f32 0.0, %v5711
        %v5713 = vpop.f32.mrf.mxu0
        %5714 = vdwg.mxu0
        %v5716 = vlaneseq
        %v5717 = vshrl.u32 %v5716, 7
        %v5718 = vsub.s32 0, %v5717
        %v5719 = vrot.slane %v5559, %v5718
        %v5721 = vadd.f32 %v5719, %v5677
        %v5722 = vadd.f32 %v5719, %v5680
        %v5723 = vadd.f32 %v5719, %v5685
        %v5724 = vadd.f32 %v5719, %v5688
        %v5725 = vadd.f32 %v5719, %v5693
        %v5726 = vadd.f32 %v5719, %v5696
        %v5727 = vadd.f32 %v5719, %v5701
        %v5728 = vadd.f32 %v5719, %v5704
        %v5729 = vadd.f32 %v5719, %v5709
        %v5730 = vadd.f32 %v5719, %v5712
        %v5731 = vpack.c.bf16 %v5550, %v5549
        %v5732 = vpack.c.bf16 %v5552, %v5551
        %v5733 = vpack.c.bf16 %v5554, %v5553
        %v5734 = vpack.c.bf16 %v5556, %v5555
        %v5735 = vpack.c.bf16 %v5558, %v5557
        %s5736 = scalar_lea.vmem %s11, 32
        %v5737 = vld [vmem:[%s5736] sm:$0xf]
        %v5738 = vld [vmem:[%s5736 + $0x4] sm:$0xf]
        %v5739 = vld [vmem:[%s5736 + $0x8] sm:$0xf]
        %v5740 = vld [vmem:[%s5736 + $0xc] sm:$0xf]
        %v5741 = vld [vmem:[%s5736 + $0x10] sm:$0xf]
        %v5742 = vld [vmem:[%s5736 + $0x14] sm:$0xf]
        %v5743 = vld [vmem:[%s5736 + $0x18] sm:$0xf]
        %v5744 = vld [vmem:[%s5736 + $0x1c] sm:$0xf]
        %v5753 = vunpack.c.l.b16 %v5737
        %v5754 = vunpack.c.l.b16 %v5738
        %v5755 = vunpack.c.l.b16 %v5739
        %v5756 = vunpack.c.l.b16 %v5740
        %v5757 = vunpack.c.l.b16 %v5741
        %v5758 = vunpack.c.l.b16 %v5742
        %v5759 = vunpack.c.l.b16 %v5743
        %v5760 = vunpack.c.l.b16 %v5744
        %v5761 = vpack.c.b16 %v5754, %v5753
        %v5762 = vpack.c.b16 %v5756, %v5755
        %v5763 = vpack.c.b16 %v5758, %v5757
        %v5764 = vpack.c.b16 %v5760, %v5759
        %v5770 = vsel %vm4810, %v5731, 0
        %v5773 = vsel %vm4810, %v5732, 0
        %v5776 = vsel %vm4810, %v5733, 0
        %v5779 = vsel %vm4810, %v5734, 0
        %v5782 = vsel %vm4810, %v5735, 0
        %5784 = vmatprep.subr.bf16.mxu0 0
        %5785 = vmatpush1.bf16.msra.mxu0 0
        %5786 = vmatprep.subr.bf16.mxu0 0
        %5787 = vmatpush1.bf16.msra.mxu0 0
        %5788 = vmatprep.subr.bf16.mxu0 0
        %5789 = vmatpush1.bf16.msra.mxu0 0
        %5790 = vmatprep.subr.bf16.mxu0 0
        %5791 = vmatpush1.bf16.msra.mxu0 0
        %5792 = vmatprep.subr.bf16.mxu0 0
        %5793 = vmatpush1.bf16.msra.mxu0 %v5764
        %5794 = vmatprep.subr.bf16.mxu0 0
        %5795 = vmatpush1.bf16.msra.mxu0 %v5763
        %5796 = vmatprep.subr.bf16.mxu0 0
        %5797 = vmatpush1.bf16.msra.mxu0 %v5762
        %5798 = vmatprep.subr.bf16.mxu0 0
        %5799 = vmatpush1.bf16.msra.mxu0 %v5761
        %5800 = vmatprep.subr.bf16.mxu0 0
        %5801 = vmatpush2.bf16.msra.mxu0 0
        %5802 = vmatprep.subr.bf16.mxu0 0
        %5803 = vmatpush2.bf16.msra.mxu0 0
        %5804 = vmatprep.subr.bf16.mxu0 0
        %5805 = vmatpush2.bf16.msra.mxu0 0
        %5806 = vmatprep.subr.bf16.mxu0 0
        %5807 = vmatpush2.bf16.msra.mxu0 0
        %5808 = vmatprep.subr.bf16.mxu0 0
        %5809 = vmatpush2.bf16.msra.mxu0 0
        %5810 = vmatprep.subr.bf16.mxu0 0
        %5811 = vmatpush2.bf16.msra.mxu0 0
        %5812 = vmatprep.subr.bf16.mxu0 0
        %5813 = vmatpush2.bf16.msra.mxu0 0
        %5814 = vmatprep.subr.bf16.mxu0 0
        %5815 = vmatpush2.bf16.msra.mxu0 0
        %5816 = vmatprep.mubr.bf16.mxu0 0
        %5817 = vmatmul.mubr.bf16.gmra.mxu0 %v5770
        %v5818 = vpop.f32.mrf.mxu0
        %v5819 = vadd.f32 0.0, %v5818
        %v5820 = vpop.f32.mrf.mxu0
        %v5821 = vpop.f32.mrf.mxu0
        %v5822 = vadd.f32 0.0, %v5821
        %v5823 = vpop.f32.mrf.mxu0
        %5824 = vmatprep.mubr.bf16.mxu0 0
        %5825 = vmatmul.mubr.bf16.gmra.mxu0 %v5773
        %v5826 = vpop.f32.mrf.mxu0
        %v5827 = vadd.f32 0.0, %v5826
        %v5828 = vpop.f32.mrf.mxu0
        %v5829 = vpop.f32.mrf.mxu0
        %v5830 = vadd.f32 0.0, %v5829
        %v5831 = vpop.f32.mrf.mxu0
        %5832 = vmatprep.mubr.bf16.mxu0 0
        %5833 = vmatmul.mubr.bf16.gmra.mxu0 %v5776
        %v5834 = vpop.f32.mrf.mxu0
        %v5835 = vadd.f32 0.0, %v5834
        %v5836 = vpop.f32.mrf.mxu0
        %v5837 = vpop.f32.mrf.mxu0
        %v5838 = vadd.f32 0.0, %v5837
        %v5839 = vpop.f32.mrf.mxu0
        %5840 = vmatprep.mubr.bf16.mxu0 0
        %5841 = vmatmul.mubr.bf16.gmra.mxu0 %v5779
        %v5842 = vpop.f32.mrf.mxu0
        %v5843 = vadd.f32 0.0, %v5842
        %v5844 = vpop.f32.mrf.mxu0
        %v5845 = vpop.f32.mrf.mxu0
        %v5846 = vadd.f32 0.0, %v5845
        %v5847 = vpop.f32.mrf.mxu0
        %5848 = vmatprep.mubr.bf16.mxu0 0
        %5849 = vmatmul.mubr.bf16.gmra.mxu0 %v5782
        %v5850 = vpop.f32.mrf.mxu0
        %v5851 = vadd.f32 0.0, %v5850
        %v5852 = vpop.f32.mrf.mxu0
        %v5853 = vpop.f32.mrf.mxu0
        %v5854 = vadd.f32 0.0, %v5853
        %v5855 = vpop.f32.mrf.mxu0
        %5856 = vdwg.mxu0
        %v5857 = vadd.f32 %v5721, %v5819
        %v5858 = vadd.f32 %v5722, %v5822
        %v5859 = vadd.f32 %v5723, %v5827
        %v5860 = vadd.f32 %v5724, %v5830
        %v5861 = vadd.f32 %v5725, %v5835
        %v5862 = vadd.f32 %v5726, %v5838
        %v5863 = vadd.f32 %v5727, %v5843
        %v5864 = vadd.f32 %v5728, %v5846
        %v5865 = vadd.f32 %v5729, %v5851
        %v5866 = vadd.f32 %v5730, %v5854
        %v5867 = vrot.slane %v5549, 1
        %v5868 = vrot.slane %v5550, 1
        %v5869 = vrot.slane %v5551, 1
        %v5870 = vrot.slane %v5552, 1
        %v5871 = vrot.slane %v5553, 1
        %v5872 = vrot.slane %v5554, 1
        %v5873 = vrot.slane %v5555, 1
        %v5874 = vrot.slane %v5556, 1
        %v5875 = vrot.slane %v5557, 1
        %v5876 = vrot.slane %v5558, 1
        %v5877 = vsel %vm1744, %v5875, %v5876
        %v5878 = vsel %vm1744, %v5874, %v5875
        %v5879 = vsel %vm1744, %v5873, %v5874
        %v5880 = vsel %vm1744, %v5872, %v5873
        %v5881 = vsel %vm1744, %v5871, %v5872
        %v5882 = vsel %vm1744, %v5870, %v5871
        %v5883 = vsel %vm1744, %v5869, %v5870
        %v5884 = vsel %vm1744, %v5868, %v5869
        %v5885 = vsel %vm1744, %v5867, %v5868
        %v5886 = vsel %vm1744, %v5876, %v5867
        %v5887 = vsel %vm1785, %v5885, 0.0
        %v5888 = vsel %vm1786, %v5884, 0.0
        %v5889 = vsel %vm1787, %v5883, 0.0
        %v5890 = vsel %vm1788, %v5882, 0.0
        %v5891 = vsel %vm1789, %v5881, 0.0
        %v5892 = vsel %vm1790, %v5880, 0.0
        %v5893 = vsel %vm1791, %v5879, 0.0
        %v5894 = vsel %vm1792, %v5878, 0.0
        %v5895 = vsel %vm1793, %v5877, 0.0
        %v5896 = vsel %vm1794, %v5886, 0.0
        %v5897 = vpack.c.bf16 %v5888, %v5887
        %v5898 = vpack.c.bf16 %v5890, %v5889
        %v5899 = vpack.c.bf16 %v5892, %v5891
        %v5900 = vpack.c.bf16 %v5894, %v5893
        %v5901 = vpack.c.bf16 %v5896, %v5895
        %s5902 = scalar_lea.vmem %s11, 64
        %v5903 = vld [vmem:[%s5902] sm:$0xf]
        %v5904 = vld [vmem:[%s5902 + $0x4] sm:$0xf]
        %v5905 = vld [vmem:[%s5902 + $0x8] sm:$0xf]
        %v5906 = vld [vmem:[%s5902 + $0xc] sm:$0xf]
        %v5907 = vld [vmem:[%s5902 + $0x10] sm:$0xf]
        %v5908 = vld [vmem:[%s5902 + $0x14] sm:$0xf]
        %v5909 = vld [vmem:[%s5902 + $0x18] sm:$0xf]
        %v5910 = vld [vmem:[%s5902 + $0x1c] sm:$0xf]
        %v5919 = vunpack.c.l.b16 %v5903
        %v5920 = vunpack.c.l.b16 %v5904
        %v5921 = vunpack.c.l.b16 %v5905
        %v5922 = vunpack.c.l.b16 %v5906
        %v5923 = vunpack.c.l.b16 %v5907
        %v5924 = vunpack.c.l.b16 %v5908
        %v5925 = vunpack.c.l.b16 %v5909
        %v5926 = vunpack.c.l.b16 %v5910
        %v5927 = vpack.c.b16 %v5920, %v5919
        %v5928 = vpack.c.b16 %v5922, %v5921
        %v5929 = vpack.c.b16 %v5924, %v5923
        %v5930 = vpack.c.b16 %v5926, %v5925
        %v5936 = vsel %vm4810, %v5897, 0
        %v5939 = vsel %vm4810, %v5898, 0
        %v5942 = vsel %vm4810, %v5899, 0
        %v5945 = vsel %vm4810, %v5900, 0
        %v5948 = vsel %vm4810, %v5901, 0
        %5950 = vmatprep.subr.bf16.mxu0 0
        %5951 = vmatpush1.bf16.msra.mxu0 0
        %5952 = vmatprep.subr.bf16.mxu0 0
        %5953 = vmatpush1.bf16.msra.mxu0 0
        %5954 = vmatprep.subr.bf16.mxu0 0
        %5955 = vmatpush1.bf16.msra.mxu0 0
        %5956 = vmatprep.subr.bf16.mxu0 0
        %5957 = vmatpush1.bf16.msra.mxu0 0
        %5958 = vmatprep.subr.bf16.mxu0 0
        %5959 = vmatpush1.bf16.msra.mxu0 %v5930
        %5960 = vmatprep.subr.bf16.mxu0 0
        %5961 = vmatpush1.bf16.msra.mxu0 %v5929
        %5962 = vmatprep.subr.bf16.mxu0 0
        %5963 = vmatpush1.bf16.msra.mxu0 %v5928
        %5964 = vmatprep.subr.bf16.mxu0 0
        %5965 = vmatpush1.bf16.msra.mxu0 %v5927
        %5966 = vmatprep.subr.bf16.mxu0 0
        %5967 = vmatpush2.bf16.msra.mxu0 0
        %5968 = vmatprep.subr.bf16.mxu0 0
        %5969 = vmatpush2.bf16.msra.mxu0 0
        %5970 = vmatprep.subr.bf16.mxu0 0
        %5971 = vmatpush2.bf16.msra.mxu0 0
        %5972 = vmatprep.subr.bf16.mxu0 0
        %5973 = vmatpush2.bf16.msra.mxu0 0
        %5974 = vmatprep.subr.bf16.mxu0 0
        %5975 = vmatpush2.bf16.msra.mxu0 0
        %5976 = vmatprep.subr.bf16.mxu0 0
        %5977 = vmatpush2.bf16.msra.mxu0 0
        %5978 = vmatprep.subr.bf16.mxu0 0
        %5979 = vmatpush2.bf16.msra.mxu0 0
        %5980 = vmatprep.subr.bf16.mxu0 0
        %5981 = vmatpush2.bf16.msra.mxu0 0
        %5982 = vmatprep.mubr.bf16.mxu0 0
        %5983 = vmatmul.mubr.bf16.gmra.mxu0 %v5936
        %v5984 = vpop.f32.mrf.mxu0
        %v5985 = vadd.f32 0.0, %v5984
        %v5986 = vpop.f32.mrf.mxu0
        %v5987 = vpop.f32.mrf.mxu0
        %v5988 = vadd.f32 0.0, %v5987
        %v5989 = vpop.f32.mrf.mxu0
        %5990 = vmatprep.mubr.bf16.mxu0 0
        %5991 = vmatmul.mubr.bf16.gmra.mxu0 %v5939
        %v5992 = vpop.f32.mrf.mxu0
        %v5993 = vadd.f32 0.0, %v5992
        %v5994 = vpop.f32.mrf.mxu0
        %v5995 = vpop.f32.mrf.mxu0
        %v5996 = vadd.f32 0.0, %v5995
        %v5997 = vpop.f32.mrf.mxu0
        %5998 = vmatprep.mubr.bf16.mxu0 0
        %5999 = vmatmul.mubr.bf16.gmra.mxu0 %v5942
        %v6000 = vpop.f32.mrf.mxu0
        %v6001 = vadd.f32 0.0, %v6000
        %v6002 = vpop.f32.mrf.mxu0
        %v6003 = vpop.f32.mrf.mxu0
        %v6004 = vadd.f32 0.0, %v6003
        %v6005 = vpop.f32.mrf.mxu0
        %6006 = vmatprep.mubr.bf16.mxu0 0
        %6007 = vmatmul.mubr.bf16.gmra.mxu0 %v5945
        %v6008 = vpop.f32.mrf.mxu0
        %v6009 = vadd.f32 0.0, %v6008
        %v6010 = vpop.f32.mrf.mxu0
        %v6011 = vpop.f32.mrf.mxu0
        %v6012 = vadd.f32 0.0, %v6011
        %v6013 = vpop.f32.mrf.mxu0
        %6014 = vmatprep.mubr.bf16.mxu0 0
        %6015 = vmatmul.mubr.bf16.gmra.mxu0 %v5948
        %v6016 = vpop.f32.mrf.mxu0
        %v6017 = vadd.f32 0.0, %v6016
        %v6018 = vpop.f32.mrf.mxu0
        %v6019 = vpop.f32.mrf.mxu0
        %v6020 = vadd.f32 0.0, %v6019
        %v6021 = vpop.f32.mrf.mxu0
        %6022 = vdwg.mxu0
        %v6023 = vadd.f32 %v5857, %v5985
        %v6024 = vadd.f32 %v5858, %v5988
        %v6025 = vadd.f32 %v5859, %v5993
        %v6026 = vadd.f32 %v5860, %v5996
        %v6027 = vadd.f32 %v5861, %v6001
        %v6028 = vadd.f32 %v5862, %v6004
        %v6029 = vadd.f32 %v5863, %v6009
        %v6030 = vadd.f32 %v5864, %v6012
        %v6031 = vadd.f32 %v5865, %v6017
        %v6032 = vadd.f32 %v5866, %v6020
        %v6033 = vadd.f32 %v6023, %v4722
        %v6034 = vadd.f32 %v6024, %v4723
        %v6035 = vadd.f32 %v6025, %v4724
        %v6036 = vadd.f32 %v6026, %v4725
        %v6037 = vadd.f32 %v6027, %v4726
        %v6038 = vadd.f32 %v6028, %v4727
        %v6039 = vadd.f32 %v6029, %v4728
        %v6040 = vadd.f32 %v6030, %v4729
        %v6041 = vadd.f32 %v6031, %v4730
        %v6042 = vadd.f32 %v6032, %v4731
        %v6043 = vmax.f32 %v6033, 0.0
        %v6044 = vmax.f32 %v6034, 0.0
        %v6045 = vmax.f32 %v6035, 0.0
        %v6046 = vmax.f32 %v6036, 0.0
        %v6047 = vmax.f32 %v6037, 0.0
        %v6048 = vmax.f32 %v6038, 0.0
        %v6049 = vmax.f32 %v6039, 0.0
        %v6050 = vmax.f32 %v6040, 0.0
        %v6051 = vmax.f32 %v6041, 0.0
        %v6052 = vmax.f32 %v6042, 0.0
        %v6053 = vadd.f32 %v6033, %v6043
        %v6054 = vadd.f32 %v6034, %v6044
        %v6055 = vadd.f32 %v6035, %v6045
        %v6056 = vadd.f32 %v6036, %v6046
        %v6057 = vadd.f32 %v6037, %v6047
        %v6058 = vadd.f32 %v6038, %v6048
        %v6059 = vadd.f32 %v6039, %v6049
        %v6060 = vadd.f32 %v6040, %v6050
        %v6061 = vadd.f32 %v6041, %v6051
        %v6062 = vadd.f32 %v6042, %v6052
        %v6063 = vld [vmem:[%s14] sm:$0x1]
        %v6064 = vrot.slane %v6053, 7
        %v6065 = vrot.slane %v6054, 7
        %v6066 = vrot.slane %v6055, 7
        %v6067 = vrot.slane %v6056, 7
        %v6068 = vrot.slane %v6057, 7
        %v6069 = vrot.slane %v6058, 7
        %v6070 = vrot.slane %v6059, 7
        %v6071 = vrot.slane %v6060, 7
        %v6072 = vrot.slane %v6061, 7
        %v6073 = vrot.slane %v6062, 7
        %v6074 = vsel %vm1209, %v6072, %v6073
        %v6075 = vsel %vm1209, %v6071, %v6072
        %v6076 = vsel %vm1209, %v6070, %v6071
        %v6077 = vsel %vm1209, %v6069, %v6070
        %v6078 = vsel %vm1209, %v6068, %v6069
        %v6079 = vsel %vm1209, %v6067, %v6068
        %v6080 = vsel %vm1209, %v6066, %v6067
        %v6081 = vsel %vm1209, %v6065, %v6066
        %v6082 = vsel %vm1209, %v6064, %v6065
        %v6083 = vsel %vm1209, %v6073, %v6064
        %v6084 = vsel %vm1250, %v6083, 0.0
        %v6085 = vsel %vm1251, %v6082, 0.0
        %v6086 = vsel %vm1252, %v6081, 0.0
        %v6087 = vsel %vm1253, %v6080, 0.0
        %v6088 = vsel %vm1254, %v6079, 0.0
        %v6089 = vsel %vm1255, %v6078, 0.0
        %v6090 = vsel %vm1256, %v6077, 0.0
        %v6091 = vsel %vm1257, %v6076, 0.0
        %v6092 = vsel %vm1258, %v6075, 0.0
        %v6093 = vsel %vm1259, %v6074, 0.0
        %v6094 = vpack.c.bf16 %v6085, %v6084
        %v6095 = vpack.c.bf16 %v6087, %v6086
        %v6096 = vpack.c.bf16 %v6089, %v6088
        %v6097 = vpack.c.bf16 %v6091, %v6090
        %v6098 = vpack.c.bf16 %v6093, %v6092
        %v6099 = vld [vmem:[%s13] sm:$0xf]
        %v6100 = vld [vmem:[%s13 + $0x4] sm:$0xf]
        %v6101 = vld [vmem:[%s13 + $0x8] sm:$0xf]
        %v6102 = vld [vmem:[%s13 + $0xc] sm:$0xf]
        %v6103 = vld [vmem:[%s13 + $0x10] sm:$0xf]
        %v6104 = vld [vmem:[%s13 + $0x14] sm:$0xf]
        %v6105 = vld [vmem:[%s13 + $0x18] sm:$0xf]
        %v6106 = vld [vmem:[%s13 + $0x1c] sm:$0xf]
        %v6115 = vunpack.c.l.b16 %v6099
        %v6116 = vunpack.c.l.b16 %v6100
        %v6117 = vunpack.c.l.b16 %v6101
        %v6118 = vunpack.c.l.b16 %v6102
        %v6119 = vunpack.c.l.b16 %v6103
        %v6120 = vunpack.c.l.b16 %v6104
        %v6121 = vunpack.c.l.b16 %v6105
        %v6122 = vunpack.c.l.b16 %v6106
        %v6123 = vpack.c.b16 %v6116, %v6115
        %v6124 = vpack.c.b16 %v6118, %v6117
        %v6125 = vpack.c.b16 %v6120, %v6119
        %v6126 = vpack.c.b16 %v6122, %v6121
        %v6132 = vsel %vm4810, %v6094, 0
        %v6135 = vsel %vm4810, %v6095, 0
        %v6138 = vsel %vm4810, %v6096, 0
        %v6141 = vsel %vm4810, %v6097, 0
        %v6144 = vsel %vm4810, %v6098, 0
        %6146 = vmatprep.subr.bf16.mxu0 0
        %6147 = vmatpush1.bf16.msra.mxu0 0
        %6148 = vmatprep.subr.bf16.mxu0 0
        %6149 = vmatpush1.bf16.msra.mxu0 0
        %6150 = vmatprep.subr.bf16.mxu0 0
        %6151 = vmatpush1.bf16.msra.mxu0 0
        %6152 = vmatprep.subr.bf16.mxu0 0
        %6153 = vmatpush1.bf16.msra.mxu0 0
        %6154 = vmatprep.subr.bf16.mxu0 0
        %6155 = vmatpush1.bf16.msra.mxu0 %v6126
        %6156 = vmatprep.subr.bf16.mxu0 0
        %6157 = vmatpush1.bf16.msra.mxu0 %v6125
        %6158 = vmatprep.subr.bf16.mxu0 0
        %6159 = vmatpush1.bf16.msra.mxu0 %v6124
        %6160 = vmatprep.subr.bf16.mxu0 0
        %6161 = vmatpush1.bf16.msra.mxu0 %v6123
        %6162 = vmatprep.subr.bf16.mxu0 0
        %6163 = vmatpush2.bf16.msra.mxu0 0
        %6164 = vmatprep.subr.bf16.mxu0 0
        %6165 = vmatpush2.bf16.msra.mxu0 0
        %6166 = vmatprep.subr.bf16.mxu0 0
        %6167 = vmatpush2.bf16.msra.mxu0 0
        %6168 = vmatprep.subr.bf16.mxu0 0
        %6169 = vmatpush2.bf16.msra.mxu0 0
        %6170 = vmatprep.subr.bf16.mxu0 0
        %6171 = vmatpush2.bf16.msra.mxu0 0
        %6172 = vmatprep.subr.bf16.mxu0 0
        %6173 = vmatpush2.bf16.msra.mxu0 0
        %6174 = vmatprep.subr.bf16.mxu0 0
        %6175 = vmatpush2.bf16.msra.mxu0 0
        %6176 = vmatprep.subr.bf16.mxu0 0
        %6177 = vmatpush2.bf16.msra.mxu0 0
        %6178 = vmatprep.mubr.bf16.mxu0 0
        %6179 = vmatmul.mubr.bf16.gmra.mxu0 %v6132
        %v6180 = vpop.f32.mrf.mxu0
        %v6181 = vadd.f32 0.0, %v6180
        %v6182 = vpop.f32.mrf.mxu0
        %v6183 = vpop.f32.mrf.mxu0
        %v6184 = vadd.f32 0.0, %v6183
        %v6185 = vpop.f32.mrf.mxu0
        %6186 = vmatprep.mubr.bf16.mxu0 0
        %6187 = vmatmul.mubr.bf16.gmra.mxu0 %v6135
        %v6188 = vpop.f32.mrf.mxu0
        %v6189 = vadd.f32 0.0, %v6188
        %v6190 = vpop.f32.mrf.mxu0
        %v6191 = vpop.f32.mrf.mxu0
        %v6192 = vadd.f32 0.0, %v6191
        %v6193 = vpop.f32.mrf.mxu0
        %6194 = vmatprep.mubr.bf16.mxu0 0
        %6195 = vmatmul.mubr.bf16.gmra.mxu0 %v6138
        %v6196 = vpop.f32.mrf.mxu0
        %v6197 = vadd.f32 0.0, %v6196
        %v6198 = vpop.f32.mrf.mxu0
        %v6199 = vpop.f32.mrf.mxu0
        %v6200 = vadd.f32 0.0, %v6199
        %v6201 = vpop.f32.mrf.mxu0
        %6202 = vmatprep.mubr.bf16.mxu0 0
        %6203 = vmatmul.mubr.bf16.gmra.mxu0 %v6141
        %v6204 = vpop.f32.mrf.mxu0
        %v6205 = vadd.f32 0.0, %v6204
        %v6206 = vpop.f32.mrf.mxu0
        %v6207 = vpop.f32.mrf.mxu0
        %v6208 = vadd.f32 0.0, %v6207
        %v6209 = vpop.f32.mrf.mxu0
        %6210 = vmatprep.mubr.bf16.mxu0 0
        %6211 = vmatmul.mubr.bf16.gmra.mxu0 %v6144
        %v6212 = vpop.f32.mrf.mxu0
        %v6213 = vadd.f32 0.0, %v6212
        %v6214 = vpop.f32.mrf.mxu0
        %v6215 = vpop.f32.mrf.mxu0
        %v6216 = vadd.f32 0.0, %v6215
        %v6217 = vpop.f32.mrf.mxu0
        %6218 = vdwg.mxu0
        %v6220 = vlaneseq
        %v6221 = vshrl.u32 %v6220, 7
        %v6222 = vsub.s32 0, %v6221
        %v6223 = vrot.slane %v6063, %v6222
        %v6225 = vadd.f32 %v6223, %v6181
        %v6226 = vadd.f32 %v6223, %v6184
        %v6227 = vadd.f32 %v6223, %v6189
        %v6228 = vadd.f32 %v6223, %v6192
        %v6229 = vadd.f32 %v6223, %v6197
        %v6230 = vadd.f32 %v6223, %v6200
        %v6231 = vadd.f32 %v6223, %v6205
        %v6232 = vadd.f32 %v6223, %v6208
        %v6233 = vadd.f32 %v6223, %v6213
        %v6234 = vadd.f32 %v6223, %v6216
        %v6235 = vpack.c.bf16 %v6054, %v6053
        %v6236 = vpack.c.bf16 %v6056, %v6055
        %v6237 = vpack.c.bf16 %v6058, %v6057
        %v6238 = vpack.c.bf16 %v6060, %v6059
        %v6239 = vpack.c.bf16 %v6062, %v6061
        %s6240 = scalar_lea.vmem %s13, 32
        %v6241 = vld [vmem:[%s6240] sm:$0xf]
        %v6242 = vld [vmem:[%s6240 + $0x4] sm:$0xf]
        %v6243 = vld [vmem:[%s6240 + $0x8] sm:$0xf]
        %v6244 = vld [vmem:[%s6240 + $0xc] sm:$0xf]
        %v6245 = vld [vmem:[%s6240 + $0x10] sm:$0xf]
        %v6246 = vld [vmem:[%s6240 + $0x14] sm:$0xf]
        %v6247 = vld [vmem:[%s6240 + $0x18] sm:$0xf]
        %v6248 = vld [vmem:[%s6240 + $0x1c] sm:$0xf]
        %v6257 = vunpack.c.l.b16 %v6241
        %v6258 = vunpack.c.l.b16 %v6242
        %v6259 = vunpack.c.l.b16 %v6243
        %v6260 = vunpack.c.l.b16 %v6244
        %v6261 = vunpack.c.l.b16 %v6245
        %v6262 = vunpack.c.l.b16 %v6246
        %v6263 = vunpack.c.l.b16 %v6247
        %v6264 = vunpack.c.l.b16 %v6248
        %v6265 = vpack.c.b16 %v6258, %v6257
        %v6266 = vpack.c.b16 %v6260, %v6259
        %v6267 = vpack.c.b16 %v6262, %v6261
        %v6268 = vpack.c.b16 %v6264, %v6263
        %v6274 = vsel %vm4810, %v6235, 0
        %v6277 = vsel %vm4810, %v6236, 0
        %v6280 = vsel %vm4810, %v6237, 0
        %v6283 = vsel %vm4810, %v6238, 0
        %v6286 = vsel %vm4810, %v6239, 0
        %6288 = vmatprep.subr.bf16.mxu0 0
        %6289 = vmatpush1.bf16.msra.mxu0 0
        %6290 = vmatprep.subr.bf16.mxu0 0
        %6291 = vmatpush1.bf16.msra.mxu0 0
        %6292 = vmatprep.subr.bf16.mxu0 0
        %6293 = vmatpush1.bf16.msra.mxu0 0
        %6294 = vmatprep.subr.bf16.mxu0 0
        %6295 = vmatpush1.bf16.msra.mxu0 0
        %6296 = vmatprep.subr.bf16.mxu0 0
        %6297 = vmatpush1.bf16.msra.mxu0 %v6268
        %6298 = vmatprep.subr.bf16.mxu0 0
        %6299 = vmatpush1.bf16.msra.mxu0 %v6267
        %6300 = vmatprep.subr.bf16.mxu0 0
        %6301 = vmatpush1.bf16.msra.mxu0 %v6266
        %6302 = vmatprep.subr.bf16.mxu0 0
        %6303 = vmatpush1.bf16.msra.mxu0 %v6265
        %6304 = vmatprep.subr.bf16.mxu0 0
        %6305 = vmatpush2.bf16.msra.mxu0 0
        %6306 = vmatprep.subr.bf16.mxu0 0
        %6307 = vmatpush2.bf16.msra.mxu0 0
        %6308 = vmatprep.subr.bf16.mxu0 0
        %6309 = vmatpush2.bf16.msra.mxu0 0
        %6310 = vmatprep.subr.bf16.mxu0 0
        %6311 = vmatpush2.bf16.msra.mxu0 0
        %6312 = vmatprep.subr.bf16.mxu0 0
        %6313 = vmatpush2.bf16.msra.mxu0 0
        %6314 = vmatprep.subr.bf16.mxu0 0
        %6315 = vmatpush2.bf16.msra.mxu0 0
        %6316 = vmatprep.subr.bf16.mxu0 0
        %6317 = vmatpush2.bf16.msra.mxu0 0
        %6318 = vmatprep.subr.bf16.mxu0 0
        %6319 = vmatpush2.bf16.msra.mxu0 0
        %6320 = vmatprep.mubr.bf16.mxu0 0
        %6321 = vmatmul.mubr.bf16.gmra.mxu0 %v6274
        %v6322 = vpop.f32.mrf.mxu0
        %v6323 = vadd.f32 0.0, %v6322
        %v6324 = vpop.f32.mrf.mxu0
        %v6325 = vpop.f32.mrf.mxu0
        %v6326 = vadd.f32 0.0, %v6325
        %v6327 = vpop.f32.mrf.mxu0
        %6328 = vmatprep.mubr.bf16.mxu0 0
        %6329 = vmatmul.mubr.bf16.gmra.mxu0 %v6277
        %v6330 = vpop.f32.mrf.mxu0
        %v6331 = vadd.f32 0.0, %v6330
        %v6332 = vpop.f32.mrf.mxu0
        %v6333 = vpop.f32.mrf.mxu0
        %v6334 = vadd.f32 0.0, %v6333
        %v6335 = vpop.f32.mrf.mxu0
        %6336 = vmatprep.mubr.bf16.mxu0 0
        %6337 = vmatmul.mubr.bf16.gmra.mxu0 %v6280
        %v6338 = vpop.f32.mrf.mxu0
        %v6339 = vadd.f32 0.0, %v6338
        %v6340 = vpop.f32.mrf.mxu0
        %v6341 = vpop.f32.mrf.mxu0
        %v6342 = vadd.f32 0.0, %v6341
        %v6343 = vpop.f32.mrf.mxu0
        %6344 = vmatprep.mubr.bf16.mxu0 0
        %6345 = vmatmul.mubr.bf16.gmra.mxu0 %v6283
        %v6346 = vpop.f32.mrf.mxu0
        %v6347 = vadd.f32 0.0, %v6346
        %v6348 = vpop.f32.mrf.mxu0
        %v6349 = vpop.f32.mrf.mxu0
        %v6350 = vadd.f32 0.0, %v6349
        %v6351 = vpop.f32.mrf.mxu0
        %6352 = vmatprep.mubr.bf16.mxu0 0
        %6353 = vmatmul.mubr.bf16.gmra.mxu0 %v6286
        %v6354 = vpop.f32.mrf.mxu0
        %v6355 = vadd.f32 0.0, %v6354
        %v6356 = vpop.f32.mrf.mxu0
        %v6357 = vpop.f32.mrf.mxu0
        %v6358 = vadd.f32 0.0, %v6357
        %v6359 = vpop.f32.mrf.mxu0
        %6360 = vdwg.mxu0
        %v6361 = vadd.f32 %v6225, %v6323
        %v6362 = vadd.f32 %v6226, %v6326
        %v6363 = vadd.f32 %v6227, %v6331
        %v6364 = vadd.f32 %v6228, %v6334
        %v6365 = vadd.f32 %v6229, %v6339
        %v6366 = vadd.f32 %v6230, %v6342
        %v6367 = vadd.f32 %v6231, %v6347
        %v6368 = vadd.f32 %v6232, %v6350
        %v6369 = vadd.f32 %v6233, %v6355
        %v6370 = vadd.f32 %v6234, %v6358
        %v6371 = vrot.slane %v6053, 1
        %v6372 = vrot.slane %v6054, 1
        %v6373 = vrot.slane %v6055, 1
        %v6374 = vrot.slane %v6056, 1
        %v6375 = vrot.slane %v6057, 1
        %v6376 = vrot.slane %v6058, 1
        %v6377 = vrot.slane %v6059, 1
        %v6378 = vrot.slane %v6060, 1
        %v6379 = vrot.slane %v6061, 1
        %v6380 = vrot.slane %v6062, 1
        %v6381 = vsel %vm1744, %v6379, %v6380
        %v6382 = vsel %vm1744, %v6378, %v6379
        %v6383 = vsel %vm1744, %v6377, %v6378
        %v6384 = vsel %vm1744, %v6376, %v6377
        %v6385 = vsel %vm1744, %v6375, %v6376
        %v6386 = vsel %vm1744, %v6374, %v6375
        %v6387 = vsel %vm1744, %v6373, %v6374
        %v6388 = vsel %vm1744, %v6372, %v6373
        %v6389 = vsel %vm1744, %v6371, %v6372
        %v6390 = vsel %vm1744, %v6380, %v6371
        %v6391 = vsel %vm1785, %v6389, 0.0
        %v6392 = vsel %vm1786, %v6388, 0.0
        %v6393 = vsel %vm1787, %v6387, 0.0
        %v6394 = vsel %vm1788, %v6386, 0.0
        %v6395 = vsel %vm1789, %v6385, 0.0
        %v6396 = vsel %vm1790, %v6384, 0.0
        %v6397 = vsel %vm1791, %v6383, 0.0
        %v6398 = vsel %vm1792, %v6382, 0.0
        %v6399 = vsel %vm1793, %v6381, 0.0
        %v6400 = vsel %vm1794, %v6390, 0.0
        %v6401 = vpack.c.bf16 %v6392, %v6391
        %v6402 = vpack.c.bf16 %v6394, %v6393
        %v6403 = vpack.c.bf16 %v6396, %v6395
        %v6404 = vpack.c.bf16 %v6398, %v6397
        %v6405 = vpack.c.bf16 %v6400, %v6399
        %s6406 = scalar_lea.vmem %s13, 64
        %v6407 = vld [vmem:[%s6406] sm:$0xf]
        %v6408 = vld [vmem:[%s6406 + $0x4] sm:$0xf]
        %v6409 = vld [vmem:[%s6406 + $0x8] sm:$0xf]
        %v6410 = vld [vmem:[%s6406 + $0xc] sm:$0xf]
        %v6411 = vld [vmem:[%s6406 + $0x10] sm:$0xf]
        %v6412 = vld [vmem:[%s6406 + $0x14] sm:$0xf]
        %v6413 = vld [vmem:[%s6406 + $0x18] sm:$0xf]
        %v6414 = vld [vmem:[%s6406 + $0x1c] sm:$0xf]
        %v6423 = vunpack.c.l.b16 %v6407
        %v6424 = vunpack.c.l.b16 %v6408
        %v6425 = vunpack.c.l.b16 %v6409
        %v6426 = vunpack.c.l.b16 %v6410
        %v6427 = vunpack.c.l.b16 %v6411
        %v6428 = vunpack.c.l.b16 %v6412
        %v6429 = vunpack.c.l.b16 %v6413
        %v6430 = vunpack.c.l.b16 %v6414
        %v6431 = vpack.c.b16 %v6424, %v6423
        %v6432 = vpack.c.b16 %v6426, %v6425
        %v6433 = vpack.c.b16 %v6428, %v6427
        %v6434 = vpack.c.b16 %v6430, %v6429
        %v6440 = vsel %vm4810, %v6401, 0
        %v6443 = vsel %vm4810, %v6402, 0
        %v6446 = vsel %vm4810, %v6403, 0
        %v6449 = vsel %vm4810, %v6404, 0
        %v6452 = vsel %vm4810, %v6405, 0
        %6454 = vmatprep.subr.bf16.mxu0 0
        %6455 = vmatpush1.bf16.msra.mxu0 0
        %6456 = vmatprep.subr.bf16.mxu0 0
        %6457 = vmatpush1.bf16.msra.mxu0 0
        %6458 = vmatprep.subr.bf16.mxu0 0
        %6459 = vmatpush1.bf16.msra.mxu0 0
        %6460 = vmatprep.subr.bf16.mxu0 0
        %6461 = vmatpush1.bf16.msra.mxu0 0
        %6462 = vmatprep.subr.bf16.mxu0 0
        %6463 = vmatpush1.bf16.msra.mxu0 %v6434
        %6464 = vmatprep.subr.bf16.mxu0 0
        %6465 = vmatpush1.bf16.msra.mxu0 %v6433
        %6466 = vmatprep.subr.bf16.mxu0 0
        %6467 = vmatpush1.bf16.msra.mxu0 %v6432
        %6468 = vmatprep.subr.bf16.mxu0 0
        %6469 = vmatpush1.bf16.msra.mxu0 %v6431
        %6470 = vmatprep.subr.bf16.mxu0 0
        %6471 = vmatpush2.bf16.msra.mxu0 0
        %6472 = vmatprep.subr.bf16.mxu0 0
        %6473 = vmatpush2.bf16.msra.mxu0 0
        %6474 = vmatprep.subr.bf16.mxu0 0
        %6475 = vmatpush2.bf16.msra.mxu0 0
        %6476 = vmatprep.subr.bf16.mxu0 0
        %6477 = vmatpush2.bf16.msra.mxu0 0
        %6478 = vmatprep.subr.bf16.mxu0 0
        %6479 = vmatpush2.bf16.msra.mxu0 0
        %6480 = vmatprep.subr.bf16.mxu0 0
        %6481 = vmatpush2.bf16.msra.mxu0 0
        %6482 = vmatprep.subr.bf16.mxu0 0
        %6483 = vmatpush2.bf16.msra.mxu0 0
        %6484 = vmatprep.subr.bf16.mxu0 0
        %6485 = vmatpush2.bf16.msra.mxu0 0
        %6486 = vmatprep.mubr.bf16.mxu0 0
        %6487 = vmatmul.mubr.bf16.gmra.mxu0 %v6440
        %v6488 = vpop.f32.mrf.mxu0
        %v6489 = vadd.f32 0.0, %v6488
        %v6490 = vpop.f32.mrf.mxu0
        %v6491 = vpop.f32.mrf.mxu0
        %v6492 = vadd.f32 0.0, %v6491
        %v6493 = vpop.f32.mrf.mxu0
        %6494 = vmatprep.mubr.bf16.mxu0 0
        %6495 = vmatmul.mubr.bf16.gmra.mxu0 %v6443
        %v6496 = vpop.f32.mrf.mxu0
        %v6497 = vadd.f32 0.0, %v6496
        %v6498 = vpop.f32.mrf.mxu0
        %v6499 = vpop.f32.mrf.mxu0
        %v6500 = vadd.f32 0.0, %v6499
        %v6501 = vpop.f32.mrf.mxu0
        %6502 = vmatprep.mubr.bf16.mxu0 0
        %6503 = vmatmul.mubr.bf16.gmra.mxu0 %v6446
        %v6504 = vpop.f32.mrf.mxu0
        %v6505 = vadd.f32 0.0, %v6504
        %v6506 = vpop.f32.mrf.mxu0
        %v6507 = vpop.f32.mrf.mxu0
        %v6508 = vadd.f32 0.0, %v6507
        %v6509 = vpop.f32.mrf.mxu0
        %6510 = vmatprep.mubr.bf16.mxu0 0
        %6511 = vmatmul.mubr.bf16.gmra.mxu0 %v6449
        %v6512 = vpop.f32.mrf.mxu0
        %v6513 = vadd.f32 0.0, %v6512
        %v6514 = vpop.f32.mrf.mxu0
        %v6515 = vpop.f32.mrf.mxu0
        %v6516 = vadd.f32 0.0, %v6515
        %v6517 = vpop.f32.mrf.mxu0
        %6518 = vmatprep.mubr.bf16.mxu0 0
        %6519 = vmatmul.mubr.bf16.gmra.mxu0 %v6452
        %v6520 = vpop.f32.mrf.mxu0
        %v6521 = vadd.f32 0.0, %v6520
        %v6522 = vpop.f32.mrf.mxu0
        %v6523 = vpop.f32.mrf.mxu0
        %v6524 = vadd.f32 0.0, %v6523
        %v6525 = vpop.f32.mrf.mxu0
        %6526 = vdwg.mxu0
        %v6527 = vadd.f32 %v6361, %v6489
        %v6528 = vadd.f32 %v6362, %v6492
        %v6529 = vadd.f32 %v6363, %v6497
        %v6530 = vadd.f32 %v6364, %v6500
        %v6531 = vadd.f32 %v6365, %v6505
        %v6532 = vadd.f32 %v6366, %v6508
        %v6533 = vadd.f32 %v6367, %v6513
        %v6534 = vadd.f32 %v6368, %v6516
        %v6535 = vadd.f32 %v6369, %v6521
        %v6536 = vadd.f32 %v6370, %v6524
        %v6537 = vmax.f32 %v6527, 0.0
        %v6538 = vmax.f32 %v6528, 0.0
        %v6539 = vmax.f32 %v6529, 0.0
        %v6540 = vmax.f32 %v6530, 0.0
        %v6541 = vmax.f32 %v6531, 0.0
        %v6542 = vmax.f32 %v6532, 0.0
        %v6543 = vmax.f32 %v6533, 0.0
        %v6544 = vmax.f32 %v6534, 0.0
        %v6545 = vmax.f32 %v6535, 0.0
        %v6546 = vmax.f32 %v6536, 0.0
        %v6547 = vmax.f32 %v6537, 0.0
        %v6548 = vmax.f32 %v6538, 0.0
        %v6549 = vmax.f32 %v6539, 0.0
        %v6550 = vmax.f32 %v6540, 0.0
        %v6551 = vmax.f32 %v6541, 0.0
        %v6552 = vmax.f32 %v6542, 0.0
        %v6553 = vmax.f32 %v6543, 0.0
        %v6554 = vmax.f32 %v6544, 0.0
        %v6555 = vmax.f32 %v6545, 0.0
        %v6556 = vmax.f32 %v6546, 0.0
        %v6557 = vld [vmem:[#allocation2] sm:$0x1]
        %v6558 = vrot.slane %v6547, 7
        %v6559 = vrot.slane %v6548, 7
        %v6560 = vrot.slane %v6549, 7
        %v6561 = vrot.slane %v6550, 7
        %v6562 = vrot.slane %v6551, 7
        %v6563 = vrot.slane %v6552, 7
        %v6564 = vrot.slane %v6553, 7
        %v6565 = vrot.slane %v6554, 7
        %v6566 = vrot.slane %v6555, 7
        %v6567 = vrot.slane %v6556, 7
        %v6568 = vsel %vm1209, %v6566, %v6567
        %v6569 = vsel %vm1209, %v6565, %v6566
        %v6570 = vsel %vm1209, %v6564, %v6565
        %v6571 = vsel %vm1209, %v6563, %v6564
        %v6572 = vsel %vm1209, %v6562, %v6563
        %v6573 = vsel %vm1209, %v6561, %v6562
        %v6574 = vsel %vm1209, %v6560, %v6561
        %v6575 = vsel %vm1209, %v6559, %v6560
        %v6576 = vsel %vm1209, %v6558, %v6559
        %v6577 = vsel %vm1209, %v6567, %v6558
        %v6578 = vsel %vm1250, %v6577, 0.0
        %v6579 = vsel %vm1251, %v6576, 0.0
        %v6580 = vsel %vm1252, %v6575, 0.0
        %v6581 = vsel %vm1253, %v6574, 0.0
        %v6582 = vsel %vm1254, %v6573, 0.0
        %v6583 = vsel %vm1255, %v6572, 0.0
        %v6584 = vsel %vm1256, %v6571, 0.0
        %v6585 = vsel %vm1257, %v6570, 0.0
        %v6586 = vsel %vm1258, %v6569, 0.0
        %v6587 = vsel %vm1259, %v6568, 0.0
        %v6588 = vld [vmem:[%s15] sm:$0x1]
        %v6590 = vlaneseq
        %v6591 = vshrl.u32 %v6590, 7
        %v6592 = vsub.s32 0, %v6591
        %v6593 = vrot.slane %v6588, %v6592
        %v6595 = vmul.f32 %v6578, %v6593
        %v6596 = vmul.f32 %v6579, %v6593
        %v6597 = vmul.f32 %v6580, %v6593
        %v6598 = vmul.f32 %v6581, %v6593
        %v6599 = vmul.f32 %v6582, %v6593
        %v6600 = vmul.f32 %v6583, %v6593
        %v6601 = vmul.f32 %v6584, %v6593
        %v6602 = vmul.f32 %v6585, %v6593
        %v6603 = vmul.f32 %v6586, %v6593
        %v6604 = vmul.f32 %v6587, %v6593
        %vm6605 = vcmask 261120
        %v6606 = vsel %vm6605, %v6595, 0.0
        %6607 = vadd.xlane.f32.xlu0 %v6606
        %v6608 = vpop.xlane.xlu0 %6607
        %v6609 = vsel %vm6605, %v6596, 0.0
        %6610 = vadd.xlane.f32.xlu0 %v6609
        %v6611 = vpop.xlane.xlu0 %6610
        %v6612 = vsel %vm6605, %v6597, 0.0
        %6613 = vadd.xlane.f32.xlu0 %v6612
        %v6614 = vpop.xlane.xlu0 %6613
        %v6615 = vsel %vm6605, %v6598, 0.0
        %6616 = vadd.xlane.f32.xlu0 %v6615
        %v6617 = vpop.xlane.xlu0 %6616
        %v6618 = vsel %vm6605, %v6599, 0.0
        %6619 = vadd.xlane.f32.xlu0 %v6618
        %v6620 = vpop.xlane.xlu0 %6619
        %v6621 = vsel %vm6605, %v6600, 0.0
        %6622 = vadd.xlane.f32.xlu0 %v6621
        %v6623 = vpop.xlane.xlu0 %6622
        %v6624 = vsel %vm6605, %v6601, 0.0
        %6625 = vadd.xlane.f32.xlu0 %v6624
        %v6626 = vpop.xlane.xlu0 %6625
        %v6627 = vsel %vm6605, %v6602, 0.0
        %6628 = vadd.xlane.f32.xlu0 %v6627
        %v6629 = vpop.xlane.xlu0 %6628
        %v6630 = vsel %vm6605, %v6603, 0.0
        %6631 = vadd.xlane.f32.xlu0 %v6630
        %v6632 = vpop.xlane.xlu0 %6631
        %v6633 = vsel %vm6605, %v6604, 0.0
        %6634 = vadd.xlane.f32.xlu0 %v6633
        %v6635 = vpop.xlane.xlu0 %6634
        %v6637 = vlaneseq
        %v6638 = vshrl.u32 %v6637, 7
        %v6639 = vsub.s32 0, %v6638
        %v6640 = vrot.slane %v6557, %v6639
        %v6642 = vadd.f32 %v6640, %v6608
        %v6643 = vadd.f32 %v6640, %v6611
        %v6644 = vadd.f32 %v6640, %v6614
        %v6645 = vadd.f32 %v6640, %v6617
        %v6646 = vadd.f32 %v6640, %v6620
        %v6647 = vadd.f32 %v6640, %v6623
        %v6648 = vadd.f32 %v6640, %v6626
        %v6649 = vadd.f32 %v6640, %v6629
        %v6650 = vadd.f32 %v6640, %v6632
        %v6651 = vadd.f32 %v6640, %v6635
        %s6652 = scalar_lea.vmem %s15, 1
        %v6653 = vld [vmem:[%s6652] sm:$0x1]
        %v6655 = vlaneseq
        %v6656 = vshrl.u32 %v6655, 7
        %v6657 = vsub.s32 0, %v6656
        %v6658 = vrot.slane %v6653, %v6657
        %v6660 = vmul.f32 %v6547, %v6658
        %v6661 = vmul.f32 %v6548, %v6658
        %v6662 = vmul.f32 %v6549, %v6658
        %v6663 = vmul.f32 %v6550, %v6658
        %v6664 = vmul.f32 %v6551, %v6658
        %v6665 = vmul.f32 %v6552, %v6658
        %v6666 = vmul.f32 %v6553, %v6658
        %v6667 = vmul.f32 %v6554, %v6658
        %v6668 = vmul.f32 %v6555, %v6658
        %v6669 = vmul.f32 %v6556, %v6658
        %v6670 = vsel %vm6605, %v6660, 0.0
        %6671 = vadd.xlane.f32.xlu0 %v6670
        %v6672 = vpop.xlane.xlu0 %6671
        %v6673 = vsel %vm6605, %v6661, 0.0
        %6674 = vadd.xlane.f32.xlu0 %v6673
        %v6675 = vpop.xlane.xlu0 %6674
        %v6676 = vsel %vm6605, %v6662, 0.0
        %6677 = vadd.xlane.f32.xlu0 %v6676
        %v6678 = vpop.xlane.xlu0 %6677
        %v6679 = vsel %vm6605, %v6663, 0.0
        %6680 = vadd.xlane.f32.xlu0 %v6679
        %v6681 = vpop.xlane.xlu0 %6680
        %v6682 = vsel %vm6605, %v6664, 0.0
        %6683 = vadd.xlane.f32.xlu0 %v6682
        %v6684 = vpop.xlane.xlu0 %6683
        %v6685 = vsel %vm6605, %v6665, 0.0
        %6686 = vadd.xlane.f32.xlu0 %v6685
        %v6687 = vpop.xlane.xlu0 %6686
        %v6688 = vsel %vm6605, %v6666, 0.0
        %6689 = vadd.xlane.f32.xlu0 %v6688
        %v6690 = vpop.xlane.xlu0 %6689
        %v6691 = vsel %vm6605, %v6667, 0.0
        %6692 = vadd.xlane.f32.xlu0 %v6691
        %v6693 = vpop.xlane.xlu0 %6692
        %v6694 = vsel %vm6605, %v6668, 0.0
        %6695 = vadd.xlane.f32.xlu0 %v6694
        %v6696 = vpop.xlane.xlu0 %6695
        %v6697 = vsel %vm6605, %v6669, 0.0
        %6698 = vadd.xlane.f32.xlu0 %v6697
        %v6699 = vpop.xlane.xlu0 %6698
        %v6700 = vadd.f32 %v6642, %v6672
        %v6701 = vadd.f32 %v6643, %v6675
        %v6702 = vadd.f32 %v6644, %v6678
        %v6703 = vadd.f32 %v6645, %v6681
        %v6704 = vadd.f32 %v6646, %v6684
        %v6705 = vadd.f32 %v6647, %v6687
        %v6706 = vadd.f32 %v6648, %v6690
        %v6707 = vadd.f32 %v6649, %v6693
        %v6708 = vadd.f32 %v6650, %v6696
        %v6709 = vadd.f32 %v6651, %v6699
        %v6710 = vrot.slane %v6547, 1
        %v6711 = vrot.slane %v6548, 1
        %v6712 = vrot.slane %v6549, 1
        %v6713 = vrot.slane %v6550, 1
        %v6714 = vrot.slane %v6551, 1
        %v6715 = vrot.slane %v6552, 1
        %v6716 = vrot.slane %v6553, 1
        %v6717 = vrot.slane %v6554, 1
        %v6718 = vrot.slane %v6555, 1
        %v6719 = vrot.slane %v6556, 1
        %v6720 = vsel %vm1744, %v6718, %v6719
        %v6721 = vsel %vm1744, %v6717, %v6718
        %v6722 = vsel %vm1744, %v6716, %v6717
        %v6723 = vsel %vm1744, %v6715, %v6716
        %v6724 = vsel %vm1744, %v6714, %v6715
        %v6725 = vsel %vm1744, %v6713, %v6714
        %v6726 = vsel %vm1744, %v6712, %v6713
        %v6727 = vsel %vm1744, %v6711, %v6712
        %v6728 = vsel %vm1744, %v6710, %v6711
        %v6729 = vsel %vm1744, %v6719, %v6710
        %v6730 = vsel %vm1785, %v6728, 0.0
        %v6731 = vsel %vm1786, %v6727, 0.0
        %v6732 = vsel %vm1787, %v6726, 0.0
        %v6733 = vsel %vm1788, %v6725, 0.0
        %v6734 = vsel %vm1789, %v6724, 0.0
        %v6735 = vsel %vm1790, %v6723, 0.0
        %v6736 = vsel %vm1791, %v6722, 0.0
        %v6737 = vsel %vm1792, %v6721, 0.0
        %v6738 = vsel %vm1793, %v6720, 0.0
        %v6739 = vsel %vm1794, %v6729, 0.0
        %s6740 = scalar_lea.vmem %s15, 2
        %v6741 = vld [vmem:[%s6740] sm:$0x1]
        %v6743 = vlaneseq
        %v6744 = vshrl.u32 %v6743, 7
        %v6745 = vsub.s32 0, %v6744
        %v6746 = vrot.slane %v6741, %v6745
        %v6748 = vmul.f32 %v6730, %v6746
        %v6749 = vmul.f32 %v6731, %v6746
        %v6750 = vmul.f32 %v6732, %v6746
        %v6751 = vmul.f32 %v6733, %v6746
        %v6752 = vmul.f32 %v6734, %v6746
        %v6753 = vmul.f32 %v6735, %v6746
        %v6754 = vmul.f32 %v6736, %v6746
        %v6755 = vmul.f32 %v6737, %v6746
        %v6756 = vmul.f32 %v6738, %v6746
        %v6757 = vmul.f32 %v6739, %v6746
        %v6758 = vsel %vm6605, %v6748, 0.0
        %6759 = vadd.xlane.f32.xlu0 %v6758
        %v6760 = vpop.xlane.xlu0 %6759
        %v6761 = vsel %vm6605, %v6749, 0.0
        %6762 = vadd.xlane.f32.xlu0 %v6761
        %v6763 = vpop.xlane.xlu0 %6762
        %v6764 = vsel %vm6605, %v6750, 0.0
        %6765 = vadd.xlane.f32.xlu0 %v6764
        %v6766 = vpop.xlane.xlu0 %6765
        %v6767 = vsel %vm6605, %v6751, 0.0
        %6768 = vadd.xlane.f32.xlu0 %v6767
        %v6769 = vpop.xlane.xlu0 %6768
        %v6770 = vsel %vm6605, %v6752, 0.0
        %6771 = vadd.xlane.f32.xlu0 %v6770
        %v6772 = vpop.xlane.xlu0 %6771
        %v6773 = vsel %vm6605, %v6753, 0.0
        %6774 = vadd.xlane.f32.xlu0 %v6773
        %v6775 = vpop.xlane.xlu0 %6774
        %v6776 = vsel %vm6605, %v6754, 0.0
        %6777 = vadd.xlane.f32.xlu0 %v6776
        %v6778 = vpop.xlane.xlu0 %6777
        %v6779 = vsel %vm6605, %v6755, 0.0
        %6780 = vadd.xlane.f32.xlu0 %v6779
        %v6781 = vpop.xlane.xlu0 %6780
        %v6782 = vsel %vm6605, %v6756, 0.0
        %6783 = vadd.xlane.f32.xlu0 %v6782
        %v6784 = vpop.xlane.xlu0 %6783
        %v6785 = vsel %vm6605, %v6757, 0.0
        %6786 = vadd.xlane.f32.xlu0 %v6785
        %v6787 = vpop.xlane.xlu0 %6786
        %v6788 = vadd.f32 %v6700, %v6760
        %v6789 = vadd.f32 %v6701, %v6763
        %v6790 = vadd.f32 %v6702, %v6766
        %v6791 = vadd.f32 %v6703, %v6769
        %v6792 = vadd.f32 %v6704, %v6772
        %v6793 = vadd.f32 %v6705, %v6775
        %v6794 = vadd.f32 %v6706, %v6778
        %v6795 = vadd.f32 %v6707, %v6781
        %v6796 = vadd.f32 %v6708, %v6784
        %v6797 = vadd.f32 %v6709, %v6787
        %vm6798 = vcmask 7168
        %6799 = vst.msk [vmem:[%s629] sm:$0xff] %vm6798, %v6788
        %6800 = vst.msk [vmem:[%s629 + $0x8] sm:$0xff] %vm6798, %v6789
        %6801 = vst.msk [vmem:[%s629 + $0x10] sm:$0xff] %vm6798, %v6790
        %6802 = vst.msk [vmem:[%s629 + $0x18] sm:$0xff] %vm6798, %v6791
        %6803 = vst.msk [vmem:[%s629 + $0x20] sm:$0xff] %vm6798, %v6792
        %6804 = vst.msk [vmem:[%s629 + $0x28] sm:$0xff] %vm6798, %v6793
        %6805 = vst.msk [vmem:[%s629 + $0x30] sm:$0xff] %vm6798, %v6794
        %6806 = vst.msk [vmem:[%s629 + $0x38] sm:$0xff] %vm6798, %v6795
        %6807 = vst.msk [vmem:[%s629 + $0x40] sm:$0xff] %vm6798, %v6796
        %6808 = vst.msk [vmem:[%s629 + $0x48] sm:$0xff] %vm6798, %v6797
        %v6809 = vsub.f32 0.0, %v6788
        %v6810 = vsub.f32 0.0, %v6789
        %v6811 = vsub.f32 0.0, %v6790
        %v6812 = vsub.f32 0.0, %v6791
        %v6813 = vsub.f32 0.0, %v6792
        %v6814 = vsub.f32 0.0, %v6793
        %v6815 = vsub.f32 0.0, %v6794
        %v6816 = vsub.f32 0.0, %v6795
        %v6817 = vsub.f32 0.0, %v6796
        %v6818 = vsub.f32 0.0, %v6797
        %v6819 = vmul.f32 %v6809, 1.442695
        %v6820 = vpow.pop %v6819
        %v6821 = vmul.f32 %v6810, 1.442695
        %v6822 = vpow.pop %v6821
        %v6823 = vmul.f32 %v6811, 1.442695
        %v6824 = vpow.pop %v6823
        %v6825 = vmul.f32 %v6812, 1.442695
        %v6826 = vpow.pop %v6825
        %v6827 = vmul.f32 %v6813, 1.442695
        %v6828 = vpow.pop %v6827
        %v6829 = vmul.f32 %v6814, 1.442695
        %v6830 = vpow.pop %v6829
        %v6831 = vmul.f32 %v6815, 1.442695
        %v6832 = vpow.pop %v6831
        %v6833 = vmul.f32 %v6816, 1.442695
        %v6834 = vpow.pop %v6833
        %v6835 = vmul.f32 %v6817, 1.442695
        %v6836 = vpow.pop %v6835
        %v6837 = vmul.f32 %v6818, 1.442695
        %v6838 = vpow.pop %v6837
        %v6839 = vadd.f32 %v6820, 1.0
        %v6840 = vadd.f32 %v6822, 1.0
        %v6841 = vadd.f32 %v6824, 1.0
        %v6842 = vadd.f32 %v6826, 1.0
        %v6843 = vadd.f32 %v6828, 1.0
        %v6844 = vadd.f32 %v6830, 1.0
        %v6845 = vadd.f32 %v6832, 1.0
        %v6846 = vadd.f32 %v6834, 1.0
        %v6847 = vadd.f32 %v6836, 1.0
        %v6848 = vadd.f32 %v6838, 1.0
        %v6849 = vrcp.pop %v6839
        %v6850 = vrcp.pop %v6840
        %v6851 = vrcp.pop %v6841
        %v6852 = vrcp.pop %v6842
        %v6853 = vrcp.pop %v6843
        %v6854 = vrcp.pop %v6844
        %v6855 = vrcp.pop %v6845
        %v6856 = vrcp.pop %v6846
        %v6857 = vrcp.pop %v6847
        %v6858 = vrcp.pop %v6848
        %6859 = vst.msk [vmem:[%s634] sm:$0xff] %vm6798, %v6849
        %6860 = vst.msk [vmem:[%s634 + $0x8] sm:$0xff] %vm6798, %v6850
        %6861 = vst.msk [vmem:[%s634 + $0x10] sm:$0xff] %vm6798, %v6851
        %6862 = vst.msk [vmem:[%s634 + $0x18] sm:$0xff] %vm6798, %v6852
        %6863 = vst.msk [vmem:[%s634 + $0x20] sm:$0xff] %vm6798, %v6853
        %6864 = vst.msk [vmem:[%s634 + $0x28] sm:$0xff] %vm6798, %v6854
        %6865 = vst.msk [vmem:[%s634 + $0x30] sm:$0xff] %vm6798, %v6855
        %6866 = vst.msk [vmem:[%s634 + $0x38] sm:$0xff] %vm6798, %v6856
        %6867 = vst.msk [vmem:[%s634 + $0x40] sm:$0xff] %vm6798, %v6857
        %6868 = vst.msk [vmem:[%s634 + $0x48] sm:$0xff] %vm6798, %v6858
        %p6869 = scmp.lt.s32.totalorder %s34, 1
        %s6870 = scalar_select %p6869, %s34, 1
        %s6871 = smul.addr %s6870, 10
        %s6872 = smul.addr %s6871, 8
        %s6873 = scalar_lea.vmem %s17, %s6872
        %p6874 = scmp.lt.s32.totalorder %s34, 1
        %s6875 = scalar_select %p6874, %s34, 1
        %s6876 = smul.addr %s6875, 10
        %s6877 = smul.addr %s6876, 8
        %s6878 = scalar_lea.vmem %s18, %s6877
        // Predicated region
        $region101: #{tpu_custom_call.1} parent=87 // pred_check
          %p6879 = pneg %p414
        $region102: #{tpu_custom_call.1} parent=87 // pred_check_branch
          %6881 = sbr.rel (%p6879) target = $region104
        $region103: #{tpu_custom_call.1} parent=87 // pred_region
          _
        $region104: #{tpu_custom_call.1} parent=87 // pred_fallthru
          _
        // Predicated region
        $region105: #{tpu_custom_call.1} parent=87 // pred_check
          %p6882 = pneg %p440
        $region106: #{tpu_custom_call.1} parent=87 // pred_check_branch
          %6884 = sbr.rel (%p6882) target = $region108
        $region107: #{tpu_custom_call.1} parent=87 // pred_region
          _
        $region108: #{tpu_custom_call.1} parent=87 // pred_fallthru
          _
      $region88: #{tpu_custom_call.1} parent=5 // pred_fallthru
        _
      %p6885 = scmp.le.s32.totalorder 2, %s29
      // Predicated region
      $region109: #{tpu_custom_call.1} parent=5 // pred_check
        %p6886 = pneg %p6885
      $region110: #{tpu_custom_call.1} parent=5 // pred_check_branch
        %6888 = sbr.rel (%p6886) target = $region112
      $region111: #{tpu_custom_call.1} parent=5 // pred_region
        %s6889 = ssub.s32 %s29, 2
        // Predicated region
        $region113: #{tpu_custom_call.1} parent=111 // pred_check
          %p6890 = pneg %p420
        $region114: #{tpu_custom_call.1} parent=111 // pred_check_branch
          %6892 = sbr.rel (%p6890) target = $region116
        $region115: #{tpu_custom_call.1} parent=111 // pred_region
          %p6893 = scmp.lt.s32.totalorder %s35, 1
          %s6894 = scalar_select %p6893, %s35, 1
          %s6895 = smul.addr %s6894, 10
          %s6896 = smul.addr %s6895, 8
          %s6897 = scalar_lea.vmem %s17, %s6896
        $region116: #{tpu_custom_call.1} parent=111 // pred_fallthru
          _
        // Predicated region
        $region117: #{tpu_custom_call.1} parent=111 // pred_check
          %p6898 = pneg %p446
        $region118: #{tpu_custom_call.1} parent=111 // pred_check_branch
          %6900 = sbr.rel (%p6898) target = $region120
        $region119: #{tpu_custom_call.1} parent=111 // pred_region
          %p6901 = scmp.lt.s32.totalorder %s35, 1
          %s6902 = scalar_select %p6901, %s35, 1
          %s6903 = smul.addr %s6902, 10
          %s6904 = smul.addr %s6903, 8
          %s6905 = scalar_lea.vmem %s18, %s6904
        $region120: #{tpu_custom_call.1} parent=111 // pred_fallthru
          _
      $region112: #{tpu_custom_call.1} parent=5 // pred_fallthru
        _
    $region6: #{tpu_custom_call.1} parent=1 // loop_footer
      %s33 = sadd.s32 1, %s29
    $region7: #{tpu_custom_call.1} parent=1 // loop_footer_branch
      %28 = sbr.rel target = $region3
    $region8: #{tpu_custom_call.1} parent=1 // loop_exit
      _
    %6906 = vsyncpa [#allocation4], 1
    %s6907 = scalar_lea.sflag [#allocation4], 1
    %6908 = vsyncpa %s6907, 1
    %6909 = vsyncpa [#allocation6], 1

</llo_original>
